<compile_context>
chip_gen: v5e
topology: v5e:2x2
jax: 0.10.0
libtpu: 0.0.40
codegen_flags: <defaults>
</compile_context>

<pallas_src>
import functools

import jax
import jax.numpy as jnp
from jax.experimental import pallas as pl
from jax.experimental.pallas import tpu as pltpu

EPS = 1e-5  # PyTorch BatchNorm2d default


def _round_up(x, m):
    return (x + m - 1) // m * m


# ----------------------------------------------------------------------------
# Generation-aware VMEM budgets.
# ----------------------------------------------------------------------------
@functools.lru_cache(maxsize=1)
def _vmem_capacity_bytes():
    try:
        cap = int(pltpu.get_tpu_info().vmem_capacity_bytes)
        if cap > 0:
            return cap
    except Exception:
        pass
    try:
        kind = jax.devices()[0].device_kind.lower()
    except Exception:
        kind = ""
    if ("v5 lite" in kind or "v5e" in kind or "v5p" in kind
            or "v6" in kind or "v4" in kind):
        return 128 * 2**20
    return 64 * 2**20          # conservative default (covers v7x's 64 MiB/TC)


def _budgets():
    cap = _vmem_capacity_bytes()
    if cap <= 64 * 2**20:
        # v7x-class: small VMEM, leave headroom for Mosaic internal scratch.
        tile_budget = 16 * 2**20
        limit_cap = cap - 12 * 2**20
    else:
        # v5e / v6e: 128 MiB -- use most of it for bigger tiles.
        tile_budget = 48 * 2**20
        limit_cap = min(cap - 16 * 2**20, 100 * 2**20)
    return tile_budget, max(limit_cap, 32 * 2**20)


def _tile_vmem_cost(th, W, row_pitch, Cin, ndf):
    scratch = (th + 2) * row_pitch * ndf * 2          # bf16 padded activation
    h1_f32 = (th + 2) * W * ndf * 4                   # conv1 intermediate
    taps = 3 * th * row_pitch * ndf * 4               # acc + tap + h2 temps
    out_blk = 2 * th * W * Cin * 4                    # double-buffered output
    return scratch + h1_f32 + taps + out_blk


def _pick_tile_h(H, W, Cin, ndf, budget_bytes, max_tile_h=None):
    max_th = H if max_tile_h is None else max(1, min(H, max_tile_h))
    row_pitch = _round_up(W + 2, 8)
    for th in range(max_th, 0, -1):
        if H % th:
            continue
        if _tile_vmem_cost(th, W, row_pitch, Cin, ndf) <= budget_bytes:
            return th
    return 1


def _vmem_limit_bytes(H, W, Cin, ndf, tile_h, row_pitch, single_buffer_weights):
    wmul = 1 if single_buffer_weights else 2
    weights = (Cin * ndf * 4 + 9 * ndf * ndf * 2 + ndf * Cin * 2
               + (4 * ndf + 2 * Cin) * 4) * wmul
    x_blk = 2 * (H + 2) * W * Cin * 4                 # varies with batch -> x2
    est = weights + x_blk + _tile_vmem_cost(tile_h, W, row_pitch, Cin, ndf)
    est = int(est * 1.25) + 2 * 2**20                 # modest headroom
    _, limit_cap = _budgets()
    return int(min(max(est, 32 * 2**20), limit_cap))


# ----------------------------------------------------------------------------
# Pallas kernel: one residual branch on one (batch, H-tile) block.
# ----------------------------------------------------------------------------
def _branch_kernel(xpad_ref, w1_ref, s1_ref, b1_ref,
                   w2_ref, s2_ref, b2_ref,
                   w3_ref, s3_ref, b3_ref,
                   out_ref, h1p_ref,
                   *, tile_h, row_pitch, flat_taps, fp8_taps):
    t = pl.program_id(1)
    n_h = pl.num_programs(1)
    _, _, W, Cin = xpad_ref.shape        # xpad block: (1, H+2, W, Cin)
    ndf = w1_ref.shape[1]
    row0 = t * tile_h                    # halo-window start (padded-H coords)

    # ---- conv1x1 (Cin -> ndf) + folded BN + ReLU on tile_h+2 halo rows -----
    xw = xpad_ref[0, pl.ds(row0, tile_h + 2), :, :].astype(jnp.float32)
    if Cin <= 8:
        # VPU path: Cin broadcast-FMAs; keeps the MXU free for the 3x3 conv.
        h1 = xw[:, :, 0:1] * w1_ref[0, :].reshape(1, 1, ndf)
        for c in range(1, Cin):
            h1 = h1 + xw[:, :, c:c + 1] * w1_ref[c, :].reshape(1, 1, ndf)
    else:
        h1 = jnp.dot(
            xw.reshape((tile_h + 2) * W, Cin).astype(jnp.bfloat16),
            w1_ref[...].astype(jnp.bfloat16),
            preferred_element_type=jnp.float32,
        ).reshape(tile_h + 2, W, ndf)
    h1 = jnp.maximum(h1 * s1_ref[...].reshape(1, 1, ndf)
                     + b1_ref[...].reshape(1, 1, ndf), 0.0)

    # ---- padded activation scratch: zero W-border columns, write interior --
    h1p_ref[:, 0:1, :] = jnp.zeros((tile_h + 2, 1, ndf), jnp.bfloat16)
    h1p_ref[:, W + 1:row_pitch, :] = jnp.zeros(
        (tile_h + 2, row_pitch - (W + 1), ndf), jnp.bfloat16)
    h1p_ref[:, 1:W + 1, :] = h1.astype(jnp.bfloat16)

    # Halo rows that fall on the image border must be exact zeros (the 3x3
    # conv pads the post-ReLU activation, not the input).  Only boundary
    # tiles need it -> cheap row zeroing instead of a full-slab iota/where.
    @pl.when(t == 0)
    def _():
        h1p_ref[0:1, :, :] = jnp.zeros((1, row_pitch, ndf), jnp.bfloat16)

    @pl.when(t == n_h - 1)
    def _():
        h1p_ref[tile_h + 1:tile_h + 2, :, :] = jnp.zeros(
            (1, row_pitch, ndf), jnp.bfloat16)

    def tap_dot(a, b):
        if fp8_taps:
            # TODO(synk): v7x-only fp8 MXU path; validate accuracy at ndf=512.
            a = a.astype(jnp.float8_e4m3fn)
            b = b.astype(jnp.float8_e4m3fn)
        return jnp.dot(a, b, preferred_element_type=jnp.float32)

    # ---- conv3x3 (ndf -> ndf, pad=1) ----------------------------------------
    if flat_taps:
        # Flat path: 3 contiguous slab reads; kx shift folded into a sublane
        # roll of the f32 tap output (XLU).  Wrapped rows land in padding
        # columns (>= W) of the last row and are sliced away below.
        npad = tile_h * row_pitch
        acc = None
        for ky in range(3):
            slab = h1p_ref[ky:ky + tile_h, :, :].reshape(npad, ndf)
            for kx in range(3):
                tap = tap_dot(slab, w2_ref[ky * 3 + kx])
                if kx:
                    tap = pltpu.roll(tap, shift=npad - kx, axis=0)
                acc = tap if acc is None else acc + tap
        h2 = jnp.maximum(acc * s2_ref[...] + b2_ref[...], 0.0)   # (npad, ndf)
        out = jnp.dot(h2.astype(jnp.bfloat16), w3_ref[...],
                      preferred_element_type=jnp.float32)
        out = out * s3_ref[...] + b3_ref[...]                    # (npad, Cin)
        out = out.reshape(tile_h, row_pitch, Cin)[:, :W, :]
    else:
        # Windowed path: 9 shifted-window matmuls; the window relayouts are
        # hidden under the MXU when ndf is large.
        hw = tile_h * W
        acc = None
        for ky in range(3):
            for kx in range(3):
                win = h1p_ref[ky:ky + tile_h, kx:kx + W, :].reshape(hw, ndf)
                tap = tap_dot(win, w2_ref[ky * 3 + kx])
                acc = tap if acc is None else acc + tap
        h2 = jnp.maximum(acc * s2_ref[...] + b2_ref[...], 0.0)   # (hw, ndf)
        out = jnp.dot(h2.astype(jnp.bfloat16), w3_ref[...],
                      preferred_element_type=jnp.float32)
        out = out * s3_ref[...] + b3_ref[...]
        out = out.reshape(tile_h, W, Cin)

    # ---- residual add + ReLU ------------------------------------------------
    resid = xpad_ref[0, pl.ds(row0 + 1, tile_h), :, :].astype(jnp.float32)
    out = jnp.maximum(out + resid, 0.0)
    # NOTE: Cin=4 last dim -> masked store; acceptable (residual tensor is a
    # negligible fraction of traffic vs. the ndf-wide convs).
    out_ref[0] = out.astype(out_ref.dtype)


# ----------------------------------------------------------------------------
# pallas_call wrapper for one branch.
# ----------------------------------------------------------------------------
def _run_branch(x_nhwc, folded, tile_h=None, use_fp8_3x3=False):
    """x_nhwc: (N, H, W, Cin) f32; folded: kernel-ready params (see fold)."""
    N, H, W, Cin = x_nhwc.shape
    w1, s1, b1, w2, s2, b2, w3, s3, b3 = folded
    ndf = w1.shape[1]
    row_pitch = _round_up(W + 2, 8)
    tile_budget, _ = _budgets()

    if tile_h is None:
        # On 2-TC chips (v7x-class, <= 64 MiB VMEM) keep >= 2 parallel grid
        # steps even when N == 1 so both TensorCores get work.
        max_th = None
        if N == 1 and H > 1 and _vmem_capacity_bytes() <= 64 * 2**20:
            max_th = max(H // 2, 1)
        tile_h = _pick_tile_h(H, W, Cin, ndf, tile_budget, max_th)
    assert H % tile_h == 0, (H, tile_h)
    n_h = H // tile_h

    # Flat (padded-width + roll) taps only when the extra MXU rows are cheap
    # (row_pitch/W <= ~1.13) or the kernel is not MXU-bound (small ndf).
    flat_taps = (row_pitch * 100 <= 113 * W) or (ndf <= 128)

    # Zero-pad H by 1 so halo reads never go out of bounds; boundary halo rows
    # of the post-ReLU activation are re-zeroed in the kernel.
    x_pad = jnp.pad(x_nhwc, ((0, 0), (1, 1), (0, 0), (0, 0)))

    kernel = functools.partial(_branch_kernel, tile_h=tile_h,
                               row_pitch=row_pitch, flat_taps=flat_taps,
                               fp8_taps=use_fp8_3x3)
    args = (x_pad, w1, s1, b1, w2, s2, b2, w3, s3, b3)

    def build(single_buffer_weights):
        def cspec(shape):
            zero = (0,) * len(shape)
            kwargs = ({"pipeline_mode": pl.Buffered(1)}
                      if single_buffer_weights else {})
            return pl.BlockSpec(shape, lambda b, t: zero, **kwargs)

        return pl.pallas_call(
            kernel,
            out_shape=jax.ShapeDtypeStruct((N, H, W, Cin), x_nhwc.dtype),
            grid_spec=pltpu.PrefetchScalarGridSpec(
                num_scalar_prefetch=0,
                grid=(N, n_h),
                in_specs=[
                    pl.BlockSpec((1, H + 2, W, Cin), lambda b, t: (b, 0, 0, 0)),
                    cspec((Cin, ndf)),        # w1 (f32, VPU path)
                    cspec((1, ndf)),          # s1
                    cspec((1, ndf)),          # b1
                    cspec((9, ndf, ndf)),     # w2 (bf16)
                    cspec((1, ndf)),          # s2
                    cspec((1, ndf)),          # b2
                    cspec((ndf, Cin)),        # w3 (bf16)
                    cspec((1, Cin)),          # s3
                    cspec((1, Cin)),          # b3
                ],
                out_specs=pl.BlockSpec((1, tile_h, W, Cin),
                                       lambda b, t: (b, t, 0, 0)),
                scratch_shapes=[pltpu.VMEM((tile_h + 2, row_pitch, ndf),
                                           jnp.bfloat16)],
            ),
            compiler_params=pltpu.CompilerParams(
                dimension_semantics=("parallel", "parallel"),
                vmem_limit_bytes=_vmem_limit_bytes(
                    H, W, Cin, ndf, tile_h, row_pitch, single_buffer_weights)),
        )

    try:
        return build(True)(*args)
    except Exception:
        # pipeline_mode=pl.Buffered(1) unsupported on this jax/backend ->
        # fall back to default double-buffering of the constant operands.
        return build(False)(*args)


# ----------------------------------------------------------------------------
# Parameter construction (deterministic, synthetic) and BN folding.
# ----------------------------------------------------------------------------
def init_branch_params(key, cin, ndf):
    ks = jax.random.split(key, 18)
    return {
        'w1': 0.10 * jax.random.normal(ks[0], (ndf, cin), jnp.float32),
        'b1': 0.05 * jax.random.normal(ks[1], (ndf,), jnp.float32),
        'g1': 1.0 + 0.1 * jax.random.normal(ks[2], (ndf,), jnp.float32),
        'be1': 0.05 * jax.random.normal(ks[3], (ndf,), jnp.float32),
        'rm1': 0.05 * jax.random.normal(ks[4], (ndf,), jnp.float32),
        'rv1': jax.random.uniform(ks[5], (ndf,), jnp.float32, 0.5, 1.5),
        'w2': 0.05 * jax.random.normal(ks[6], (ndf, ndf, 3, 3), jnp.float32),
        'b2': 0.05 * jax.random.normal(ks[7], (ndf,), jnp.float32),
        'g2': 1.0 + 0.1 * jax.random.normal(ks[8], (ndf,), jnp.float32),
        'be2': 0.05 * jax.random.normal(ks[9], (ndf,), jnp.float32),
        'rm2': 0.05 * jax.random.normal(ks[10], (ndf,), jnp.float32),
        'rv2': jax.random.uniform(ks[11], (ndf,), jnp.float32, 0.5, 1.5),
        'w3': 0.10 * jax.random.normal(ks[12], (cin, ndf), jnp.float32),
        'b3': 0.05 * jax.random.normal(ks[13], (cin,), jnp.float32),
        'g3': 1.0 + 0.1 * jax.random.normal(ks[14], (cin,), jnp.float32),
        'be3': 0.05 * jax.random.normal(ks[15], (cin,), jnp.float32),
        'rm3': 0.05 * jax.random.normal(ks[16], (cin,), jnp.float32),
        'rv3': jax.random.uniform(ks[17], (cin,), jnp.float32, 0.5, 1.5),
    }


def _fold(conv_b, g, be, rm, rv):
    scale = g / jnp.sqrt(rv + EPS)
    bias = be + (conv_b - rm) * scale
    return scale, bias


def fold_branch_params(p):
    ndf, cin = p['w1'].shape
    s1, b1 = _fold(p['b1'], p['g1'], p['be1'], p['rm1'], p['rv1'])
    s2, b2 = _fold(p['b2'], p['g2'], p['be2'], p['rm2'], p['rv2'])
    s3, b3 = _fold(p['b3'], p['g3'], p['be3'], p['rm3'], p['rv3'])
    w1 = p['w1'].T.astype(jnp.float32)                            # (cin, ndf)
    w2 = (p['w2'].transpose(2, 3, 1, 0)                           # (kh,kw,in,out)
          .reshape(9, ndf, ndf).astype(jnp.bfloat16))
    w3 = p['w3'].T.astype(jnp.bfloat16)                           # (ndf, cin)
    return (w1, s1.reshape(1, ndf), b1.reshape(1, ndf),
            w2, s2.reshape(1, ndf), b2.reshape(1, ndf),
            w3, s3.reshape(1, cin), b3.reshape(1, cin))


# ----------------------------------------------------------------------------
# Full DUAL forward (Pallas) and a pure-JAX f32 reference for validation.
# ----------------------------------------------------------------------------
def dual_forward_pallas(x_nchw, params1, params2, tile_h=None,
                        use_fp8_3x3=False):
    x = jnp.transpose(x_nchw, (0, 2, 3, 1)).astype(jnp.float32)   # NCHW->NHWC
    out1 = _run_branch(x, fold_branch_params(params1), tile_h, use_fp8_3x3)
    out2 = _run_branch(out1, fold_branch_params(params2), tile_h, use_fp8_3x3)
    return jnp.transpose(out2, (0, 3, 1, 2))                      # NHWC->NCHW


def _branch_ref(x_nhwc, p):
    def bn(y, g, be, rm, rv):
        return (y - rm) * (g / jnp.sqrt(rv + EPS)) + be

    h = jnp.einsum('nhwc,oc->nhwo', x_nhwc, p['w1']) + p['b1']
    h = jax.nn.relu(bn(h, p['g1'], p['be1'], p['rm1'], p['rv1']))
    w2_hwio = p['w2'].transpose(2, 3, 1, 0)
    h = jax.lax.conv_general_dilated(
        h, w2_hwio, (1, 1), 'SAME',
        dimension_numbers=('NHWC', 'HWIO', 'NHWC')) + p['b2']
    h = jax.nn.relu(bn(h, p['g2'], p['be2'], p['rm2'], p['rv2']))
    h = jnp.einsum('nhwc,oc->nhwo', h, p['w3']) + p['b3']
    h = bn(h, p['g3'], p['be3'], p['rm3'], p['rv3'])
    return jax.nn.relu(h + x_nhwc)


def dual_forward_ref(x_nchw, params1, params2):
    x = jnp.transpose(x_nchw, (0, 2, 3, 1)).astype(jnp.float32)
    out = _branch_ref(_branch_ref(x, params1), params2)
    return jnp.transpose(out, (0, 3, 1, 2))


# ----------------------------------------------------------------------------
if __name__ == "__main__":
    key = jax.random.PRNGKey(0)
    kx1, kb1, kb2, kb3, kb4, kx2 = jax.random.split(key, 6)

    # Config A: small ndf -> exercises the flat (roll-based) 3x3 path,
    # explicit multi-tile + auto-picked single-tile cases.
    N, CIN, H, W = 2, 4, 16, 16
    NDF = 32  # small synthetic stand-in for ndf=512 in the original module
    x = jax.random.normal(kx1, (N, CIN, H, W), jnp.float32)   # NCHW like PyTorch
    params1 = init_branch_params(kb1, CIN, NDF)
    params2 = init_branch_params(kb2, CIN, NDF)
    ref = jax.block_until_ready(dual_forward_ref(x, params1, params2))
    for th in (8, None):   # th=8: interior tile boundary; None: auto (whole image)
        out = jax.block_until_ready(
            dual_forward_pallas(x, params1, params2, tile_h=th))
        assert out.shape == (N, CIN, H, W)
        err = float(jnp.max(jnp.abs(out - ref)))
        assert jnp.allclose(out, ref, atol=2e-2, rtol=2e-2), (th, err)

    # Config B: larger ndf -> exercises the MXU windowed-tap path with an
    # interior tile boundary (N=1).
    N2, H2, W2, NDF2 = 1, 8, 8, 256
    x2 = jax.random.normal(kx2, (N2, CIN, H2, W2), jnp.float32)
    p1 = init_branch_params(kb3, CIN, NDF2)
    p2 = init_branch_params(kb4, CIN, NDF2)
    ref2 = jax.block_until_ready(dual_forward_ref(x2, p1, p2))
    out2 = jax.block_until_ready(dual_forward_pallas(x2, p1, p2, tile_h=4))
    err2 = float(jnp.max(jnp.abs(out2 - ref2)))
    assert jnp.allclose(out2, ref2, atol=5e-2, rtol=5e-2), err2

    print("KERNEL_OK")
</pallas_src>

<mosaic_0001>
module attributes {stable_mosaic.version = 11 : i64} {
  func.func @_branch_kernel(%arg0: i32, %arg1: i32, %arg2: memref<1x18x16x4xf32, #tpu.memory_space<vmem>>, %arg3: memref<4x32xf32, #tpu.memory_space<vmem>>, %arg4: memref<1x32xf32, #tpu.memory_space<vmem>>, %arg5: memref<1x32xf32, #tpu.memory_space<vmem>>, %arg6: memref<9x32x32xbf16, #tpu.memory_space<vmem>>, %arg7: memref<1x32xf32, #tpu.memory_space<vmem>>, %arg8: memref<1x32xf32, #tpu.memory_space<vmem>>, %arg9: memref<32x4xbf16, #tpu.memory_space<vmem>>, %arg10: memref<1x4xf32, #tpu.memory_space<vmem>>, %arg11: memref<1x4xf32, #tpu.memory_space<vmem>>, %arg12: memref<1x8x16x4xf32, #tpu.memory_space<vmem>>, %arg13: memref<10x24x32xbf16, #tpu.memory_space<vmem>>) attributes {dimension_semantics = [#tpu.dimension_semantics<parallel>, #tpu.dimension_semantics<parallel>], iteration_bounds = array<i64: 2, 2>, scalar_prefetch = 0 : i64, scratch_operands = 1 : i64, tpu.core_type = #tpu.core_type<tc>, window_params = [{transform_indices = @transform_0, window_bounds = array<i64: 1, 18, 16, 4>}, {pipeline_mode = #tpu.pipeline_mode<synchronous>, transform_indices = @transform_1, window_bounds = array<i64: 4, 32>}, {pipeline_mode = #tpu.pipeline_mode<synchronous>, transform_indices = @transform_2, window_bounds = array<i64: 1, 32>}, {pipeline_mode = #tpu.pipeline_mode<synchronous>, transform_indices = @transform_3, window_bounds = array<i64: 1, 32>}, {pipeline_mode = #tpu.pipeline_mode<synchronous>, transform_indices = @transform_4, window_bounds = array<i64: 9, 32, 32>}, {pipeline_mode = #tpu.pipeline_mode<synchronous>, transform_indices = @transform_5, window_bounds = array<i64: 1, 32>}, {pipeline_mode = #tpu.pipeline_mode<synchronous>, transform_indices = @transform_6, window_bounds = array<i64: 1, 32>}, {pipeline_mode = #tpu.pipeline_mode<synchronous>, transform_indices = @transform_7, window_bounds = array<i64: 32, 4>}, {pipeline_mode = #tpu.pipeline_mode<synchronous>, transform_indices = @transform_8, window_bounds = array<i64: 1, 4>}, {pipeline_mode = #tpu.pipeline_mode<synchronous>, transform_indices = @transform_9, window_bounds = array<i64: 1, 4>}, {transform_indices = @transform_10, window_bounds = array<i64: 1, 8, 16, 4>}]} {
    %c8_i32 = arith.constant 8 : i32
    %0 = arith.muli %arg1, %c8_i32 : i32
    %c0 = arith.constant 0 : index
    %1 = arith.index_cast %0 : i32 to index
    %c0_0 = arith.constant 0 : index
    %c0_1 = arith.constant 0 : index
    %2 = vector.load %arg2[%c0, %1, %c0_0, %c0_1] : memref<1x18x16x4xf32, #tpu.memory_space<vmem>>, vector<1x10x16x4xf32>
    %3 = vector.shape_cast %2 : vector<1x10x16x4xf32> to vector<10x16x4xf32>
    %4 = vector.extract_strided_slice %3 {offsets = [0, 0, 0], sizes = [10, 16, 1], strides = [1, 1, 1]} : vector<10x16x4xf32> to vector<10x16x1xf32>
    %c0_2 = arith.constant 0 : index
    %c0_3 = arith.constant 0 : index
    %5 = vector.load %arg3[%c0_2, %c0_3] : memref<4x32xf32, #tpu.memory_space<vmem>>, vector<1x32xf32>
    %6 = vector.shape_cast %5 : vector<1x32xf32> to vector<32xf32>
    %7 = vector.shape_cast %6 : vector<32xf32> to vector<1x1x32xf32>
    %8 = vector.broadcast %4 : vector<10x16x1xf32> to vector<10x16x32xf32>
    %9 = vector.broadcast %7 : vector<1x1x32xf32> to vector<10x16x32xf32>
    %10 = arith.mulf %8, %9 : vector<10x16x32xf32>
    %11 = vector.extract_strided_slice %3 {offsets = [0, 0, 1], sizes = [10, 16, 1], strides = [1, 1, 1]} : vector<10x16x4xf32> to vector<10x16x1xf32>
    %c1 = arith.constant 1 : index
    %c0_4 = arith.constant 0 : index
    %12 = vector.load %arg3[%c1, %c0_4] : memref<4x32xf32, #tpu.memory_space<vmem>>, vector<1x32xf32>
    %13 = vector.shape_cast %12 : vector<1x32xf32> to vector<32xf32>
    %14 = vector.shape_cast %13 : vector<32xf32> to vector<1x1x32xf32>
    %15 = vector.broadcast %11 : vector<10x16x1xf32> to vector<10x16x32xf32>
    %16 = vector.broadcast %14 : vector<1x1x32xf32> to vector<10x16x32xf32>
    %17 = arith.mulf %15, %16 : vector<10x16x32xf32>
    %18 = arith.addf %10, %17 : vector<10x16x32xf32>
    %19 = vector.extract_strided_slice %3 {offsets = [0, 0, 2], sizes = [10, 16, 1], strides = [1, 1, 1]} : vector<10x16x4xf32> to vector<10x16x1xf32>
    %c2 = arith.constant 2 : index
    %c0_5 = arith.constant 0 : index
    %20 = vector.load %arg3[%c2, %c0_5] : memref<4x32xf32, #tpu.memory_space<vmem>>, vector<1x32xf32>
    %21 = vector.shape_cast %20 : vector<1x32xf32> to vector<32xf32>
    %22 = vector.shape_cast %21 : vector<32xf32> to vector<1x1x32xf32>
    %23 = vector.broadcast %19 : vector<10x16x1xf32> to vector<10x16x32xf32>
    %24 = vector.broadcast %22 : vector<1x1x32xf32> to vector<10x16x32xf32>
    %25 = arith.mulf %23, %24 : vector<10x16x32xf32>
    %26 = arith.addf %18, %25 : vector<10x16x32xf32>
    %27 = vector.extract_strided_slice %3 {offsets = [0, 0, 3], sizes = [10, 16, 1], strides = [1, 1, 1]} : vector<10x16x4xf32> to vector<10x16x1xf32>
    %c3 = arith.constant 3 : index
    %c0_6 = arith.constant 0 : index
    %28 = vector.load %arg3[%c3, %c0_6] : memref<4x32xf32, #tpu.memory_space<vmem>>, vector<1x32xf32>
    %29 = vector.shape_cast %28 : vector<1x32xf32> to vector<32xf32>
    %30 = vector.shape_cast %29 : vector<32xf32> to vector<1x1x32xf32>
    %31 = vector.broadcast %27 : vector<10x16x1xf32> to vector<10x16x32xf32>
    %32 = vector.broadcast %30 : vector<1x1x32xf32> to vector<10x16x32xf32>
    %33 = arith.mulf %31, %32 : vector<10x16x32xf32>
    %34 = arith.addf %26, %33 : vector<10x16x32xf32>
    %c0_7 = arith.constant 0 : index
    %c0_8 = arith.constant 0 : index
    %35 = vector.load %arg4[%c0_7, %c0_8] : memref<1x32xf32, #tpu.memory_space<vmem>>, vector<1x32xf32>
    %36 = vector.shape_cast %35 : vector<1x32xf32> to vector<1x1x32xf32>
    %37 = vector.broadcast %36 : vector<1x1x32xf32> to vector<10x16x32xf32>
    %38 = arith.mulf %34, %37 : vector<10x16x32xf32>
    %c0_9 = arith.constant 0 : index
    %c0_10 = arith.constant 0 : index
    %39 = vector.load %arg5[%c0_9, %c0_10] : memref<1x32xf32, #tpu.memory_space<vmem>>, vector<1x32xf32>
    %40 = vector.shape_cast %39 : vector<1x32xf32> to vector<1x1x32xf32>
    %41 = vector.broadcast %40 : vector<1x1x32xf32> to vector<10x16x32xf32>
    %42 = arith.addf %38, %41 : vector<10x16x32xf32>
    %cst = arith.constant 0.000000e+00 : f32
    %43 = vector.broadcast %cst : f32 to vector<10x16x32xf32>
    %44 = arith.maximumf %42, %43 : vector<10x16x32xf32>
    %cst_11 = arith.constant 0.000000e+00 : bf16
    %45 = vector.broadcast %cst_11 : bf16 to vector<10x1x32xbf16>
    %c0_12 = arith.constant 0 : index
    %c0_13 = arith.constant 0 : index
    %c0_14 = arith.constant 0 : index
    %46 = vector.load %arg13[%c0_12, %c0_13, %c0_14] : memref<10x24x32xbf16, #tpu.memory_space<vmem>>, vector<10x1x32xbf16>
    tpu.vector_store %arg13[%c0_12, %c0_13, %c0_14], %45 {strides = array<i32>} : memref<10x24x32xbf16, #tpu.memory_space<vmem>>, vector<10x1x32xbf16>,
    %cst_15 = arith.constant 0.000000e+00 : bf16
    %47 = vector.broadcast %cst_15 : bf16 to vector<10x7x32xbf16>
    %c0_16 = arith.constant 0 : index
    %c17 = arith.constant 17 : index
    %c0_17 = arith.constant 0 : index
    %48 = vector.load %arg13[%c0_16, %c17, %c0_17] : memref<10x24x32xbf16, #tpu.memory_space<vmem>>, vector<10x7x32xbf16>
    tpu.vector_store %arg13[%c0_16, %c17, %c0_17], %47 {strides = array<i32>} : memref<10x24x32xbf16, #tpu.memory_space<vmem>>, vector<10x7x32xbf16>,
    %49 = arith.truncf %44 : vector<10x16x32xf32> to vector<10x16x32xbf16>
    %c0_18 = arith.constant 0 : index
    %c1_19 = arith.constant 1 : index
    %c0_20 = arith.constant 0 : index
    %50 = vector.load %arg13[%c0_18, %c1_19, %c0_20] : memref<10x24x32xbf16, #tpu.memory_space<vmem>>, vector<10x16x32xbf16>
    tpu.vector_store %arg13[%c0_18, %c1_19, %c0_20], %49 {strides = array<i32>} : memref<10x24x32xbf16, #tpu.memory_space<vmem>>, vector<10x16x32xbf16>,
    %c0_i32 = arith.constant 0 : i32
    %51 = arith.cmpi eq, %arg1, %c0_i32 : i32
    %52 = arith.extui %51 : i1 to i32
    %c0_i32_21 = arith.constant 0 : i32
    %53 = arith.cmpi ne, %52, %c0_i32_21 : i32
    scf.if %53 {
      %cst_88 = arith.constant 0.000000e+00 : bf16
      %133 = vector.broadcast %cst_88 : bf16 to vector<1x24x32xbf16>
      %c0_89 = arith.constant 0 : index
      %c0_90 = arith.constant 0 : index
      %c0_91 = arith.constant 0 : index
      %134 = vector.load %arg13[%c0_89, %c0_90, %c0_91] : memref<10x24x32xbf16, #tpu.memory_space<vmem>>, vector<1x24x32xbf16>
      tpu.vector_store %arg13[%c0_89, %c0_90, %c0_91], %133 {strides = array<i32>} : memref<10x24x32xbf16, #tpu.memory_space<vmem>>, vector<1x24x32xbf16>,
    } else {
    }
    %c1_i32 = arith.constant 1 : i32
    %54 = arith.cmpi eq, %arg1, %c1_i32 : i32
    %55 = arith.extui %54 : i1 to i32
    %c0_i32_22 = arith.constant 0 : i32
    %56 = arith.cmpi ne, %55, %c0_i32_22 : i32
    scf.if %56 {
      %cst_88 = arith.constant 0.000000e+00 : bf16
      %133 = vector.broadcast %cst_88 : bf16 to vector<1x24x32xbf16>
      %c9 = arith.constant 9 : index
      %c0_89 = arith.constant 0 : index
      %c0_90 = arith.constant 0 : index
      %134 = vector.load %arg13[%c9, %c0_89, %c0_90] : memref<10x24x32xbf16, #tpu.memory_space<vmem>>, vector<1x24x32xbf16>
      tpu.vector_store %arg13[%c9, %c0_89, %c0_90], %133 {strides = array<i32>} : memref<10x24x32xbf16, #tpu.memory_space<vmem>>, vector<1x24x32xbf16>,
    } else {
    }
    %c0_23 = arith.constant 0 : index
    %c0_24 = arith.constant 0 : index
    %c0_25 = arith.constant 0 : index
    %57 = vector.load %arg13[%c0_23, %c0_24, %c0_25] : memref<10x24x32xbf16, #tpu.memory_space<vmem>>, vector<8x24x32xbf16>
    %58 = vector.shape_cast %57 : vector<8x24x32xbf16> to vector<192x32xbf16>
    %c0_26 = arith.constant 0 : index
    %c0_27 = arith.constant 0 : index
    %c0_28 = arith.constant 0 : index
    %59 = vector.load %arg6[%c0_26, %c0_27, %c0_28] : memref<9x32x32xbf16, #tpu.memory_space<vmem>>, vector<1x32x32xbf16>
    %60 = vector.shape_cast %59 : vector<1x32x32xbf16> to vector<32x32xbf16>
    %cst_29 = arith.constant dense<0.000000e+00> : vector<192x32xf32>
    %61 = tpu.matmul %58, %60, %cst_29 {dimension_numbers = #tpu.dot_dimension_numbers<[1], [0], [0], [1], [0, 0, 1, 1], [], []>} : vector<192x32xbf16>, vector<32x32xbf16>, vector<192x32xf32> -> vector<192x32xf32>
    %c1_30 = arith.constant 1 : index
    %c0_31 = arith.constant 0 : index
    %c0_32 = arith.constant 0 : index
    %62 = vector.load %arg6[%c1_30, %c0_31, %c0_32] : memref<9x32x32xbf16, #tpu.memory_space<vmem>>, vector<1x32x32xbf16>
    %63 = vector.shape_cast %62 : vector<1x32x32xbf16> to vector<32x32xbf16>
    %cst_33 = arith.constant dense<0.000000e+00> : vector<192x32xf32>
    %64 = tpu.matmul %58, %63, %cst_33 {dimension_numbers = #tpu.dot_dimension_numbers<[1], [0], [0], [1], [0, 0, 1, 1], [], []>} : vector<192x32xbf16>, vector<32x32xbf16>, vector<192x32xf32> -> vector<192x32xf32>
    %c191_i32 = arith.constant 191 : i32
    %65 = tpu.dynamic_rotate %64 by %c191_i32 dim 0 : vector<192x32xf32>, i32 -> vector<192x32xf32>
    %66 = arith.addf %61, %65 : vector<192x32xf32>
    %c2_34 = arith.constant 2 : index
    %c0_35 = arith.constant 0 : index
    %c0_36 = arith.constant 0 : index
    %67 = vector.load %arg6[%c2_34, %c0_35, %c0_36] : memref<9x32x32xbf16, #tpu.memory_space<vmem>>, vector<1x32x32xbf16>
    %68 = vector.shape_cast %67 : vector<1x32x32xbf16> to vector<32x32xbf16>
    %cst_37 = arith.constant dense<0.000000e+00> : vector<192x32xf32>
    %69 = tpu.matmul %58, %68, %cst_37 {dimension_numbers = #tpu.dot_dimension_numbers<[1], [0], [0], [1], [0, 0, 1, 1], [], []>} : vector<192x32xbf16>, vector<32x32xbf16>, vector<192x32xf32> -> vector<192x32xf32>
    %c190_i32 = arith.constant 190 : i32
    %70 = tpu.dynamic_rotate %69 by %c190_i32 dim 0 : vector<192x32xf32>, i32 -> vector<192x32xf32>
    %71 = arith.addf %66, %70 : vector<192x32xf32>
    %c1_38 = arith.constant 1 : index
    %c0_39 = arith.constant 0 : index
    %c0_40 = arith.constant 0 : index
    %72 = vector.load %arg13[%c1_38, %c0_39, %c0_40] : memref<10x24x32xbf16, #tpu.memory_space<vmem>>, vector<8x24x32xbf16>
    %73 = vector.shape_cast %72 : vector<8x24x32xbf16> to vector<192x32xbf16>
    %c3_41 = arith.constant 3 : index
    %c0_42 = arith.constant 0 : index
    %c0_43 = arith.constant 0 : index
    %74 = vector.load %arg6[%c3_41, %c0_42, %c0_43] : memref<9x32x32xbf16, #tpu.memory_space<vmem>>, vector<1x32x32xbf16>
    %75 = vector.shape_cast %74 : vector<1x32x32xbf16> to vector<32x32xbf16>
    %cst_44 = arith.constant dense<0.000000e+00> : vector<192x32xf32>
    %76 = tpu.matmul %73, %75, %cst_44 {dimension_numbers = #tpu.dot_dimension_numbers<[1], [0], [0], [1], [0, 0, 1, 1], [], []>} : vector<192x32xbf16>, vector<32x32xbf16>, vector<192x32xf32> -> vector<192x32xf32>
    %77 = arith.addf %71, %76 : vector<192x32xf32>
    %c4 = arith.constant 4 : index
    %c0_45 = arith.constant 0 : index
    %c0_46 = arith.constant 0 : index
    %78 = vector.load %arg6[%c4, %c0_45, %c0_46] : memref<9x32x32xbf16, #tpu.memory_space<vmem>>, vector<1x32x32xbf16>
    %79 = vector.shape_cast %78 : vector<1x32x32xbf16> to vector<32x32xbf16>
    %cst_47 = arith.constant dense<0.000000e+00> : vector<192x32xf32>
    %80 = tpu.matmul %73, %79, %cst_47 {dimension_numbers = #tpu.dot_dimension_numbers<[1], [0], [0], [1], [0, 0, 1, 1], [], []>} : vector<192x32xbf16>, vector<32x32xbf16>, vector<192x32xf32> -> vector<192x32xf32>
    %c191_i32_48 = arith.constant 191 : i32
    %81 = tpu.dynamic_rotate %80 by %c191_i32_48 dim 0 : vector<192x32xf32>, i32 -> vector<192x32xf32>
    %82 = arith.addf %77, %81 : vector<192x32xf32>
    %c5 = arith.constant 5 : index
    %c0_49 = arith.constant 0 : index
    %c0_50 = arith.constant 0 : index
    %83 = vector.load %arg6[%c5, %c0_49, %c0_50] : memref<9x32x32xbf16, #tpu.memory_space<vmem>>, vector<1x32x32xbf16>
    %84 = vector.shape_cast %83 : vector<1x32x32xbf16> to vector<32x32xbf16>
    %cst_51 = arith.constant dense<0.000000e+00> : vector<192x32xf32>
    %85 = tpu.matmul %73, %84, %cst_51 {dimension_numbers = #tpu.dot_dimension_numbers<[1], [0], [0], [1], [0, 0, 1, 1], [], []>} : vector<192x32xbf16>, vector<32x32xbf16>, vector<192x32xf32> -> vector<192x32xf32>
    %c190_i32_52 = arith.constant 190 : i32
    %86 = tpu.dynamic_rotate %85 by %c190_i32_52 dim 0 : vector<192x32xf32>, i32 -> vector<192x32xf32>
    %87 = arith.addf %82, %86 : vector<192x32xf32>
    %c2_53 = arith.constant 2 : index
    %c0_54 = arith.constant 0 : index
    %c0_55 = arith.constant 0 : index
    %88 = vector.load %arg13[%c2_53, %c0_54, %c0_55] : memref<10x24x32xbf16, #tpu.memory_space<vmem>>, vector<8x24x32xbf16>
    %89 = vector.shape_cast %88 : vector<8x24x32xbf16> to vector<192x32xbf16>
    %c6 = arith.constant 6 : index
    %c0_56 = arith.constant 0 : index
    %c0_57 = arith.constant 0 : index
    %90 = vector.load %arg6[%c6, %c0_56, %c0_57] : memref<9x32x32xbf16, #tpu.memory_space<vmem>>, vector<1x32x32xbf16>
    %91 = vector.shape_cast %90 : vector<1x32x32xbf16> to vector<32x32xbf16>
    %cst_58 = arith.constant dense<0.000000e+00> : vector<192x32xf32>
    %92 = tpu.matmul %89, %91, %cst_58 {dimension_numbers = #tpu.dot_dimension_numbers<[1], [0], [0], [1], [0, 0, 1, 1], [], []>} : vector<192x32xbf16>, vector<32x32xbf16>, vector<192x32xf32> -> vector<192x32xf32>
    %93 = arith.addf %87, %92 : vector<192x32xf32>
    %c7 = arith.constant 7 : index
    %c0_59 = arith.constant 0 : index
    %c0_60 = arith.constant 0 : index
    %94 = vector.load %arg6[%c7, %c0_59, %c0_60] : memref<9x32x32xbf16, #tpu.memory_space<vmem>>, vector<1x32x32xbf16>
    %95 = vector.shape_cast %94 : vector<1x32x32xbf16> to vector<32x32xbf16>
    %cst_61 = arith.constant dense<0.000000e+00> : vector<192x32xf32>
    %96 = tpu.matmul %89, %95, %cst_61 {dimension_numbers = #tpu.dot_dimension_numbers<[1], [0], [0], [1], [0, 0, 1, 1], [], []>} : vector<192x32xbf16>, vector<32x32xbf16>, vector<192x32xf32> -> vector<192x32xf32>
    %c191_i32_62 = arith.constant 191 : i32
    %97 = tpu.dynamic_rotate %96 by %c191_i32_62 dim 0 : vector<192x32xf32>, i32 -> vector<192x32xf32>
    %98 = arith.addf %93, %97 : vector<192x32xf32>
    %c8 = arith.constant 8 : index
    %c0_63 = arith.constant 0 : index
    %c0_64 = arith.constant 0 : index
    %99 = vector.load %arg6[%c8, %c0_63, %c0_64] : memref<9x32x32xbf16, #tpu.memory_space<vmem>>, vector<1x32x32xbf16>
    %100 = vector.shape_cast %99 : vector<1x32x32xbf16> to vector<32x32xbf16>
    %cst_65 = arith.constant dense<0.000000e+00> : vector<192x32xf32>
    %101 = tpu.matmul %89, %100, %cst_65 {dimension_numbers = #tpu.dot_dimension_numbers<[1], [0], [0], [1], [0, 0, 1, 1], [], []>} : vector<192x32xbf16>, vector<32x32xbf16>, vector<192x32xf32> -> vector<192x32xf32>
    %c190_i32_66 = arith.constant 190 : i32
    %102 = tpu.dynamic_rotate %101 by %c190_i32_66 dim 0 : vector<192x32xf32>, i32 -> vector<192x32xf32>
    %103 = arith.addf %98, %102 : vector<192x32xf32>
    %c0_67 = arith.constant 0 : index
    %c0_68 = arith.constant 0 : index
    %104 = vector.load %arg7[%c0_67, %c0_68] : memref<1x32xf32, #tpu.memory_space<vmem>>, vector<1x32xf32>
    %105 = vector.broadcast %104 : vector<1x32xf32> to vector<192x32xf32>
    %106 = arith.mulf %103, %105 : vector<192x32xf32>
    %c0_69 = arith.constant 0 : index
    %c0_70 = arith.constant 0 : index
    %107 = vector.load %arg8[%c0_69, %c0_70] : memref<1x32xf32, #tpu.memory_space<vmem>>, vector<1x32xf32>
    %108 = vector.broadcast %107 : vector<1x32xf32> to vector<192x32xf32>
    %109 = arith.addf %106, %108 : vector<192x32xf32>
    %cst_71 = arith.constant 0.000000e+00 : f32
    %110 = vector.broadcast %cst_71 : f32 to vector<192x32xf32>
    %111 = arith.maximumf %109, %110 : vector<192x32xf32>
    %112 = arith.truncf %111 : vector<192x32xf32> to vector<192x32xbf16>
    %c0_72 = arith.constant 0 : index
    %c0_73 = arith.constant 0 : index
    %113 = vector.load %arg9[%c0_72, %c0_73] : memref<32x4xbf16, #tpu.memory_space<vmem>>, vector<32x4xbf16>
    %cst_74 = arith.constant dense<0.000000e+00> : vector<192x4xf32>
    %114 = tpu.matmul %112, %113, %cst_74 {dimension_numbers = #tpu.dot_dimension_numbers<[1], [0], [0], [1], [0, 0, 1, 1], [], []>} : vector<192x32xbf16>, vector<32x4xbf16>, vector<192x4xf32> -> vector<192x4xf32>
    %c0_75 = arith.constant 0 : index
    %c0_76 = arith.constant 0 : index
    %115 = vector.load %arg10[%c0_75, %c0_76] : memref<1x4xf32, #tpu.memory_space<vmem>>, vector<1x4xf32>
    %116 = vector.broadcast %115 : vector<1x4xf32> to vector<192x4xf32>
    %117 = arith.mulf %114, %116 : vector<192x4xf32>
    %c0_77 = arith.constant 0 : index
    %c0_78 = arith.constant 0 : index
    %118 = vector.load %arg11[%c0_77, %c0_78] : memref<1x4xf32, #tpu.memory_space<vmem>>, vector<1x4xf32>
    %119 = vector.broadcast %118 : vector<1x4xf32> to vector<192x4xf32>
    %120 = arith.addf %117, %119 : vector<192x4xf32>
    %121 = vector.shape_cast %120 : vector<192x4xf32> to vector<8x24x4xf32>
    %122 = vector.extract_strided_slice %121 {offsets = [0, 0, 0], sizes = [8, 16, 4], strides = [1, 1, 1]} : vector<8x24x4xf32> to vector<8x16x4xf32>
    %c1_i32_79 = arith.constant 1 : i32
    %123 = arith.addi %0, %c1_i32_79 : i32
    %c0_80 = arith.constant 0 : index
    %124 = arith.index_cast %123 : i32 to index
    %c0_81 = arith.constant 0 : index
    %c0_82 = arith.constant 0 : index
    %125 = vector.load %arg2[%c0_80, %124, %c0_81, %c0_82] : memref<1x18x16x4xf32, #tpu.memory_space<vmem>>, vector<1x8x16x4xf32>
    %126 = vector.shape_cast %125 : vector<1x8x16x4xf32> to vector<8x16x4xf32>
    %127 = arith.addf %122, %126 : vector<8x16x4xf32>
    %cst_83 = arith.constant 0.000000e+00 : f32
    %128 = vector.broadcast %cst_83 : f32 to vector<8x16x4xf32>
    %129 = arith.maximumf %127, %128 : vector<8x16x4xf32>
    %c0_84 = arith.constant 0 : index
    %c0_85 = arith.constant 0 : index
    %c0_86 = arith.constant 0 : index
    %c0_87 = arith.constant 0 : index
    %130 = vector.load %arg12[%c0_84, %c0_85, %c0_86, %c0_87] : memref<1x8x16x4xf32, #tpu.memory_space<vmem>>, vector<1x8x16x4xf32>
    %131 = vector.shape_cast %130 : vector<1x8x16x4xf32> to vector<8x16x4xf32>
    %132 = vector.shape_cast %129 : vector<8x16x4xf32> to vector<1x8x16x4xf32>
    tpu.vector_store %arg12[%c0_84, %c0_85, %c0_86, %c0_87], %132 {strides = array<i32>} : memref<1x8x16x4xf32, #tpu.memory_space<vmem>>, vector<1x8x16x4xf32>,
    return
  }
  func.func @transform_0(%arg0: i32, %arg1: i32) -> (i32, i32, i32, i32) {
    %c0_i32 = arith.constant 0 : i32
    %c0_i32_0 = arith.constant 0 : i32
    %c0_i32_1 = arith.constant 0 : i32
    %c0_i32_2 = arith.constant 0 : i32
    return %arg0, %c0_i32, %c0_i32_0, %c0_i32_1 : i32, i32, i32, i32
  }
  func.func @transform_1(%arg0: i32, %arg1: i32) -> (i32, i32) {
    %c0_i32 = arith.constant 0 : i32
    %c0_i32_0 = arith.constant 0 : i32
    %c0_i32_1 = arith.constant 0 : i32
    return %c0_i32, %c0_i32_0 : i32, i32
  }
  func.func @transform_2(%arg0: i32, %arg1: i32) -> (i32, i32) {
    %c0_i32 = arith.constant 0 : i32
    %c0_i32_0 = arith.constant 0 : i32
    %c0_i32_1 = arith.constant 0 : i32
    return %c0_i32, %c0_i32_0 : i32, i32
  }
  func.func @transform_3(%arg0: i32, %arg1: i32) -> (i32, i32) {
    %c0_i32 = arith.constant 0 : i32
    %c0_i32_0 = arith.constant 0 : i32
    %c0_i32_1 = arith.constant 0 : i32
    return %c0_i32, %c0_i32_0 : i32, i32
  }
  func.func @transform_4(%arg0: i32, %arg1: i32) -> (i32, i32, i32) {
    %c0_i32 = arith.constant 0 : i32
    %c0_i32_0 = arith.constant 0 : i32
    %c0_i32_1 = arith.constant 0 : i32
    %c0_i32_2 = arith.constant 0 : i32
    return %c0_i32, %c0_i32_0, %c0_i32_1 : i32, i32, i32
  }
  func.func @transform_5(%arg0: i32, %arg1: i32) -> (i32, i32) {
    %c0_i32 = arith.constant 0 : i32
    %c0_i32_0 = arith.constant 0 : i32
    %c0_i32_1 = arith.constant 0 : i32
    return %c0_i32, %c0_i32_0 : i32, i32
  }
  func.func @transform_6(%arg0: i32, %arg1: i32) -> (i32, i32) {
    %c0_i32 = arith.constant 0 : i32
    %c0_i32_0 = arith.constant 0 : i32
    %c0_i32_1 = arith.constant 0 : i32
    return %c0_i32, %c0_i32_0 : i32, i32
  }
  func.func @transform_7(%arg0: i32, %arg1: i32) -> (i32, i32) {
    %c0_i32 = arith.constant 0 : i32
    %c0_i32_0 = arith.constant 0 : i32
    %c0_i32_1 = arith.constant 0 : i32
    return %c0_i32, %c0_i32_0 : i32, i32
  }
  func.func @transform_8(%arg0: i32, %arg1: i32) -> (i32, i32) {
    %c0_i32 = arith.constant 0 : i32
    %c0_i32_0 = arith.constant 0 : i32
    %c0_i32_1 = arith.constant 0 : i32
    return %c0_i32, %c0_i32_0 : i32, i32
  }
  func.func @transform_9(%arg0: i32, %arg1: i32) -> (i32, i32) {
    %c0_i32 = arith.constant 0 : i32
    %c0_i32_0 = arith.constant 0 : i32
    %c0_i32_1 = arith.constant 0 : i32
    return %c0_i32, %c0_i32_0 : i32, i32
  }
  func.func @transform_10(%arg0: i32, %arg1: i32) -> (i32, i32, i32, i32) {
    %c0_i32 = arith.constant 0 : i32
    %c0_i32_0 = arith.constant 0 : i32
    %c0_i32_1 = arith.constant 0 : i32
    return %arg0, %arg1, %c0_i32, %c0_i32_0 : i32, i32, i32, i32
  }
}

module attributes {stable_mosaic.version = 11 : i64} {
  func.func @_branch_kernel(%arg0: i32, %arg1: i32, %arg2: memref<1x18x16x4xf32, #tpu.memory_space<vmem>>, %arg3: memref<4x32xf32, #tpu.memory_space<vmem>>, %arg4: memref<1x32xf32, #tpu.memory_space<vmem>>, %arg5: memref<1x32xf32, #tpu.memory_space<vmem>>, %arg6: memref<9x32x32xbf16, #tpu.memory_space<vmem>>, %arg7: memref<1x32xf32, #tpu.memory_space<vmem>>, %arg8: memref<1x32xf32, #tpu.memory_space<vmem>>, %arg9: memref<32x4xbf16, #tpu.memory_space<vmem>>, %arg10: memref<1x4xf32, #tpu.memory_space<vmem>>, %arg11: memref<1x4xf32, #tpu.memory_space<vmem>>, %arg12: memref<1x8x16x4xf32, #tpu.memory_space<vmem>>, %arg13: memref<10x24x32xbf16, #tpu.memory_space<vmem>>) attributes {dimension_semantics = [#tpu.dimension_semantics<parallel>, #tpu.dimension_semantics<parallel>], iteration_bounds = array<i64: 2, 2>, scalar_prefetch = 0 : i64, scratch_operands = 1 : i64, tpu.core_type = #tpu.core_type<tc>, window_params = [{transform_indices = @transform_0, window_bounds = array<i64: 1, 18, 16, 4>}, {pipeline_mode = #tpu.pipeline_mode<synchronous>, transform_indices = @transform_1, window_bounds = array<i64: 4, 32>}, {pipeline_mode = #tpu.pipeline_mode<synchronous>, transform_indices = @transform_2, window_bounds = array<i64: 1, 32>}, {pipeline_mode = #tpu.pipeline_mode<synchronous>, transform_indices = @transform_3, window_bounds = array<i64: 1, 32>}, {pipeline_mode = #tpu.pipeline_mode<synchronous>, transform_indices = @transform_4, window_bounds = array<i64: 9, 32, 32>}, {pipeline_mode = #tpu.pipeline_mode<synchronous>, transform_indices = @transform_5, window_bounds = array<i64: 1, 32>}, {pipeline_mode = #tpu.pipeline_mode<synchronous>, transform_indices = @transform_6, window_bounds = array<i64: 1, 32>}, {pipeline_mode = #tpu.pipeline_mode<synchronous>, transform_indices = @transform_7, window_bounds = array<i64: 32, 4>}, {pipeline_mode = #tpu.pipeline_mode<synchronous>, transform_indices = @transform_8, window_bounds = array<i64: 1, 4>}, {pipeline_mode = #tpu.pipeline_mode<synchronous>, transform_indices = @transform_9, window_bounds = array<i64: 1, 4>}, {transform_indices = @transform_10, window_bounds = array<i64: 1, 8, 16, 4>}]} {
    %c8_i32 = arith.constant 8 : i32
    %0 = arith.muli %arg1, %c8_i32 : i32
    %c0 = arith.constant 0 : index
    %1 = arith.index_cast %0 : i32 to index
    %c0_0 = arith.constant 0 : index
    %c0_1 = arith.constant 0 : index
    %2 = vector.load %arg2[%c0, %1, %c0_0, %c0_1] : memref<1x18x16x4xf32, #tpu.memory_space<vmem>>, vector<1x10x16x4xf32>
    %3 = vector.shape_cast %2 : vector<1x10x16x4xf32> to vector<10x16x4xf32>
    %4 = vector.extract_strided_slice %3 {offsets = [0, 0, 0], sizes = [10, 16, 1], strides = [1, 1, 1]} : vector<10x16x4xf32> to vector<10x16x1xf32>
    %c0_2 = arith.constant 0 : index
    %c0_3 = arith.constant 0 : index
    %5 = vector.load %arg3[%c0_2, %c0_3] : memref<4x32xf32, #tpu.memory_space<vmem>>, vector<1x32xf32>
    %6 = vector.shape_cast %5 : vector<1x32xf32> to vector<32xf32>
    %7 = vector.shape_cast %6 : vector<32xf32> to vector<1x1x32xf32>
    %8 = vector.broadcast %4 : vector<10x16x1xf32> to vector<10x16x32xf32>
    %9 = vector.broadcast %7 : vector<1x1x32xf32> to vector<10x16x32xf32>
    %10 = arith.mulf %8, %9 : vector<10x16x32xf32>
    %11 = vector.extract_strided_slice %3 {offsets = [0, 0, 1], sizes = [10, 16, 1], strides = [1, 1, 1]} : vector<10x16x4xf32> to vector<10x16x1xf32>
    %c1 = arith.constant 1 : index
    %c0_4 = arith.constant 0 : index
    %12 = vector.load %arg3[%c1, %c0_4] : memref<4x32xf32, #tpu.memory_space<vmem>>, vector<1x32xf32>
    %13 = vector.shape_cast %12 : vector<1x32xf32> to vector<32xf32>
    %14 = vector.shape_cast %13 : vector<32xf32> to vector<1x1x32xf32>
    %15 = vector.broadcast %11 : vector<10x16x1xf32> to vector<10x16x32xf32>
    %16 = vector.broadcast %14 : vector<1x1x32xf32> to vector<10x16x32xf32>
    %17 = arith.mulf %15, %16 : vector<10x16x32xf32>
    %18 = arith.addf %10, %17 : vector<10x16x32xf32>
    %19 = vector.extract_strided_slice %3 {offsets = [0, 0, 2], sizes = [10, 16, 1], strides = [1, 1, 1]} : vector<10x16x4xf32> to vector<10x16x1xf32>
    %c2 = arith.constant 2 : index
    %c0_5 = arith.constant 0 : index
    %20 = vector.load %arg3[%c2, %c0_5] : memref<4x32xf32, #tpu.memory_space<vmem>>, vector<1x32xf32>
    %21 = vector.shape_cast %20 : vector<1x32xf32> to vector<32xf32>
    %22 = vector.shape_cast %21 : vector<32xf32> to vector<1x1x32xf32>
    %23 = vector.broadcast %19 : vector<10x16x1xf32> to vector<10x16x32xf32>
    %24 = vector.broadcast %22 : vector<1x1x32xf32> to vector<10x16x32xf32>
    %25 = arith.mulf %23, %24 : vector<10x16x32xf32>
    %26 = arith.addf %18, %25 : vector<10x16x32xf32>
    %27 = vector.extract_strided_slice %3 {offsets = [0, 0, 3], sizes = [10, 16, 1], strides = [1, 1, 1]} : vector<10x16x4xf32> to vector<10x16x1xf32>
    %c3 = arith.constant 3 : index
    %c0_6 = arith.constant 0 : index
    %28 = vector.load %arg3[%c3, %c0_6] : memref<4x32xf32, #tpu.memory_space<vmem>>, vector<1x32xf32>
    %29 = vector.shape_cast %28 : vector<1x32xf32> to vector<32xf32>
    %30 = vector.shape_cast %29 : vector<32xf32> to vector<1x1x32xf32>
    %31 = vector.broadcast %27 : vector<10x16x1xf32> to vector<10x16x32xf32>
    %32 = vector.broadcast %30 : vector<1x1x32xf32> to vector<10x16x32xf32>
    %33 = arith.mulf %31, %32 : vector<10x16x32xf32>
    %34 = arith.addf %26, %33 : vector<10x16x32xf32>
    %c0_7 = arith.constant 0 : index
    %c0_8 = arith.constant 0 : index
    %35 = vector.load %arg4[%c0_7, %c0_8] : memref<1x32xf32, #tpu.memory_space<vmem>>, vector<1x32xf32>
    %36 = vector.shape_cast %35 : vector<1x32xf32> to vector<1x1x32xf32>
    %37 = vector.broadcast %36 : vector<1x1x32xf32> to vector<10x16x32xf32>
    %38 = arith.mulf %34, %37 : vector<10x16x32xf32>
    %c0_9 = arith.constant 0 : index
    %c0_10 = arith.constant 0 : index
    %39 = vector.load %arg5[%c0_9, %c0_10] : memref<1x32xf32, #tpu.memory_space<vmem>>, vector<1x32xf32>
    %40 = vector.shape_cast %39 : vector<1x32xf32> to vector<1x1x32xf32>
    %41 = vector.broadcast %40 : vector<1x1x32xf32> to vector<10x16x32xf32>
    %42 = arith.addf %38, %41 : vector<10x16x32xf32>
    %cst = arith.constant 0.000000e+00 : f32
    %43 = vector.broadcast %cst : f32 to vector<10x16x32xf32>
    %44 = arith.maximumf %42, %43 : vector<10x16x32xf32>
    %cst_11 = arith.constant 0.000000e+00 : bf16
    %45 = vector.broadcast %cst_11 : bf16 to vector<10x1x32xbf16>
    %c0_12 = arith.constant 0 : index
    %c0_13 = arith.constant 0 : index
    %c0_14 = arith.constant 0 : index
    %46 = vector.load %arg13[%c0_12, %c0_13, %c0_14] : memref<10x24x32xbf16, #tpu.memory_space<vmem>>, vector<10x1x32xbf16>
    tpu.vector_store %arg13[%c0_12, %c0_13, %c0_14], %45 {strides = array<i32>} : memref<10x24x32xbf16, #tpu.memory_space<vmem>>, vector<10x1x32xbf16>,
    %cst_15 = arith.constant 0.000000e+00 : bf16
    %47 = vector.broadcast %cst_15 : bf16 to vector<10x7x32xbf16>
    %c0_16 = arith.constant 0 : index
    %c17 = arith.constant 17 : index
    %c0_17 = arith.constant 0 : index
    %48 = vector.load %arg13[%c0_16, %c17, %c0_17] : memref<10x24x32xbf16, #tpu.memory_space<vmem>>, vector<10x7x32xbf16>
    tpu.vector_store %arg13[%c0_16, %c17, %c0_17], %47 {strides = array<i32>} : memref<10x24x32xbf16, #tpu.memory_space<vmem>>, vector<10x7x32xbf16>,
    %49 = arith.truncf %44 : vector<10x16x32xf32> to vector<10x16x32xbf16>
    %c0_18 = arith.constant 0 : index
    %c1_19 = arith.constant 1 : index
    %c0_20 = arith.constant 0 : index
    %50 = vector.load %arg13[%c0_18, %c1_19, %c0_20] : memref<10x24x32xbf16, #tpu.memory_space<vmem>>, vector<10x16x32xbf16>
    tpu.vector_store %arg13[%c0_18, %c1_19, %c0_20], %49 {strides = array<i32>} : memref<10x24x32xbf16, #tpu.memory_space<vmem>>, vector<10x16x32xbf16>,
    %c0_i32 = arith.constant 0 : i32
    %51 = arith.cmpi eq, %arg1, %c0_i32 : i32
    %52 = arith.extui %51 : i1 to i32
    %c0_i32_21 = arith.constant 0 : i32
    %53 = arith.cmpi ne, %52, %c0_i32_21 : i32
    scf.if %53 {
      %cst_88 = arith.constant 0.000000e+00 : bf16
      %133 = vector.broadcast %cst_88 : bf16 to vector<1x24x32xbf16>
      %c0_89 = arith.constant 0 : index
      %c0_90 = arith.constant 0 : index
      %c0_91 = arith.constant 0 : index
      %134 = vector.load %arg13[%c0_89, %c0_90, %c0_91] : memref<10x24x32xbf16, #tpu.memory_space<vmem>>, vector<1x24x32xbf16>
      tpu.vector_store %arg13[%c0_89, %c0_90, %c0_91], %133 {strides = array<i32>} : memref<10x24x32xbf16, #tpu.memory_space<vmem>>, vector<1x24x32xbf16>,
    } else {
    }
    %c1_i32 = arith.constant 1 : i32
    %54 = arith.cmpi eq, %arg1, %c1_i32 : i32
    %55 = arith.extui %54 : i1 to i32
    %c0_i32_22 = arith.constant 0 : i32
    %56 = arith.cmpi ne, %55, %c0_i32_22 : i32
    scf.if %56 {
      %cst_88 = arith.constant 0.000000e+00 : bf16
      %133 = vector.broadcast %cst_88 : bf16 to vector<1x24x32xbf16>
      %c9 = arith.constant 9 : index
      %c0_89 = arith.constant 0 : index
      %c0_90 = arith.constant 0 : index
      %134 = vector.load %arg13[%c9, %c0_89, %c0_90] : memref<10x24x32xbf16, #tpu.memory_space<vmem>>, vector<1x24x32xbf16>
      tpu.vector_store %arg13[%c9, %c0_89, %c0_90], %133 {strides = array<i32>} : memref<10x24x32xbf16, #tpu.memory_space<vmem>>, vector<1x24x32xbf16>,
    } else {
    }
    %c0_23 = arith.constant 0 : index
    %c0_24 = arith.constant 0 : index
    %c0_25 = arith.constant 0 : index
    %57 = vector.load %arg13[%c0_23, %c0_24, %c0_25] : memref<10x24x32xbf16, #tpu.memory_space<vmem>>, vector<8x24x32xbf16>
    %58 = vector.shape_cast %57 : vector<8x24x32xbf16> to vector<192x32xbf16>
    %c0_26 = arith.constant 0 : index
    %c0_27 = arith.constant 0 : index
    %c0_28 = arith.constant 0 : index
    %59 = vector.load %arg6[%c0_26, %c0_27, %c0_28] : memref<9x32x32xbf16, #tpu.memory_space<vmem>>, vector<1x32x32xbf16>
    %60 = vector.shape_cast %59 : vector<1x32x32xbf16> to vector<32x32xbf16>
    %cst_29 = arith.constant dense<0.000000e+00> : vector<192x32xf32>
    %61 = tpu.matmul %58, %60, %cst_29 {dimension_numbers = #tpu.dot_dimension_numbers<[1], [0], [0], [1], [0, 0, 1, 1], [], []>} : vector<192x32xbf16>, vector<32x32xbf16>, vector<192x32xf32> -> vector<192x32xf32>
    %c1_30 = arith.constant 1 : index
    %c0_31 = arith.constant 0 : index
    %c0_32 = arith.constant 0 : index
    %62 = vector.load %arg6[%c1_30, %c0_31, %c0_32] : memref<9x32x32xbf16, #tpu.memory_space<vmem>>, vector<1x32x32xbf16>
    %63 = vector.shape_cast %62 : vector<1x32x32xbf16> to vector<32x32xbf16>
    %cst_33 = arith.constant dense<0.000000e+00> : vector<192x32xf32>
    %64 = tpu.matmul %58, %63, %cst_33 {dimension_numbers = #tpu.dot_dimension_numbers<[1], [0], [0], [1], [0, 0, 1, 1], [], []>} : vector<192x32xbf16>, vector<32x32xbf16>, vector<192x32xf32> -> vector<192x32xf32>
    %c191_i32 = arith.constant 191 : i32
    %65 = tpu.dynamic_rotate %64 by %c191_i32 dim 0 : vector<192x32xf32>, i32 -> vector<192x32xf32>
    %66 = arith.addf %61, %65 : vector<192x32xf32>
    %c2_34 = arith.constant 2 : index
    %c0_35 = arith.constant 0 : index
    %c0_36 = arith.constant 0 : index
    %67 = vector.load %arg6[%c2_34, %c0_35, %c0_36] : memref<9x32x32xbf16, #tpu.memory_space<vmem>>, vector<1x32x32xbf16>
    %68 = vector.shape_cast %67 : vector<1x32x32xbf16> to vector<32x32xbf16>
    %cst_37 = arith.constant dense<0.000000e+00> : vector<192x32xf32>
    %69 = tpu.matmul %58, %68, %cst_37 {dimension_numbers = #tpu.dot_dimension_numbers<[1], [0], [0], [1], [0, 0, 1, 1], [], []>} : vector<192x32xbf16>, vector<32x32xbf16>, vector<192x32xf32> -> vector<192x32xf32>
    %c190_i32 = arith.constant 190 : i32
    %70 = tpu.dynamic_rotate %69 by %c190_i32 dim 0 : vector<192x32xf32>, i32 -> vector<192x32xf32>
    %71 = arith.addf %66, %70 : vector<192x32xf32>
    %c1_38 = arith.constant 1 : index
    %c0_39 = arith.constant 0 : index
    %c0_40 = arith.constant 0 : index
    %72 = vector.load %arg13[%c1_38, %c0_39, %c0_40] : memref<10x24x32xbf16, #tpu.memory_space<vmem>>, vector<8x24x32xbf16>
    %73 = vector.shape_cast %72 : vector<8x24x32xbf16> to vector<192x32xbf16>
    %c3_41 = arith.constant 3 : index
    %c0_42 = arith.constant 0 : index
    %c0_43 = arith.constant 0 : index
    %74 = vector.load %arg6[%c3_41, %c0_42, %c0_43] : memref<9x32x32xbf16, #tpu.memory_space<vmem>>, vector<1x32x32xbf16>
    %75 = vector.shape_cast %74 : vector<1x32x32xbf16> to vector<32x32xbf16>
    %cst_44 = arith.constant dense<0.000000e+00> : vector<192x32xf32>
    %76 = tpu.matmul %73, %75, %cst_44 {dimension_numbers = #tpu.dot_dimension_numbers<[1], [0], [0], [1], [0, 0, 1, 1], [], []>} : vector<192x32xbf16>, vector<32x32xbf16>, vector<192x32xf32> -> vector<192x32xf32>
    %77 = arith.addf %71, %76 : vector<192x32xf32>
    %c4 = arith.constant 4 : index
    %c0_45 = arith.constant 0 : index
    %c0_46 = arith.constant 0 : index
    %78 = vector.load %arg6[%c4, %c0_45, %c0_46] : memref<9x32x32xbf16, #tpu.memory_space<vmem>>, vector<1x32x32xbf16>
    %79 = vector.shape_cast %78 : vector<1x32x32xbf16> to vector<32x32xbf16>
    %cst_47 = arith.constant dense<0.000000e+00> : vector<192x32xf32>
    %80 = tpu.matmul %73, %79, %cst_47 {dimension_numbers = #tpu.dot_dimension_numbers<[1], [0], [0], [1], [0, 0, 1, 1], [], []>} : vector<192x32xbf16>, vector<32x32xbf16>, vector<192x32xf32> -> vector<192x32xf32>
    %c191_i32_48 = arith.constant 191 : i32
    %81 = tpu.dynamic_rotate %80 by %c191_i32_48 dim 0 : vector<192x32xf32>, i32 -> vector<192x32xf32>
    %82 = arith.addf %77, %81 : vector<192x32xf32>
    %c5 = arith.constant 5 : index
    %c0_49 = arith.constant 0 : index
    %c0_50 = arith.constant 0 : index
    %83 = vector.load %arg6[%c5, %c0_49, %c0_50] : memref<9x32x32xbf16, #tpu.memory_space<vmem>>, vector<1x32x32xbf16>
    %84 = vector.shape_cast %83 : vector<1x32x32xbf16> to vector<32x32xbf16>
    %cst_51 = arith.constant dense<0.000000e+00> : vector<192x32xf32>
    %85 = tpu.matmul %73, %84, %cst_51 {dimension_numbers = #tpu.dot_dimension_numbers<[1], [0], [0], [1], [0, 0, 1, 1], [], []>} : vector<192x32xbf16>, vector<32x32xbf16>, vector<192x32xf32> -> vector<192x32xf32>
    %c190_i32_52 = arith.constant 190 : i32
    %86 = tpu.dynamic_rotate %85 by %c190_i32_52 dim 0 : vector<192x32xf32>, i32 -> vector<192x32xf32>
    %87 = arith.addf %82, %86 : vector<192x32xf32>
    %c2_53 = arith.constant 2 : index
    %c0_54 = arith.constant 0 : index
    %c0_55 = arith.constant 0 : index
    %88 = vector.load %arg13[%c2_53, %c0_54, %c0_55] : memref<10x24x32xbf16, #tpu.memory_space<vmem>>, vector<8x24x32xbf16>
    %89 = vector.shape_cast %88 : vector<8x24x32xbf16> to vector<192x32xbf16>
    %c6 = arith.constant 6 : index
    %c0_56 = arith.constant 0 : index
    %c0_57 = arith.constant 0 : index
    %90 = vector.load %arg6[%c6, %c0_56, %c0_57] : memref<9x32x32xbf16, #tpu.memory_space<vmem>>, vector<1x32x32xbf16>
    %91 = vector.shape_cast %90 : vector<1x32x32xbf16> to vector<32x32xbf16>
    %cst_58 = arith.constant dense<0.000000e+00> : vector<192x32xf32>
    %92 = tpu.matmul %89, %91, %cst_58 {dimension_numbers = #tpu.dot_dimension_numbers<[1], [0], [0], [1], [0, 0, 1, 1], [], []>} : vector<192x32xbf16>, vector<32x32xbf16>, vector<192x32xf32> -> vector<192x32xf32>
    %93 = arith.addf %87, %92 : vector<192x32xf32>
    %c7 = arith.constant 7 : index
    %c0_59 = arith.constant 0 : index
    %c0_60 = arith.constant 0 : index
    %94 = vector.load %arg6[%c7, %c0_59, %c0_60] : memref<9x32x32xbf16, #tpu.memory_space<vmem>>, vector<1x32x32xbf16>
    %95 = vector.shape_cast %94 : vector<1x32x32xbf16> to vector<32x32xbf16>
    %cst_61 = arith.constant dense<0.000000e+00> : vector<192x32xf32>
    %96 = tpu.matmul %89, %95, %cst_61 {dimension_numbers = #tpu.dot_dimension_numbers<[1], [0], [0], [1], [0, 0, 1, 1], [], []>} : vector<192x32xbf16>, vector<32x32xbf16>, vector<192x32xf32> -> vector<192x32xf32>
    %c191_i32_62 = arith.constant 191 : i32
    %97 = tpu.dynamic_rotate %96 by %c191_i32_62 dim 0 : vector<192x32xf32>, i32 -> vector<192x32xf32>
    %98 = arith.addf %93, %97 : vector<192x32xf32>
    %c8 = arith.constant 8 : index
    %c0_63 = arith.constant 0 : index
    %c0_64 = arith.constant 0 : index
    %99 = vector.load %arg6[%c8, %c0_63, %c0_64] : memref<9x32x32xbf16, #tpu.memory_space<vmem>>, vector<1x32x32xbf16>
    %100 = vector.shape_cast %99 : vector<1x32x32xbf16> to vector<32x32xbf16>
    %cst_65 = arith.constant dense<0.000000e+00> : vector<192x32xf32>
    %101 = tpu.matmul %89, %100, %cst_65 {dimension_numbers = #tpu.dot_dimension_numbers<[1], [0], [0], [1], [0, 0, 1, 1], [], []>} : vector<192x32xbf16>, vector<32x32xbf16>, vector<192x32xf32> -> vector<192x32xf32>
    %c190_i32_66 = arith.constant 190 : i32
    %102 = tpu.dynamic_rotate %101 by %c190_i32_66 dim 0 : vector<192x32xf32>, i32 -> vector<192x32xf32>
    %103 = arith.addf %98, %102 : vector<192x32xf32>
    %c0_67 = arith.constant 0 : index
    %c0_68 = arith.constant 0 : index
    %104 = vector.load %arg7[%c0_67, %c0_68] : memref<1x32xf32, #tpu.memory_space<vmem>>, vector<1x32xf32>
    %105 = vector.broadcast %104 : vector<1x32xf32> to vector<192x32xf32>
    %106 = arith.mulf %103, %105 : vector<192x32xf32>
    %c0_69 = arith.constant 0 : index
    %c0_70 = arith.constant 0 : index
    %107 = vector.load %arg8[%c0_69, %c0_70] : memref<1x32xf32, #tpu.memory_space<vmem>>, vector<1x32xf32>
    %108 = vector.broadcast %107 : vector<1x32xf32> to vector<192x32xf32>
    %109 = arith.addf %106, %108 : vector<192x32xf32>
    %cst_71 = arith.constant 0.000000e+00 : f32
    %110 = vector.broadcast %cst_71 : f32 to vector<192x32xf32>
    %111 = arith.maximumf %109, %110 : vector<192x32xf32>
    %112 = arith.truncf %111 : vector<192x32xf32> to vector<192x32xbf16>
    %c0_72 = arith.constant 0 : index
    %c0_73 = arith.constant 0 : index
    %113 = vector.load %arg9[%c0_72, %c0_73] : memref<32x4xbf16, #tpu.memory_space<vmem>>, vector<32x4xbf16>
    %cst_74 = arith.constant dense<0.000000e+00> : vector<192x4xf32>
    %114 = tpu.matmul %112, %113, %cst_74 {dimension_numbers = #tpu.dot_dimension_numbers<[1], [0], [0], [1], [0, 0, 1, 1], [], []>} : vector<192x32xbf16>, vector<32x4xbf16>, vector<192x4xf32> -> vector<192x4xf32>
    %c0_75 = arith.constant 0 : index
    %c0_76 = arith.constant 0 : index
    %115 = vector.load %arg10[%c0_75, %c0_76] : memref<1x4xf32, #tpu.memory_space<vmem>>, vector<1x4xf32>
    %116 = vector.broadcast %115 : vector<1x4xf32> to vector<192x4xf32>
    %117 = arith.mulf %114, %116 : vector<192x4xf32>
    %c0_77 = arith.constant 0 : index
    %c0_78 = arith.constant 0 : index
    %118 = vector.load %arg11[%c0_77, %c0_78] : memref<1x4xf32, #tpu.memory_space<vmem>>, vector<1x4xf32>
    %119 = vector.broadcast %118 : vector<1x4xf32> to vector<192x4xf32>
    %120 = arith.addf %117, %119 : vector<192x4xf32>
    %121 = vector.shape_cast %120 : vector<192x4xf32> to vector<8x24x4xf32>
    %122 = vector.extract_strided_slice %121 {offsets = [0, 0, 0], sizes = [8, 16, 4], strides = [1, 1, 1]} : vector<8x24x4xf32> to vector<8x16x4xf32>
    %c1_i32_79 = arith.constant 1 : i32
    %123 = arith.addi %0, %c1_i32_79 : i32
    %c0_80 = arith.constant 0 : index
    %124 = arith.index_cast %123 : i32 to index
    %c0_81 = arith.constant 0 : index
    %c0_82 = arith.constant 0 : index
    %125 = vector.load %arg2[%c0_80, %124, %c0_81, %c0_82] : memref<1x18x16x4xf32, #tpu.memory_space<vmem>>, vector<1x8x16x4xf32>
    %126 = vector.shape_cast %125 : vector<1x8x16x4xf32> to vector<8x16x4xf32>
    %127 = arith.addf %122, %126 : vector<8x16x4xf32>
    %cst_83 = arith.constant 0.000000e+00 : f32
    %128 = vector.broadcast %cst_83 : f32 to vector<8x16x4xf32>
    %129 = arith.maximumf %127, %128 : vector<8x16x4xf32>
    %c0_84 = arith.constant 0 : index
    %c0_85 = arith.constant 0 : index
    %c0_86 = arith.constant 0 : index
    %c0_87 = arith.constant 0 : index
    %130 = vector.load %arg12[%c0_84, %c0_85, %c0_86, %c0_87] : memref<1x8x16x4xf32, #tpu.memory_space<vmem>>, vector<1x8x16x4xf32>
    %131 = vector.shape_cast %130 : vector<1x8x16x4xf32> to vector<8x16x4xf32>
    %132 = vector.shape_cast %129 : vector<8x16x4xf32> to vector<1x8x16x4xf32>
    tpu.vector_store %arg12[%c0_84, %c0_85, %c0_86, %c0_87], %132 {strides = array<i32>} : memref<1x8x16x4xf32, #tpu.memory_space<vmem>>, vector<1x8x16x4xf32>,
    return
  }
  func.func @transform_0(%arg0: i32, %arg1: i32) -> (i32, i32, i32, i32) {
    %c0_i32 = arith.constant 0 : i32
    %c0_i32_0 = arith.constant 0 : i32
    %c0_i32_1 = arith.constant 0 : i32
    %c0_i32_2 = arith.constant 0 : i32
    return %arg0, %c0_i32, %c0_i32_0, %c0_i32_1 : i32, i32, i32, i32
  }
  func.func @transform_1(%arg0: i32, %arg1: i32) -> (i32, i32) {
    %c0_i32 = arith.constant 0 : i32
    %c0_i32_0 = arith.constant 0 : i32
    %c0_i32_1 = arith.constant 0 : i32
    return %c0_i32, %c0_i32_0 : i32, i32
  }
  func.func @transform_2(%arg0: i32, %arg1: i32) -> (i32, i32) {
    %c0_i32 = arith.constant 0 : i32
    %c0_i32_0 = arith.constant 0 : i32
    %c0_i32_1 = arith.constant 0 : i32
    return %c0_i32, %c0_i32_0 : i32, i32
  }
  func.func @transform_3(%arg0: i32, %arg1: i32) -> (i32, i32) {
    %c0_i32 = arith.constant 0 : i32
    %c0_i32_0 = arith.constant 0 : i32
    %c0_i32_1 = arith.constant 0 : i32
    return %c0_i32, %c0_i32_0 : i32, i32
  }
  func.func @transform_4(%arg0: i32, %arg1: i32) -> (i32, i32, i32) {
    %c0_i32 = arith.constant 0 : i32
    %c0_i32_0 = arith.constant 0 : i32
    %c0_i32_1 = arith.constant 0 : i32
    %c0_i32_2 = arith.constant 0 : i32
    return %c0_i32, %c0_i32_0, %c0_i32_1 : i32, i32, i32
  }
  func.func @transform_5(%arg0: i32, %arg1: i32) -> (i32, i32) {
    %c0_i32 = arith.constant 0 : i32
    %c0_i32_0 = arith.constant 0 : i32
    %c0_i32_1 = arith.constant 0 : i32
    return %c0_i32, %c0_i32_0 : i32, i32
  }
  func.func @transform_6(%arg0: i32, %arg1: i32) -> (i32, i32) {
    %c0_i32 = arith.constant 0 : i32
    %c0_i32_0 = arith.constant 0 : i32
    %c0_i32_1 = arith.constant 0 : i32
    return %c0_i32, %c0_i32_0 : i32, i32
  }
  func.func @transform_7(%arg0: i32, %arg1: i32) -> (i32, i32) {
    %c0_i32 = arith.constant 0 : i32
    %c0_i32_0 = arith.constant 0 : i32
    %c0_i32_1 = arith.constant 0 : i32
    return %c0_i32, %c0_i32_0 : i32, i32
  }
  func.func @transform_8(%arg0: i32, %arg1: i32) -> (i32, i32) {
    %c0_i32 = arith.constant 0 : i32
    %c0_i32_0 = arith.constant 0 : i32
    %c0_i32_1 = arith.constant 0 : i32
    return %c0_i32, %c0_i32_0 : i32, i32
  }
  func.func @transform_9(%arg0: i32, %arg1: i32) -> (i32, i32) {
    %c0_i32 = arith.constant 0 : i32
    %c0_i32_0 = arith.constant 0 : i32
    %c0_i32_1 = arith.constant 0 : i32
    return %c0_i32, %c0_i32_0 : i32, i32
  }
  func.func @transform_10(%arg0: i32, %arg1: i32) -> (i32, i32, i32, i32) {
    %c0_i32 = arith.constant 0 : i32
    %c0_i32_0 = arith.constant 0 : i32
    %c0_i32_1 = arith.constant 0 : i32
    return %arg0, %arg1, %c0_i32, %c0_i32_0 : i32, i32, i32, i32
  }
}

</mosaic_0001>

<llo_original>
// kernel: tpu_custom_call.1
$region0: #{tpu_custom_call.1}
  #allocation0 [shape = 'u32[]', space=smem, size = 0x4, offset = 0x4, fixed_abs, tag = 'smem constant byte address 0x4 - core index']
  #allocation1 [shape = 'u32[72,128]{1,0:T(1,128)}', space=vmem, size = 0x9000, scoped, tag = 'internal scratch']
  #allocation2 [shape = 'bf16[10,24,32]{2,1,0:T(8,128)(2,1)}', space=vmem, size = 0xf000, scoped, tag = 'scratch operand']
  %s0 = inlined_call_operand.vmem [shape: f32[2,18,16,4], index: 0, kind: input, shape index: {}]
  %s1 = inlined_call_operand.vmem [shape: f32[4,32], index: 1, kind: input, shape index: {}]
  %s2 = inlined_call_operand.vmem [shape: f32[1,32], index: 2, kind: input, shape index: {}]
  %s3 = inlined_call_operand.vmem [shape: f32[1,32], index: 3, kind: input, shape index: {}]
  %s4 = inlined_call_operand.vmem [shape: bf16[9,32,32], index: 4, kind: input, shape index: {}]
  %s5 = inlined_call_operand.vmem [shape: f32[1,32], index: 5, kind: input, shape index: {}]
  %s6 = inlined_call_operand.vmem [shape: f32[1,32], index: 6, kind: input, shape index: {}]
  %s7 = inlined_call_operand.vmem [shape: bf16[32,4], index: 7, kind: input, shape index: {}]
  %s8 = inlined_call_operand.vmem [shape: f32[1,4], index: 8, kind: input, shape index: {}]
  %s9 = inlined_call_operand.vmem [shape: f32[1,4], index: 9, kind: input, shape index: {}]
  %s10 = inlined_call_operand.vmem [shape: f32[2,16,16,4], index: 10, kind: output, shape index: {}]
  %s11 = sld [smem:[#allocation0]]
  $region81: #{tpu_custom_call.1} parent=0
    _
  %s13 = ssub.s32 1, %s11
  %s14 = scalar_select 0, %s13, %s11
  loop: start=0, step=1, limit=6
  $region2: #{tpu_custom_call.1} parent=0 // loop_pre_header
    _
  $region3: #{tpu_custom_call.1} parent=0 // loop_header
    %s16 = sphi 0, %s20
    %p17 = scmp.ge.s32.totalorder %s16, 6
    %s23 = sphi 0, %s35
    %s24 = sphi 0, %s31
    %s25 = sphi 0, %s23
    %s26 = sphi 0, %s24
    %s27 = sphi 0, %s25
    %s28 = sphi 0, %s26
    %s38 = sphi 0, %s40
    %s41 = sphi 0, %s38
    %s42 = sphi 0, %s41
    %s58 = sphi 0, %s42
    %s62 = sphi 0, %s62
    %s64 = sphi 0, %s62
    %s65 = sphi 0, %s64
    %s79 = sphi 0, %s65
    %s83 = sphi 0, %s83
    %s85 = sphi 0, %s83
    %s86 = sphi 0, %s85
    %s100 = sphi 0, %s86
    %s104 = sphi 0, %s104
    %s106 = sphi 0, %s104
    %s107 = sphi 0, %s106
    %s121 = sphi 0, %s107
    %s125 = sphi 0, %s125
    %s127 = sphi 0, %s125
    %s128 = sphi 0, %s127
    %s142 = sphi 0, %s128
    %s146 = sphi 0, %s146
    %s148 = sphi 0, %s146
    %s149 = sphi 0, %s148
    %s163 = sphi 0, %s149
    %s167 = sphi 0, %s167
    %s169 = sphi 0, %s167
    %s170 = sphi 0, %s169
    %s184 = sphi 0, %s170
    %s188 = sphi 0, %s188
    %s190 = sphi 0, %s188
    %s191 = sphi 0, %s190
    %s205 = sphi 0, %s191
    %s209 = sphi 0, %s209
    %s211 = sphi 0, %s209
    %s212 = sphi 0, %s211
    %s226 = sphi 0, %s212
    %s230 = sphi 0, %s230
    %s232 = sphi 0, %s230
    %s233 = sphi 0, %s232
    %s247 = sphi 0, %s233
    %s255 = sphi 0, %s257
    %s258 = sphi 0, %s255
    %s259 = sphi 0, %s258
    %s275 = sphi 0, %s259
  $region4: #{tpu_custom_call.1} parent=0 // loop_header_branch
    %19 = sbr.rel (%p17) target = $region8
  $region5: #{tpu_custom_call.1} parent=0 // loop_body
    %s21 = ssub.s32 %s16, 1
    %s22 = ssub.s32 %s16, 2
    %s29 = sadd.s32 1, %s24
    %p30 = scmp.ge.s32.totalorder %s29, 2
    %s31 = scalar_select %p30, 0, %s29
    %s32 = sadd.s32 1, %s23
    %s33 = scalar_select %p30, %s32, %s23
    %p34 = scmp.ge.s32.totalorder %s33, 2
    %s35 = scalar_select %p34, 0, %s33
    %s36 = ssub.s32 %s23, %s35
    %p37 = scmp.eq.s32.totalorder %s36, 0
    %s39 = sadd.s32 %s38, 1
    %s40 = scalar_select %p37, %s38, %s39
    %p43 = pneg %p37
    %p44 = scmp.eq.s32.totalorder %s16, 3
    %p45 = por %p43, %p44
    %p46 = scmp.ne.s32.totalorder %s38, %s41
    %p47 = scmp.eq.s32.totalorder %s16, 0
    %p48 = por %p46, %p47
    %p49 = scmp.ne.s32.totalorder %s38, %s41
    %p50 = scmp.eq.s32.totalorder %s21, 3
    %p51 = por %p49, %p50
    %p52 = scmp.ne.s32.totalorder %s41, %s42
    %p53 = scmp.eq.s32.totalorder %s21, 0
    %p54 = por %p52, %p53
    %p55 = scmp.ne.s32.totalorder %s41, %s42
    %p56 = scmp.eq.s32.totalorder %s22, 3
    %p57 = por %p55, %p56
    %p59 = scmp.ne.s32.totalorder %s42, %s58
    %p60 = scmp.eq.s32.totalorder %s22, 0
    %p61 = por %p59, %p60
    %s63 = sadd.s32 %s62, 1
    %p66 = scmp.eq.s32.totalorder %s16, 3
    %p67 = scmp.ne.s32.totalorder %s62, %s64
    %p68 = scmp.eq.s32.totalorder %s16, 0
    %p69 = por %p67, %p68
    %p70 = scmp.ne.s32.totalorder %s62, %s64
    %p71 = scmp.eq.s32.totalorder %s21, 3
    %p72 = por %p70, %p71
    %p73 = scmp.ne.s32.totalorder %s64, %s65
    %p74 = scmp.eq.s32.totalorder %s21, 0
    %p75 = por %p73, %p74
    %p76 = scmp.ne.s32.totalorder %s64, %s65
    %p77 = scmp.eq.s32.totalorder %s22, 3
    %p78 = por %p76, %p77
    %p80 = scmp.ne.s32.totalorder %s65, %s79
    %p81 = scmp.eq.s32.totalorder %s22, 0
    %p82 = por %p80, %p81
    %s84 = sadd.s32 %s83, 1
    %p87 = scmp.eq.s32.totalorder %s16, 3
    %p88 = scmp.ne.s32.totalorder %s83, %s85
    %p89 = scmp.eq.s32.totalorder %s16, 0
    %p90 = por %p88, %p89
    %p91 = scmp.ne.s32.totalorder %s83, %s85
    %p92 = scmp.eq.s32.totalorder %s21, 3
    %p93 = por %p91, %p92
    %p94 = scmp.ne.s32.totalorder %s85, %s86
    %p95 = scmp.eq.s32.totalorder %s21, 0
    %p96 = por %p94, %p95
    %p97 = scmp.ne.s32.totalorder %s85, %s86
    %p98 = scmp.eq.s32.totalorder %s22, 3
    %p99 = por %p97, %p98
    %p101 = scmp.ne.s32.totalorder %s86, %s100
    %p102 = scmp.eq.s32.totalorder %s22, 0
    %p103 = por %p101, %p102
    %s105 = sadd.s32 %s104, 1
    %p108 = scmp.eq.s32.totalorder %s16, 3
    %p109 = scmp.ne.s32.totalorder %s104, %s106
    %p110 = scmp.eq.s32.totalorder %s16, 0
    %p111 = por %p109, %p110
    %p112 = scmp.ne.s32.totalorder %s104, %s106
    %p113 = scmp.eq.s32.totalorder %s21, 3
    %p114 = por %p112, %p113
    %p115 = scmp.ne.s32.totalorder %s106, %s107
    %p116 = scmp.eq.s32.totalorder %s21, 0
    %p117 = por %p115, %p116
    %p118 = scmp.ne.s32.totalorder %s106, %s107
    %p119 = scmp.eq.s32.totalorder %s22, 3
    %p120 = por %p118, %p119
    %p122 = scmp.ne.s32.totalorder %s107, %s121
    %p123 = scmp.eq.s32.totalorder %s22, 0
    %p124 = por %p122, %p123
    %s126 = sadd.s32 %s125, 1
    %p129 = scmp.eq.s32.totalorder %s16, 3
    %p130 = scmp.ne.s32.totalorder %s125, %s127
    %p131 = scmp.eq.s32.totalorder %s16, 0
    %p132 = por %p130, %p131
    %p133 = scmp.ne.s32.totalorder %s125, %s127
    %p134 = scmp.eq.s32.totalorder %s21, 3
    %p135 = por %p133, %p134
    %p136 = scmp.ne.s32.totalorder %s127, %s128
    %p137 = scmp.eq.s32.totalorder %s21, 0
    %p138 = por %p136, %p137
    %p139 = scmp.ne.s32.totalorder %s127, %s128
    %p140 = scmp.eq.s32.totalorder %s22, 3
    %p141 = por %p139, %p140
    %p143 = scmp.ne.s32.totalorder %s128, %s142
    %p144 = scmp.eq.s32.totalorder %s22, 0
    %p145 = por %p143, %p144
    %s147 = sadd.s32 %s146, 1
    %p150 = scmp.eq.s32.totalorder %s16, 3
    %p151 = scmp.ne.s32.totalorder %s146, %s148
    %p152 = scmp.eq.s32.totalorder %s16, 0
    %p153 = por %p151, %p152
    %p154 = scmp.ne.s32.totalorder %s146, %s148
    %p155 = scmp.eq.s32.totalorder %s21, 3
    %p156 = por %p154, %p155
    %p157 = scmp.ne.s32.totalorder %s148, %s149
    %p158 = scmp.eq.s32.totalorder %s21, 0
    %p159 = por %p157, %p158
    %p160 = scmp.ne.s32.totalorder %s148, %s149
    %p161 = scmp.eq.s32.totalorder %s22, 3
    %p162 = por %p160, %p161
    %p164 = scmp.ne.s32.totalorder %s149, %s163
    %p165 = scmp.eq.s32.totalorder %s22, 0
    %p166 = por %p164, %p165
    %s168 = sadd.s32 %s167, 1
    %p171 = scmp.eq.s32.totalorder %s16, 3
    %p172 = scmp.ne.s32.totalorder %s167, %s169
    %p173 = scmp.eq.s32.totalorder %s16, 0
    %p174 = por %p172, %p173
    %p175 = scmp.ne.s32.totalorder %s167, %s169
    %p176 = scmp.eq.s32.totalorder %s21, 3
    %p177 = por %p175, %p176
    %p178 = scmp.ne.s32.totalorder %s169, %s170
    %p179 = scmp.eq.s32.totalorder %s21, 0
    %p180 = por %p178, %p179
    %p181 = scmp.ne.s32.totalorder %s169, %s170
    %p182 = scmp.eq.s32.totalorder %s22, 3
    %p183 = por %p181, %p182
    %p185 = scmp.ne.s32.totalorder %s170, %s184
    %p186 = scmp.eq.s32.totalorder %s22, 0
    %p187 = por %p185, %p186
    %s189 = sadd.s32 %s188, 1
    %p192 = scmp.eq.s32.totalorder %s16, 3
    %p193 = scmp.ne.s32.totalorder %s188, %s190
    %p194 = scmp.eq.s32.totalorder %s16, 0
    %p195 = por %p193, %p194
    %p196 = scmp.ne.s32.totalorder %s188, %s190
    %p197 = scmp.eq.s32.totalorder %s21, 3
    %p198 = por %p196, %p197
    %p199 = scmp.ne.s32.totalorder %s190, %s191
    %p200 = scmp.eq.s32.totalorder %s21, 0
    %p201 = por %p199, %p200
    %p202 = scmp.ne.s32.totalorder %s190, %s191
    %p203 = scmp.eq.s32.totalorder %s22, 3
    %p204 = por %p202, %p203
    %p206 = scmp.ne.s32.totalorder %s191, %s205
    %p207 = scmp.eq.s32.totalorder %s22, 0
    %p208 = por %p206, %p207
    %s210 = sadd.s32 %s209, 1
    %p213 = scmp.eq.s32.totalorder %s16, 3
    %p214 = scmp.ne.s32.totalorder %s209, %s211
    %p215 = scmp.eq.s32.totalorder %s16, 0
    %p216 = por %p214, %p215
    %p217 = scmp.ne.s32.totalorder %s209, %s211
    %p218 = scmp.eq.s32.totalorder %s21, 3
    %p219 = por %p217, %p218
    %p220 = scmp.ne.s32.totalorder %s211, %s212
    %p221 = scmp.eq.s32.totalorder %s21, 0
    %p222 = por %p220, %p221
    %p223 = scmp.ne.s32.totalorder %s211, %s212
    %p224 = scmp.eq.s32.totalorder %s22, 3
    %p225 = por %p223, %p224
    %p227 = scmp.ne.s32.totalorder %s212, %s226
    %p228 = scmp.eq.s32.totalorder %s22, 0
    %p229 = por %p227, %p228
    %s231 = sadd.s32 %s230, 1
    %p234 = scmp.eq.s32.totalorder %s16, 3
    %p235 = scmp.ne.s32.totalorder %s230, %s232
    %p236 = scmp.eq.s32.totalorder %s16, 0
    %p237 = por %p235, %p236
    %p238 = scmp.ne.s32.totalorder %s230, %s232
    %p239 = scmp.eq.s32.totalorder %s21, 3
    %p240 = por %p238, %p239
    %p241 = scmp.ne.s32.totalorder %s232, %s233
    %p242 = scmp.eq.s32.totalorder %s21, 0
    %p243 = por %p241, %p242
    %p244 = scmp.ne.s32.totalorder %s232, %s233
    %p245 = scmp.eq.s32.totalorder %s22, 3
    %p246 = por %p244, %p245
    %p248 = scmp.ne.s32.totalorder %s233, %s247
    %p249 = scmp.eq.s32.totalorder %s22, 0
    %p250 = por %p248, %p249
    %s251 = ssub.s32 %s23, %s35
    %s252 = ssub.s32 %s24, %s31
    %s253 = sor.u32 %s251, %s252
    %p254 = scmp.eq.s32.totalorder %s253, 0
    %s256 = sadd.s32 %s255, 1
    %s257 = scalar_select %p254, %s255, %s256
    %p260 = pneg %p254
    %p261 = scmp.eq.s32.totalorder %s16, 3
    %p262 = por %p260, %p261
    %p263 = scmp.ne.s32.totalorder %s255, %s258
    %p264 = scmp.eq.s32.totalorder %s16, 0
    %p265 = por %p263, %p264
    %p266 = scmp.ne.s32.totalorder %s255, %s258
    %p267 = scmp.eq.s32.totalorder %s21, 3
    %p268 = por %p266, %p267
    %p269 = scmp.ne.s32.totalorder %s258, %s259
    %p270 = scmp.eq.s32.totalorder %s21, 0
    %p271 = por %p269, %p270
    %p272 = scmp.ne.s32.totalorder %s258, %s259
    %p273 = scmp.eq.s32.totalorder %s22, 3
    %p274 = por %p272, %p273
    %p276 = scmp.ne.s32.totalorder %s259, %s275
    %p277 = scmp.eq.s32.totalorder %s22, 0
    %p278 = por %p276, %p277
    %p279 = scmp.le.s32.totalorder 1, %s16
    %p280 = scmp.lt.s32.totalorder %s16, 5
    %p281 = pnand %p279, %p280
    %p282 = pneg %p281
    // Predicated region
    $region9: #{tpu_custom_call.1} parent=5 // pred_check
      _
    $region10: #{tpu_custom_call.1} parent=5 // pred_check_branch
      %284 = sbr.rel (%p281) target = $region12
    $region11: #{tpu_custom_call.1} parent=5 // pred_region
      %s285 = ssub.s32 %s16, 1
      // Predicated region
      $region13: #{tpu_custom_call.1} parent=11 // pred_check
        %p286 = pneg %p75
      $region14: #{tpu_custom_call.1} parent=11 // pred_check_branch
        %288 = sbr.rel (%p286) target = $region16
      $region15: #{tpu_custom_call.1} parent=11 // pred_region
        _
      $region16: #{tpu_custom_call.1} parent=11 // pred_fallthru
        _
      // Predicated region
      $region17: #{tpu_custom_call.1} parent=11 // pred_check
        %p289 = pneg %p96
      $region18: #{tpu_custom_call.1} parent=11 // pred_check_branch
        %291 = sbr.rel (%p289) target = $region20
      $region19: #{tpu_custom_call.1} parent=11 // pred_region
        _
      $region20: #{tpu_custom_call.1} parent=11 // pred_fallthru
        _
      // Predicated region
      $region21: #{tpu_custom_call.1} parent=11 // pred_check
        %p292 = pneg %p117
      $region22: #{tpu_custom_call.1} parent=11 // pred_check_branch
        %294 = sbr.rel (%p292) target = $region24
      $region23: #{tpu_custom_call.1} parent=11 // pred_region
        _
      $region24: #{tpu_custom_call.1} parent=11 // pred_fallthru
        _
      // Predicated region
      $region25: #{tpu_custom_call.1} parent=11 // pred_check
        %p295 = pneg %p138
      $region26: #{tpu_custom_call.1} parent=11 // pred_check_branch
        %297 = sbr.rel (%p295) target = $region28
      $region27: #{tpu_custom_call.1} parent=11 // pred_region
        _
      $region28: #{tpu_custom_call.1} parent=11 // pred_fallthru
        _
      // Predicated region
      $region29: #{tpu_custom_call.1} parent=11 // pred_check
        %p298 = pneg %p159
      $region30: #{tpu_custom_call.1} parent=11 // pred_check_branch
        %300 = sbr.rel (%p298) target = $region32
      $region31: #{tpu_custom_call.1} parent=11 // pred_region
        _
      $region32: #{tpu_custom_call.1} parent=11 // pred_fallthru
        _
      // Predicated region
      $region33: #{tpu_custom_call.1} parent=11 // pred_check
        %p301 = pneg %p180
      $region34: #{tpu_custom_call.1} parent=11 // pred_check_branch
        %303 = sbr.rel (%p301) target = $region36
      $region35: #{tpu_custom_call.1} parent=11 // pred_region
        _
      $region36: #{tpu_custom_call.1} parent=11 // pred_fallthru
        _
      // Predicated region
      $region37: #{tpu_custom_call.1} parent=11 // pred_check
        %p304 = pneg %p201
      $region38: #{tpu_custom_call.1} parent=11 // pred_check_branch
        %306 = sbr.rel (%p304) target = $region40
      $region39: #{tpu_custom_call.1} parent=11 // pred_region
        _
      $region40: #{tpu_custom_call.1} parent=11 // pred_fallthru
        _
      // Predicated region
      $region41: #{tpu_custom_call.1} parent=11 // pred_check
        %p307 = pneg %p222
      $region42: #{tpu_custom_call.1} parent=11 // pred_check_branch
        %309 = sbr.rel (%p307) target = $region44
      $region43: #{tpu_custom_call.1} parent=11 // pred_region
        _
      $region44: #{tpu_custom_call.1} parent=11 // pred_fallthru
        _
      // Predicated region
      $region45: #{tpu_custom_call.1} parent=11 // pred_check
        %p310 = pneg %p243
      $region46: #{tpu_custom_call.1} parent=11 // pred_check_branch
        %312 = sbr.rel (%p310) target = $region48
      $region47: #{tpu_custom_call.1} parent=11 // pred_region
        _
      $region48: #{tpu_custom_call.1} parent=11 // pred_fallthru
        _
    $region12: #{tpu_custom_call.1} parent=5 // pred_fallthru
      _
    %p313 = scmp.lt.s32.totalorder %s16, 4
    // Predicated region
    $region49: #{tpu_custom_call.1} parent=5 // pred_check
      %p314 = pneg %p313
    $region50: #{tpu_custom_call.1} parent=5 // pred_check_branch
      %316 = sbr.rel (%p314) target = $region52
    $region51: #{tpu_custom_call.1} parent=5 // pred_region
      // Predicated region
      $region53: #{tpu_custom_call.1} parent=51 // pred_check
        %p317 = pneg %p48
      $region54: #{tpu_custom_call.1} parent=51 // pred_check_branch
        %319 = sbr.rel (%p317) target = $region56
      $region55: #{tpu_custom_call.1} parent=51 // pred_region
        %p320 = scmp.lt.s32.totalorder %s23, 1
        %s321 = scalar_select %p320, %s23, 1
        %s322 = smul.addr %s321, 36
        %s323 = smul.addr %s322, 8
        %s324 = scalar_lea.vmem %s0, %s323
      $region56: #{tpu_custom_call.1} parent=51 // pred_fallthru
        _
    $region52: #{tpu_custom_call.1} parent=5 // pred_fallthru
      _
    %p325 = scmp.le.s32.totalorder 1, %s16
    %p326 = scmp.lt.s32.totalorder %s16, 5
    %p327 = pnand %p325, %p326
    %p328 = pneg %p327
    // Predicated region
    $region57: #{tpu_custom_call.1} parent=5 // pred_check
      _
    $region58: #{tpu_custom_call.1} parent=5 // pred_check_branch
      %330 = sbr.rel (%p327) target = $region60
    $region59: #{tpu_custom_call.1} parent=5 // pred_region
      %s331 = ssub.s32 %s16, 1
      %p332 = scmp.lt.s32.totalorder %s25, 1
      %s333 = scalar_select %p332, %s25, 1
      %s334 = smul.addr %s333, 36
      %s335 = smul.addr %s334, 8
      %s336 = scalar_lea.vmem %s0, %s335
      %p337 = pneg %p54
      %p338 = pneg %p51
      %p339 = pneg %p75
      %p340 = pneg %p72
      %p341 = pneg %p96
      %p342 = pneg %p93
      %p343 = pneg %p117
      %p344 = pneg %p114
      %p345 = pneg %p138
      %p346 = pneg %p135
      %p347 = pneg %p159
      %p348 = pneg %p156
      %p349 = pneg %p180
      %p350 = pneg %p177
      %p351 = pneg %p201
      %p352 = pneg %p198
      %p353 = pneg %p222
      %p354 = pneg %p219
      %p355 = pneg %p243
      %p356 = pneg %p240
      %p357 = pneg %p271
      %p358 = pneg %p268
      %s359 = smul.u32 8, %s26
      %p360 = scmp.lt.s32.totalorder %s25, 1
      %s361 = scalar_select %p360, %s25, 1
      %p362 = scmp.lt.s32.totalorder %s359, 15
      %s363 = scalar_select %p362, %s359, 15
      %s364 = smul.addr %s363, 2
      %s365 = smul.addr %s361, 32
      %s366 = sadd.s32 %s364, %s365
      %s367 = smul.addr %s366, 8
      %s368 = scalar_lea.vmem %s10, %s367
      %p369 = scmp.lt.s32.totalorder %s25, 1
      %s370 = scalar_select %p369, %s25, 1
      %s371 = smul.addr %s370, 36
      %s372 = smul.addr %s371, 8
      %s373 = scalar_lea.vmem %s0, %s372
      %s374 = smul.u32 8, %s26
      %p375 = scmp.lt.s32.totalorder %s25, 1
      %s376 = scalar_select %p375, %s25, 1
      %p377 = scmp.lt.s32.totalorder %s374, 15
      %s378 = scalar_select %p377, %s374, 15
      %s379 = smul.addr %s378, 2
      %s380 = smul.addr %s376, 32
      %s381 = sadd.s32 %s379, %s380
      %s382 = smul.addr %s381, 8
      %s383 = scalar_lea.vmem %s10, %s382
      %s384 = smul.u32 8, %s26
      %s386 = smul.u32 %s26, 8
      %s387 = smul.u32 %s386, 16
      %s388 = scalar_lea.vmem %s373, %s387
      %v389 = vld [vmem:[%s388] sm:$0xff]
      %v390 = vld [vmem:[%s388 + $0x8] sm:$0xff]
      %v391 = vld [vmem:[%s388 + $0x10] sm:$0xff]
      %v392 = vld [vmem:[%s388 + $0x18] sm:$0xff]
      %v393 = vld [vmem:[%s388 + $0x20] sm:$0xff]
      %v394 = vld [vmem:[%s388 + $0x28] sm:$0xff]
      %v395 = vld [vmem:[%s388 + $0x30] sm:$0xff]
      %v396 = vld [vmem:[%s388 + $0x38] sm:$0xff]
      %v397 = vld [vmem:[%s388 + $0x40] sm:$0xff]
      %v398 = vld [vmem:[%s388 + $0x48] sm:$0xff]
      %v399 = vld [vmem:[%s388 + $0x50] sm:$0xff]
      %v400 = vld [vmem:[%s388 + $0x58] sm:$0xff]
      %v401 = vld [vmem:[%s388 + $0x60] sm:$0xff]
      %v402 = vld [vmem:[%s388 + $0x68] sm:$0xff]
      %v403 = vld [vmem:[%s388 + $0x70] sm:$0xff]
      %v404 = vld [vmem:[%s388 + $0x78] sm:$0xff]
      %v405 = vld [vmem:[%s388 + $0x80] sm:$0xff]
      %v406 = vld [vmem:[%s388 + $0x88] sm:$0xff]
      %v407 = vld [vmem:[%s388 + $0x90] sm:$0xff]
      %v408 = vld [vmem:[%s388 + $0x98] sm:$0xff]
      %v409 = vld [vmem:[%s1] sm:$0x1]
      %411 = vset.pattern.permute.xlu0 0
      %412 = vperm.xlu0 %411, %v389
      %v413 = vpop.permute.xlu0 %412
      %416 = vset.pattern.permute.xlu0 0
      %417 = vperm.xlu0 %416, %v390
      %v418 = vpop.permute.xlu0 %417
      %421 = vset.pattern.permute.xlu0 0
      %422 = vperm.xlu0 %421, %v391
      %v423 = vpop.permute.xlu0 %422
      %426 = vset.pattern.permute.xlu0 0
      %427 = vperm.xlu0 %426, %v392
      %v428 = vpop.permute.xlu0 %427
      %431 = vset.pattern.permute.xlu0 0
      %432 = vperm.xlu0 %431, %v393
      %v433 = vpop.permute.xlu0 %432
      %436 = vset.pattern.permute.xlu0 0
      %437 = vperm.xlu0 %436, %v394
      %v438 = vpop.permute.xlu0 %437
      %441 = vset.pattern.permute.xlu0 0
      %442 = vperm.xlu0 %441, %v395
      %v443 = vpop.permute.xlu0 %442
      %446 = vset.pattern.permute.xlu0 0
      %447 = vperm.xlu0 %446, %v396
      %v448 = vpop.permute.xlu0 %447
      %451 = vset.pattern.permute.xlu0 0
      %452 = vperm.xlu0 %451, %v397
      %v453 = vpop.permute.xlu0 %452
      %456 = vset.pattern.permute.xlu0 0
      %457 = vperm.xlu0 %456, %v398
      %v458 = vpop.permute.xlu0 %457
      %461 = vset.pattern.permute.xlu0 0
      %462 = vperm.xlu0 %461, %v399
      %v463 = vpop.permute.xlu0 %462
      %466 = vset.pattern.permute.xlu0 0
      %467 = vperm.xlu0 %466, %v400
      %v468 = vpop.permute.xlu0 %467
      %471 = vset.pattern.permute.xlu0 0
      %472 = vperm.xlu0 %471, %v401
      %v473 = vpop.permute.xlu0 %472
      %476 = vset.pattern.permute.xlu0 0
      %477 = vperm.xlu0 %476, %v402
      %v478 = vpop.permute.xlu0 %477
      %481 = vset.pattern.permute.xlu0 0
      %482 = vperm.xlu0 %481, %v403
      %v483 = vpop.permute.xlu0 %482
      %486 = vset.pattern.permute.xlu0 0
      %487 = vperm.xlu0 %486, %v404
      %v488 = vpop.permute.xlu0 %487
      %491 = vset.pattern.permute.xlu0 0
      %492 = vperm.xlu0 %491, %v405
      %v493 = vpop.permute.xlu0 %492
      %496 = vset.pattern.permute.xlu0 0
      %497 = vperm.xlu0 %496, %v406
      %v498 = vpop.permute.xlu0 %497
      %501 = vset.pattern.permute.xlu0 0
      %502 = vperm.xlu0 %501, %v407
      %v503 = vpop.permute.xlu0 %502
      %506 = vset.pattern.permute.xlu0 0
      %507 = vperm.xlu0 %506, %v408
      %v508 = vpop.permute.xlu0 %507
      %v510 = vperm.slane %v409, 0
      %v511 = vmul.f32 %v413, %v510
      %v512 = vmul.f32 %v418, %v510
      %v513 = vmul.f32 %v423, %v510
      %v514 = vmul.f32 %v428, %v510
      %v515 = vmul.f32 %v433, %v510
      %v516 = vmul.f32 %v438, %v510
      %v517 = vmul.f32 %v443, %v510
      %v518 = vmul.f32 %v448, %v510
      %v519 = vmul.f32 %v453, %v510
      %v520 = vmul.f32 %v458, %v510
      %v521 = vmul.f32 %v463, %v510
      %v522 = vmul.f32 %v468, %v510
      %v523 = vmul.f32 %v473, %v510
      %v524 = vmul.f32 %v478, %v510
      %v525 = vmul.f32 %v483, %v510
      %v526 = vmul.f32 %v488, %v510
      %v527 = vmul.f32 %v493, %v510
      %v528 = vmul.f32 %v498, %v510
      %v529 = vmul.f32 %v503, %v510
      %v530 = vmul.f32 %v508, %v510
      %v531 = vld [vmem:[%s1 + $0x1] sm:$0x1]
      %532 = vset.pattern.permute.xlu0 1
      %533 = vperm.xlu0 %532, %v389
      %v534 = vpop.permute.xlu0 %533
      %536 = vset.pattern.permute.xlu0 1
      %537 = vperm.xlu0 %536, %v390
      %v538 = vpop.permute.xlu0 %537
      %540 = vset.pattern.permute.xlu0 1
      %541 = vperm.xlu0 %540, %v391
      %v542 = vpop.permute.xlu0 %541
      %544 = vset.pattern.permute.xlu0 1
      %545 = vperm.xlu0 %544, %v392
      %v546 = vpop.permute.xlu0 %545
      %548 = vset.pattern.permute.xlu0 1
      %549 = vperm.xlu0 %548, %v393
      %v550 = vpop.permute.xlu0 %549
      %552 = vset.pattern.permute.xlu0 1
      %553 = vperm.xlu0 %552, %v394
      %v554 = vpop.permute.xlu0 %553
      %556 = vset.pattern.permute.xlu0 1
      %557 = vperm.xlu0 %556, %v395
      %v558 = vpop.permute.xlu0 %557
      %560 = vset.pattern.permute.xlu0 1
      %561 = vperm.xlu0 %560, %v396
      %v562 = vpop.permute.xlu0 %561
      %564 = vset.pattern.permute.xlu0 1
      %565 = vperm.xlu0 %564, %v397
      %v566 = vpop.permute.xlu0 %565
      %568 = vset.pattern.permute.xlu0 1
      %569 = vperm.xlu0 %568, %v398
      %v570 = vpop.permute.xlu0 %569
      %572 = vset.pattern.permute.xlu0 1
      %573 = vperm.xlu0 %572, %v399
      %v574 = vpop.permute.xlu0 %573
      %576 = vset.pattern.permute.xlu0 1
      %577 = vperm.xlu0 %576, %v400
      %v578 = vpop.permute.xlu0 %577
      %580 = vset.pattern.permute.xlu0 1
      %581 = vperm.xlu0 %580, %v401
      %v582 = vpop.permute.xlu0 %581
      %584 = vset.pattern.permute.xlu0 1
      %585 = vperm.xlu0 %584, %v402
      %v586 = vpop.permute.xlu0 %585
      %588 = vset.pattern.permute.xlu0 1
      %589 = vperm.xlu0 %588, %v403
      %v590 = vpop.permute.xlu0 %589
      %592 = vset.pattern.permute.xlu0 1
      %593 = vperm.xlu0 %592, %v404
      %v594 = vpop.permute.xlu0 %593
      %596 = vset.pattern.permute.xlu0 1
      %597 = vperm.xlu0 %596, %v405
      %v598 = vpop.permute.xlu0 %597
      %600 = vset.pattern.permute.xlu0 1
      %601 = vperm.xlu0 %600, %v406
      %v602 = vpop.permute.xlu0 %601
      %604 = vset.pattern.permute.xlu0 1
      %605 = vperm.xlu0 %604, %v407
      %v606 = vpop.permute.xlu0 %605
      %608 = vset.pattern.permute.xlu0 1
      %609 = vperm.xlu0 %608, %v408
      %v610 = vpop.permute.xlu0 %609
      %v612 = vperm.slane %v531, 0
      %v613 = vmul.f32 %v534, %v612
      %v614 = vmul.f32 %v538, %v612
      %v615 = vmul.f32 %v542, %v612
      %v616 = vmul.f32 %v546, %v612
      %v617 = vmul.f32 %v550, %v612
      %v618 = vmul.f32 %v554, %v612
      %v619 = vmul.f32 %v558, %v612
      %v620 = vmul.f32 %v562, %v612
      %v621 = vmul.f32 %v566, %v612
      %v622 = vmul.f32 %v570, %v612
      %v623 = vmul.f32 %v574, %v612
      %v624 = vmul.f32 %v578, %v612
      %v625 = vmul.f32 %v582, %v612
      %v626 = vmul.f32 %v586, %v612
      %v627 = vmul.f32 %v590, %v612
      %v628 = vmul.f32 %v594, %v612
      %v629 = vmul.f32 %v598, %v612
      %v630 = vmul.f32 %v602, %v612
      %v631 = vmul.f32 %v606, %v612
      %v632 = vmul.f32 %v610, %v612
      %v633 = vadd.f32 %v511, %v613
      %v634 = vadd.f32 %v512, %v614
      %v635 = vadd.f32 %v513, %v615
      %v636 = vadd.f32 %v514, %v616
      %v637 = vadd.f32 %v515, %v617
      %v638 = vadd.f32 %v516, %v618
      %v639 = vadd.f32 %v517, %v619
      %v640 = vadd.f32 %v518, %v620
      %v641 = vadd.f32 %v519, %v621
      %v642 = vadd.f32 %v520, %v622
      %v643 = vadd.f32 %v521, %v623
      %v644 = vadd.f32 %v522, %v624
      %v645 = vadd.f32 %v523, %v625
      %v646 = vadd.f32 %v524, %v626
      %v647 = vadd.f32 %v525, %v627
      %v648 = vadd.f32 %v526, %v628
      %v649 = vadd.f32 %v527, %v629
      %v650 = vadd.f32 %v528, %v630
      %v651 = vadd.f32 %v529, %v631
      %v652 = vadd.f32 %v530, %v632
      %v653 = vld [vmem:[%s1 + $0x2] sm:$0x1]
      %654 = vset.pattern.permute.xlu0 2
      %655 = vperm.xlu0 %654, %v389
      %v656 = vpop.permute.xlu0 %655
      %658 = vset.pattern.permute.xlu0 2
      %659 = vperm.xlu0 %658, %v390
      %v660 = vpop.permute.xlu0 %659
      %662 = vset.pattern.permute.xlu0 2
      %663 = vperm.xlu0 %662, %v391
      %v664 = vpop.permute.xlu0 %663
      %666 = vset.pattern.permute.xlu0 2
      %667 = vperm.xlu0 %666, %v392
      %v668 = vpop.permute.xlu0 %667
      %670 = vset.pattern.permute.xlu0 2
      %671 = vperm.xlu0 %670, %v393
      %v672 = vpop.permute.xlu0 %671
      %674 = vset.pattern.permute.xlu0 2
      %675 = vperm.xlu0 %674, %v394
      %v676 = vpop.permute.xlu0 %675
      %678 = vset.pattern.permute.xlu0 2
      %679 = vperm.xlu0 %678, %v395
      %v680 = vpop.permute.xlu0 %679
      %682 = vset.pattern.permute.xlu0 2
      %683 = vperm.xlu0 %682, %v396
      %v684 = vpop.permute.xlu0 %683
      %686 = vset.pattern.permute.xlu0 2
      %687 = vperm.xlu0 %686, %v397
      %v688 = vpop.permute.xlu0 %687
      %690 = vset.pattern.permute.xlu0 2
      %691 = vperm.xlu0 %690, %v398
      %v692 = vpop.permute.xlu0 %691
      %694 = vset.pattern.permute.xlu0 2
      %695 = vperm.xlu0 %694, %v399
      %v696 = vpop.permute.xlu0 %695
      %698 = vset.pattern.permute.xlu0 2
      %699 = vperm.xlu0 %698, %v400
      %v700 = vpop.permute.xlu0 %699
      %702 = vset.pattern.permute.xlu0 2
      %703 = vperm.xlu0 %702, %v401
      %v704 = vpop.permute.xlu0 %703
      %706 = vset.pattern.permute.xlu0 2
      %707 = vperm.xlu0 %706, %v402
      %v708 = vpop.permute.xlu0 %707
      %710 = vset.pattern.permute.xlu0 2
      %711 = vperm.xlu0 %710, %v403
      %v712 = vpop.permute.xlu0 %711
      %714 = vset.pattern.permute.xlu0 2
      %715 = vperm.xlu0 %714, %v404
      %v716 = vpop.permute.xlu0 %715
      %718 = vset.pattern.permute.xlu0 2
      %719 = vperm.xlu0 %718, %v405
      %v720 = vpop.permute.xlu0 %719
      %722 = vset.pattern.permute.xlu0 2
      %723 = vperm.xlu0 %722, %v406
      %v724 = vpop.permute.xlu0 %723
      %726 = vset.pattern.permute.xlu0 2
      %727 = vperm.xlu0 %726, %v407
      %v728 = vpop.permute.xlu0 %727
      %730 = vset.pattern.permute.xlu0 2
      %731 = vperm.xlu0 %730, %v408
      %v732 = vpop.permute.xlu0 %731
      %v734 = vperm.slane %v653, 0
      %v735 = vmul.f32 %v656, %v734
      %v736 = vmul.f32 %v660, %v734
      %v737 = vmul.f32 %v664, %v734
      %v738 = vmul.f32 %v668, %v734
      %v739 = vmul.f32 %v672, %v734
      %v740 = vmul.f32 %v676, %v734
      %v741 = vmul.f32 %v680, %v734
      %v742 = vmul.f32 %v684, %v734
      %v743 = vmul.f32 %v688, %v734
      %v744 = vmul.f32 %v692, %v734
      %v745 = vmul.f32 %v696, %v734
      %v746 = vmul.f32 %v700, %v734
      %v747 = vmul.f32 %v704, %v734
      %v748 = vmul.f32 %v708, %v734
      %v749 = vmul.f32 %v712, %v734
      %v750 = vmul.f32 %v716, %v734
      %v751 = vmul.f32 %v720, %v734
      %v752 = vmul.f32 %v724, %v734
      %v753 = vmul.f32 %v728, %v734
      %v754 = vmul.f32 %v732, %v734
      %v755 = vadd.f32 %v633, %v735
      %v756 = vadd.f32 %v634, %v736
      %v757 = vadd.f32 %v635, %v737
      %v758 = vadd.f32 %v636, %v738
      %v759 = vadd.f32 %v637, %v739
      %v760 = vadd.f32 %v638, %v740
      %v761 = vadd.f32 %v639, %v741
      %v762 = vadd.f32 %v640, %v742
      %v763 = vadd.f32 %v641, %v743
      %v764 = vadd.f32 %v642, %v744
      %v765 = vadd.f32 %v643, %v745
      %v766 = vadd.f32 %v644, %v746
      %v767 = vadd.f32 %v645, %v747
      %v768 = vadd.f32 %v646, %v748
      %v769 = vadd.f32 %v647, %v749
      %v770 = vadd.f32 %v648, %v750
      %v771 = vadd.f32 %v649, %v751
      %v772 = vadd.f32 %v650, %v752
      %v773 = vadd.f32 %v651, %v753
      %v774 = vadd.f32 %v652, %v754
      %v775 = vld [vmem:[%s1 + $0x3] sm:$0x1]
      %776 = vset.pattern.permute.xlu0 3
      %777 = vperm.xlu0 %776, %v389
      %v778 = vpop.permute.xlu0 %777
      %780 = vset.pattern.permute.xlu0 3
      %781 = vperm.xlu0 %780, %v390
      %v782 = vpop.permute.xlu0 %781
      %784 = vset.pattern.permute.xlu0 3
      %785 = vperm.xlu0 %784, %v391
      %v786 = vpop.permute.xlu0 %785
      %788 = vset.pattern.permute.xlu0 3
      %789 = vperm.xlu0 %788, %v392
      %v790 = vpop.permute.xlu0 %789
      %792 = vset.pattern.permute.xlu0 3
      %793 = vperm.xlu0 %792, %v393
      %v794 = vpop.permute.xlu0 %793
      %796 = vset.pattern.permute.xlu0 3
      %797 = vperm.xlu0 %796, %v394
      %v798 = vpop.permute.xlu0 %797
      %800 = vset.pattern.permute.xlu0 3
      %801 = vperm.xlu0 %800, %v395
      %v802 = vpop.permute.xlu0 %801
      %804 = vset.pattern.permute.xlu0 3
      %805 = vperm.xlu0 %804, %v396
      %v806 = vpop.permute.xlu0 %805
      %808 = vset.pattern.permute.xlu0 3
      %809 = vperm.xlu0 %808, %v397
      %v810 = vpop.permute.xlu0 %809
      %812 = vset.pattern.permute.xlu0 3
      %813 = vperm.xlu0 %812, %v398
      %v814 = vpop.permute.xlu0 %813
      %816 = vset.pattern.permute.xlu0 3
      %817 = vperm.xlu0 %816, %v399
      %v818 = vpop.permute.xlu0 %817
      %820 = vset.pattern.permute.xlu0 3
      %821 = vperm.xlu0 %820, %v400
      %v822 = vpop.permute.xlu0 %821
      %824 = vset.pattern.permute.xlu0 3
      %825 = vperm.xlu0 %824, %v401
      %v826 = vpop.permute.xlu0 %825
      %828 = vset.pattern.permute.xlu0 3
      %829 = vperm.xlu0 %828, %v402
      %v830 = vpop.permute.xlu0 %829
      %832 = vset.pattern.permute.xlu0 3
      %833 = vperm.xlu0 %832, %v403
      %v834 = vpop.permute.xlu0 %833
      %836 = vset.pattern.permute.xlu0 3
      %837 = vperm.xlu0 %836, %v404
      %v838 = vpop.permute.xlu0 %837
      %840 = vset.pattern.permute.xlu0 3
      %841 = vperm.xlu0 %840, %v405
      %v842 = vpop.permute.xlu0 %841
      %844 = vset.pattern.permute.xlu0 3
      %845 = vperm.xlu0 %844, %v406
      %v846 = vpop.permute.xlu0 %845
      %848 = vset.pattern.permute.xlu0 3
      %849 = vperm.xlu0 %848, %v407
      %v850 = vpop.permute.xlu0 %849
      %852 = vset.pattern.permute.xlu0 3
      %853 = vperm.xlu0 %852, %v408
      %v854 = vpop.permute.xlu0 %853
      %v856 = vperm.slane %v775, 0
      %v857 = vmul.f32 %v778, %v856
      %v858 = vmul.f32 %v782, %v856
      %v859 = vmul.f32 %v786, %v856
      %v860 = vmul.f32 %v790, %v856
      %v861 = vmul.f32 %v794, %v856
      %v862 = vmul.f32 %v798, %v856
      %v863 = vmul.f32 %v802, %v856
      %v864 = vmul.f32 %v806, %v856
      %v865 = vmul.f32 %v810, %v856
      %v866 = vmul.f32 %v814, %v856
      %v867 = vmul.f32 %v818, %v856
      %v868 = vmul.f32 %v822, %v856
      %v869 = vmul.f32 %v826, %v856
      %v870 = vmul.f32 %v830, %v856
      %v871 = vmul.f32 %v834, %v856
      %v872 = vmul.f32 %v838, %v856
      %v873 = vmul.f32 %v842, %v856
      %v874 = vmul.f32 %v846, %v856
      %v875 = vmul.f32 %v850, %v856
      %v876 = vmul.f32 %v854, %v856
      %v877 = vadd.f32 %v755, %v857
      %v878 = vadd.f32 %v756, %v858
      %v879 = vadd.f32 %v757, %v859
      %v880 = vadd.f32 %v758, %v860
      %v881 = vadd.f32 %v759, %v861
      %v882 = vadd.f32 %v760, %v862
      %v883 = vadd.f32 %v761, %v863
      %v884 = vadd.f32 %v762, %v864
      %v885 = vadd.f32 %v763, %v865
      %v886 = vadd.f32 %v764, %v866
      %v887 = vadd.f32 %v765, %v867
      %v888 = vadd.f32 %v766, %v868
      %v889 = vadd.f32 %v767, %v869
      %v890 = vadd.f32 %v768, %v870
      %v891 = vadd.f32 %v769, %v871
      %v892 = vadd.f32 %v770, %v872
      %v893 = vadd.f32 %v771, %v873
      %v894 = vadd.f32 %v772, %v874
      %v895 = vadd.f32 %v773, %v875
      %v896 = vadd.f32 %v774, %v876
      %v897 = vld [vmem:[%s2] sm:$0x1]
      %v899 = vperm.slane %v897, 0
      %v901 = vmul.f32 %v877, %v899
      %v902 = vmul.f32 %v878, %v899
      %v903 = vmul.f32 %v879, %v899
      %v904 = vmul.f32 %v880, %v899
      %v905 = vmul.f32 %v881, %v899
      %v906 = vmul.f32 %v882, %v899
      %v907 = vmul.f32 %v883, %v899
      %v908 = vmul.f32 %v884, %v899
      %v909 = vmul.f32 %v885, %v899
      %v910 = vmul.f32 %v886, %v899
      %v911 = vmul.f32 %v887, %v899
      %v912 = vmul.f32 %v888, %v899
      %v913 = vmul.f32 %v889, %v899
      %v914 = vmul.f32 %v890, %v899
      %v915 = vmul.f32 %v891, %v899
      %v916 = vmul.f32 %v892, %v899
      %v917 = vmul.f32 %v893, %v899
      %v918 = vmul.f32 %v894, %v899
      %v919 = vmul.f32 %v895, %v899
      %v920 = vmul.f32 %v896, %v899
      %v921 = vld [vmem:[%s3] sm:$0x1]
      %v923 = vperm.slane %v921, 0
      %v925 = vadd.f32 %v901, %v923
      %v926 = vadd.f32 %v902, %v923
      %v927 = vadd.f32 %v903, %v923
      %v928 = vadd.f32 %v904, %v923
      %v929 = vadd.f32 %v905, %v923
      %v930 = vadd.f32 %v906, %v923
      %v931 = vadd.f32 %v907, %v923
      %v932 = vadd.f32 %v908, %v923
      %v933 = vadd.f32 %v909, %v923
      %v934 = vadd.f32 %v910, %v923
      %v935 = vadd.f32 %v911, %v923
      %v936 = vadd.f32 %v912, %v923
      %v937 = vadd.f32 %v913, %v923
      %v938 = vadd.f32 %v914, %v923
      %v939 = vadd.f32 %v915, %v923
      %v940 = vadd.f32 %v916, %v923
      %v941 = vadd.f32 %v917, %v923
      %v942 = vadd.f32 %v918, %v923
      %v943 = vadd.f32 %v919, %v923
      %v944 = vadd.f32 %v920, %v923
      %v945 = vmax.f32 %v925, 0.0
      %v946 = vmax.f32 %v926, 0.0
      %v947 = vmax.f32 %v927, 0.0
      %v948 = vmax.f32 %v928, 0.0
      %v949 = vmax.f32 %v929, 0.0
      %v950 = vmax.f32 %v930, 0.0
      %v951 = vmax.f32 %v931, 0.0
      %v952 = vmax.f32 %v932, 0.0
      %v953 = vmax.f32 %v933, 0.0
      %v954 = vmax.f32 %v934, 0.0
      %v955 = vmax.f32 %v935, 0.0
      %v956 = vmax.f32 %v936, 0.0
      %v957 = vmax.f32 %v937, 0.0
      %v958 = vmax.f32 %v938, 0.0
      %v959 = vmax.f32 %v939, 0.0
      %v960 = vmax.f32 %v940, 0.0
      %v961 = vmax.f32 %v941, 0.0
      %v962 = vmax.f32 %v942, 0.0
      %v963 = vmax.f32 %v943, 0.0
      %v964 = vmax.f32 %v944, 0.0
      %vm965 = vcmask 253952
      %vm966 = vsmask.f32 256
      %vm967 = vmand %vm965, %vm966
      %v968 = vld [vmem:[#allocation2] sm:$0x1]
      %v969 = vsel %vm967, 0, %v968
      %970 = vst [vmem:[#allocation2] sm:$0x1] %v969
      %v971 = vld [vmem:[#allocation2 + $0xc] sm:$0x1]
      %v972 = vsel %vm967, 0, %v971
      %973 = vst [vmem:[#allocation2 + $0xc] sm:$0x1] %v972
      %v974 = vld [vmem:[#allocation2 + $0x18] sm:$0x1]
      %v975 = vsel %vm967, 0, %v974
      %976 = vst [vmem:[#allocation2 + $0x18] sm:$0x1] %v975
      %v977 = vld [vmem:[#allocation2 + $0x24] sm:$0x1]
      %v978 = vsel %vm967, 0, %v977
      %979 = vst [vmem:[#allocation2 + $0x24] sm:$0x1] %v978
      %v980 = vld [vmem:[#allocation2 + $0x30] sm:$0x1]
      %v981 = vsel %vm967, 0, %v980
      %982 = vst [vmem:[#allocation2 + $0x30] sm:$0x1] %v981
      %v983 = vld [vmem:[#allocation2 + $0x3c] sm:$0x1]
      %v984 = vsel %vm967, 0, %v983
      %985 = vst [vmem:[#allocation2 + $0x3c] sm:$0x1] %v984
      %v986 = vld [vmem:[#allocation2 + $0x48] sm:$0x1]
      %v987 = vsel %vm967, 0, %v986
      %988 = vst [vmem:[#allocation2 + $0x48] sm:$0x1] %v987
      %v989 = vld [vmem:[#allocation2 + $0x54] sm:$0x1]
      %v990 = vsel %vm967, 0, %v989
      %991 = vst [vmem:[#allocation2 + $0x54] sm:$0x1] %v990
      %v992 = vld [vmem:[#allocation2 + $0x60] sm:$0x1]
      %v993 = vsel %vm967, 0, %v992
      %994 = vst [vmem:[#allocation2 + $0x60] sm:$0x1] %v993
      %v995 = vld [vmem:[#allocation2 + $0x6c] sm:$0x1]
      %v996 = vsel %vm967, 0, %v995
      %997 = vst [vmem:[#allocation2 + $0x6c] sm:$0x1] %v996
      %vm998 = vcmask 257024
      %vm999 = vsmask.f32 7938
      %vm1000 = vmand %vm998, %vm999
      %v1001 = vld [vmem:[#allocation2 + $0x8] sm:$0xf]
      %v1002 = vsel %vm1000, 0, %v1001
      %1003 = vst [vmem:[#allocation2 + $0x8] sm:$0xf] %v1002
      %v1004 = vld [vmem:[#allocation2 + $0x14] sm:$0xf]
      %v1005 = vsel %vm1000, 0, %v1004
      %1006 = vst [vmem:[#allocation2 + $0x14] sm:$0xf] %v1005
      %v1007 = vld [vmem:[#allocation2 + $0x20] sm:$0xf]
      %v1008 = vsel %vm1000, 0, %v1007
      %1009 = vst [vmem:[#allocation2 + $0x20] sm:$0xf] %v1008
      %v1010 = vld [vmem:[#allocation2 + $0x2c] sm:$0xf]
      %v1011 = vsel %vm1000, 0, %v1010
      %1012 = vst [vmem:[#allocation2 + $0x2c] sm:$0xf] %v1011
      %v1013 = vld [vmem:[#allocation2 + $0x38] sm:$0xf]
      %v1014 = vsel %vm1000, 0, %v1013
      %1015 = vst [vmem:[#allocation2 + $0x38] sm:$0xf] %v1014
      %v1016 = vld [vmem:[#allocation2 + $0x44] sm:$0xf]
      %v1017 = vsel %vm1000, 0, %v1016
      %1018 = vst [vmem:[#allocation2 + $0x44] sm:$0xf] %v1017
      %v1019 = vld [vmem:[#allocation2 + $0x50] sm:$0xf]
      %v1020 = vsel %vm1000, 0, %v1019
      %1021 = vst [vmem:[#allocation2 + $0x50] sm:$0xf] %v1020
      %v1022 = vld [vmem:[#allocation2 + $0x5c] sm:$0xf]
      %v1023 = vsel %vm1000, 0, %v1022
      %1024 = vst [vmem:[#allocation2 + $0x5c] sm:$0xf] %v1023
      %v1025 = vld [vmem:[#allocation2 + $0x68] sm:$0xf]
      %v1026 = vsel %vm1000, 0, %v1025
      %1027 = vst [vmem:[#allocation2 + $0x68] sm:$0xf] %v1026
      %v1028 = vld [vmem:[#allocation2 + $0x74] sm:$0xf]
      %v1029 = vsel %vm1000, 0, %v1028
      %1030 = vst [vmem:[#allocation2 + $0x74] sm:$0xf] %v1029
      %v1031 = vpack.c.bf16 %v945, %v945
      %v1032 = vpack.c.bf16 %v946, %v946
      %v1033 = vpack.c.bf16 %v947, %v947
      %v1034 = vpack.c.bf16 %v948, %v948
      %v1035 = vpack.c.bf16 %v949, %v949
      %v1036 = vpack.c.bf16 %v950, %v950
      %v1037 = vpack.c.bf16 %v951, %v951
      %v1038 = vpack.c.bf16 %v952, %v952
      %v1039 = vpack.c.bf16 %v953, %v953
      %v1040 = vpack.c.bf16 %v954, %v954
      %v1041 = vpack.c.bf16 %v955, %v955
      %v1042 = vpack.c.bf16 %v956, %v956
      %v1043 = vpack.c.bf16 %v957, %v957
      %v1044 = vpack.c.bf16 %v958, %v958
      %v1045 = vpack.c.bf16 %v959, %v959
      %v1046 = vpack.c.bf16 %v960, %v960
      %v1047 = vpack.c.bf16 %v961, %v961
      %v1048 = vpack.c.bf16 %v962, %v962
      %v1049 = vpack.c.bf16 %v963, %v963
      %v1050 = vpack.c.bf16 %v964, %v964
      %vm1051 = vsmask.f32 4368
      %vm1052 = vmor %vm966, %vm1051
      %v1054 = vshrl.u32 %v1031, 16
      %v1056 = vrot.slane %v1054, 7
      %v1057 = vshll.u32 %v1031, 16
      %v1059 = vor.u32 %v1056, %v1057
      %v1060 = vrot.slane %v1056, 4
      %v1062 = vshrl.u32 %v1032, 16
      %v1064 = vrot.slane %v1062, 7
      %v1065 = vshll.u32 %v1032, 16
      %v1067 = vor.u32 %v1064, %v1065
      %v1068 = vsel %vm1052, %v1060, %v1067
      %v1069 = vrot.slane %v1064, 4
      %v1071 = vshrl.u32 %v1033, 16
      %v1073 = vrot.slane %v1071, 7
      %v1074 = vshll.u32 %v1033, 16
      %v1076 = vor.u32 %v1073, %v1074
      %v1077 = vrot.slane %v1073, 4
      %v1079 = vshrl.u32 %v1034, 16
      %v1081 = vrot.slane %v1079, 7
      %v1082 = vshll.u32 %v1034, 16
      %v1084 = vor.u32 %v1081, %v1082
      %v1085 = vsel %vm1052, %v1077, %v1084
      %v1086 = vrot.slane %v1081, 4
      %v1088 = vshrl.u32 %v1035, 16
      %v1090 = vrot.slane %v1088, 7
      %v1091 = vshll.u32 %v1035, 16
      %v1093 = vor.u32 %v1090, %v1091
      %v1094 = vrot.slane %v1090, 4
      %v1096 = vshrl.u32 %v1036, 16
      %v1098 = vrot.slane %v1096, 7
      %v1099 = vshll.u32 %v1036, 16
      %v1101 = vor.u32 %v1098, %v1099
      %v1102 = vsel %vm1052, %v1094, %v1101
      %v1103 = vrot.slane %v1098, 4
      %v1105 = vshrl.u32 %v1037, 16
      %v1107 = vrot.slane %v1105, 7
      %v1108 = vshll.u32 %v1037, 16
      %v1110 = vor.u32 %v1107, %v1108
      %v1111 = vrot.slane %v1107, 4
      %v1113 = vshrl.u32 %v1038, 16
      %v1115 = vrot.slane %v1113, 7
      %v1116 = vshll.u32 %v1038, 16
      %v1118 = vor.u32 %v1115, %v1116
      %v1119 = vsel %vm1052, %v1111, %v1118
      %v1120 = vrot.slane %v1115, 4
      %v1122 = vshrl.u32 %v1039, 16
      %v1124 = vrot.slane %v1122, 7
      %v1125 = vshll.u32 %v1039, 16
      %v1127 = vor.u32 %v1124, %v1125
      %v1128 = vrot.slane %v1124, 4
      %v1130 = vshrl.u32 %v1040, 16
      %v1132 = vrot.slane %v1130, 7
      %v1133 = vshll.u32 %v1040, 16
      %v1135 = vor.u32 %v1132, %v1133
      %v1136 = vsel %vm1052, %v1128, %v1135
      %v1137 = vrot.slane %v1132, 4
      %v1139 = vshrl.u32 %v1041, 16
      %v1141 = vrot.slane %v1139, 7
      %v1142 = vshll.u32 %v1041, 16
      %v1144 = vor.u32 %v1141, %v1142
      %v1145 = vrot.slane %v1141, 4
      %v1147 = vshrl.u32 %v1042, 16
      %v1149 = vrot.slane %v1147, 7
      %v1150 = vshll.u32 %v1042, 16
      %v1152 = vor.u32 %v1149, %v1150
      %v1153 = vsel %vm1052, %v1145, %v1152
      %v1154 = vrot.slane %v1149, 4
      %v1156 = vshrl.u32 %v1043, 16
      %v1158 = vrot.slane %v1156, 7
      %v1159 = vshll.u32 %v1043, 16
      %v1161 = vor.u32 %v1158, %v1159
      %v1162 = vrot.slane %v1158, 4
      %v1164 = vshrl.u32 %v1044, 16
      %v1166 = vrot.slane %v1164, 7
      %v1167 = vshll.u32 %v1044, 16
      %v1169 = vor.u32 %v1166, %v1167
      %v1170 = vsel %vm1052, %v1162, %v1169
      %v1171 = vrot.slane %v1166, 4
      %v1173 = vshrl.u32 %v1045, 16
      %v1175 = vrot.slane %v1173, 7
      %v1176 = vshll.u32 %v1045, 16
      %v1178 = vor.u32 %v1175, %v1176
      %v1179 = vrot.slane %v1175, 4
      %v1181 = vshrl.u32 %v1046, 16
      %v1183 = vrot.slane %v1181, 7
      %v1184 = vshll.u32 %v1046, 16
      %v1186 = vor.u32 %v1183, %v1184
      %v1187 = vsel %vm1052, %v1179, %v1186
      %v1188 = vrot.slane %v1183, 4
      %v1190 = vshrl.u32 %v1047, 16
      %v1192 = vrot.slane %v1190, 7
      %v1193 = vshll.u32 %v1047, 16
      %v1195 = vor.u32 %v1192, %v1193
      %v1196 = vrot.slane %v1192, 4
      %v1198 = vshrl.u32 %v1048, 16
      %v1200 = vrot.slane %v1198, 7
      %v1201 = vshll.u32 %v1048, 16
      %v1203 = vor.u32 %v1200, %v1201
      %v1204 = vsel %vm1052, %v1196, %v1203
      %v1205 = vrot.slane %v1200, 4
      %v1207 = vshrl.u32 %v1049, 16
      %v1209 = vrot.slane %v1207, 7
      %v1210 = vshll.u32 %v1049, 16
      %v1212 = vor.u32 %v1209, %v1210
      %v1213 = vrot.slane %v1209, 4
      %v1215 = vshrl.u32 %v1050, 16
      %v1217 = vrot.slane %v1215, 7
      %v1218 = vshll.u32 %v1050, 16
      %v1220 = vor.u32 %v1217, %v1218
      %v1221 = vsel %vm1052, %v1213, %v1220
      %v1222 = vrot.slane %v1217, 4
      %v1253 = vld [vmem:[#allocation2] sm:$0xf]
      %v1254 = vsel %vm1000, %v1059, %v1253
      %1255 = vst [vmem:[#allocation2] sm:$0xf] %v1254
      %vm1256 = vcmask 257024
      %1257 = vst.msk [vmem:[#allocation2 + $0x4] sm:$0xf] %vm1256, %v1068
      %v1258 = vld [vmem:[#allocation2 + $0x8] sm:$0x1]
      %v1259 = vsel %vm967, %v1069, %v1258
      %1260 = vst [vmem:[#allocation2 + $0x8] sm:$0x1] %v1259
      %v1261 = vld [vmem:[#allocation2 + $0xc] sm:$0xf]
      %v1262 = vsel %vm1000, %v1076, %v1261
      %1263 = vst [vmem:[#allocation2 + $0xc] sm:$0xf] %v1262
      %1264 = vst.msk [vmem:[#allocation2 + $0x10] sm:$0xf] %vm1256, %v1085
      %v1265 = vld [vmem:[#allocation2 + $0x14] sm:$0x1]
      %v1266 = vsel %vm967, %v1086, %v1265
      %1267 = vst [vmem:[#allocation2 + $0x14] sm:$0x1] %v1266
      %v1268 = vld [vmem:[#allocation2 + $0x18] sm:$0xf]
      %v1269 = vsel %vm1000, %v1093, %v1268
      %1270 = vst [vmem:[#allocation2 + $0x18] sm:$0xf] %v1269
      %1271 = vst.msk [vmem:[#allocation2 + $0x1c] sm:$0xf] %vm1256, %v1102
      %v1272 = vld [vmem:[#allocation2 + $0x20] sm:$0x1]
      %v1273 = vsel %vm967, %v1103, %v1272
      %1274 = vst [vmem:[#allocation2 + $0x20] sm:$0x1] %v1273
      %v1275 = vld [vmem:[#allocation2 + $0x24] sm:$0xf]
      %v1276 = vsel %vm1000, %v1110, %v1275
      %1277 = vst [vmem:[#allocation2 + $0x24] sm:$0xf] %v1276
      %1278 = vst.msk [vmem:[#allocation2 + $0x28] sm:$0xf] %vm1256, %v1119
      %v1279 = vld [vmem:[#allocation2 + $0x2c] sm:$0x1]
      %v1280 = vsel %vm967, %v1120, %v1279
      %1281 = vst [vmem:[#allocation2 + $0x2c] sm:$0x1] %v1280
      %v1282 = vld [vmem:[#allocation2 + $0x30] sm:$0xf]
      %v1283 = vsel %vm1000, %v1127, %v1282
      %1284 = vst [vmem:[#allocation2 + $0x30] sm:$0xf] %v1283
      %1285 = vst.msk [vmem:[#allocation2 + $0x34] sm:$0xf] %vm1256, %v1136
      %v1286 = vld [vmem:[#allocation2 + $0x38] sm:$0x1]
      %v1287 = vsel %vm967, %v1137, %v1286
      %1288 = vst [vmem:[#allocation2 + $0x38] sm:$0x1] %v1287
      %v1289 = vld [vmem:[#allocation2 + $0x3c] sm:$0xf]
      %v1290 = vsel %vm1000, %v1144, %v1289
      %1291 = vst [vmem:[#allocation2 + $0x3c] sm:$0xf] %v1290
      %1292 = vst.msk [vmem:[#allocation2 + $0x40] sm:$0xf] %vm1256, %v1153
      %v1293 = vld [vmem:[#allocation2 + $0x44] sm:$0x1]
      %v1294 = vsel %vm967, %v1154, %v1293
      %1295 = vst [vmem:[#allocation2 + $0x44] sm:$0x1] %v1294
      %v1296 = vld [vmem:[#allocation2 + $0x48] sm:$0xf]
      %v1297 = vsel %vm1000, %v1161, %v1296
      %1298 = vst [vmem:[#allocation2 + $0x48] sm:$0xf] %v1297
      %1299 = vst.msk [vmem:[#allocation2 + $0x4c] sm:$0xf] %vm1256, %v1170
      %v1300 = vld [vmem:[#allocation2 + $0x50] sm:$0x1]
      %v1301 = vsel %vm967, %v1171, %v1300
      %1302 = vst [vmem:[#allocation2 + $0x50] sm:$0x1] %v1301
      %v1303 = vld [vmem:[#allocation2 + $0x54] sm:$0xf]
      %v1304 = vsel %vm1000, %v1178, %v1303
      %1305 = vst [vmem:[#allocation2 + $0x54] sm:$0xf] %v1304
      %1306 = vst.msk [vmem:[#allocation2 + $0x58] sm:$0xf] %vm1256, %v1187
      %v1307 = vld [vmem:[#allocation2 + $0x5c] sm:$0x1]
      %v1308 = vsel %vm967, %v1188, %v1307
      %1309 = vst [vmem:[#allocation2 + $0x5c] sm:$0x1] %v1308
      %v1310 = vld [vmem:[#allocation2 + $0x60] sm:$0xf]
      %v1311 = vsel %vm1000, %v1195, %v1310
      %1312 = vst [vmem:[#allocation2 + $0x60] sm:$0xf] %v1311
      %1313 = vst.msk [vmem:[#allocation2 + $0x64] sm:$0xf] %vm1256, %v1204
      %v1314 = vld [vmem:[#allocation2 + $0x68] sm:$0x1]
      %v1315 = vsel %vm967, %v1205, %v1314
      %1316 = vst [vmem:[#allocation2 + $0x68] sm:$0x1] %v1315
      %v1317 = vld [vmem:[#allocation2 + $0x6c] sm:$0xf]
      %v1318 = vsel %vm1000, %v1212, %v1317
      %1319 = vst [vmem:[#allocation2 + $0x6c] sm:$0xf] %v1318
      %1320 = vst.msk [vmem:[#allocation2 + $0x70] sm:$0xf] %vm1256, %v1221
      %v1321 = vld [vmem:[#allocation2 + $0x74] sm:$0x1]
      %v1322 = vsel %vm967, %v1222, %v1321
      %1323 = vst [vmem:[#allocation2 + $0x74] sm:$0x1] %v1322
      %p1324 = scmp.eq.s32.totalorder %s26, 0
      // Predicated region
      $region61: #{tpu_custom_call.1} parent=59 // pred_check
        %p1325 = pneg %p1324
      $region62: #{tpu_custom_call.1} parent=59 // pred_check_branch
        %1327 = sbr.rel (%p1325) target = $region64
      $region63: #{tpu_custom_call.1} parent=59 // pred_region
        %1328 = vst.msk [vmem:[#allocation2] sm:$0xf] %vm1256, 0
        %1329 = vst.msk [vmem:[#allocation2 + $0x4] sm:$0xf] %vm1256, 0
        %1330 = vst.msk [vmem:[#allocation2 + $0x8] sm:$0xf] %vm1256, 0
      $region64: #{tpu_custom_call.1} parent=59 // pred_fallthru
        _
      %p1331 = scmp.eq.s32.totalorder %s26, 1
      // Predicated region
      $region65: #{tpu_custom_call.1} parent=59 // pred_check
        %p1332 = pneg %p1331
      $region66: #{tpu_custom_call.1} parent=59 // pred_check_branch
        %1334 = sbr.rel (%p1332) target = $region68
      $region67: #{tpu_custom_call.1} parent=59 // pred_region
        %s1335 = scalar_lea.vmem [#allocation2], 108
        %1336 = vst.msk [vmem:[%s1335] sm:$0xf] %vm1256, 0
        %1337 = vst.msk [vmem:[%s1335 + $0x4] sm:$0xf] %vm1256, 0
        %1338 = vst.msk [vmem:[%s1335 + $0x8] sm:$0xf] %vm1256, 0
      $region68: #{tpu_custom_call.1} parent=59 // pred_fallthru
        _
      %v1339 = vld [vmem:[#allocation2] sm:$0xf]
      %v1340 = vld [vmem:[#allocation2 + $0x4] sm:$0xf]
      %v1341 = vld [vmem:[#allocation2 + $0x8] sm:$0xf]
      %v1342 = vld [vmem:[#allocation2 + $0xc] sm:$0xf]
      %v1343 = vld [vmem:[#allocation2 + $0x10] sm:$0xf]
      %v1344 = vld [vmem:[#allocation2 + $0x14] sm:$0xf]
      %v1345 = vld [vmem:[#allocation2 + $0x18] sm:$0xf]
      %v1346 = vld [vmem:[#allocation2 + $0x1c] sm:$0xf]
      %v1347 = vld [vmem:[#allocation2 + $0x20] sm:$0xf]
      %v1348 = vld [vmem:[#allocation2 + $0x24] sm:$0xf]
      %v1349 = vld [vmem:[#allocation2 + $0x28] sm:$0xf]
      %v1350 = vld [vmem:[#allocation2 + $0x2c] sm:$0xf]
      %v1351 = vld [vmem:[#allocation2 + $0x30] sm:$0xf]
      %v1352 = vld [vmem:[#allocation2 + $0x34] sm:$0xf]
      %v1353 = vld [vmem:[#allocation2 + $0x38] sm:$0xf]
      %v1354 = vld [vmem:[#allocation2 + $0x3c] sm:$0xf]
      %v1355 = vld [vmem:[#allocation2 + $0x40] sm:$0xf]
      %v1356 = vld [vmem:[#allocation2 + $0x44] sm:$0xf]
      %v1357 = vld [vmem:[#allocation2 + $0x48] sm:$0xf]
      %v1358 = vld [vmem:[#allocation2 + $0x4c] sm:$0xf]
      %v1359 = vld [vmem:[#allocation2 + $0x50] sm:$0xf]
      %v1360 = vld [vmem:[#allocation2 + $0x54] sm:$0xf]
      %v1361 = vld [vmem:[#allocation2 + $0x58] sm:$0xf]
      %v1362 = vld [vmem:[#allocation2 + $0x5c] sm:$0xf]
      %v1363 = vld [vmem:[%s4] sm:$0xf]
      %v1364 = vld [vmem:[%s4 + $0x4] sm:$0xf]
      %v1365 = vld [vmem:[%s4 + $0x8] sm:$0xf]
      %v1366 = vld [vmem:[%s4 + $0xc] sm:$0xf]
      %s1367 = scalar_lea.vmem %s4, 16
      %v1368 = vld [vmem:[%s1367] sm:$0xf]
      %v1369 = vld [vmem:[%s1367 + $0x4] sm:$0xf]
      %v1370 = vld [vmem:[%s1367 + $0x8] sm:$0xf]
      %v1371 = vld [vmem:[%s1367 + $0xc] sm:$0xf]
      %v1396 = vunpack.c.l.b16 %v1339
      %v1397 = vunpack.c.l.b16 %v1340
      %v1398 = vunpack.c.l.b16 %v1341
      %v1399 = vunpack.c.l.b16 %v1342
      %v1400 = vunpack.c.l.b16 %v1343
      %v1401 = vunpack.c.l.b16 %v1344
      %v1402 = vunpack.c.l.b16 %v1345
      %v1403 = vunpack.c.l.b16 %v1346
      %v1404 = vunpack.c.l.b16 %v1347
      %v1405 = vunpack.c.l.b16 %v1348
      %v1406 = vunpack.c.l.b16 %v1349
      %v1407 = vunpack.c.l.b16 %v1350
      %v1408 = vunpack.c.l.b16 %v1351
      %v1409 = vunpack.c.l.b16 %v1352
      %v1410 = vunpack.c.l.b16 %v1353
      %v1411 = vunpack.c.l.b16 %v1354
      %v1412 = vunpack.c.l.b16 %v1355
      %v1413 = vunpack.c.l.b16 %v1356
      %v1414 = vunpack.c.l.b16 %v1357
      %v1415 = vunpack.c.l.b16 %v1358
      %v1416 = vunpack.c.l.b16 %v1359
      %v1417 = vunpack.c.l.b16 %v1360
      %v1418 = vunpack.c.l.b16 %v1361
      %v1419 = vunpack.c.l.b16 %v1362
      %v1420 = vpack.c.b16 %v1397, %v1396
      %v1421 = vpack.c.b16 %v1399, %v1398
      %v1422 = vpack.c.b16 %v1401, %v1400
      %v1423 = vpack.c.b16 %v1403, %v1402
      %v1424 = vpack.c.b16 %v1405, %v1404
      %v1425 = vpack.c.b16 %v1407, %v1406
      %v1426 = vpack.c.b16 %v1409, %v1408
      %v1427 = vpack.c.b16 %v1411, %v1410
      %v1428 = vpack.c.b16 %v1413, %v1412
      %v1429 = vpack.c.b16 %v1415, %v1414
      %v1430 = vpack.c.b16 %v1417, %v1416
      %v1431 = vpack.c.b16 %v1419, %v1418
      %v1436 = vunpack.c.l.b16 %v1368
      %v1437 = vunpack.c.l.b16 %v1369
      %v1438 = vunpack.c.l.b16 %v1370
      %v1439 = vunpack.c.l.b16 %v1371
      %v1440 = vpack.c.b16 %v1437, %v1436
      %v1441 = vpack.c.b16 %v1439, %v1438
      %vm1444 = vcmask 261120
      %v1446 = vsel %vm1444, %v1420, 0
      %v1449 = vsel %vm1444, %v1421, 0
      %v1452 = vsel %vm1444, %v1422, 0
      %v1455 = vsel %vm1444, %v1423, 0
      %v1458 = vsel %vm1444, %v1424, 0
      %v1461 = vsel %vm1444, %v1425, 0
      %v1464 = vsel %vm1444, %v1426, 0
      %v1467 = vsel %vm1444, %v1427, 0
      %v1470 = vsel %vm1444, %v1428, 0
      %v1473 = vsel %vm1444, %v1429, 0
      %v1476 = vsel %vm1444, %v1430, 0
      %v1479 = vsel %vm1444, %v1431, 0
      %1481 = vmatpush.bf16.msra.mxu0 0
      %1482 = vmatpush.bf16.msra.mxu0 0
      %1483 = vmatpush.bf16.msra.mxu0 0
      %1484 = vmatpush.bf16.msra.mxu0 0
      %1485 = vmatpush.bf16.msra.mxu0 0
      %1486 = vmatpush.bf16.msra.mxu0 0
      %1487 = vmatpush.bf16.msra.mxu0 %v1441
      %1488 = vmatpush.bf16.msra.mxu0 %v1440
      %1489 = vmatmul.bf16.gmra.mxu0 %v1446
      %v1490 = vpop.f32.mrf.mxu0
      %v1491 = vadd.f32 0.0, %v1490
      %v1492 = vpop.f32.mrf.mxu0
      %v1493 = vadd.f32 0.0, %v1492
      %1494 = vmatmul.bf16.gmra.mxu0 %v1449
      %v1495 = vpop.f32.mrf.mxu0
      %v1496 = vadd.f32 0.0, %v1495
      %v1497 = vpop.f32.mrf.mxu0
      %v1498 = vadd.f32 0.0, %v1497
      %1499 = vmatmul.bf16.gmra.mxu0 %v1452
      %v1500 = vpop.f32.mrf.mxu0
      %v1501 = vadd.f32 0.0, %v1500
      %v1502 = vpop.f32.mrf.mxu0
      %v1503 = vadd.f32 0.0, %v1502
      %1504 = vmatmul.bf16.gmra.mxu0 %v1455
      %v1505 = vpop.f32.mrf.mxu0
      %v1506 = vadd.f32 0.0, %v1505
      %v1507 = vpop.f32.mrf.mxu0
      %v1508 = vadd.f32 0.0, %v1507
      %1509 = vmatmul.bf16.gmra.mxu0 %v1458
      %v1510 = vpop.f32.mrf.mxu0
      %v1511 = vadd.f32 0.0, %v1510
      %v1512 = vpop.f32.mrf.mxu0
      %v1513 = vadd.f32 0.0, %v1512
      %1514 = vmatmul.bf16.gmra.mxu0 %v1461
      %v1515 = vpop.f32.mrf.mxu0
      %v1516 = vadd.f32 0.0, %v1515
      %v1517 = vpop.f32.mrf.mxu0
      %v1518 = vadd.f32 0.0, %v1517
      %1519 = vmatmul.bf16.gmra.mxu0 %v1464
      %v1520 = vpop.f32.mrf.mxu0
      %v1521 = vadd.f32 0.0, %v1520
      %v1522 = vpop.f32.mrf.mxu0
      %v1523 = vadd.f32 0.0, %v1522
      %1524 = vmatmul.bf16.gmra.mxu0 %v1467
      %v1525 = vpop.f32.mrf.mxu0
      %v1526 = vadd.f32 0.0, %v1525
      %v1527 = vpop.f32.mrf.mxu0
      %v1528 = vadd.f32 0.0, %v1527
      %1529 = vmatmul.bf16.gmra.mxu0 %v1470
      %v1530 = vpop.f32.mrf.mxu0
      %v1531 = vadd.f32 0.0, %v1530
      %v1532 = vpop.f32.mrf.mxu0
      %v1533 = vadd.f32 0.0, %v1532
      %1534 = vmatmul.bf16.gmra.mxu0 %v1473
      %v1535 = vpop.f32.mrf.mxu0
      %v1536 = vadd.f32 0.0, %v1535
      %v1537 = vpop.f32.mrf.mxu0
      %v1538 = vadd.f32 0.0, %v1537
      %1539 = vmatmul.bf16.gmra.mxu0 %v1476
      %v1540 = vpop.f32.mrf.mxu0
      %v1541 = vadd.f32 0.0, %v1540
      %v1542 = vpop.f32.mrf.mxu0
      %v1543 = vadd.f32 0.0, %v1542
      %1544 = vmatmul.bf16.gmra.mxu0 %v1479
      %v1545 = vpop.f32.mrf.mxu0
      %v1546 = vadd.f32 0.0, %v1545
      %v1547 = vpop.f32.mrf.mxu0
      %v1548 = vadd.f32 0.0, %v1547
      %1549 = vdwg.mxu0
      %v1550 = vrot.slane %v1491, 1
      %v1551 = vrot.slane %v1493, 1
      %v1552 = vrot.slane %v1496, 1
      %v1553 = vrot.slane %v1498, 1
      %v1554 = vrot.slane %v1501, 1
      %v1555 = vrot.slane %v1503, 1
      %v1556 = vrot.slane %v1506, 1
      %v1557 = vrot.slane %v1508, 1
      %v1558 = vrot.slane %v1511, 1
      %v1559 = vrot.slane %v1513, 1
      %v1560 = vrot.slane %v1516, 1
      %v1561 = vrot.slane %v1518, 1
      %v1562 = vrot.slane %v1521, 1
      %v1563 = vrot.slane %v1523, 1
      %v1564 = vrot.slane %v1526, 1
      %v1565 = vrot.slane %v1528, 1
      %v1566 = vrot.slane %v1531, 1
      %v1567 = vrot.slane %v1533, 1
      %v1568 = vrot.slane %v1536, 1
      %v1569 = vrot.slane %v1538, 1
      %v1570 = vrot.slane %v1541, 1
      %v1571 = vrot.slane %v1543, 1
      %v1572 = vrot.slane %v1546, 1
      %v1573 = vrot.slane %v1548, 1
      %v1574 = vlaneseq
      %v1575 = vshrl.u32 %v1574, 7
      %vm1576 = vcmp.lt.s32.totalorder %v1575, 7
      %v1577 = vsel %vm1576, %v1572, %v1573
      %v1578 = vsel %vm1576, %v1571, %v1572
      %v1579 = vsel %vm1576, %v1570, %v1571
      %v1580 = vsel %vm1576, %v1569, %v1570
      %v1581 = vsel %vm1576, %v1568, %v1569
      %v1582 = vsel %vm1576, %v1567, %v1568
      %v1583 = vsel %vm1576, %v1566, %v1567
      %v1584 = vsel %vm1576, %v1565, %v1566
      %v1585 = vsel %vm1576, %v1564, %v1565
      %v1586 = vsel %vm1576, %v1563, %v1564
      %v1587 = vsel %vm1576, %v1562, %v1563
      %v1588 = vsel %vm1576, %v1561, %v1562
      %v1589 = vsel %vm1576, %v1560, %v1561
      %v1590 = vsel %vm1576, %v1559, %v1560
      %v1591 = vsel %vm1576, %v1558, %v1559
      %v1592 = vsel %vm1576, %v1557, %v1558
      %v1593 = vsel %vm1576, %v1556, %v1557
      %v1594 = vsel %vm1576, %v1555, %v1556
      %v1595 = vsel %vm1576, %v1554, %v1555
      %v1596 = vsel %vm1576, %v1553, %v1554
      %v1597 = vsel %vm1576, %v1552, %v1553
      %v1598 = vsel %vm1576, %v1551, %v1552
      %v1599 = vsel %vm1576, %v1550, %v1551
      %v1600 = vsel %vm1576, %v1573, %v1550
      %v1605 = vunpack.c.l.b16 %v1363
      %v1606 = vunpack.c.l.b16 %v1364
      %v1607 = vunpack.c.l.b16 %v1365
      %v1608 = vunpack.c.l.b16 %v1366
      %v1609 = vpack.c.b16 %v1606, %v1605
      %v1610 = vpack.c.b16 %v1608, %v1607
      %1613 = vmatpush.bf16.msra.mxu0 0
      %1614 = vmatpush.bf16.msra.mxu0 0
      %1615 = vmatpush.bf16.msra.mxu0 0
      %1616 = vmatpush.bf16.msra.mxu0 0
      %1617 = vmatpush.bf16.msra.mxu0 0
      %1618 = vmatpush.bf16.msra.mxu0 0
      %1619 = vmatpush.bf16.msra.mxu0 %v1610
      %1620 = vmatpush.bf16.msra.mxu0 %v1609
      %1621 = vmatmul.bf16.gmra.mxu0 %v1446
      %v1622 = vpop.f32.mrf.mxu0
      %v1623 = vadd.f32 %v1599, %v1622
      %v1624 = vpop.f32.mrf.mxu0
      %v1625 = vadd.f32 %v1598, %v1624
      %1626 = vmatmul.bf16.gmra.mxu0 %v1449
      %v1627 = vpop.f32.mrf.mxu0
      %v1628 = vadd.f32 %v1597, %v1627
      %v1629 = vpop.f32.mrf.mxu0
      %v1630 = vadd.f32 %v1596, %v1629
      %1631 = vmatmul.bf16.gmra.mxu0 %v1452
      %v1632 = vpop.f32.mrf.mxu0
      %v1633 = vadd.f32 %v1595, %v1632
      %v1634 = vpop.f32.mrf.mxu0
      %v1635 = vadd.f32 %v1594, %v1634
      %1636 = vmatmul.bf16.gmra.mxu0 %v1455
      %v1637 = vpop.f32.mrf.mxu0
      %v1638 = vadd.f32 %v1593, %v1637
      %v1639 = vpop.f32.mrf.mxu0
      %v1640 = vadd.f32 %v1592, %v1639
      %1641 = vmatmul.bf16.gmra.mxu0 %v1458
      %v1642 = vpop.f32.mrf.mxu0
      %v1643 = vadd.f32 %v1591, %v1642
      %v1644 = vpop.f32.mrf.mxu0
      %v1645 = vadd.f32 %v1590, %v1644
      %1646 = vmatmul.bf16.gmra.mxu0 %v1461
      %v1647 = vpop.f32.mrf.mxu0
      %v1648 = vadd.f32 %v1589, %v1647
      %v1649 = vpop.f32.mrf.mxu0
      %v1650 = vadd.f32 %v1588, %v1649
      %1651 = vmatmul.bf16.gmra.mxu0 %v1464
      %v1652 = vpop.f32.mrf.mxu0
      %v1653 = vadd.f32 %v1587, %v1652
      %v1654 = vpop.f32.mrf.mxu0
      %v1655 = vadd.f32 %v1586, %v1654
      %1656 = vmatmul.bf16.gmra.mxu0 %v1467
      %v1657 = vpop.f32.mrf.mxu0
      %v1658 = vadd.f32 %v1585, %v1657
      %v1659 = vpop.f32.mrf.mxu0
      %v1660 = vadd.f32 %v1584, %v1659
      %1661 = vmatmul.bf16.gmra.mxu0 %v1470
      %v1662 = vpop.f32.mrf.mxu0
      %v1663 = vadd.f32 %v1583, %v1662
      %v1664 = vpop.f32.mrf.mxu0
      %v1665 = vadd.f32 %v1582, %v1664
      %1666 = vmatmul.bf16.gmra.mxu0 %v1473
      %v1667 = vpop.f32.mrf.mxu0
      %v1668 = vadd.f32 %v1581, %v1667
      %v1669 = vpop.f32.mrf.mxu0
      %v1670 = vadd.f32 %v1580, %v1669
      %1671 = vmatmul.bf16.gmra.mxu0 %v1476
      %v1672 = vpop.f32.mrf.mxu0
      %v1673 = vadd.f32 %v1579, %v1672
      %v1674 = vpop.f32.mrf.mxu0
      %v1675 = vadd.f32 %v1578, %v1674
      %1676 = vmatmul.bf16.gmra.mxu0 %v1479
      %v1677 = vpop.f32.mrf.mxu0
      %v1678 = vadd.f32 %v1577, %v1677
      %v1679 = vpop.f32.mrf.mxu0
      %v1680 = vadd.f32 %v1600, %v1679
      %1681 = vdwg.mxu0
      %s1682 = scalar_lea.vmem %s4, 32
      %v1683 = vld [vmem:[%s1682] sm:$0xf]
      %v1684 = vld [vmem:[%s1682 + $0x4] sm:$0xf]
      %v1685 = vld [vmem:[%s1682 + $0x8] sm:$0xf]
      %v1686 = vld [vmem:[%s1682 + $0xc] sm:$0xf]
      %v1691 = vunpack.c.l.b16 %v1683
      %v1692 = vunpack.c.l.b16 %v1684
      %v1693 = vunpack.c.l.b16 %v1685
      %v1694 = vunpack.c.l.b16 %v1686
      %v1695 = vpack.c.b16 %v1692, %v1691
      %v1696 = vpack.c.b16 %v1694, %v1693
      %1699 = vmatpush.bf16.msra.mxu0 0
      %1700 = vmatpush.bf16.msra.mxu0 0
      %1701 = vmatpush.bf16.msra.mxu0 0
      %1702 = vmatpush.bf16.msra.mxu0 0
      %1703 = vmatpush.bf16.msra.mxu0 0
      %1704 = vmatpush.bf16.msra.mxu0 0
      %1705 = vmatpush.bf16.msra.mxu0 %v1696
      %1706 = vmatpush.bf16.msra.mxu0 %v1695
      %1707 = vmatmul.bf16.gmra.mxu0 %v1446
      %v1708 = vpop.f32.mrf.mxu0
      %v1709 = vadd.f32 0.0, %v1708
      %v1710 = vpop.f32.mrf.mxu0
      %v1711 = vadd.f32 0.0, %v1710
      %1712 = vmatmul.bf16.gmra.mxu0 %v1449
      %v1713 = vpop.f32.mrf.mxu0
      %v1714 = vadd.f32 0.0, %v1713
      %v1715 = vpop.f32.mrf.mxu0
      %v1716 = vadd.f32 0.0, %v1715
      %1717 = vmatmul.bf16.gmra.mxu0 %v1452
      %v1718 = vpop.f32.mrf.mxu0
      %v1719 = vadd.f32 0.0, %v1718
      %v1720 = vpop.f32.mrf.mxu0
      %v1721 = vadd.f32 0.0, %v1720
      %1722 = vmatmul.bf16.gmra.mxu0 %v1455
      %v1723 = vpop.f32.mrf.mxu0
      %v1724 = vadd.f32 0.0, %v1723
      %v1725 = vpop.f32.mrf.mxu0
      %v1726 = vadd.f32 0.0, %v1725
      %1727 = vmatmul.bf16.gmra.mxu0 %v1458
      %v1728 = vpop.f32.mrf.mxu0
      %v1729 = vadd.f32 0.0, %v1728
      %v1730 = vpop.f32.mrf.mxu0
      %v1731 = vadd.f32 0.0, %v1730
      %1732 = vmatmul.bf16.gmra.mxu0 %v1461
      %v1733 = vpop.f32.mrf.mxu0
      %v1734 = vadd.f32 0.0, %v1733
      %v1735 = vpop.f32.mrf.mxu0
      %v1736 = vadd.f32 0.0, %v1735
      %1737 = vmatmul.bf16.gmra.mxu0 %v1464
      %v1738 = vpop.f32.mrf.mxu0
      %v1739 = vadd.f32 0.0, %v1738
      %v1740 = vpop.f32.mrf.mxu0
      %v1741 = vadd.f32 0.0, %v1740
      %1742 = vmatmul.bf16.gmra.mxu0 %v1467
      %v1743 = vpop.f32.mrf.mxu0
      %v1744 = vadd.f32 0.0, %v1743
      %v1745 = vpop.f32.mrf.mxu0
      %v1746 = vadd.f32 0.0, %v1745
      %1747 = vmatmul.bf16.gmra.mxu0 %v1470
      %v1748 = vpop.f32.mrf.mxu0
      %v1749 = vadd.f32 0.0, %v1748
      %v1750 = vpop.f32.mrf.mxu0
      %v1751 = vadd.f32 0.0, %v1750
      %1752 = vmatmul.bf16.gmra.mxu0 %v1473
      %v1753 = vpop.f32.mrf.mxu0
      %v1754 = vadd.f32 0.0, %v1753
      %v1755 = vpop.f32.mrf.mxu0
      %v1756 = vadd.f32 0.0, %v1755
      %1757 = vmatmul.bf16.gmra.mxu0 %v1476
      %v1758 = vpop.f32.mrf.mxu0
      %v1759 = vadd.f32 0.0, %v1758
      %v1760 = vpop.f32.mrf.mxu0
      %v1761 = vadd.f32 0.0, %v1760
      %1762 = vmatmul.bf16.gmra.mxu0 %v1479
      %v1763 = vpop.f32.mrf.mxu0
      %v1764 = vadd.f32 0.0, %v1763
      %v1765 = vpop.f32.mrf.mxu0
      %v1766 = vadd.f32 0.0, %v1765
      %1767 = vdwg.mxu0
      %v1768 = vrot.slane %v1709, 2
      %v1769 = vrot.slane %v1711, 2
      %v1770 = vrot.slane %v1714, 2
      %v1771 = vrot.slane %v1716, 2
      %v1772 = vrot.slane %v1719, 2
      %v1773 = vrot.slane %v1721, 2
      %v1774 = vrot.slane %v1724, 2
      %v1775 = vrot.slane %v1726, 2
      %v1776 = vrot.slane %v1729, 2
      %v1777 = vrot.slane %v1731, 2
      %v1778 = vrot.slane %v1734, 2
      %v1779 = vrot.slane %v1736, 2
      %v1780 = vrot.slane %v1739, 2
      %v1781 = vrot.slane %v1741, 2
      %v1782 = vrot.slane %v1744, 2
      %v1783 = vrot.slane %v1746, 2
      %v1784 = vrot.slane %v1749, 2
      %v1785 = vrot.slane %v1751, 2
      %v1786 = vrot.slane %v1754, 2
      %v1787 = vrot.slane %v1756, 2
      %v1788 = vrot.slane %v1759, 2
      %v1789 = vrot.slane %v1761, 2
      %v1790 = vrot.slane %v1764, 2
      %v1791 = vrot.slane %v1766, 2
      %vm1792 = vcmp.lt.s32.totalorder %v1575, 6
      %v1793 = vsel %vm1792, %v1790, %v1791
      %v1794 = vsel %vm1792, %v1789, %v1790
      %v1795 = vsel %vm1792, %v1788, %v1789
      %v1796 = vsel %vm1792, %v1787, %v1788
      %v1797 = vsel %vm1792, %v1786, %v1787
      %v1798 = vsel %vm1792, %v1785, %v1786
      %v1799 = vsel %vm1792, %v1784, %v1785
      %v1800 = vsel %vm1792, %v1783, %v1784
      %v1801 = vsel %vm1792, %v1782, %v1783
      %v1802 = vsel %vm1792, %v1781, %v1782
      %v1803 = vsel %vm1792, %v1780, %v1781
      %v1804 = vsel %vm1792, %v1779, %v1780
      %v1805 = vsel %vm1792, %v1778, %v1779
      %v1806 = vsel %vm1792, %v1777, %v1778
      %v1807 = vsel %vm1792, %v1776, %v1777
      %v1808 = vsel %vm1792, %v1775, %v1776
      %v1809 = vsel %vm1792, %v1774, %v1775
      %v1810 = vsel %vm1792, %v1773, %v1774
      %v1811 = vsel %vm1792, %v1772, %v1773
      %v1812 = vsel %vm1792, %v1771, %v1772
      %v1813 = vsel %vm1792, %v1770, %v1771
      %v1814 = vsel %vm1792, %v1769, %v1770
      %v1815 = vsel %vm1792, %v1768, %v1769
      %v1816 = vsel %vm1792, %v1791, %v1768
      %v1817 = vadd.f32 %v1623, %v1815
      %v1818 = vadd.f32 %v1625, %v1814
      %v1819 = vadd.f32 %v1628, %v1813
      %v1820 = vadd.f32 %v1630, %v1812
      %v1821 = vadd.f32 %v1633, %v1811
      %v1822 = vadd.f32 %v1635, %v1810
      %v1823 = vadd.f32 %v1638, %v1809
      %v1824 = vadd.f32 %v1640, %v1808
      %v1825 = vadd.f32 %v1643, %v1807
      %v1826 = vadd.f32 %v1645, %v1806
      %v1827 = vadd.f32 %v1648, %v1805
      %v1828 = vadd.f32 %v1650, %v1804
      %v1829 = vadd.f32 %v1653, %v1803
      %v1830 = vadd.f32 %v1655, %v1802
      %v1831 = vadd.f32 %v1658, %v1801
      %v1832 = vadd.f32 %v1660, %v1800
      %v1833 = vadd.f32 %v1663, %v1799
      %v1834 = vadd.f32 %v1665, %v1798
      %v1835 = vadd.f32 %v1668, %v1797
      %v1836 = vadd.f32 %v1670, %v1796
      %v1837 = vadd.f32 %v1673, %v1795
      %v1838 = vadd.f32 %v1675, %v1794
      %v1839 = vadd.f32 %v1678, %v1793
      %v1840 = vadd.f32 %v1680, %v1816
      %s1841 = scalar_lea.vmem [#allocation2], 12
      %v1842 = vld [vmem:[%s1841] sm:$0xf]
      %v1843 = vld [vmem:[%s1841 + $0x4] sm:$0xf]
      %v1844 = vld [vmem:[%s1841 + $0x8] sm:$0xf]
      %v1845 = vld [vmem:[%s1841 + $0xc] sm:$0xf]
      %v1846 = vld [vmem:[%s1841 + $0x10] sm:$0xf]
      %v1847 = vld [vmem:[%s1841 + $0x14] sm:$0xf]
      %v1848 = vld [vmem:[%s1841 + $0x18] sm:$0xf]
      %v1849 = vld [vmem:[%s1841 + $0x1c] sm:$0xf]
      %v1850 = vld [vmem:[%s1841 + $0x20] sm:$0xf]
      %v1851 = vld [vmem:[%s1841 + $0x24] sm:$0xf]
      %v1852 = vld [vmem:[%s1841 + $0x28] sm:$0xf]
      %v1853 = vld [vmem:[%s1841 + $0x2c] sm:$0xf]
      %v1854 = vld [vmem:[%s1841 + $0x30] sm:$0xf]
      %v1855 = vld [vmem:[%s1841 + $0x34] sm:$0xf]
      %v1856 = vld [vmem:[%s1841 + $0x38] sm:$0xf]
      %v1857 = vld [vmem:[%s1841 + $0x3c] sm:$0xf]
      %v1858 = vld [vmem:[%s1841 + $0x40] sm:$0xf]
      %v1859 = vld [vmem:[%s1841 + $0x44] sm:$0xf]
      %v1860 = vld [vmem:[%s1841 + $0x48] sm:$0xf]
      %v1861 = vld [vmem:[%s1841 + $0x4c] sm:$0xf]
      %v1862 = vld [vmem:[%s1841 + $0x50] sm:$0xf]
      %v1863 = vld [vmem:[%s1841 + $0x54] sm:$0xf]
      %v1864 = vld [vmem:[%s1841 + $0x58] sm:$0xf]
      %v1865 = vld [vmem:[%s1841 + $0x5c] sm:$0xf]
      %s1866 = scalar_lea.vmem %s4, 48
      %v1867 = vld [vmem:[%s1866] sm:$0xf]
      %v1868 = vld [vmem:[%s1866 + $0x4] sm:$0xf]
      %v1869 = vld [vmem:[%s1866 + $0x8] sm:$0xf]
      %v1870 = vld [vmem:[%s1866 + $0xc] sm:$0xf]
      %v1895 = vunpack.c.l.b16 %v1842
      %v1896 = vunpack.c.l.b16 %v1843
      %v1897 = vunpack.c.l.b16 %v1844
      %v1898 = vunpack.c.l.b16 %v1845
      %v1899 = vunpack.c.l.b16 %v1846
      %v1900 = vunpack.c.l.b16 %v1847
      %v1901 = vunpack.c.l.b16 %v1848
      %v1902 = vunpack.c.l.b16 %v1849
      %v1903 = vunpack.c.l.b16 %v1850
      %v1904 = vunpack.c.l.b16 %v1851
      %v1905 = vunpack.c.l.b16 %v1852
      %v1906 = vunpack.c.l.b16 %v1853
      %v1907 = vunpack.c.l.b16 %v1854
      %v1908 = vunpack.c.l.b16 %v1855
      %v1909 = vunpack.c.l.b16 %v1856
      %v1910 = vunpack.c.l.b16 %v1857
      %v1911 = vunpack.c.l.b16 %v1858
      %v1912 = vunpack.c.l.b16 %v1859
      %v1913 = vunpack.c.l.b16 %v1860
      %v1914 = vunpack.c.l.b16 %v1861
      %v1915 = vunpack.c.l.b16 %v1862
      %v1916 = vunpack.c.l.b16 %v1863
      %v1917 = vunpack.c.l.b16 %v1864
      %v1918 = vunpack.c.l.b16 %v1865
      %v1919 = vpack.c.b16 %v1896, %v1895
      %v1920 = vpack.c.b16 %v1898, %v1897
      %v1921 = vpack.c.b16 %v1900, %v1899
      %v1922 = vpack.c.b16 %v1902, %v1901
      %v1923 = vpack.c.b16 %v1904, %v1903
      %v1924 = vpack.c.b16 %v1906, %v1905
      %v1925 = vpack.c.b16 %v1908, %v1907
      %v1926 = vpack.c.b16 %v1910, %v1909
      %v1927 = vpack.c.b16 %v1912, %v1911
      %v1928 = vpack.c.b16 %v1914, %v1913
      %v1929 = vpack.c.b16 %v1916, %v1915
      %v1930 = vpack.c.b16 %v1918, %v1917
      %v1935 = vunpack.c.l.b16 %v1867
      %v1936 = vunpack.c.l.b16 %v1868
      %v1937 = vunpack.c.l.b16 %v1869
      %v1938 = vunpack.c.l.b16 %v1870
      %v1939 = vpack.c.b16 %v1936, %v1935
      %v1940 = vpack.c.b16 %v1938, %v1937
      %v1944 = vsel %vm1444, %v1919, 0
      %v1947 = vsel %vm1444, %v1920, 0
      %v1950 = vsel %vm1444, %v1921, 0
      %v1953 = vsel %vm1444, %v1922, 0
      %v1956 = vsel %vm1444, %v1923, 0
      %v1959 = vsel %vm1444, %v1924, 0
      %v1962 = vsel %vm1444, %v1925, 0
      %v1965 = vsel %vm1444, %v1926, 0
      %v1968 = vsel %vm1444, %v1927, 0
      %v1971 = vsel %vm1444, %v1928, 0
      %v1974 = vsel %vm1444, %v1929, 0
      %v1977 = vsel %vm1444, %v1930, 0
      %1979 = vmatpush.bf16.msra.mxu0 0
      %1980 = vmatpush.bf16.msra.mxu0 0
      %1981 = vmatpush.bf16.msra.mxu0 0
      %1982 = vmatpush.bf16.msra.mxu0 0
      %1983 = vmatpush.bf16.msra.mxu0 0
      %1984 = vmatpush.bf16.msra.mxu0 0
      %1985 = vmatpush.bf16.msra.mxu0 %v1940
      %1986 = vmatpush.bf16.msra.mxu0 %v1939
      %1987 = vmatmul.bf16.gmra.mxu0 %v1944
      %v1988 = vpop.f32.mrf.mxu0
      %v1989 = vadd.f32 0.0, %v1988
      %v1990 = vpop.f32.mrf.mxu0
      %v1991 = vadd.f32 0.0, %v1990
      %1992 = vmatmul.bf16.gmra.mxu0 %v1947
      %v1993 = vpop.f32.mrf.mxu0
      %v1994 = vadd.f32 0.0, %v1993
      %v1995 = vpop.f32.mrf.mxu0
      %v1996 = vadd.f32 0.0, %v1995
      %1997 = vmatmul.bf16.gmra.mxu0 %v1950
      %v1998 = vpop.f32.mrf.mxu0
      %v1999 = vadd.f32 0.0, %v1998
      %v2000 = vpop.f32.mrf.mxu0
      %v2001 = vadd.f32 0.0, %v2000
      %2002 = vmatmul.bf16.gmra.mxu0 %v1953
      %v2003 = vpop.f32.mrf.mxu0
      %v2004 = vadd.f32 0.0, %v2003
      %v2005 = vpop.f32.mrf.mxu0
      %v2006 = vadd.f32 0.0, %v2005
      %2007 = vmatmul.bf16.gmra.mxu0 %v1956
      %v2008 = vpop.f32.mrf.mxu0
      %v2009 = vadd.f32 0.0, %v2008
      %v2010 = vpop.f32.mrf.mxu0
      %v2011 = vadd.f32 0.0, %v2010
      %2012 = vmatmul.bf16.gmra.mxu0 %v1959
      %v2013 = vpop.f32.mrf.mxu0
      %v2014 = vadd.f32 0.0, %v2013
      %v2015 = vpop.f32.mrf.mxu0
      %v2016 = vadd.f32 0.0, %v2015
      %2017 = vmatmul.bf16.gmra.mxu0 %v1962
      %v2018 = vpop.f32.mrf.mxu0
      %v2019 = vadd.f32 0.0, %v2018
      %v2020 = vpop.f32.mrf.mxu0
      %v2021 = vadd.f32 0.0, %v2020
      %2022 = vmatmul.bf16.gmra.mxu0 %v1965
      %v2023 = vpop.f32.mrf.mxu0
      %v2024 = vadd.f32 0.0, %v2023
      %v2025 = vpop.f32.mrf.mxu0
      %v2026 = vadd.f32 0.0, %v2025
      %2027 = vmatmul.bf16.gmra.mxu0 %v1968
      %v2028 = vpop.f32.mrf.mxu0
      %v2029 = vadd.f32 0.0, %v2028
      %v2030 = vpop.f32.mrf.mxu0
      %v2031 = vadd.f32 0.0, %v2030
      %2032 = vmatmul.bf16.gmra.mxu0 %v1971
      %v2033 = vpop.f32.mrf.mxu0
      %v2034 = vadd.f32 0.0, %v2033
      %v2035 = vpop.f32.mrf.mxu0
      %v2036 = vadd.f32 0.0, %v2035
      %2037 = vmatmul.bf16.gmra.mxu0 %v1974
      %v2038 = vpop.f32.mrf.mxu0
      %v2039 = vadd.f32 0.0, %v2038
      %v2040 = vpop.f32.mrf.mxu0
      %v2041 = vadd.f32 0.0, %v2040
      %2042 = vmatmul.bf16.gmra.mxu0 %v1977
      %v2043 = vpop.f32.mrf.mxu0
      %v2044 = vadd.f32 0.0, %v2043
      %v2045 = vpop.f32.mrf.mxu0
      %v2046 = vadd.f32 0.0, %v2045
      %2047 = vdwg.mxu0
      %v2048 = vadd.f32 %v1817, %v1989
      %v2049 = vadd.f32 %v1818, %v1991
      %v2050 = vadd.f32 %v1819, %v1994
      %v2051 = vadd.f32 %v1820, %v1996
      %v2052 = vadd.f32 %v1821, %v1999
      %v2053 = vadd.f32 %v1822, %v2001
      %v2054 = vadd.f32 %v1823, %v2004
      %v2055 = vadd.f32 %v1824, %v2006
      %v2056 = vadd.f32 %v1825, %v2009
      %v2057 = vadd.f32 %v1826, %v2011
      %v2058 = vadd.f32 %v1827, %v2014
      %v2059 = vadd.f32 %v1828, %v2016
      %v2060 = vadd.f32 %v1829, %v2019
      %v2061 = vadd.f32 %v1830, %v2021
      %v2062 = vadd.f32 %v1831, %v2024
      %v2063 = vadd.f32 %v1832, %v2026
      %v2064 = vadd.f32 %v1833, %v2029
      %v2065 = vadd.f32 %v1834, %v2031
      %v2066 = vadd.f32 %v1835, %v2034
      %v2067 = vadd.f32 %v1836, %v2036
      %v2068 = vadd.f32 %v1837, %v2039
      %v2069 = vadd.f32 %v1838, %v2041
      %v2070 = vadd.f32 %v1839, %v2044
      %v2071 = vadd.f32 %v1840, %v2046
      %s2072 = scalar_lea.vmem %s4, 64
      %v2073 = vld [vmem:[%s2072] sm:$0xf]
      %v2074 = vld [vmem:[%s2072 + $0x4] sm:$0xf]
      %v2075 = vld [vmem:[%s2072 + $0x8] sm:$0xf]
      %v2076 = vld [vmem:[%s2072 + $0xc] sm:$0xf]
      %v2081 = vunpack.c.l.b16 %v2073
      %v2082 = vunpack.c.l.b16 %v2074
      %v2083 = vunpack.c.l.b16 %v2075
      %v2084 = vunpack.c.l.b16 %v2076
      %v2085 = vpack.c.b16 %v2082, %v2081
      %v2086 = vpack.c.b16 %v2084, %v2083
      %2089 = vmatpush.bf16.msra.mxu0 0
      %2090 = vmatpush.bf16.msra.mxu0 0
      %2091 = vmatpush.bf16.msra.mxu0 0
      %2092 = vmatpush.bf16.msra.mxu0 0
      %2093 = vmatpush.bf16.msra.mxu0 0
      %2094 = vmatpush.bf16.msra.mxu0 0
      %2095 = vmatpush.bf16.msra.mxu0 %v2086
      %2096 = vmatpush.bf16.msra.mxu0 %v2085
      %2097 = vmatmul.bf16.gmra.mxu0 %v1944
      %v2098 = vpop.f32.mrf.mxu0
      %v2099 = vadd.f32 0.0, %v2098
      %v2100 = vpop.f32.mrf.mxu0
      %v2101 = vadd.f32 0.0, %v2100
      %2102 = vmatmul.bf16.gmra.mxu0 %v1947
      %v2103 = vpop.f32.mrf.mxu0
      %v2104 = vadd.f32 0.0, %v2103
      %v2105 = vpop.f32.mrf.mxu0
      %v2106 = vadd.f32 0.0, %v2105
      %2107 = vmatmul.bf16.gmra.mxu0 %v1950
      %v2108 = vpop.f32.mrf.mxu0
      %v2109 = vadd.f32 0.0, %v2108
      %v2110 = vpop.f32.mrf.mxu0
      %v2111 = vadd.f32 0.0, %v2110
      %2112 = vmatmul.bf16.gmra.mxu0 %v1953
      %v2113 = vpop.f32.mrf.mxu0
      %v2114 = vadd.f32 0.0, %v2113
      %v2115 = vpop.f32.mrf.mxu0
      %v2116 = vadd.f32 0.0, %v2115
      %2117 = vmatmul.bf16.gmra.mxu0 %v1956
      %v2118 = vpop.f32.mrf.mxu0
      %v2119 = vadd.f32 0.0, %v2118
      %v2120 = vpop.f32.mrf.mxu0
      %v2121 = vadd.f32 0.0, %v2120
      %2122 = vmatmul.bf16.gmra.mxu0 %v1959
      %v2123 = vpop.f32.mrf.mxu0
      %v2124 = vadd.f32 0.0, %v2123
      %v2125 = vpop.f32.mrf.mxu0
      %v2126 = vadd.f32 0.0, %v2125
      %2127 = vmatmul.bf16.gmra.mxu0 %v1962
      %v2128 = vpop.f32.mrf.mxu0
      %v2129 = vadd.f32 0.0, %v2128
      %v2130 = vpop.f32.mrf.mxu0
      %v2131 = vadd.f32 0.0, %v2130
      %2132 = vmatmul.bf16.gmra.mxu0 %v1965
      %v2133 = vpop.f32.mrf.mxu0
      %v2134 = vadd.f32 0.0, %v2133
      %v2135 = vpop.f32.mrf.mxu0
      %v2136 = vadd.f32 0.0, %v2135
      %2137 = vmatmul.bf16.gmra.mxu0 %v1968
      %v2138 = vpop.f32.mrf.mxu0
      %v2139 = vadd.f32 0.0, %v2138
      %v2140 = vpop.f32.mrf.mxu0
      %v2141 = vadd.f32 0.0, %v2140
      %2142 = vmatmul.bf16.gmra.mxu0 %v1971
      %v2143 = vpop.f32.mrf.mxu0
      %v2144 = vadd.f32 0.0, %v2143
      %v2145 = vpop.f32.mrf.mxu0
      %v2146 = vadd.f32 0.0, %v2145
      %2147 = vmatmul.bf16.gmra.mxu0 %v1974
      %v2148 = vpop.f32.mrf.mxu0
      %v2149 = vadd.f32 0.0, %v2148
      %v2150 = vpop.f32.mrf.mxu0
      %v2151 = vadd.f32 0.0, %v2150
      %2152 = vmatmul.bf16.gmra.mxu0 %v1977
      %v2153 = vpop.f32.mrf.mxu0
      %v2154 = vadd.f32 0.0, %v2153
      %v2155 = vpop.f32.mrf.mxu0
      %v2156 = vadd.f32 0.0, %v2155
      %2157 = vdwg.mxu0
      %v2158 = vrot.slane %v2099, 1
      %v2159 = vrot.slane %v2101, 1
      %v2160 = vrot.slane %v2104, 1
      %v2161 = vrot.slane %v2106, 1
      %v2162 = vrot.slane %v2109, 1
      %v2163 = vrot.slane %v2111, 1
      %v2164 = vrot.slane %v2114, 1
      %v2165 = vrot.slane %v2116, 1
      %v2166 = vrot.slane %v2119, 1
      %v2167 = vrot.slane %v2121, 1
      %v2168 = vrot.slane %v2124, 1
      %v2169 = vrot.slane %v2126, 1
      %v2170 = vrot.slane %v2129, 1
      %v2171 = vrot.slane %v2131, 1
      %v2172 = vrot.slane %v2134, 1
      %v2173 = vrot.slane %v2136, 1
      %v2174 = vrot.slane %v2139, 1
      %v2175 = vrot.slane %v2141, 1
      %v2176 = vrot.slane %v2144, 1
      %v2177 = vrot.slane %v2146, 1
      %v2178 = vrot.slane %v2149, 1
      %v2179 = vrot.slane %v2151, 1
      %v2180 = vrot.slane %v2154, 1
      %v2181 = vrot.slane %v2156, 1
      %v2182 = vsel %vm1576, %v2180, %v2181
      %v2183 = vsel %vm1576, %v2179, %v2180
      %v2184 = vsel %vm1576, %v2178, %v2179
      %v2185 = vsel %vm1576, %v2177, %v2178
      %v2186 = vsel %vm1576, %v2176, %v2177
      %v2187 = vsel %vm1576, %v2175, %v2176
      %v2188 = vsel %vm1576, %v2174, %v2175
      %v2189 = vsel %vm1576, %v2173, %v2174
      %v2190 = vsel %vm1576, %v2172, %v2173
      %v2191 = vsel %vm1576, %v2171, %v2172
      %v2192 = vsel %vm1576, %v2170, %v2171
      %v2193 = vsel %vm1576, %v2169, %v2170
      %v2194 = vsel %vm1576, %v2168, %v2169
      %v2195 = vsel %vm1576, %v2167, %v2168
      %v2196 = vsel %vm1576, %v2166, %v2167
      %v2197 = vsel %vm1576, %v2165, %v2166
      %v2198 = vsel %vm1576, %v2164, %v2165
      %v2199 = vsel %vm1576, %v2163, %v2164
      %v2200 = vsel %vm1576, %v2162, %v2163
      %v2201 = vsel %vm1576, %v2161, %v2162
      %v2202 = vsel %vm1576, %v2160, %v2161
      %v2203 = vsel %vm1576, %v2159, %v2160
      %v2204 = vsel %vm1576, %v2158, %v2159
      %v2205 = vsel %vm1576, %v2181, %v2158
      %v2206 = vadd.f32 %v2048, %v2204
      %v2207 = vadd.f32 %v2049, %v2203
      %v2208 = vadd.f32 %v2050, %v2202
      %v2209 = vadd.f32 %v2051, %v2201
      %v2210 = vadd.f32 %v2052, %v2200
      %v2211 = vadd.f32 %v2053, %v2199
      %v2212 = vadd.f32 %v2054, %v2198
      %v2213 = vadd.f32 %v2055, %v2197
      %v2214 = vadd.f32 %v2056, %v2196
      %v2215 = vadd.f32 %v2057, %v2195
      %v2216 = vadd.f32 %v2058, %v2194
      %v2217 = vadd.f32 %v2059, %v2193
      %v2218 = vadd.f32 %v2060, %v2192
      %v2219 = vadd.f32 %v2061, %v2191
      %v2220 = vadd.f32 %v2062, %v2190
      %v2221 = vadd.f32 %v2063, %v2189
      %v2222 = vadd.f32 %v2064, %v2188
      %v2223 = vadd.f32 %v2065, %v2187
      %v2224 = vadd.f32 %v2066, %v2186
      %v2225 = vadd.f32 %v2067, %v2185
      %v2226 = vadd.f32 %v2068, %v2184
      %v2227 = vadd.f32 %v2069, %v2183
      %v2228 = vadd.f32 %v2070, %v2182
      %v2229 = vadd.f32 %v2071, %v2205
      %s2230 = scalar_lea.vmem %s4, 80
      %v2231 = vld [vmem:[%s2230] sm:$0xf]
      %v2232 = vld [vmem:[%s2230 + $0x4] sm:$0xf]
      %v2233 = vld [vmem:[%s2230 + $0x8] sm:$0xf]
      %v2234 = vld [vmem:[%s2230 + $0xc] sm:$0xf]
      %v2239 = vunpack.c.l.b16 %v2231
      %v2240 = vunpack.c.l.b16 %v2232
      %v2241 = vunpack.c.l.b16 %v2233
      %v2242 = vunpack.c.l.b16 %v2234
      %v2243 = vpack.c.b16 %v2240, %v2239
      %v2244 = vpack.c.b16 %v2242, %v2241
      %2247 = vmatpush.bf16.msra.mxu0 0
      %2248 = vmatpush.bf16.msra.mxu0 0
      %2249 = vmatpush.bf16.msra.mxu0 0
      %2250 = vmatpush.bf16.msra.mxu0 0
      %2251 = vmatpush.bf16.msra.mxu0 0
      %2252 = vmatpush.bf16.msra.mxu0 0
      %2253 = vmatpush.bf16.msra.mxu0 %v2244
      %2254 = vmatpush.bf16.msra.mxu0 %v2243
      %2255 = vmatmul.bf16.gmra.mxu0 %v1944
      %v2256 = vpop.f32.mrf.mxu0
      %v2257 = vadd.f32 0.0, %v2256
      %v2258 = vpop.f32.mrf.mxu0
      %v2259 = vadd.f32 0.0, %v2258
      %2260 = vmatmul.bf16.gmra.mxu0 %v1947
      %v2261 = vpop.f32.mrf.mxu0
      %v2262 = vadd.f32 0.0, %v2261
      %v2263 = vpop.f32.mrf.mxu0
      %v2264 = vadd.f32 0.0, %v2263
      %2265 = vmatmul.bf16.gmra.mxu0 %v1950
      %v2266 = vpop.f32.mrf.mxu0
      %v2267 = vadd.f32 0.0, %v2266
      %v2268 = vpop.f32.mrf.mxu0
      %v2269 = vadd.f32 0.0, %v2268
      %2270 = vmatmul.bf16.gmra.mxu0 %v1953
      %v2271 = vpop.f32.mrf.mxu0
      %v2272 = vadd.f32 0.0, %v2271
      %v2273 = vpop.f32.mrf.mxu0
      %v2274 = vadd.f32 0.0, %v2273
      %2275 = vmatmul.bf16.gmra.mxu0 %v1956
      %v2276 = vpop.f32.mrf.mxu0
      %v2277 = vadd.f32 0.0, %v2276
      %v2278 = vpop.f32.mrf.mxu0
      %v2279 = vadd.f32 0.0, %v2278
      %2280 = vmatmul.bf16.gmra.mxu0 %v1959
      %v2281 = vpop.f32.mrf.mxu0
      %v2282 = vadd.f32 0.0, %v2281
      %v2283 = vpop.f32.mrf.mxu0
      %v2284 = vadd.f32 0.0, %v2283
      %2285 = vmatmul.bf16.gmra.mxu0 %v1962
      %v2286 = vpop.f32.mrf.mxu0
      %v2287 = vadd.f32 0.0, %v2286
      %v2288 = vpop.f32.mrf.mxu0
      %v2289 = vadd.f32 0.0, %v2288
      %2290 = vmatmul.bf16.gmra.mxu0 %v1965
      %v2291 = vpop.f32.mrf.mxu0
      %v2292 = vadd.f32 0.0, %v2291
      %v2293 = vpop.f32.mrf.mxu0
      %v2294 = vadd.f32 0.0, %v2293
      %2295 = vmatmul.bf16.gmra.mxu0 %v1968
      %v2296 = vpop.f32.mrf.mxu0
      %v2297 = vadd.f32 0.0, %v2296
      %v2298 = vpop.f32.mrf.mxu0
      %v2299 = vadd.f32 0.0, %v2298
      %2300 = vmatmul.bf16.gmra.mxu0 %v1971
      %v2301 = vpop.f32.mrf.mxu0
      %v2302 = vadd.f32 0.0, %v2301
      %v2303 = vpop.f32.mrf.mxu0
      %v2304 = vadd.f32 0.0, %v2303
      %2305 = vmatmul.bf16.gmra.mxu0 %v1974
      %v2306 = vpop.f32.mrf.mxu0
      %v2307 = vadd.f32 0.0, %v2306
      %v2308 = vpop.f32.mrf.mxu0
      %v2309 = vadd.f32 0.0, %v2308
      %2310 = vmatmul.bf16.gmra.mxu0 %v1977
      %v2311 = vpop.f32.mrf.mxu0
      %v2312 = vadd.f32 0.0, %v2311
      %v2313 = vpop.f32.mrf.mxu0
      %v2314 = vadd.f32 0.0, %v2313
      %2315 = vdwg.mxu0
      %v2316 = vrot.slane %v2257, 2
      %v2317 = vrot.slane %v2259, 2
      %v2318 = vrot.slane %v2262, 2
      %v2319 = vrot.slane %v2264, 2
      %v2320 = vrot.slane %v2267, 2
      %v2321 = vrot.slane %v2269, 2
      %v2322 = vrot.slane %v2272, 2
      %v2323 = vrot.slane %v2274, 2
      %v2324 = vrot.slane %v2277, 2
      %v2325 = vrot.slane %v2279, 2
      %v2326 = vrot.slane %v2282, 2
      %v2327 = vrot.slane %v2284, 2
      %v2328 = vrot.slane %v2287, 2
      %v2329 = vrot.slane %v2289, 2
      %v2330 = vrot.slane %v2292, 2
      %v2331 = vrot.slane %v2294, 2
      %v2332 = vrot.slane %v2297, 2
      %v2333 = vrot.slane %v2299, 2
      %v2334 = vrot.slane %v2302, 2
      %v2335 = vrot.slane %v2304, 2
      %v2336 = vrot.slane %v2307, 2
      %v2337 = vrot.slane %v2309, 2
      %v2338 = vrot.slane %v2312, 2
      %v2339 = vrot.slane %v2314, 2
      %v2340 = vsel %vm1792, %v2338, %v2339
      %v2341 = vsel %vm1792, %v2337, %v2338
      %v2342 = vsel %vm1792, %v2336, %v2337
      %v2343 = vsel %vm1792, %v2335, %v2336
      %v2344 = vsel %vm1792, %v2334, %v2335
      %v2345 = vsel %vm1792, %v2333, %v2334
      %v2346 = vsel %vm1792, %v2332, %v2333
      %v2347 = vsel %vm1792, %v2331, %v2332
      %v2348 = vsel %vm1792, %v2330, %v2331
      %v2349 = vsel %vm1792, %v2329, %v2330
      %v2350 = vsel %vm1792, %v2328, %v2329
      %v2351 = vsel %vm1792, %v2327, %v2328
      %v2352 = vsel %vm1792, %v2326, %v2327
      %v2353 = vsel %vm1792, %v2325, %v2326
      %v2354 = vsel %vm1792, %v2324, %v2325
      %v2355 = vsel %vm1792, %v2323, %v2324
      %v2356 = vsel %vm1792, %v2322, %v2323
      %v2357 = vsel %vm1792, %v2321, %v2322
      %v2358 = vsel %vm1792, %v2320, %v2321
      %v2359 = vsel %vm1792, %v2319, %v2320
      %v2360 = vsel %vm1792, %v2318, %v2319
      %v2361 = vsel %vm1792, %v2317, %v2318
      %v2362 = vsel %vm1792, %v2316, %v2317
      %v2363 = vsel %vm1792, %v2339, %v2316
      %v2364 = vadd.f32 %v2206, %v2362
      %v2365 = vadd.f32 %v2207, %v2361
      %v2366 = vadd.f32 %v2208, %v2360
      %v2367 = vadd.f32 %v2209, %v2359
      %v2368 = vadd.f32 %v2210, %v2358
      %v2369 = vadd.f32 %v2211, %v2357
      %v2370 = vadd.f32 %v2212, %v2356
      %v2371 = vadd.f32 %v2213, %v2355
      %v2372 = vadd.f32 %v2214, %v2354
      %v2373 = vadd.f32 %v2215, %v2353
      %v2374 = vadd.f32 %v2216, %v2352
      %v2375 = vadd.f32 %v2217, %v2351
      %v2376 = vadd.f32 %v2218, %v2350
      %v2377 = vadd.f32 %v2219, %v2349
      %v2378 = vadd.f32 %v2220, %v2348
      %v2379 = vadd.f32 %v2221, %v2347
      %v2380 = vadd.f32 %v2222, %v2346
      %v2381 = vadd.f32 %v2223, %v2345
      %v2382 = vadd.f32 %v2224, %v2344
      %v2383 = vadd.f32 %v2225, %v2343
      %v2384 = vadd.f32 %v2226, %v2342
      %v2385 = vadd.f32 %v2227, %v2341
      %v2386 = vadd.f32 %v2228, %v2340
      %v2387 = vadd.f32 %v2229, %v2363
      %s2388 = scalar_lea.vmem [#allocation2], 24
      %v2389 = vld [vmem:[%s2388] sm:$0xf]
      %v2390 = vld [vmem:[%s2388 + $0x4] sm:$0xf]
      %v2391 = vld [vmem:[%s2388 + $0x8] sm:$0xf]
      %v2392 = vld [vmem:[%s2388 + $0xc] sm:$0xf]
      %v2393 = vld [vmem:[%s2388 + $0x10] sm:$0xf]
      %v2394 = vld [vmem:[%s2388 + $0x14] sm:$0xf]
      %v2395 = vld [vmem:[%s2388 + $0x18] sm:$0xf]
      %v2396 = vld [vmem:[%s2388 + $0x1c] sm:$0xf]
      %v2397 = vld [vmem:[%s2388 + $0x20] sm:$0xf]
      %v2398 = vld [vmem:[%s2388 + $0x24] sm:$0xf]
      %v2399 = vld [vmem:[%s2388 + $0x28] sm:$0xf]
      %v2400 = vld [vmem:[%s2388 + $0x2c] sm:$0xf]
      %v2401 = vld [vmem:[%s2388 + $0x30] sm:$0xf]
      %v2402 = vld [vmem:[%s2388 + $0x34] sm:$0xf]
      %v2403 = vld [vmem:[%s2388 + $0x38] sm:$0xf]
      %v2404 = vld [vmem:[%s2388 + $0x3c] sm:$0xf]
      %v2405 = vld [vmem:[%s2388 + $0x40] sm:$0xf]
      %v2406 = vld [vmem:[%s2388 + $0x44] sm:$0xf]
      %v2407 = vld [vmem:[%s2388 + $0x48] sm:$0xf]
      %v2408 = vld [vmem:[%s2388 + $0x4c] sm:$0xf]
      %v2409 = vld [vmem:[%s2388 + $0x50] sm:$0xf]
      %v2410 = vld [vmem:[%s2388 + $0x54] sm:$0xf]
      %v2411 = vld [vmem:[%s2388 + $0x58] sm:$0xf]
      %v2412 = vld [vmem:[%s2388 + $0x5c] sm:$0xf]
      %s2413 = scalar_lea.vmem %s4, 96
      %v2414 = vld [vmem:[%s2413] sm:$0xf]
      %v2415 = vld [vmem:[%s2413 + $0x4] sm:$0xf]
      %v2416 = vld [vmem:[%s2413 + $0x8] sm:$0xf]
      %v2417 = vld [vmem:[%s2413 + $0xc] sm:$0xf]
      %v2442 = vunpack.c.l.b16 %v2389
      %v2443 = vunpack.c.l.b16 %v2390
      %v2444 = vunpack.c.l.b16 %v2391
      %v2445 = vunpack.c.l.b16 %v2392
      %v2446 = vunpack.c.l.b16 %v2393
      %v2447 = vunpack.c.l.b16 %v2394
      %v2448 = vunpack.c.l.b16 %v2395
      %v2449 = vunpack.c.l.b16 %v2396
      %v2450 = vunpack.c.l.b16 %v2397
      %v2451 = vunpack.c.l.b16 %v2398
      %v2452 = vunpack.c.l.b16 %v2399
      %v2453 = vunpack.c.l.b16 %v2400
      %v2454 = vunpack.c.l.b16 %v2401
      %v2455 = vunpack.c.l.b16 %v2402
      %v2456 = vunpack.c.l.b16 %v2403
      %v2457 = vunpack.c.l.b16 %v2404
      %v2458 = vunpack.c.l.b16 %v2405
      %v2459 = vunpack.c.l.b16 %v2406
      %v2460 = vunpack.c.l.b16 %v2407
      %v2461 = vunpack.c.l.b16 %v2408
      %v2462 = vunpack.c.l.b16 %v2409
      %v2463 = vunpack.c.l.b16 %v2410
      %v2464 = vunpack.c.l.b16 %v2411
      %v2465 = vunpack.c.l.b16 %v2412
      %v2466 = vpack.c.b16 %v2443, %v2442
      %v2467 = vpack.c.b16 %v2445, %v2444
      %v2468 = vpack.c.b16 %v2447, %v2446
      %v2469 = vpack.c.b16 %v2449, %v2448
      %v2470 = vpack.c.b16 %v2451, %v2450
      %v2471 = vpack.c.b16 %v2453, %v2452
      %v2472 = vpack.c.b16 %v2455, %v2454
      %v2473 = vpack.c.b16 %v2457, %v2456
      %v2474 = vpack.c.b16 %v2459, %v2458
      %v2475 = vpack.c.b16 %v2461, %v2460
      %v2476 = vpack.c.b16 %v2463, %v2462
      %v2477 = vpack.c.b16 %v2465, %v2464
      %v2482 = vunpack.c.l.b16 %v2414
      %v2483 = vunpack.c.l.b16 %v2415
      %v2484 = vunpack.c.l.b16 %v2416
      %v2485 = vunpack.c.l.b16 %v2417
      %v2486 = vpack.c.b16 %v2483, %v2482
      %v2487 = vpack.c.b16 %v2485, %v2484
      %v2491 = vsel %vm1444, %v2466, 0
      %v2494 = vsel %vm1444, %v2467, 0
      %v2497 = vsel %vm1444, %v2468, 0
      %v2500 = vsel %vm1444, %v2469, 0
      %v2503 = vsel %vm1444, %v2470, 0
      %v2506 = vsel %vm1444, %v2471, 0
      %v2509 = vsel %vm1444, %v2472, 0
      %v2512 = vsel %vm1444, %v2473, 0
      %v2515 = vsel %vm1444, %v2474, 0
      %v2518 = vsel %vm1444, %v2475, 0
      %v2521 = vsel %vm1444, %v2476, 0
      %v2524 = vsel %vm1444, %v2477, 0
      %2526 = vmatpush.bf16.msra.mxu0 0
      %2527 = vmatpush.bf16.msra.mxu0 0
      %2528 = vmatpush.bf16.msra.mxu0 0
      %2529 = vmatpush.bf16.msra.mxu0 0
      %2530 = vmatpush.bf16.msra.mxu0 0
      %2531 = vmatpush.bf16.msra.mxu0 0
      %2532 = vmatpush.bf16.msra.mxu0 %v2487
      %2533 = vmatpush.bf16.msra.mxu0 %v2486
      %2534 = vmatmul.bf16.gmra.mxu0 %v2491
      %v2535 = vpop.f32.mrf.mxu0
      %v2536 = vadd.f32 0.0, %v2535
      %v2537 = vpop.f32.mrf.mxu0
      %v2538 = vadd.f32 0.0, %v2537
      %2539 = vmatmul.bf16.gmra.mxu0 %v2494
      %v2540 = vpop.f32.mrf.mxu0
      %v2541 = vadd.f32 0.0, %v2540
      %v2542 = vpop.f32.mrf.mxu0
      %v2543 = vadd.f32 0.0, %v2542
      %2544 = vmatmul.bf16.gmra.mxu0 %v2497
      %v2545 = vpop.f32.mrf.mxu0
      %v2546 = vadd.f32 0.0, %v2545
      %v2547 = vpop.f32.mrf.mxu0
      %v2548 = vadd.f32 0.0, %v2547
      %2549 = vmatmul.bf16.gmra.mxu0 %v2500
      %v2550 = vpop.f32.mrf.mxu0
      %v2551 = vadd.f32 0.0, %v2550
      %v2552 = vpop.f32.mrf.mxu0
      %v2553 = vadd.f32 0.0, %v2552
      %2554 = vmatmul.bf16.gmra.mxu0 %v2503
      %v2555 = vpop.f32.mrf.mxu0
      %v2556 = vadd.f32 0.0, %v2555
      %v2557 = vpop.f32.mrf.mxu0
      %v2558 = vadd.f32 0.0, %v2557
      %2559 = vmatmul.bf16.gmra.mxu0 %v2506
      %v2560 = vpop.f32.mrf.mxu0
      %v2561 = vadd.f32 0.0, %v2560
      %v2562 = vpop.f32.mrf.mxu0
      %v2563 = vadd.f32 0.0, %v2562
      %2564 = vmatmul.bf16.gmra.mxu0 %v2509
      %v2565 = vpop.f32.mrf.mxu0
      %v2566 = vadd.f32 0.0, %v2565
      %v2567 = vpop.f32.mrf.mxu0
      %v2568 = vadd.f32 0.0, %v2567
      %2569 = vmatmul.bf16.gmra.mxu0 %v2512
      %v2570 = vpop.f32.mrf.mxu0
      %v2571 = vadd.f32 0.0, %v2570
      %v2572 = vpop.f32.mrf.mxu0
      %v2573 = vadd.f32 0.0, %v2572
      %2574 = vmatmul.bf16.gmra.mxu0 %v2515
      %v2575 = vpop.f32.mrf.mxu0
      %v2576 = vadd.f32 0.0, %v2575
      %v2577 = vpop.f32.mrf.mxu0
      %v2578 = vadd.f32 0.0, %v2577
      %2579 = vmatmul.bf16.gmra.mxu0 %v2518
      %v2580 = vpop.f32.mrf.mxu0
      %v2581 = vadd.f32 0.0, %v2580
      %v2582 = vpop.f32.mrf.mxu0
      %v2583 = vadd.f32 0.0, %v2582
      %2584 = vmatmul.bf16.gmra.mxu0 %v2521
      %v2585 = vpop.f32.mrf.mxu0
      %v2586 = vadd.f32 0.0, %v2585
      %v2587 = vpop.f32.mrf.mxu0
      %v2588 = vadd.f32 0.0, %v2587
      %2589 = vmatmul.bf16.gmra.mxu0 %v2524
      %v2590 = vpop.f32.mrf.mxu0
      %v2591 = vadd.f32 0.0, %v2590
      %v2592 = vpop.f32.mrf.mxu0
      %v2593 = vadd.f32 0.0, %v2592
      %2594 = vdwg.mxu0
      %v2595 = vadd.f32 %v2364, %v2536
      %v2596 = vadd.f32 %v2365, %v2538
      %v2597 = vadd.f32 %v2366, %v2541
      %v2598 = vadd.f32 %v2367, %v2543
      %v2599 = vadd.f32 %v2368, %v2546
      %v2600 = vadd.f32 %v2369, %v2548
      %v2601 = vadd.f32 %v2370, %v2551
      %v2602 = vadd.f32 %v2371, %v2553
      %v2603 = vadd.f32 %v2372, %v2556
      %v2604 = vadd.f32 %v2373, %v2558
      %v2605 = vadd.f32 %v2374, %v2561
      %v2606 = vadd.f32 %v2375, %v2563
      %v2607 = vadd.f32 %v2376, %v2566
      %v2608 = vadd.f32 %v2377, %v2568
      %v2609 = vadd.f32 %v2378, %v2571
      %v2610 = vadd.f32 %v2379, %v2573
      %v2611 = vadd.f32 %v2380, %v2576
      %v2612 = vadd.f32 %v2381, %v2578
      %v2613 = vadd.f32 %v2382, %v2581
      %v2614 = vadd.f32 %v2383, %v2583
      %v2615 = vadd.f32 %v2384, %v2586
      %v2616 = vadd.f32 %v2385, %v2588
      %v2617 = vadd.f32 %v2386, %v2591
      %v2618 = vadd.f32 %v2387, %v2593
      %s2619 = scalar_lea.vmem %s4, 112
      %v2620 = vld [vmem:[%s2619] sm:$0xf]
      %v2621 = vld [vmem:[%s2619 + $0x4] sm:$0xf]
      %v2622 = vld [vmem:[%s2619 + $0x8] sm:$0xf]
      %v2623 = vld [vmem:[%s2619 + $0xc] sm:$0xf]
      %v2628 = vunpack.c.l.b16 %v2620
      %v2629 = vunpack.c.l.b16 %v2621
      %v2630 = vunpack.c.l.b16 %v2622
      %v2631 = vunpack.c.l.b16 %v2623
      %v2632 = vpack.c.b16 %v2629, %v2628
      %v2633 = vpack.c.b16 %v2631, %v2630
      %2636 = vmatpush.bf16.msra.mxu0 0
      %2637 = vmatpush.bf16.msra.mxu0 0
      %2638 = vmatpush.bf16.msra.mxu0 0
      %2639 = vmatpush.bf16.msra.mxu0 0
      %2640 = vmatpush.bf16.msra.mxu0 0
      %2641 = vmatpush.bf16.msra.mxu0 0
      %2642 = vmatpush.bf16.msra.mxu0 %v2633
      %2643 = vmatpush.bf16.msra.mxu0 %v2632
      %2644 = vmatmul.bf16.gmra.mxu0 %v2491
      %v2645 = vpop.f32.mrf.mxu0
      %v2646 = vadd.f32 0.0, %v2645
      %v2647 = vpop.f32.mrf.mxu0
      %v2648 = vadd.f32 0.0, %v2647
      %2649 = vmatmul.bf16.gmra.mxu0 %v2494
      %v2650 = vpop.f32.mrf.mxu0
      %v2651 = vadd.f32 0.0, %v2650
      %v2652 = vpop.f32.mrf.mxu0
      %v2653 = vadd.f32 0.0, %v2652
      %2654 = vmatmul.bf16.gmra.mxu0 %v2497
      %v2655 = vpop.f32.mrf.mxu0
      %v2656 = vadd.f32 0.0, %v2655
      %v2657 = vpop.f32.mrf.mxu0
      %v2658 = vadd.f32 0.0, %v2657
      %2659 = vmatmul.bf16.gmra.mxu0 %v2500
      %v2660 = vpop.f32.mrf.mxu0
      %v2661 = vadd.f32 0.0, %v2660
      %v2662 = vpop.f32.mrf.mxu0
      %v2663 = vadd.f32 0.0, %v2662
      %2664 = vmatmul.bf16.gmra.mxu0 %v2503
      %v2665 = vpop.f32.mrf.mxu0
      %v2666 = vadd.f32 0.0, %v2665
      %v2667 = vpop.f32.mrf.mxu0
      %v2668 = vadd.f32 0.0, %v2667
      %2669 = vmatmul.bf16.gmra.mxu0 %v2506
      %v2670 = vpop.f32.mrf.mxu0
      %v2671 = vadd.f32 0.0, %v2670
      %v2672 = vpop.f32.mrf.mxu0
      %v2673 = vadd.f32 0.0, %v2672
      %2674 = vmatmul.bf16.gmra.mxu0 %v2509
      %v2675 = vpop.f32.mrf.mxu0
      %v2676 = vadd.f32 0.0, %v2675
      %v2677 = vpop.f32.mrf.mxu0
      %v2678 = vadd.f32 0.0, %v2677
      %2679 = vmatmul.bf16.gmra.mxu0 %v2512
      %v2680 = vpop.f32.mrf.mxu0
      %v2681 = vadd.f32 0.0, %v2680
      %v2682 = vpop.f32.mrf.mxu0
      %v2683 = vadd.f32 0.0, %v2682
      %2684 = vmatmul.bf16.gmra.mxu0 %v2515
      %v2685 = vpop.f32.mrf.mxu0
      %v2686 = vadd.f32 0.0, %v2685
      %v2687 = vpop.f32.mrf.mxu0
      %v2688 = vadd.f32 0.0, %v2687
      %2689 = vmatmul.bf16.gmra.mxu0 %v2518
      %v2690 = vpop.f32.mrf.mxu0
      %v2691 = vadd.f32 0.0, %v2690
      %v2692 = vpop.f32.mrf.mxu0
      %v2693 = vadd.f32 0.0, %v2692
      %2694 = vmatmul.bf16.gmra.mxu0 %v2521
      %v2695 = vpop.f32.mrf.mxu0
      %v2696 = vadd.f32 0.0, %v2695
      %v2697 = vpop.f32.mrf.mxu0
      %v2698 = vadd.f32 0.0, %v2697
      %2699 = vmatmul.bf16.gmra.mxu0 %v2524
      %v2700 = vpop.f32.mrf.mxu0
      %v2701 = vadd.f32 0.0, %v2700
      %v2702 = vpop.f32.mrf.mxu0
      %v2703 = vadd.f32 0.0, %v2702
      %2704 = vdwg.mxu0
      %v2705 = vrot.slane %v2646, 1
      %v2706 = vrot.slane %v2648, 1
      %v2707 = vrot.slane %v2651, 1
      %v2708 = vrot.slane %v2653, 1
      %v2709 = vrot.slane %v2656, 1
      %v2710 = vrot.slane %v2658, 1
      %v2711 = vrot.slane %v2661, 1
      %v2712 = vrot.slane %v2663, 1
      %v2713 = vrot.slane %v2666, 1
      %v2714 = vrot.slane %v2668, 1
      %v2715 = vrot.slane %v2671, 1
      %v2716 = vrot.slane %v2673, 1
      %v2717 = vrot.slane %v2676, 1
      %v2718 = vrot.slane %v2678, 1
      %v2719 = vrot.slane %v2681, 1
      %v2720 = vrot.slane %v2683, 1
      %v2721 = vrot.slane %v2686, 1
      %v2722 = vrot.slane %v2688, 1
      %v2723 = vrot.slane %v2691, 1
      %v2724 = vrot.slane %v2693, 1
      %v2725 = vrot.slane %v2696, 1
      %v2726 = vrot.slane %v2698, 1
      %v2727 = vrot.slane %v2701, 1
      %v2728 = vrot.slane %v2703, 1
      %v2729 = vsel %vm1576, %v2727, %v2728
      %v2730 = vsel %vm1576, %v2726, %v2727
      %v2731 = vsel %vm1576, %v2725, %v2726
      %v2732 = vsel %vm1576, %v2724, %v2725
      %v2733 = vsel %vm1576, %v2723, %v2724
      %v2734 = vsel %vm1576, %v2722, %v2723
      %v2735 = vsel %vm1576, %v2721, %v2722
      %v2736 = vsel %vm1576, %v2720, %v2721
      %v2737 = vsel %vm1576, %v2719, %v2720
      %v2738 = vsel %vm1576, %v2718, %v2719
      %v2739 = vsel %vm1576, %v2717, %v2718
      %v2740 = vsel %vm1576, %v2716, %v2717
      %v2741 = vsel %vm1576, %v2715, %v2716
      %v2742 = vsel %vm1576, %v2714, %v2715
      %v2743 = vsel %vm1576, %v2713, %v2714
      %v2744 = vsel %vm1576, %v2712, %v2713
      %v2745 = vsel %vm1576, %v2711, %v2712
      %v2746 = vsel %vm1576, %v2710, %v2711
      %v2747 = vsel %vm1576, %v2709, %v2710
      %v2748 = vsel %vm1576, %v2708, %v2709
      %v2749 = vsel %vm1576, %v2707, %v2708
      %v2750 = vsel %vm1576, %v2706, %v2707
      %v2751 = vsel %vm1576, %v2705, %v2706
      %v2752 = vsel %vm1576, %v2728, %v2705
      %v2753 = vadd.f32 %v2595, %v2751
      %v2754 = vadd.f32 %v2596, %v2750
      %v2755 = vadd.f32 %v2597, %v2749
      %v2756 = vadd.f32 %v2598, %v2748
      %v2757 = vadd.f32 %v2599, %v2747
      %v2758 = vadd.f32 %v2600, %v2746
      %v2759 = vadd.f32 %v2601, %v2745
      %v2760 = vadd.f32 %v2602, %v2744
      %v2761 = vadd.f32 %v2603, %v2743
      %v2762 = vadd.f32 %v2604, %v2742
      %v2763 = vadd.f32 %v2605, %v2741
      %v2764 = vadd.f32 %v2606, %v2740
      %v2765 = vadd.f32 %v2607, %v2739
      %v2766 = vadd.f32 %v2608, %v2738
      %v2767 = vadd.f32 %v2609, %v2737
      %v2768 = vadd.f32 %v2610, %v2736
      %v2769 = vadd.f32 %v2611, %v2735
      %v2770 = vadd.f32 %v2612, %v2734
      %v2771 = vadd.f32 %v2613, %v2733
      %v2772 = vadd.f32 %v2614, %v2732
      %v2773 = vadd.f32 %v2615, %v2731
      %v2774 = vadd.f32 %v2616, %v2730
      %v2775 = vadd.f32 %v2617, %v2729
      %v2776 = vadd.f32 %v2618, %v2752
      %s2777 = scalar_lea.vmem %s4, 128
      %v2778 = vld [vmem:[%s2777] sm:$0xf]
      %v2779 = vld [vmem:[%s2777 + $0x4] sm:$0xf]
      %v2780 = vld [vmem:[%s2777 + $0x8] sm:$0xf]
      %v2781 = vld [vmem:[%s2777 + $0xc] sm:$0xf]
      %v2786 = vunpack.c.l.b16 %v2778
      %v2787 = vunpack.c.l.b16 %v2779
      %v2788 = vunpack.c.l.b16 %v2780
      %v2789 = vunpack.c.l.b16 %v2781
      %v2790 = vpack.c.b16 %v2787, %v2786
      %v2791 = vpack.c.b16 %v2789, %v2788
      %2794 = vmatpush.bf16.msra.mxu0 0
      %2795 = vmatpush.bf16.msra.mxu0 0
      %2796 = vmatpush.bf16.msra.mxu0 0
      %2797 = vmatpush.bf16.msra.mxu0 0
      %2798 = vmatpush.bf16.msra.mxu0 0
      %2799 = vmatpush.bf16.msra.mxu0 0
      %2800 = vmatpush.bf16.msra.mxu0 %v2791
      %2801 = vmatpush.bf16.msra.mxu0 %v2790
      %2802 = vmatmul.bf16.gmra.mxu0 %v2491
      %v2803 = vpop.f32.mrf.mxu0
      %v2804 = vadd.f32 0.0, %v2803
      %v2805 = vpop.f32.mrf.mxu0
      %v2806 = vadd.f32 0.0, %v2805
      %2807 = vmatmul.bf16.gmra.mxu0 %v2494
      %v2808 = vpop.f32.mrf.mxu0
      %v2809 = vadd.f32 0.0, %v2808
      %v2810 = vpop.f32.mrf.mxu0
      %v2811 = vadd.f32 0.0, %v2810
      %2812 = vmatmul.bf16.gmra.mxu0 %v2497
      %v2813 = vpop.f32.mrf.mxu0
      %v2814 = vadd.f32 0.0, %v2813
      %v2815 = vpop.f32.mrf.mxu0
      %v2816 = vadd.f32 0.0, %v2815
      %2817 = vmatmul.bf16.gmra.mxu0 %v2500
      %v2818 = vpop.f32.mrf.mxu0
      %v2819 = vadd.f32 0.0, %v2818
      %v2820 = vpop.f32.mrf.mxu0
      %v2821 = vadd.f32 0.0, %v2820
      %2822 = vmatmul.bf16.gmra.mxu0 %v2503
      %v2823 = vpop.f32.mrf.mxu0
      %v2824 = vadd.f32 0.0, %v2823
      %v2825 = vpop.f32.mrf.mxu0
      %v2826 = vadd.f32 0.0, %v2825
      %2827 = vmatmul.bf16.gmra.mxu0 %v2506
      %v2828 = vpop.f32.mrf.mxu0
      %v2829 = vadd.f32 0.0, %v2828
      %v2830 = vpop.f32.mrf.mxu0
      %v2831 = vadd.f32 0.0, %v2830
      %2832 = vmatmul.bf16.gmra.mxu0 %v2509
      %v2833 = vpop.f32.mrf.mxu0
      %v2834 = vadd.f32 0.0, %v2833
      %v2835 = vpop.f32.mrf.mxu0
      %v2836 = vadd.f32 0.0, %v2835
      %2837 = vmatmul.bf16.gmra.mxu0 %v2512
      %v2838 = vpop.f32.mrf.mxu0
      %v2839 = vadd.f32 0.0, %v2838
      %v2840 = vpop.f32.mrf.mxu0
      %v2841 = vadd.f32 0.0, %v2840
      %2842 = vmatmul.bf16.gmra.mxu0 %v2515
      %v2843 = vpop.f32.mrf.mxu0
      %v2844 = vadd.f32 0.0, %v2843
      %v2845 = vpop.f32.mrf.mxu0
      %v2846 = vadd.f32 0.0, %v2845
      %2847 = vmatmul.bf16.gmra.mxu0 %v2518
      %v2848 = vpop.f32.mrf.mxu0
      %v2849 = vadd.f32 0.0, %v2848
      %v2850 = vpop.f32.mrf.mxu0
      %v2851 = vadd.f32 0.0, %v2850
      %2852 = vmatmul.bf16.gmra.mxu0 %v2521
      %v2853 = vpop.f32.mrf.mxu0
      %v2854 = vadd.f32 0.0, %v2853
      %v2855 = vpop.f32.mrf.mxu0
      %v2856 = vadd.f32 0.0, %v2855
      %2857 = vmatmul.bf16.gmra.mxu0 %v2524
      %v2858 = vpop.f32.mrf.mxu0
      %v2859 = vadd.f32 0.0, %v2858
      %v2860 = vpop.f32.mrf.mxu0
      %v2861 = vadd.f32 0.0, %v2860
      %2862 = vdwg.mxu0
      %v2863 = vrot.slane %v2804, 2
      %v2864 = vrot.slane %v2806, 2
      %v2865 = vrot.slane %v2809, 2
      %v2866 = vrot.slane %v2811, 2
      %v2867 = vrot.slane %v2814, 2
      %v2868 = vrot.slane %v2816, 2
      %v2869 = vrot.slane %v2819, 2
      %v2870 = vrot.slane %v2821, 2
      %v2871 = vrot.slane %v2824, 2
      %v2872 = vrot.slane %v2826, 2
      %v2873 = vrot.slane %v2829, 2
      %v2874 = vrot.slane %v2831, 2
      %v2875 = vrot.slane %v2834, 2
      %v2876 = vrot.slane %v2836, 2
      %v2877 = vrot.slane %v2839, 2
      %v2878 = vrot.slane %v2841, 2
      %v2879 = vrot.slane %v2844, 2
      %v2880 = vrot.slane %v2846, 2
      %v2881 = vrot.slane %v2849, 2
      %v2882 = vrot.slane %v2851, 2
      %v2883 = vrot.slane %v2854, 2
      %v2884 = vrot.slane %v2856, 2
      %v2885 = vrot.slane %v2859, 2
      %v2886 = vrot.slane %v2861, 2
      %v2887 = vsel %vm1792, %v2885, %v2886
      %v2888 = vsel %vm1792, %v2884, %v2885
      %v2889 = vsel %vm1792, %v2883, %v2884
      %v2890 = vsel %vm1792, %v2882, %v2883
      %v2891 = vsel %vm1792, %v2881, %v2882
      %v2892 = vsel %vm1792, %v2880, %v2881
      %v2893 = vsel %vm1792, %v2879, %v2880
      %v2894 = vsel %vm1792, %v2878, %v2879
      %v2895 = vsel %vm1792, %v2877, %v2878
      %v2896 = vsel %vm1792, %v2876, %v2877
      %v2897 = vsel %vm1792, %v2875, %v2876
      %v2898 = vsel %vm1792, %v2874, %v2875
      %v2899 = vsel %vm1792, %v2873, %v2874
      %v2900 = vsel %vm1792, %v2872, %v2873
      %v2901 = vsel %vm1792, %v2871, %v2872
      %v2902 = vsel %vm1792, %v2870, %v2871
      %v2903 = vsel %vm1792, %v2869, %v2870
      %v2904 = vsel %vm1792, %v2868, %v2869
      %v2905 = vsel %vm1792, %v2867, %v2868
      %v2906 = vsel %vm1792, %v2866, %v2867
      %v2907 = vsel %vm1792, %v2865, %v2866
      %v2908 = vsel %vm1792, %v2864, %v2865
      %v2909 = vsel %vm1792, %v2863, %v2864
      %v2910 = vsel %vm1792, %v2886, %v2863
      %v2911 = vadd.f32 %v2753, %v2909
      %v2912 = vadd.f32 %v2754, %v2908
      %v2913 = vadd.f32 %v2755, %v2907
      %v2914 = vadd.f32 %v2756, %v2906
      %v2915 = vadd.f32 %v2757, %v2905
      %v2916 = vadd.f32 %v2758, %v2904
      %v2917 = vadd.f32 %v2759, %v2903
      %v2918 = vadd.f32 %v2760, %v2902
      %v2919 = vadd.f32 %v2761, %v2901
      %v2920 = vadd.f32 %v2762, %v2900
      %v2921 = vadd.f32 %v2763, %v2899
      %v2922 = vadd.f32 %v2764, %v2898
      %v2923 = vadd.f32 %v2765, %v2897
      %v2924 = vadd.f32 %v2766, %v2896
      %v2925 = vadd.f32 %v2767, %v2895
      %v2926 = vadd.f32 %v2768, %v2894
      %v2927 = vadd.f32 %v2769, %v2893
      %v2928 = vadd.f32 %v2770, %v2892
      %v2929 = vadd.f32 %v2771, %v2891
      %v2930 = vadd.f32 %v2772, %v2890
      %v2931 = vadd.f32 %v2773, %v2889
      %v2932 = vadd.f32 %v2774, %v2888
      %v2933 = vadd.f32 %v2775, %v2887
      %v2934 = vadd.f32 %v2776, %v2910
      %v2935 = vld [vmem:[%s5] sm:$0x1]
      %v2937 = vperm.slane %v2935, 0
      %v2939 = vmul.f32 %v2911, %v2937
      %v2940 = vmul.f32 %v2912, %v2937
      %v2941 = vmul.f32 %v2913, %v2937
      %v2942 = vmul.f32 %v2914, %v2937
      %v2943 = vmul.f32 %v2915, %v2937
      %v2944 = vmul.f32 %v2916, %v2937
      %v2945 = vmul.f32 %v2917, %v2937
      %v2946 = vmul.f32 %v2918, %v2937
      %v2947 = vmul.f32 %v2919, %v2937
      %v2948 = vmul.f32 %v2920, %v2937
      %v2949 = vmul.f32 %v2921, %v2937
      %v2950 = vmul.f32 %v2922, %v2937
      %v2951 = vmul.f32 %v2923, %v2937
      %v2952 = vmul.f32 %v2924, %v2937
      %v2953 = vmul.f32 %v2925, %v2937
      %v2954 = vmul.f32 %v2926, %v2937
      %v2955 = vmul.f32 %v2927, %v2937
      %v2956 = vmul.f32 %v2928, %v2937
      %v2957 = vmul.f32 %v2929, %v2937
      %v2958 = vmul.f32 %v2930, %v2937
      %v2959 = vmul.f32 %v2931, %v2937
      %v2960 = vmul.f32 %v2932, %v2937
      %v2961 = vmul.f32 %v2933, %v2937
      %v2962 = vmul.f32 %v2934, %v2937
      %v2963 = vld [vmem:[%s6] sm:$0x1]
      %v2965 = vperm.slane %v2963, 0
      %v2967 = vadd.f32 %v2939, %v2965
      %v2968 = vadd.f32 %v2940, %v2965
      %v2969 = vadd.f32 %v2941, %v2965
      %v2970 = vadd.f32 %v2942, %v2965
      %v2971 = vadd.f32 %v2943, %v2965
      %v2972 = vadd.f32 %v2944, %v2965
      %v2973 = vadd.f32 %v2945, %v2965
      %v2974 = vadd.f32 %v2946, %v2965
      %v2975 = vadd.f32 %v2947, %v2965
      %v2976 = vadd.f32 %v2948, %v2965
      %v2977 = vadd.f32 %v2949, %v2965
      %v2978 = vadd.f32 %v2950, %v2965
      %v2979 = vadd.f32 %v2951, %v2965
      %v2980 = vadd.f32 %v2952, %v2965
      %v2981 = vadd.f32 %v2953, %v2965
      %v2982 = vadd.f32 %v2954, %v2965
      %v2983 = vadd.f32 %v2955, %v2965
      %v2984 = vadd.f32 %v2956, %v2965
      %v2985 = vadd.f32 %v2957, %v2965
      %v2986 = vadd.f32 %v2958, %v2965
      %v2987 = vadd.f32 %v2959, %v2965
      %v2988 = vadd.f32 %v2960, %v2965
      %v2989 = vadd.f32 %v2961, %v2965
      %v2990 = vadd.f32 %v2962, %v2965
      %v2991 = vmax.f32 %v2967, 0.0
      %v2992 = vmax.f32 %v2968, 0.0
      %v2993 = vmax.f32 %v2969, 0.0
      %v2994 = vmax.f32 %v2970, 0.0
      %v2995 = vmax.f32 %v2971, 0.0
      %v2996 = vmax.f32 %v2972, 0.0
      %v2997 = vmax.f32 %v2973, 0.0
      %v2998 = vmax.f32 %v2974, 0.0
      %v2999 = vmax.f32 %v2975, 0.0
      %v3000 = vmax.f32 %v2976, 0.0
      %v3001 = vmax.f32 %v2977, 0.0
      %v3002 = vmax.f32 %v2978, 0.0
      %v3003 = vmax.f32 %v2979, 0.0
      %v3004 = vmax.f32 %v2980, 0.0
      %v3005 = vmax.f32 %v2981, 0.0
      %v3006 = vmax.f32 %v2982, 0.0
      %v3007 = vmax.f32 %v2983, 0.0
      %v3008 = vmax.f32 %v2984, 0.0
      %v3009 = vmax.f32 %v2985, 0.0
      %v3010 = vmax.f32 %v2986, 0.0
      %v3011 = vmax.f32 %v2987, 0.0
      %v3012 = vmax.f32 %v2988, 0.0
      %v3013 = vmax.f32 %v2989, 0.0
      %v3014 = vmax.f32 %v2990, 0.0
      %v3015 = vpack.c.bf16 %v2992, %v2991
      %v3016 = vpack.c.bf16 %v2994, %v2993
      %v3017 = vpack.c.bf16 %v2996, %v2995
      %v3018 = vpack.c.bf16 %v2998, %v2997
      %v3019 = vpack.c.bf16 %v3000, %v2999
      %v3020 = vpack.c.bf16 %v3002, %v3001
      %v3021 = vpack.c.bf16 %v3004, %v3003
      %v3022 = vpack.c.bf16 %v3006, %v3005
      %v3023 = vpack.c.bf16 %v3008, %v3007
      %v3024 = vpack.c.bf16 %v3010, %v3009
      %v3025 = vpack.c.bf16 %v3012, %v3011
      %v3026 = vpack.c.bf16 %v3014, %v3013
      %v3027 = vld [vmem:[%s7] sm:$0xf]
      %v3028 = vld [vmem:[%s7 + $0x4] sm:$0xf]
      %v3029 = vld [vmem:[%s7 + $0x8] sm:$0xf]
      %v3030 = vld [vmem:[%s7 + $0xc] sm:$0xf]
      %v3035 = vunpack.c.l.b16 %v3027
      %v3036 = vunpack.c.l.b16 %v3028
      %v3037 = vunpack.c.l.b16 %v3029
      %v3038 = vunpack.c.l.b16 %v3030
      %v3039 = vpack.c.b16 %v3036, %v3035
      %v3040 = vpack.c.b16 %v3038, %v3037
      %v3044 = vsel %vm1444, %v3015, 0
      %v3047 = vsel %vm1444, %v3016, 0
      %v3050 = vsel %vm1444, %v3017, 0
      %v3053 = vsel %vm1444, %v3018, 0
      %v3056 = vsel %vm1444, %v3019, 0
      %v3059 = vsel %vm1444, %v3020, 0
      %v3062 = vsel %vm1444, %v3021, 0
      %v3065 = vsel %vm1444, %v3022, 0
      %v3068 = vsel %vm1444, %v3023, 0
      %v3071 = vsel %vm1444, %v3024, 0
      %v3074 = vsel %vm1444, %v3025, 0
      %v3077 = vsel %vm1444, %v3026, 0
      %3079 = vmatpush.bf16.msra.mxu0 0
      %3080 = vmatpush.bf16.msra.mxu0 0
      %3081 = vmatpush.bf16.msra.mxu0 0
      %3082 = vmatpush.bf16.msra.mxu0 0
      %3083 = vmatpush.bf16.msra.mxu0 0
      %3084 = vmatpush.bf16.msra.mxu0 0
      %3085 = vmatpush.bf16.msra.mxu0 %v3040
      %3086 = vmatpush.bf16.msra.mxu0 %v3039
      %3087 = vmatmul.bf16.gmra.mxu0 %v3044
      %v3088 = vpop.f32.mrf.mxu0
      %v3089 = vadd.f32 0.0, %v3088
      %v3090 = vpop.f32.mrf.mxu0
      %v3091 = vadd.f32 0.0, %v3090
      %3092 = vmatmul.bf16.gmra.mxu0 %v3047
      %v3093 = vpop.f32.mrf.mxu0
      %v3094 = vpop.f32.mrf.mxu0
      %v3095 = vadd.f32 0.0, %v3094
      %3096 = vmatmul.bf16.gmra.mxu0 %v3050
      %v3097 = vpop.f32.mrf.mxu0
      %v3098 = vadd.f32 0.0, %v3097
      %v3099 = vpop.f32.mrf.mxu0
      %3100 = vmatmul.bf16.gmra.mxu0 %v3053
      %v3101 = vpop.f32.mrf.mxu0
      %v3102 = vadd.f32 0.0, %v3101
      %v3103 = vpop.f32.mrf.mxu0
      %v3104 = vadd.f32 0.0, %v3103
      %3105 = vmatmul.bf16.gmra.mxu0 %v3056
      %v3106 = vpop.f32.mrf.mxu0
      %v3107 = vpop.f32.mrf.mxu0
      %v3108 = vadd.f32 0.0, %v3107
      %3109 = vmatmul.bf16.gmra.mxu0 %v3059
      %v3110 = vpop.f32.mrf.mxu0
      %v3111 = vadd.f32 0.0, %v3110
      %v3112 = vpop.f32.mrf.mxu0
      %3113 = vmatmul.bf16.gmra.mxu0 %v3062
      %v3114 = vpop.f32.mrf.mxu0
      %v3115 = vadd.f32 0.0, %v3114
      %v3116 = vpop.f32.mrf.mxu0
      %v3117 = vadd.f32 0.0, %v3116
      %3118 = vmatmul.bf16.gmra.mxu0 %v3065
      %v3119 = vpop.f32.mrf.mxu0
      %v3120 = vpop.f32.mrf.mxu0
      %v3121 = vadd.f32 0.0, %v3120
      %3122 = vmatmul.bf16.gmra.mxu0 %v3068
      %v3123 = vpop.f32.mrf.mxu0
      %v3124 = vadd.f32 0.0, %v3123
      %v3125 = vpop.f32.mrf.mxu0
      %3126 = vmatmul.bf16.gmra.mxu0 %v3071
      %v3127 = vpop.f32.mrf.mxu0
      %v3128 = vadd.f32 0.0, %v3127
      %v3129 = vpop.f32.mrf.mxu0
      %v3130 = vadd.f32 0.0, %v3129
      %3131 = vmatmul.bf16.gmra.mxu0 %v3074
      %v3132 = vpop.f32.mrf.mxu0
      %v3133 = vpop.f32.mrf.mxu0
      %v3134 = vadd.f32 0.0, %v3133
      %3135 = vmatmul.bf16.gmra.mxu0 %v3077
      %v3136 = vpop.f32.mrf.mxu0
      %v3137 = vadd.f32 0.0, %v3136
      %v3138 = vpop.f32.mrf.mxu0
      %3139 = vdwg.mxu0
      %v3140 = vld [vmem:[%s8] sm:$0x1]
      %v3142 = vperm.slane %v3140, 0
      %v3144 = vmul.f32 %v3089, %v3142
      %v3145 = vmul.f32 %v3091, %v3142
      %v3146 = vmul.f32 %v3095, %v3142
      %v3147 = vmul.f32 %v3098, %v3142
      %v3148 = vmul.f32 %v3102, %v3142
      %v3149 = vmul.f32 %v3104, %v3142
      %v3150 = vmul.f32 %v3108, %v3142
      %v3151 = vmul.f32 %v3111, %v3142
      %v3152 = vmul.f32 %v3115, %v3142
      %v3153 = vmul.f32 %v3117, %v3142
      %v3154 = vmul.f32 %v3121, %v3142
      %v3155 = vmul.f32 %v3124, %v3142
      %v3156 = vmul.f32 %v3128, %v3142
      %v3157 = vmul.f32 %v3130, %v3142
      %v3158 = vmul.f32 %v3134, %v3142
      %v3159 = vmul.f32 %v3137, %v3142
      %v3160 = vld [vmem:[%s9] sm:$0x1]
      %v3162 = vperm.slane %v3160, 0
      %v3164 = vadd.f32 %v3144, %v3162
      %v3165 = vadd.f32 %v3145, %v3162
      %v3166 = vadd.f32 %v3146, %v3162
      %v3167 = vadd.f32 %v3147, %v3162
      %v3168 = vadd.f32 %v3148, %v3162
      %v3169 = vadd.f32 %v3149, %v3162
      %v3170 = vadd.f32 %v3150, %v3162
      %v3171 = vadd.f32 %v3151, %v3162
      %v3172 = vadd.f32 %v3152, %v3162
      %v3173 = vadd.f32 %v3153, %v3162
      %v3174 = vadd.f32 %v3154, %v3162
      %v3175 = vadd.f32 %v3155, %v3162
      %v3176 = vadd.f32 %v3156, %v3162
      %v3177 = vadd.f32 %v3157, %v3162
      %v3178 = vadd.f32 %v3158, %v3162
      %v3179 = vadd.f32 %v3159, %v3162
      %s3180 = sadd.s32 %s386, 1
      %s3181 = smul.u32 %s3180, 16
      %s3182 = scalar_lea.vmem %s373, %s3181
      %v3183 = vld [vmem:[%s3182] sm:$0xff]
      %v3184 = vld [vmem:[%s3182 + $0x8] sm:$0xff]
      %v3185 = vld [vmem:[%s3182 + $0x10] sm:$0xff]
      %v3186 = vld [vmem:[%s3182 + $0x18] sm:$0xff]
      %v3187 = vld [vmem:[%s3182 + $0x20] sm:$0xff]
      %v3188 = vld [vmem:[%s3182 + $0x28] sm:$0xff]
      %v3189 = vld [vmem:[%s3182 + $0x30] sm:$0xff]
      %v3190 = vld [vmem:[%s3182 + $0x38] sm:$0xff]
      %v3191 = vld [vmem:[%s3182 + $0x40] sm:$0xff]
      %v3192 = vld [vmem:[%s3182 + $0x48] sm:$0xff]
      %v3193 = vld [vmem:[%s3182 + $0x50] sm:$0xff]
      %v3194 = vld [vmem:[%s3182 + $0x58] sm:$0xff]
      %v3195 = vld [vmem:[%s3182 + $0x60] sm:$0xff]
      %v3196 = vld [vmem:[%s3182 + $0x68] sm:$0xff]
      %v3197 = vld [vmem:[%s3182 + $0x70] sm:$0xff]
      %v3198 = vld [vmem:[%s3182 + $0x78] sm:$0xff]
      %v3199 = vadd.f32 %v3164, %v3183
      %v3200 = vadd.f32 %v3165, %v3184
      %v3201 = vadd.f32 %v3166, %v3185
      %v3202 = vadd.f32 %v3167, %v3186
      %v3203 = vadd.f32 %v3168, %v3187
      %v3204 = vadd.f32 %v3169, %v3188
      %v3205 = vadd.f32 %v3170, %v3189
      %v3206 = vadd.f32 %v3171, %v3190
      %v3207 = vadd.f32 %v3172, %v3191
      %v3208 = vadd.f32 %v3173, %v3192
      %v3209 = vadd.f32 %v3174, %v3193
      %v3210 = vadd.f32 %v3175, %v3194
      %v3211 = vadd.f32 %v3176, %v3195
      %v3212 = vadd.f32 %v3177, %v3196
      %v3213 = vadd.f32 %v3178, %v3197
      %v3214 = vadd.f32 %v3179, %v3198
      %v3215 = vmax.f32 %v3199, 0.0
      %v3216 = vmax.f32 %v3200, 0.0
      %v3217 = vmax.f32 %v3201, 0.0
      %v3218 = vmax.f32 %v3202, 0.0
      %v3219 = vmax.f32 %v3203, 0.0
      %v3220 = vmax.f32 %v3204, 0.0
      %v3221 = vmax.f32 %v3205, 0.0
      %v3222 = vmax.f32 %v3206, 0.0
      %v3223 = vmax.f32 %v3207, 0.0
      %v3224 = vmax.f32 %v3208, 0.0
      %v3225 = vmax.f32 %v3209, 0.0
      %v3226 = vmax.f32 %v3210, 0.0
      %v3227 = vmax.f32 %v3211, 0.0
      %v3228 = vmax.f32 %v3212, 0.0
      %v3229 = vmax.f32 %v3213, 0.0
      %v3230 = vmax.f32 %v3214, 0.0
      %vm3231 = vcmask 31744
      %3232 = vst.msk [vmem:[%s383] sm:$0xff] %vm3231, %v3215
      %3233 = vst.msk [vmem:[%s383 + $0x8] sm:$0xff] %vm3231, %v3216
      %3234 = vst.msk [vmem:[%s383 + $0x10] sm:$0xff] %vm3231, %v3217
      %3235 = vst.msk [vmem:[%s383 + $0x18] sm:$0xff] %vm3231, %v3218
      %3236 = vst.msk [vmem:[%s383 + $0x20] sm:$0xff] %vm3231, %v3219
      %3237 = vst.msk [vmem:[%s383 + $0x28] sm:$0xff] %vm3231, %v3220
      %3238 = vst.msk [vmem:[%s383 + $0x30] sm:$0xff] %vm3231, %v3221
      %3239 = vst.msk [vmem:[%s383 + $0x38] sm:$0xff] %vm3231, %v3222
      %3240 = vst.msk [vmem:[%s383 + $0x40] sm:$0xff] %vm3231, %v3223
      %3241 = vst.msk [vmem:[%s383 + $0x48] sm:$0xff] %vm3231, %v3224
      %3242 = vst.msk [vmem:[%s383 + $0x50] sm:$0xff] %vm3231, %v3225
      %3243 = vst.msk [vmem:[%s383 + $0x58] sm:$0xff] %vm3231, %v3226
      %3244 = vst.msk [vmem:[%s383 + $0x60] sm:$0xff] %vm3231, %v3227
      %3245 = vst.msk [vmem:[%s383 + $0x68] sm:$0xff] %vm3231, %v3228
      %3246 = vst.msk [vmem:[%s383 + $0x70] sm:$0xff] %vm3231, %v3229
      %3247 = vst.msk [vmem:[%s383 + $0x78] sm:$0xff] %vm3231, %v3230
      %s3248 = smul.u32 8, %s26
      %p3249 = scmp.lt.s32.totalorder %s25, 1
      %s3250 = scalar_select %p3249, %s25, 1
      %p3251 = scmp.lt.s32.totalorder %s3248, 15
      %s3252 = scalar_select %p3251, %s3248, 15
      %s3253 = smul.addr %s3252, 2
      %s3254 = smul.addr %s3250, 32
      %s3255 = sadd.s32 %s3253, %s3254
      %s3256 = smul.addr %s3255, 8
      %s3257 = scalar_lea.vmem %s10, %s3256
      // Predicated region
      $region69: #{tpu_custom_call.1} parent=59 // pred_check
        %p3258 = pneg %p268
      $region70: #{tpu_custom_call.1} parent=59 // pred_check_branch
        %3260 = sbr.rel (%p3258) target = $region72
      $region71: #{tpu_custom_call.1} parent=59 // pred_region
        %s3261 = smul.u32 8, %s26
      $region72: #{tpu_custom_call.1} parent=59 // pred_fallthru
        _
    $region60: #{tpu_custom_call.1} parent=5 // pred_fallthru
      _
    %p3262 = scmp.le.s32.totalorder 2, %s16
    // Predicated region
    $region73: #{tpu_custom_call.1} parent=5 // pred_check
      %p3263 = pneg %p3262
    $region74: #{tpu_custom_call.1} parent=5 // pred_check_branch
      %3265 = sbr.rel (%p3263) target = $region76
    $region75: #{tpu_custom_call.1} parent=5 // pred_region
      %s3266 = ssub.s32 %s16, 2
      // Predicated region
      $region77: #{tpu_custom_call.1} parent=75 // pred_check
        %p3267 = pneg %p274
      $region78: #{tpu_custom_call.1} parent=75 // pred_check_branch
        %3269 = sbr.rel (%p3267) target = $region80
      $region79: #{tpu_custom_call.1} parent=75 // pred_region
        %s3270 = smul.u32 8, %s28
        %p3271 = scmp.lt.s32.totalorder %s27, 1
        %s3272 = scalar_select %p3271, %s27, 1
        %p3273 = scmp.lt.s32.totalorder %s3270, 15
        %s3274 = scalar_select %p3273, %s3270, 15
        %s3275 = smul.addr %s3274, 2
        %s3276 = smul.addr %s3272, 32
        %s3277 = sadd.s32 %s3275, %s3276
        %s3278 = smul.addr %s3277, 8
        %s3279 = scalar_lea.vmem %s10, %s3278
      $region80: #{tpu_custom_call.1} parent=75 // pred_fallthru
        _
    $region76: #{tpu_custom_call.1} parent=5 // pred_fallthru
      _
  $region6: #{tpu_custom_call.1} parent=0 // loop_footer
    %s20 = sadd.s32 1, %s16
  $region7: #{tpu_custom_call.1} parent=0 // loop_footer_branch
    %15 = sbr.rel target = $region3
  $region8: #{tpu_custom_call.1} parent=0 // loop_exit
    _

// kernel: tpu_custom_call.1
$region0: #{tpu_custom_call.1}
  #allocation0 [shape = 'u32[]', space=smem, size = 0x4, offset = 0x4, fixed_abs, tag = 'smem constant byte address 0x4 - core index']
  #allocation1 [shape = 'u32[72,128]{1,0:T(1,128)}', space=vmem, size = 0x9000, scoped, tag = 'internal scratch']
  #allocation2 [shape = 'bf16[10,24,32]{2,1,0:T(8,128)(2,1)}', space=vmem, size = 0xf000, scoped, tag = 'scratch operand']
  %s0 = inlined_call_operand.vmem [shape: f32[2,18,16,4], index: 0, kind: input, shape index: {}]
  %s1 = inlined_call_operand.vmem [shape: f32[4,32], index: 1, kind: input, shape index: {}]
  %s2 = inlined_call_operand.vmem [shape: f32[1,32], index: 2, kind: input, shape index: {}]
  %s3 = inlined_call_operand.vmem [shape: f32[1,32], index: 3, kind: input, shape index: {}]
  %s4 = inlined_call_operand.vmem [shape: bf16[9,32,32], index: 4, kind: input, shape index: {}]
  %s5 = inlined_call_operand.vmem [shape: f32[1,32], index: 5, kind: input, shape index: {}]
  %s6 = inlined_call_operand.vmem [shape: f32[1,32], index: 6, kind: input, shape index: {}]
  %s7 = inlined_call_operand.vmem [shape: bf16[32,4], index: 7, kind: input, shape index: {}]
  %s8 = inlined_call_operand.vmem [shape: f32[1,4], index: 8, kind: input, shape index: {}]
  %s9 = inlined_call_operand.vmem [shape: f32[1,4], index: 9, kind: input, shape index: {}]
  %s10 = inlined_call_operand.vmem [shape: f32[2,16,16,4], index: 10, kind: output, shape index: {}]
  %s11 = sld [smem:[#allocation0]]
  $region81: #{tpu_custom_call.1} parent=0
    _
  %s13 = ssub.s32 1, %s11
  %s14 = scalar_select 0, %s13, %s11
  loop: start=0, step=1, limit=6
  $region2: #{tpu_custom_call.1} parent=0 // loop_pre_header
    _
  $region3: #{tpu_custom_call.1} parent=0 // loop_header
    %s16 = sphi 0, %s20
    %p17 = scmp.ge.s32.totalorder %s16, 6
    %s23 = sphi 0, %s35
    %s24 = sphi 0, %s31
    %s25 = sphi 0, %s23
    %s26 = sphi 0, %s24
    %s27 = sphi 0, %s25
    %s28 = sphi 0, %s26
    %s38 = sphi 0, %s40
    %s41 = sphi 0, %s38
    %s42 = sphi 0, %s41
    %s58 = sphi 0, %s42
    %s62 = sphi 0, %s62
    %s64 = sphi 0, %s62
    %s65 = sphi 0, %s64
    %s79 = sphi 0, %s65
    %s83 = sphi 0, %s83
    %s85 = sphi 0, %s83
    %s86 = sphi 0, %s85
    %s100 = sphi 0, %s86
    %s104 = sphi 0, %s104
    %s106 = sphi 0, %s104
    %s107 = sphi 0, %s106
    %s121 = sphi 0, %s107
    %s125 = sphi 0, %s125
    %s127 = sphi 0, %s125
    %s128 = sphi 0, %s127
    %s142 = sphi 0, %s128
    %s146 = sphi 0, %s146
    %s148 = sphi 0, %s146
    %s149 = sphi 0, %s148
    %s163 = sphi 0, %s149
    %s167 = sphi 0, %s167
    %s169 = sphi 0, %s167
    %s170 = sphi 0, %s169
    %s184 = sphi 0, %s170
    %s188 = sphi 0, %s188
    %s190 = sphi 0, %s188
    %s191 = sphi 0, %s190
    %s205 = sphi 0, %s191
    %s209 = sphi 0, %s209
    %s211 = sphi 0, %s209
    %s212 = sphi 0, %s211
    %s226 = sphi 0, %s212
    %s230 = sphi 0, %s230
    %s232 = sphi 0, %s230
    %s233 = sphi 0, %s232
    %s247 = sphi 0, %s233
    %s255 = sphi 0, %s257
    %s258 = sphi 0, %s255
    %s259 = sphi 0, %s258
    %s275 = sphi 0, %s259
  $region4: #{tpu_custom_call.1} parent=0 // loop_header_branch
    %19 = sbr.rel (%p17) target = $region8
  $region5: #{tpu_custom_call.1} parent=0 // loop_body
    %s21 = ssub.s32 %s16, 1
    %s22 = ssub.s32 %s16, 2
    %s29 = sadd.s32 1, %s24
    %p30 = scmp.ge.s32.totalorder %s29, 2
    %s31 = scalar_select %p30, 0, %s29
    %s32 = sadd.s32 1, %s23
    %s33 = scalar_select %p30, %s32, %s23
    %p34 = scmp.ge.s32.totalorder %s33, 2
    %s35 = scalar_select %p34, 0, %s33
    %s36 = ssub.s32 %s23, %s35
    %p37 = scmp.eq.s32.totalorder %s36, 0
    %s39 = sadd.s32 %s38, 1
    %s40 = scalar_select %p37, %s38, %s39
    %p43 = pneg %p37
    %p44 = scmp.eq.s32.totalorder %s16, 3
    %p45 = por %p43, %p44
    %p46 = scmp.ne.s32.totalorder %s38, %s41
    %p47 = scmp.eq.s32.totalorder %s16, 0
    %p48 = por %p46, %p47
    %p49 = scmp.ne.s32.totalorder %s38, %s41
    %p50 = scmp.eq.s32.totalorder %s21, 3
    %p51 = por %p49, %p50
    %p52 = scmp.ne.s32.totalorder %s41, %s42
    %p53 = scmp.eq.s32.totalorder %s21, 0
    %p54 = por %p52, %p53
    %p55 = scmp.ne.s32.totalorder %s41, %s42
    %p56 = scmp.eq.s32.totalorder %s22, 3
    %p57 = por %p55, %p56
    %p59 = scmp.ne.s32.totalorder %s42, %s58
    %p60 = scmp.eq.s32.totalorder %s22, 0
    %p61 = por %p59, %p60
    %s63 = sadd.s32 %s62, 1
    %p66 = scmp.eq.s32.totalorder %s16, 3
    %p67 = scmp.ne.s32.totalorder %s62, %s64
    %p68 = scmp.eq.s32.totalorder %s16, 0
    %p69 = por %p67, %p68
    %p70 = scmp.ne.s32.totalorder %s62, %s64
    %p71 = scmp.eq.s32.totalorder %s21, 3
    %p72 = por %p70, %p71
    %p73 = scmp.ne.s32.totalorder %s64, %s65
    %p74 = scmp.eq.s32.totalorder %s21, 0
    %p75 = por %p73, %p74
    %p76 = scmp.ne.s32.totalorder %s64, %s65
    %p77 = scmp.eq.s32.totalorder %s22, 3
    %p78 = por %p76, %p77
    %p80 = scmp.ne.s32.totalorder %s65, %s79
    %p81 = scmp.eq.s32.totalorder %s22, 0
    %p82 = por %p80, %p81
    %s84 = sadd.s32 %s83, 1
    %p87 = scmp.eq.s32.totalorder %s16, 3
    %p88 = scmp.ne.s32.totalorder %s83, %s85
    %p89 = scmp.eq.s32.totalorder %s16, 0
    %p90 = por %p88, %p89
    %p91 = scmp.ne.s32.totalorder %s83, %s85
    %p92 = scmp.eq.s32.totalorder %s21, 3
    %p93 = por %p91, %p92
    %p94 = scmp.ne.s32.totalorder %s85, %s86
    %p95 = scmp.eq.s32.totalorder %s21, 0
    %p96 = por %p94, %p95
    %p97 = scmp.ne.s32.totalorder %s85, %s86
    %p98 = scmp.eq.s32.totalorder %s22, 3
    %p99 = por %p97, %p98
    %p101 = scmp.ne.s32.totalorder %s86, %s100
    %p102 = scmp.eq.s32.totalorder %s22, 0
    %p103 = por %p101, %p102
    %s105 = sadd.s32 %s104, 1
    %p108 = scmp.eq.s32.totalorder %s16, 3
    %p109 = scmp.ne.s32.totalorder %s104, %s106
    %p110 = scmp.eq.s32.totalorder %s16, 0
    %p111 = por %p109, %p110
    %p112 = scmp.ne.s32.totalorder %s104, %s106
    %p113 = scmp.eq.s32.totalorder %s21, 3
    %p114 = por %p112, %p113
    %p115 = scmp.ne.s32.totalorder %s106, %s107
    %p116 = scmp.eq.s32.totalorder %s21, 0
    %p117 = por %p115, %p116
    %p118 = scmp.ne.s32.totalorder %s106, %s107
    %p119 = scmp.eq.s32.totalorder %s22, 3
    %p120 = por %p118, %p119
    %p122 = scmp.ne.s32.totalorder %s107, %s121
    %p123 = scmp.eq.s32.totalorder %s22, 0
    %p124 = por %p122, %p123
    %s126 = sadd.s32 %s125, 1
    %p129 = scmp.eq.s32.totalorder %s16, 3
    %p130 = scmp.ne.s32.totalorder %s125, %s127
    %p131 = scmp.eq.s32.totalorder %s16, 0
    %p132 = por %p130, %p131
    %p133 = scmp.ne.s32.totalorder %s125, %s127
    %p134 = scmp.eq.s32.totalorder %s21, 3
    %p135 = por %p133, %p134
    %p136 = scmp.ne.s32.totalorder %s127, %s128
    %p137 = scmp.eq.s32.totalorder %s21, 0
    %p138 = por %p136, %p137
    %p139 = scmp.ne.s32.totalorder %s127, %s128
    %p140 = scmp.eq.s32.totalorder %s22, 3
    %p141 = por %p139, %p140
    %p143 = scmp.ne.s32.totalorder %s128, %s142
    %p144 = scmp.eq.s32.totalorder %s22, 0
    %p145 = por %p143, %p144
    %s147 = sadd.s32 %s146, 1
    %p150 = scmp.eq.s32.totalorder %s16, 3
    %p151 = scmp.ne.s32.totalorder %s146, %s148
    %p152 = scmp.eq.s32.totalorder %s16, 0
    %p153 = por %p151, %p152
    %p154 = scmp.ne.s32.totalorder %s146, %s148
    %p155 = scmp.eq.s32.totalorder %s21, 3
    %p156 = por %p154, %p155
    %p157 = scmp.ne.s32.totalorder %s148, %s149
    %p158 = scmp.eq.s32.totalorder %s21, 0
    %p159 = por %p157, %p158
    %p160 = scmp.ne.s32.totalorder %s148, %s149
    %p161 = scmp.eq.s32.totalorder %s22, 3
    %p162 = por %p160, %p161
    %p164 = scmp.ne.s32.totalorder %s149, %s163
    %p165 = scmp.eq.s32.totalorder %s22, 0
    %p166 = por %p164, %p165
    %s168 = sadd.s32 %s167, 1
    %p171 = scmp.eq.s32.totalorder %s16, 3
    %p172 = scmp.ne.s32.totalorder %s167, %s169
    %p173 = scmp.eq.s32.totalorder %s16, 0
    %p174 = por %p172, %p173
    %p175 = scmp.ne.s32.totalorder %s167, %s169
    %p176 = scmp.eq.s32.totalorder %s21, 3
    %p177 = por %p175, %p176
    %p178 = scmp.ne.s32.totalorder %s169, %s170
    %p179 = scmp.eq.s32.totalorder %s21, 0
    %p180 = por %p178, %p179
    %p181 = scmp.ne.s32.totalorder %s169, %s170
    %p182 = scmp.eq.s32.totalorder %s22, 3
    %p183 = por %p181, %p182
    %p185 = scmp.ne.s32.totalorder %s170, %s184
    %p186 = scmp.eq.s32.totalorder %s22, 0
    %p187 = por %p185, %p186
    %s189 = sadd.s32 %s188, 1
    %p192 = scmp.eq.s32.totalorder %s16, 3
    %p193 = scmp.ne.s32.totalorder %s188, %s190
    %p194 = scmp.eq.s32.totalorder %s16, 0
    %p195 = por %p193, %p194
    %p196 = scmp.ne.s32.totalorder %s188, %s190
    %p197 = scmp.eq.s32.totalorder %s21, 3
    %p198 = por %p196, %p197
    %p199 = scmp.ne.s32.totalorder %s190, %s191
    %p200 = scmp.eq.s32.totalorder %s21, 0
    %p201 = por %p199, %p200
    %p202 = scmp.ne.s32.totalorder %s190, %s191
    %p203 = scmp.eq.s32.totalorder %s22, 3
    %p204 = por %p202, %p203
    %p206 = scmp.ne.s32.totalorder %s191, %s205
    %p207 = scmp.eq.s32.totalorder %s22, 0
    %p208 = por %p206, %p207
    %s210 = sadd.s32 %s209, 1
    %p213 = scmp.eq.s32.totalorder %s16, 3
    %p214 = scmp.ne.s32.totalorder %s209, %s211
    %p215 = scmp.eq.s32.totalorder %s16, 0
    %p216 = por %p214, %p215
    %p217 = scmp.ne.s32.totalorder %s209, %s211
    %p218 = scmp.eq.s32.totalorder %s21, 3
    %p219 = por %p217, %p218
    %p220 = scmp.ne.s32.totalorder %s211, %s212
    %p221 = scmp.eq.s32.totalorder %s21, 0
    %p222 = por %p220, %p221
    %p223 = scmp.ne.s32.totalorder %s211, %s212
    %p224 = scmp.eq.s32.totalorder %s22, 3
    %p225 = por %p223, %p224
    %p227 = scmp.ne.s32.totalorder %s212, %s226
    %p228 = scmp.eq.s32.totalorder %s22, 0
    %p229 = por %p227, %p228
    %s231 = sadd.s32 %s230, 1
    %p234 = scmp.eq.s32.totalorder %s16, 3
    %p235 = scmp.ne.s32.totalorder %s230, %s232
    %p236 = scmp.eq.s32.totalorder %s16, 0
    %p237 = por %p235, %p236
    %p238 = scmp.ne.s32.totalorder %s230, %s232
    %p239 = scmp.eq.s32.totalorder %s21, 3
    %p240 = por %p238, %p239
    %p241 = scmp.ne.s32.totalorder %s232, %s233
    %p242 = scmp.eq.s32.totalorder %s21, 0
    %p243 = por %p241, %p242
    %p244 = scmp.ne.s32.totalorder %s232, %s233
    %p245 = scmp.eq.s32.totalorder %s22, 3
    %p246 = por %p244, %p245
    %p248 = scmp.ne.s32.totalorder %s233, %s247
    %p249 = scmp.eq.s32.totalorder %s22, 0
    %p250 = por %p248, %p249
    %s251 = ssub.s32 %s23, %s35
    %s252 = ssub.s32 %s24, %s31
    %s253 = sor.u32 %s251, %s252
    %p254 = scmp.eq.s32.totalorder %s253, 0
    %s256 = sadd.s32 %s255, 1
    %s257 = scalar_select %p254, %s255, %s256
    %p260 = pneg %p254
    %p261 = scmp.eq.s32.totalorder %s16, 3
    %p262 = por %p260, %p261
    %p263 = scmp.ne.s32.totalorder %s255, %s258
    %p264 = scmp.eq.s32.totalorder %s16, 0
    %p265 = por %p263, %p264
    %p266 = scmp.ne.s32.totalorder %s255, %s258
    %p267 = scmp.eq.s32.totalorder %s21, 3
    %p268 = por %p266, %p267
    %p269 = scmp.ne.s32.totalorder %s258, %s259
    %p270 = scmp.eq.s32.totalorder %s21, 0
    %p271 = por %p269, %p270
    %p272 = scmp.ne.s32.totalorder %s258, %s259
    %p273 = scmp.eq.s32.totalorder %s22, 3
    %p274 = por %p272, %p273
    %p276 = scmp.ne.s32.totalorder %s259, %s275
    %p277 = scmp.eq.s32.totalorder %s22, 0
    %p278 = por %p276, %p277
    %p279 = scmp.le.s32.totalorder 1, %s16
    %p280 = scmp.lt.s32.totalorder %s16, 5
    %p281 = pnand %p279, %p280
    %p282 = pneg %p281
    // Predicated region
    $region9: #{tpu_custom_call.1} parent=5 // pred_check
      _
    $region10: #{tpu_custom_call.1} parent=5 // pred_check_branch
      %284 = sbr.rel (%p281) target = $region12
    $region11: #{tpu_custom_call.1} parent=5 // pred_region
      %s285 = ssub.s32 %s16, 1
      // Predicated region
      $region13: #{tpu_custom_call.1} parent=11 // pred_check
        %p286 = pneg %p75
      $region14: #{tpu_custom_call.1} parent=11 // pred_check_branch
        %288 = sbr.rel (%p286) target = $region16
      $region15: #{tpu_custom_call.1} parent=11 // pred_region
        _
      $region16: #{tpu_custom_call.1} parent=11 // pred_fallthru
        _
      // Predicated region
      $region17: #{tpu_custom_call.1} parent=11 // pred_check
        %p289 = pneg %p96
      $region18: #{tpu_custom_call.1} parent=11 // pred_check_branch
        %291 = sbr.rel (%p289) target = $region20
      $region19: #{tpu_custom_call.1} parent=11 // pred_region
        _
      $region20: #{tpu_custom_call.1} parent=11 // pred_fallthru
        _
      // Predicated region
      $region21: #{tpu_custom_call.1} parent=11 // pred_check
        %p292 = pneg %p117
      $region22: #{tpu_custom_call.1} parent=11 // pred_check_branch
        %294 = sbr.rel (%p292) target = $region24
      $region23: #{tpu_custom_call.1} parent=11 // pred_region
        _
      $region24: #{tpu_custom_call.1} parent=11 // pred_fallthru
        _
      // Predicated region
      $region25: #{tpu_custom_call.1} parent=11 // pred_check
        %p295 = pneg %p138
      $region26: #{tpu_custom_call.1} parent=11 // pred_check_branch
        %297 = sbr.rel (%p295) target = $region28
      $region27: #{tpu_custom_call.1} parent=11 // pred_region
        _
      $region28: #{tpu_custom_call.1} parent=11 // pred_fallthru
        _
      // Predicated region
      $region29: #{tpu_custom_call.1} parent=11 // pred_check
        %p298 = pneg %p159
      $region30: #{tpu_custom_call.1} parent=11 // pred_check_branch
        %300 = sbr.rel (%p298) target = $region32
      $region31: #{tpu_custom_call.1} parent=11 // pred_region
        _
      $region32: #{tpu_custom_call.1} parent=11 // pred_fallthru
        _
      // Predicated region
      $region33: #{tpu_custom_call.1} parent=11 // pred_check
        %p301 = pneg %p180
      $region34: #{tpu_custom_call.1} parent=11 // pred_check_branch
        %303 = sbr.rel (%p301) target = $region36
      $region35: #{tpu_custom_call.1} parent=11 // pred_region
        _
      $region36: #{tpu_custom_call.1} parent=11 // pred_fallthru
        _
      // Predicated region
      $region37: #{tpu_custom_call.1} parent=11 // pred_check
        %p304 = pneg %p201
      $region38: #{tpu_custom_call.1} parent=11 // pred_check_branch
        %306 = sbr.rel (%p304) target = $region40
      $region39: #{tpu_custom_call.1} parent=11 // pred_region
        _
      $region40: #{tpu_custom_call.1} parent=11 // pred_fallthru
        _
      // Predicated region
      $region41: #{tpu_custom_call.1} parent=11 // pred_check
        %p307 = pneg %p222
      $region42: #{tpu_custom_call.1} parent=11 // pred_check_branch
        %309 = sbr.rel (%p307) target = $region44
      $region43: #{tpu_custom_call.1} parent=11 // pred_region
        _
      $region44: #{tpu_custom_call.1} parent=11 // pred_fallthru
        _
      // Predicated region
      $region45: #{tpu_custom_call.1} parent=11 // pred_check
        %p310 = pneg %p243
      $region46: #{tpu_custom_call.1} parent=11 // pred_check_branch
        %312 = sbr.rel (%p310) target = $region48
      $region47: #{tpu_custom_call.1} parent=11 // pred_region
        _
      $region48: #{tpu_custom_call.1} parent=11 // pred_fallthru
        _
    $region12: #{tpu_custom_call.1} parent=5 // pred_fallthru
      _
    %p313 = scmp.lt.s32.totalorder %s16, 4
    // Predicated region
    $region49: #{tpu_custom_call.1} parent=5 // pred_check
      %p314 = pneg %p313
    $region50: #{tpu_custom_call.1} parent=5 // pred_check_branch
      %316 = sbr.rel (%p314) target = $region52
    $region51: #{tpu_custom_call.1} parent=5 // pred_region
      // Predicated region
      $region53: #{tpu_custom_call.1} parent=51 // pred_check
        %p317 = pneg %p48
      $region54: #{tpu_custom_call.1} parent=51 // pred_check_branch
        %319 = sbr.rel (%p317) target = $region56
      $region55: #{tpu_custom_call.1} parent=51 // pred_region
        %p320 = scmp.lt.s32.totalorder %s23, 1
        %s321 = scalar_select %p320, %s23, 1
        %s322 = smul.addr %s321, 36
        %s323 = smul.addr %s322, 8
        %s324 = scalar_lea.vmem %s0, %s323
      $region56: #{tpu_custom_call.1} parent=51 // pred_fallthru
        _
    $region52: #{tpu_custom_call.1} parent=5 // pred_fallthru
      _
    %p325 = scmp.le.s32.totalorder 1, %s16
    %p326 = scmp.lt.s32.totalorder %s16, 5
    %p327 = pnand %p325, %p326
    %p328 = pneg %p327
    // Predicated region
    $region57: #{tpu_custom_call.1} parent=5 // pred_check
      _
    $region58: #{tpu_custom_call.1} parent=5 // pred_check_branch
      %330 = sbr.rel (%p327) target = $region60
    $region59: #{tpu_custom_call.1} parent=5 // pred_region
      %s331 = ssub.s32 %s16, 1
      %p332 = scmp.lt.s32.totalorder %s25, 1
      %s333 = scalar_select %p332, %s25, 1
      %s334 = smul.addr %s333, 36
      %s335 = smul.addr %s334, 8
      %s336 = scalar_lea.vmem %s0, %s335
      %p337 = pneg %p54
      %p338 = pneg %p51
      %p339 = pneg %p75
      %p340 = pneg %p72
      %p341 = pneg %p96
      %p342 = pneg %p93
      %p343 = pneg %p117
      %p344 = pneg %p114
      %p345 = pneg %p138
      %p346 = pneg %p135
      %p347 = pneg %p159
      %p348 = pneg %p156
      %p349 = pneg %p180
      %p350 = pneg %p177
      %p351 = pneg %p201
      %p352 = pneg %p198
      %p353 = pneg %p222
      %p354 = pneg %p219
      %p355 = pneg %p243
      %p356 = pneg %p240
      %p357 = pneg %p271
      %p358 = pneg %p268
      %s359 = smul.u32 8, %s26
      %p360 = scmp.lt.s32.totalorder %s25, 1
      %s361 = scalar_select %p360, %s25, 1
      %p362 = scmp.lt.s32.totalorder %s359, 15
      %s363 = scalar_select %p362, %s359, 15
      %s364 = smul.addr %s363, 2
      %s365 = smul.addr %s361, 32
      %s366 = sadd.s32 %s364, %s365
      %s367 = smul.addr %s366, 8
      %s368 = scalar_lea.vmem %s10, %s367
      %p369 = scmp.lt.s32.totalorder %s25, 1
      %s370 = scalar_select %p369, %s25, 1
      %s371 = smul.addr %s370, 36
      %s372 = smul.addr %s371, 8
      %s373 = scalar_lea.vmem %s0, %s372
      %s374 = smul.u32 8, %s26
      %p375 = scmp.lt.s32.totalorder %s25, 1
      %s376 = scalar_select %p375, %s25, 1
      %p377 = scmp.lt.s32.totalorder %s374, 15
      %s378 = scalar_select %p377, %s374, 15
      %s379 = smul.addr %s378, 2
      %s380 = smul.addr %s376, 32
      %s381 = sadd.s32 %s379, %s380
      %s382 = smul.addr %s381, 8
      %s383 = scalar_lea.vmem %s10, %s382
      %s384 = smul.u32 8, %s26
      %s386 = smul.u32 %s26, 8
      %s387 = smul.u32 %s386, 16
      %s388 = scalar_lea.vmem %s373, %s387
      %v389 = vld [vmem:[%s388] sm:$0xff]
      %v390 = vld [vmem:[%s388 + $0x8] sm:$0xff]
      %v391 = vld [vmem:[%s388 + $0x10] sm:$0xff]
      %v392 = vld [vmem:[%s388 + $0x18] sm:$0xff]
      %v393 = vld [vmem:[%s388 + $0x20] sm:$0xff]
      %v394 = vld [vmem:[%s388 + $0x28] sm:$0xff]
      %v395 = vld [vmem:[%s388 + $0x30] sm:$0xff]
      %v396 = vld [vmem:[%s388 + $0x38] sm:$0xff]
      %v397 = vld [vmem:[%s388 + $0x40] sm:$0xff]
      %v398 = vld [vmem:[%s388 + $0x48] sm:$0xff]
      %v399 = vld [vmem:[%s388 + $0x50] sm:$0xff]
      %v400 = vld [vmem:[%s388 + $0x58] sm:$0xff]
      %v401 = vld [vmem:[%s388 + $0x60] sm:$0xff]
      %v402 = vld [vmem:[%s388 + $0x68] sm:$0xff]
      %v403 = vld [vmem:[%s388 + $0x70] sm:$0xff]
      %v404 = vld [vmem:[%s388 + $0x78] sm:$0xff]
      %v405 = vld [vmem:[%s388 + $0x80] sm:$0xff]
      %v406 = vld [vmem:[%s388 + $0x88] sm:$0xff]
      %v407 = vld [vmem:[%s388 + $0x90] sm:$0xff]
      %v408 = vld [vmem:[%s388 + $0x98] sm:$0xff]
      %v409 = vld [vmem:[%s1] sm:$0x1]
      %411 = vset.pattern.permute.xlu0 0
      %412 = vperm.xlu0 %411, %v389
      %v413 = vpop.permute.xlu0 %412
      %416 = vset.pattern.permute.xlu0 0
      %417 = vperm.xlu0 %416, %v390
      %v418 = vpop.permute.xlu0 %417
      %421 = vset.pattern.permute.xlu0 0
      %422 = vperm.xlu0 %421, %v391
      %v423 = vpop.permute.xlu0 %422
      %426 = vset.pattern.permute.xlu0 0
      %427 = vperm.xlu0 %426, %v392
      %v428 = vpop.permute.xlu0 %427
      %431 = vset.pattern.permute.xlu0 0
      %432 = vperm.xlu0 %431, %v393
      %v433 = vpop.permute.xlu0 %432
      %436 = vset.pattern.permute.xlu0 0
      %437 = vperm.xlu0 %436, %v394
      %v438 = vpop.permute.xlu0 %437
      %441 = vset.pattern.permute.xlu0 0
      %442 = vperm.xlu0 %441, %v395
      %v443 = vpop.permute.xlu0 %442
      %446 = vset.pattern.permute.xlu0 0
      %447 = vperm.xlu0 %446, %v396
      %v448 = vpop.permute.xlu0 %447
      %451 = vset.pattern.permute.xlu0 0
      %452 = vperm.xlu0 %451, %v397
      %v453 = vpop.permute.xlu0 %452
      %456 = vset.pattern.permute.xlu0 0
      %457 = vperm.xlu0 %456, %v398
      %v458 = vpop.permute.xlu0 %457
      %461 = vset.pattern.permute.xlu0 0
      %462 = vperm.xlu0 %461, %v399
      %v463 = vpop.permute.xlu0 %462
      %466 = vset.pattern.permute.xlu0 0
      %467 = vperm.xlu0 %466, %v400
      %v468 = vpop.permute.xlu0 %467
      %471 = vset.pattern.permute.xlu0 0
      %472 = vperm.xlu0 %471, %v401
      %v473 = vpop.permute.xlu0 %472
      %476 = vset.pattern.permute.xlu0 0
      %477 = vperm.xlu0 %476, %v402
      %v478 = vpop.permute.xlu0 %477
      %481 = vset.pattern.permute.xlu0 0
      %482 = vperm.xlu0 %481, %v403
      %v483 = vpop.permute.xlu0 %482
      %486 = vset.pattern.permute.xlu0 0
      %487 = vperm.xlu0 %486, %v404
      %v488 = vpop.permute.xlu0 %487
      %491 = vset.pattern.permute.xlu0 0
      %492 = vperm.xlu0 %491, %v405
      %v493 = vpop.permute.xlu0 %492
      %496 = vset.pattern.permute.xlu0 0
      %497 = vperm.xlu0 %496, %v406
      %v498 = vpop.permute.xlu0 %497
      %501 = vset.pattern.permute.xlu0 0
      %502 = vperm.xlu0 %501, %v407
      %v503 = vpop.permute.xlu0 %502
      %506 = vset.pattern.permute.xlu0 0
      %507 = vperm.xlu0 %506, %v408
      %v508 = vpop.permute.xlu0 %507
      %v510 = vperm.slane %v409, 0
      %v511 = vmul.f32 %v413, %v510
      %v512 = vmul.f32 %v418, %v510
      %v513 = vmul.f32 %v423, %v510
      %v514 = vmul.f32 %v428, %v510
      %v515 = vmul.f32 %v433, %v510
      %v516 = vmul.f32 %v438, %v510
      %v517 = vmul.f32 %v443, %v510
      %v518 = vmul.f32 %v448, %v510
      %v519 = vmul.f32 %v453, %v510
      %v520 = vmul.f32 %v458, %v510
      %v521 = vmul.f32 %v463, %v510
      %v522 = vmul.f32 %v468, %v510
      %v523 = vmul.f32 %v473, %v510
      %v524 = vmul.f32 %v478, %v510
      %v525 = vmul.f32 %v483, %v510
      %v526 = vmul.f32 %v488, %v510
      %v527 = vmul.f32 %v493, %v510
      %v528 = vmul.f32 %v498, %v510
      %v529 = vmul.f32 %v503, %v510
      %v530 = vmul.f32 %v508, %v510
      %v531 = vld [vmem:[%s1 + $0x1] sm:$0x1]
      %532 = vset.pattern.permute.xlu0 1
      %533 = vperm.xlu0 %532, %v389
      %v534 = vpop.permute.xlu0 %533
      %536 = vset.pattern.permute.xlu0 1
      %537 = vperm.xlu0 %536, %v390
      %v538 = vpop.permute.xlu0 %537
      %540 = vset.pattern.permute.xlu0 1
      %541 = vperm.xlu0 %540, %v391
      %v542 = vpop.permute.xlu0 %541
      %544 = vset.pattern.permute.xlu0 1
      %545 = vperm.xlu0 %544, %v392
      %v546 = vpop.permute.xlu0 %545
      %548 = vset.pattern.permute.xlu0 1
      %549 = vperm.xlu0 %548, %v393
      %v550 = vpop.permute.xlu0 %549
      %552 = vset.pattern.permute.xlu0 1
      %553 = vperm.xlu0 %552, %v394
      %v554 = vpop.permute.xlu0 %553
      %556 = vset.pattern.permute.xlu0 1
      %557 = vperm.xlu0 %556, %v395
      %v558 = vpop.permute.xlu0 %557
      %560 = vset.pattern.permute.xlu0 1
      %561 = vperm.xlu0 %560, %v396
      %v562 = vpop.permute.xlu0 %561
      %564 = vset.pattern.permute.xlu0 1
      %565 = vperm.xlu0 %564, %v397
      %v566 = vpop.permute.xlu0 %565
      %568 = vset.pattern.permute.xlu0 1
      %569 = vperm.xlu0 %568, %v398
      %v570 = vpop.permute.xlu0 %569
      %572 = vset.pattern.permute.xlu0 1
      %573 = vperm.xlu0 %572, %v399
      %v574 = vpop.permute.xlu0 %573
      %576 = vset.pattern.permute.xlu0 1
      %577 = vperm.xlu0 %576, %v400
      %v578 = vpop.permute.xlu0 %577
      %580 = vset.pattern.permute.xlu0 1
      %581 = vperm.xlu0 %580, %v401
      %v582 = vpop.permute.xlu0 %581
      %584 = vset.pattern.permute.xlu0 1
      %585 = vperm.xlu0 %584, %v402
      %v586 = vpop.permute.xlu0 %585
      %588 = vset.pattern.permute.xlu0 1
      %589 = vperm.xlu0 %588, %v403
      %v590 = vpop.permute.xlu0 %589
      %592 = vset.pattern.permute.xlu0 1
      %593 = vperm.xlu0 %592, %v404
      %v594 = vpop.permute.xlu0 %593
      %596 = vset.pattern.permute.xlu0 1
      %597 = vperm.xlu0 %596, %v405
      %v598 = vpop.permute.xlu0 %597
      %600 = vset.pattern.permute.xlu0 1
      %601 = vperm.xlu0 %600, %v406
      %v602 = vpop.permute.xlu0 %601
      %604 = vset.pattern.permute.xlu0 1
      %605 = vperm.xlu0 %604, %v407
      %v606 = vpop.permute.xlu0 %605
      %608 = vset.pattern.permute.xlu0 1
      %609 = vperm.xlu0 %608, %v408
      %v610 = vpop.permute.xlu0 %609
      %v612 = vperm.slane %v531, 0
      %v613 = vmul.f32 %v534, %v612
      %v614 = vmul.f32 %v538, %v612
      %v615 = vmul.f32 %v542, %v612
      %v616 = vmul.f32 %v546, %v612
      %v617 = vmul.f32 %v550, %v612
      %v618 = vmul.f32 %v554, %v612
      %v619 = vmul.f32 %v558, %v612
      %v620 = vmul.f32 %v562, %v612
      %v621 = vmul.f32 %v566, %v612
      %v622 = vmul.f32 %v570, %v612
      %v623 = vmul.f32 %v574, %v612
      %v624 = vmul.f32 %v578, %v612
      %v625 = vmul.f32 %v582, %v612
      %v626 = vmul.f32 %v586, %v612
      %v627 = vmul.f32 %v590, %v612
      %v628 = vmul.f32 %v594, %v612
      %v629 = vmul.f32 %v598, %v612
      %v630 = vmul.f32 %v602, %v612
      %v631 = vmul.f32 %v606, %v612
      %v632 = vmul.f32 %v610, %v612
      %v633 = vadd.f32 %v511, %v613
      %v634 = vadd.f32 %v512, %v614
      %v635 = vadd.f32 %v513, %v615
      %v636 = vadd.f32 %v514, %v616
      %v637 = vadd.f32 %v515, %v617
      %v638 = vadd.f32 %v516, %v618
      %v639 = vadd.f32 %v517, %v619
      %v640 = vadd.f32 %v518, %v620
      %v641 = vadd.f32 %v519, %v621
      %v642 = vadd.f32 %v520, %v622
      %v643 = vadd.f32 %v521, %v623
      %v644 = vadd.f32 %v522, %v624
      %v645 = vadd.f32 %v523, %v625
      %v646 = vadd.f32 %v524, %v626
      %v647 = vadd.f32 %v525, %v627
      %v648 = vadd.f32 %v526, %v628
      %v649 = vadd.f32 %v527, %v629
      %v650 = vadd.f32 %v528, %v630
      %v651 = vadd.f32 %v529, %v631
      %v652 = vadd.f32 %v530, %v632
      %v653 = vld [vmem:[%s1 + $0x2] sm:$0x1]
      %654 = vset.pattern.permute.xlu0 2
      %655 = vperm.xlu0 %654, %v389
      %v656 = vpop.permute.xlu0 %655
      %658 = vset.pattern.permute.xlu0 2
      %659 = vperm.xlu0 %658, %v390
      %v660 = vpop.permute.xlu0 %659
      %662 = vset.pattern.permute.xlu0 2
      %663 = vperm.xlu0 %662, %v391
      %v664 = vpop.permute.xlu0 %663
      %666 = vset.pattern.permute.xlu0 2
      %667 = vperm.xlu0 %666, %v392
      %v668 = vpop.permute.xlu0 %667
      %670 = vset.pattern.permute.xlu0 2
      %671 = vperm.xlu0 %670, %v393
      %v672 = vpop.permute.xlu0 %671
      %674 = vset.pattern.permute.xlu0 2
      %675 = vperm.xlu0 %674, %v394
      %v676 = vpop.permute.xlu0 %675
      %678 = vset.pattern.permute.xlu0 2
      %679 = vperm.xlu0 %678, %v395
      %v680 = vpop.permute.xlu0 %679
      %682 = vset.pattern.permute.xlu0 2
      %683 = vperm.xlu0 %682, %v396
      %v684 = vpop.permute.xlu0 %683
      %686 = vset.pattern.permute.xlu0 2
      %687 = vperm.xlu0 %686, %v397
      %v688 = vpop.permute.xlu0 %687
      %690 = vset.pattern.permute.xlu0 2
      %691 = vperm.xlu0 %690, %v398
      %v692 = vpop.permute.xlu0 %691
      %694 = vset.pattern.permute.xlu0 2
      %695 = vperm.xlu0 %694, %v399
      %v696 = vpop.permute.xlu0 %695
      %698 = vset.pattern.permute.xlu0 2
      %699 = vperm.xlu0 %698, %v400
      %v700 = vpop.permute.xlu0 %699
      %702 = vset.pattern.permute.xlu0 2
      %703 = vperm.xlu0 %702, %v401
      %v704 = vpop.permute.xlu0 %703
      %706 = vset.pattern.permute.xlu0 2
      %707 = vperm.xlu0 %706, %v402
      %v708 = vpop.permute.xlu0 %707
      %710 = vset.pattern.permute.xlu0 2
      %711 = vperm.xlu0 %710, %v403
      %v712 = vpop.permute.xlu0 %711
      %714 = vset.pattern.permute.xlu0 2
      %715 = vperm.xlu0 %714, %v404
      %v716 = vpop.permute.xlu0 %715
      %718 = vset.pattern.permute.xlu0 2
      %719 = vperm.xlu0 %718, %v405
      %v720 = vpop.permute.xlu0 %719
      %722 = vset.pattern.permute.xlu0 2
      %723 = vperm.xlu0 %722, %v406
      %v724 = vpop.permute.xlu0 %723
      %726 = vset.pattern.permute.xlu0 2
      %727 = vperm.xlu0 %726, %v407
      %v728 = vpop.permute.xlu0 %727
      %730 = vset.pattern.permute.xlu0 2
      %731 = vperm.xlu0 %730, %v408
      %v732 = vpop.permute.xlu0 %731
      %v734 = vperm.slane %v653, 0
      %v735 = vmul.f32 %v656, %v734
      %v736 = vmul.f32 %v660, %v734
      %v737 = vmul.f32 %v664, %v734
      %v738 = vmul.f32 %v668, %v734
      %v739 = vmul.f32 %v672, %v734
      %v740 = vmul.f32 %v676, %v734
      %v741 = vmul.f32 %v680, %v734
      %v742 = vmul.f32 %v684, %v734
      %v743 = vmul.f32 %v688, %v734
      %v744 = vmul.f32 %v692, %v734
      %v745 = vmul.f32 %v696, %v734
      %v746 = vmul.f32 %v700, %v734
      %v747 = vmul.f32 %v704, %v734
      %v748 = vmul.f32 %v708, %v734
      %v749 = vmul.f32 %v712, %v734
      %v750 = vmul.f32 %v716, %v734
      %v751 = vmul.f32 %v720, %v734
      %v752 = vmul.f32 %v724, %v734
      %v753 = vmul.f32 %v728, %v734
      %v754 = vmul.f32 %v732, %v734
      %v755 = vadd.f32 %v633, %v735
      %v756 = vadd.f32 %v634, %v736
      %v757 = vadd.f32 %v635, %v737
      %v758 = vadd.f32 %v636, %v738
      %v759 = vadd.f32 %v637, %v739
      %v760 = vadd.f32 %v638, %v740
      %v761 = vadd.f32 %v639, %v741
      %v762 = vadd.f32 %v640, %v742
      %v763 = vadd.f32 %v641, %v743
      %v764 = vadd.f32 %v642, %v744
      %v765 = vadd.f32 %v643, %v745
      %v766 = vadd.f32 %v644, %v746
      %v767 = vadd.f32 %v645, %v747
      %v768 = vadd.f32 %v646, %v748
      %v769 = vadd.f32 %v647, %v749
      %v770 = vadd.f32 %v648, %v750
      %v771 = vadd.f32 %v649, %v751
      %v772 = vadd.f32 %v650, %v752
      %v773 = vadd.f32 %v651, %v753
      %v774 = vadd.f32 %v652, %v754
      %v775 = vld [vmem:[%s1 + $0x3] sm:$0x1]
      %776 = vset.pattern.permute.xlu0 3
      %777 = vperm.xlu0 %776, %v389
      %v778 = vpop.permute.xlu0 %777
      %780 = vset.pattern.permute.xlu0 3
      %781 = vperm.xlu0 %780, %v390
      %v782 = vpop.permute.xlu0 %781
      %784 = vset.pattern.permute.xlu0 3
      %785 = vperm.xlu0 %784, %v391
      %v786 = vpop.permute.xlu0 %785
      %788 = vset.pattern.permute.xlu0 3
      %789 = vperm.xlu0 %788, %v392
      %v790 = vpop.permute.xlu0 %789
      %792 = vset.pattern.permute.xlu0 3
      %793 = vperm.xlu0 %792, %v393
      %v794 = vpop.permute.xlu0 %793
      %796 = vset.pattern.permute.xlu0 3
      %797 = vperm.xlu0 %796, %v394
      %v798 = vpop.permute.xlu0 %797
      %800 = vset.pattern.permute.xlu0 3
      %801 = vperm.xlu0 %800, %v395
      %v802 = vpop.permute.xlu0 %801
      %804 = vset.pattern.permute.xlu0 3
      %805 = vperm.xlu0 %804, %v396
      %v806 = vpop.permute.xlu0 %805
      %808 = vset.pattern.permute.xlu0 3
      %809 = vperm.xlu0 %808, %v397
      %v810 = vpop.permute.xlu0 %809
      %812 = vset.pattern.permute.xlu0 3
      %813 = vperm.xlu0 %812, %v398
      %v814 = vpop.permute.xlu0 %813
      %816 = vset.pattern.permute.xlu0 3
      %817 = vperm.xlu0 %816, %v399
      %v818 = vpop.permute.xlu0 %817
      %820 = vset.pattern.permute.xlu0 3
      %821 = vperm.xlu0 %820, %v400
      %v822 = vpop.permute.xlu0 %821
      %824 = vset.pattern.permute.xlu0 3
      %825 = vperm.xlu0 %824, %v401
      %v826 = vpop.permute.xlu0 %825
      %828 = vset.pattern.permute.xlu0 3
      %829 = vperm.xlu0 %828, %v402
      %v830 = vpop.permute.xlu0 %829
      %832 = vset.pattern.permute.xlu0 3
      %833 = vperm.xlu0 %832, %v403
      %v834 = vpop.permute.xlu0 %833
      %836 = vset.pattern.permute.xlu0 3
      %837 = vperm.xlu0 %836, %v404
      %v838 = vpop.permute.xlu0 %837
      %840 = vset.pattern.permute.xlu0 3
      %841 = vperm.xlu0 %840, %v405
      %v842 = vpop.permute.xlu0 %841
      %844 = vset.pattern.permute.xlu0 3
      %845 = vperm.xlu0 %844, %v406
      %v846 = vpop.permute.xlu0 %845
      %848 = vset.pattern.permute.xlu0 3
      %849 = vperm.xlu0 %848, %v407
      %v850 = vpop.permute.xlu0 %849
      %852 = vset.pattern.permute.xlu0 3
      %853 = vperm.xlu0 %852, %v408
      %v854 = vpop.permute.xlu0 %853
      %v856 = vperm.slane %v775, 0
      %v857 = vmul.f32 %v778, %v856
      %v858 = vmul.f32 %v782, %v856
      %v859 = vmul.f32 %v786, %v856
      %v860 = vmul.f32 %v790, %v856
      %v861 = vmul.f32 %v794, %v856
      %v862 = vmul.f32 %v798, %v856
      %v863 = vmul.f32 %v802, %v856
      %v864 = vmul.f32 %v806, %v856
      %v865 = vmul.f32 %v810, %v856
      %v866 = vmul.f32 %v814, %v856
      %v867 = vmul.f32 %v818, %v856
      %v868 = vmul.f32 %v822, %v856
      %v869 = vmul.f32 %v826, %v856
      %v870 = vmul.f32 %v830, %v856
      %v871 = vmul.f32 %v834, %v856
      %v872 = vmul.f32 %v838, %v856
      %v873 = vmul.f32 %v842, %v856
      %v874 = vmul.f32 %v846, %v856
      %v875 = vmul.f32 %v850, %v856
      %v876 = vmul.f32 %v854, %v856
      %v877 = vadd.f32 %v755, %v857
      %v878 = vadd.f32 %v756, %v858
      %v879 = vadd.f32 %v757, %v859
      %v880 = vadd.f32 %v758, %v860
      %v881 = vadd.f32 %v759, %v861
      %v882 = vadd.f32 %v760, %v862
      %v883 = vadd.f32 %v761, %v863
      %v884 = vadd.f32 %v762, %v864
      %v885 = vadd.f32 %v763, %v865
      %v886 = vadd.f32 %v764, %v866
      %v887 = vadd.f32 %v765, %v867
      %v888 = vadd.f32 %v766, %v868
      %v889 = vadd.f32 %v767, %v869
      %v890 = vadd.f32 %v768, %v870
      %v891 = vadd.f32 %v769, %v871
      %v892 = vadd.f32 %v770, %v872
      %v893 = vadd.f32 %v771, %v873
      %v894 = vadd.f32 %v772, %v874
      %v895 = vadd.f32 %v773, %v875
      %v896 = vadd.f32 %v774, %v876
      %v897 = vld [vmem:[%s2] sm:$0x1]
      %v899 = vperm.slane %v897, 0
      %v901 = vmul.f32 %v877, %v899
      %v902 = vmul.f32 %v878, %v899
      %v903 = vmul.f32 %v879, %v899
      %v904 = vmul.f32 %v880, %v899
      %v905 = vmul.f32 %v881, %v899
      %v906 = vmul.f32 %v882, %v899
      %v907 = vmul.f32 %v883, %v899
      %v908 = vmul.f32 %v884, %v899
      %v909 = vmul.f32 %v885, %v899
      %v910 = vmul.f32 %v886, %v899
      %v911 = vmul.f32 %v887, %v899
      %v912 = vmul.f32 %v888, %v899
      %v913 = vmul.f32 %v889, %v899
      %v914 = vmul.f32 %v890, %v899
      %v915 = vmul.f32 %v891, %v899
      %v916 = vmul.f32 %v892, %v899
      %v917 = vmul.f32 %v893, %v899
      %v918 = vmul.f32 %v894, %v899
      %v919 = vmul.f32 %v895, %v899
      %v920 = vmul.f32 %v896, %v899
      %v921 = vld [vmem:[%s3] sm:$0x1]
      %v923 = vperm.slane %v921, 0
      %v925 = vadd.f32 %v901, %v923
      %v926 = vadd.f32 %v902, %v923
      %v927 = vadd.f32 %v903, %v923
      %v928 = vadd.f32 %v904, %v923
      %v929 = vadd.f32 %v905, %v923
      %v930 = vadd.f32 %v906, %v923
      %v931 = vadd.f32 %v907, %v923
      %v932 = vadd.f32 %v908, %v923
      %v933 = vadd.f32 %v909, %v923
      %v934 = vadd.f32 %v910, %v923
      %v935 = vadd.f32 %v911, %v923
      %v936 = vadd.f32 %v912, %v923
      %v937 = vadd.f32 %v913, %v923
      %v938 = vadd.f32 %v914, %v923
      %v939 = vadd.f32 %v915, %v923
      %v940 = vadd.f32 %v916, %v923
      %v941 = vadd.f32 %v917, %v923
      %v942 = vadd.f32 %v918, %v923
      %v943 = vadd.f32 %v919, %v923
      %v944 = vadd.f32 %v920, %v923
      %v945 = vmax.f32 %v925, 0.0
      %v946 = vmax.f32 %v926, 0.0
      %v947 = vmax.f32 %v927, 0.0
      %v948 = vmax.f32 %v928, 0.0
      %v949 = vmax.f32 %v929, 0.0
      %v950 = vmax.f32 %v930, 0.0
      %v951 = vmax.f32 %v931, 0.0
      %v952 = vmax.f32 %v932, 0.0
      %v953 = vmax.f32 %v933, 0.0
      %v954 = vmax.f32 %v934, 0.0
      %v955 = vmax.f32 %v935, 0.0
      %v956 = vmax.f32 %v936, 0.0
      %v957 = vmax.f32 %v937, 0.0
      %v958 = vmax.f32 %v938, 0.0
      %v959 = vmax.f32 %v939, 0.0
      %v960 = vmax.f32 %v940, 0.0
      %v961 = vmax.f32 %v941, 0.0
      %v962 = vmax.f32 %v942, 0.0
      %v963 = vmax.f32 %v943, 0.0
      %v964 = vmax.f32 %v944, 0.0
      %vm965 = vcmask 253952
      %vm966 = vsmask.f32 256
      %vm967 = vmand %vm965, %vm966
      %v968 = vld [vmem:[#allocation2] sm:$0x1]
      %v969 = vsel %vm967, 0, %v968
      %970 = vst [vmem:[#allocation2] sm:$0x1] %v969
      %v971 = vld [vmem:[#allocation2 + $0xc] sm:$0x1]
      %v972 = vsel %vm967, 0, %v971
      %973 = vst [vmem:[#allocation2 + $0xc] sm:$0x1] %v972
      %v974 = vld [vmem:[#allocation2 + $0x18] sm:$0x1]
      %v975 = vsel %vm967, 0, %v974
      %976 = vst [vmem:[#allocation2 + $0x18] sm:$0x1] %v975
      %v977 = vld [vmem:[#allocation2 + $0x24] sm:$0x1]
      %v978 = vsel %vm967, 0, %v977
      %979 = vst [vmem:[#allocation2 + $0x24] sm:$0x1] %v978
      %v980 = vld [vmem:[#allocation2 + $0x30] sm:$0x1]
      %v981 = vsel %vm967, 0, %v980
      %982 = vst [vmem:[#allocation2 + $0x30] sm:$0x1] %v981
      %v983 = vld [vmem:[#allocation2 + $0x3c] sm:$0x1]
      %v984 = vsel %vm967, 0, %v983
      %985 = vst [vmem:[#allocation2 + $0x3c] sm:$0x1] %v984
      %v986 = vld [vmem:[#allocation2 + $0x48] sm:$0x1]
      %v987 = vsel %vm967, 0, %v986
      %988 = vst [vmem:[#allocation2 + $0x48] sm:$0x1] %v987
      %v989 = vld [vmem:[#allocation2 + $0x54] sm:$0x1]
      %v990 = vsel %vm967, 0, %v989
      %991 = vst [vmem:[#allocation2 + $0x54] sm:$0x1] %v990
      %v992 = vld [vmem:[#allocation2 + $0x60] sm:$0x1]
      %v993 = vsel %vm967, 0, %v992
      %994 = vst [vmem:[#allocation2 + $0x60] sm:$0x1] %v993
      %v995 = vld [vmem:[#allocation2 + $0x6c] sm:$0x1]
      %v996 = vsel %vm967, 0, %v995
      %997 = vst [vmem:[#allocation2 + $0x6c] sm:$0x1] %v996
      %vm998 = vcmask 257024
      %vm999 = vsmask.f32 7938
      %vm1000 = vmand %vm998, %vm999
      %v1001 = vld [vmem:[#allocation2 + $0x8] sm:$0xf]
      %v1002 = vsel %vm1000, 0, %v1001
      %1003 = vst [vmem:[#allocation2 + $0x8] sm:$0xf] %v1002
      %v1004 = vld [vmem:[#allocation2 + $0x14] sm:$0xf]
      %v1005 = vsel %vm1000, 0, %v1004
      %1006 = vst [vmem:[#allocation2 + $0x14] sm:$0xf] %v1005
      %v1007 = vld [vmem:[#allocation2 + $0x20] sm:$0xf]
      %v1008 = vsel %vm1000, 0, %v1007
      %1009 = vst [vmem:[#allocation2 + $0x20] sm:$0xf] %v1008
      %v1010 = vld [vmem:[#allocation2 + $0x2c] sm:$0xf]
      %v1011 = vsel %vm1000, 0, %v1010
      %1012 = vst [vmem:[#allocation2 + $0x2c] sm:$0xf] %v1011
      %v1013 = vld [vmem:[#allocation2 + $0x38] sm:$0xf]
      %v1014 = vsel %vm1000, 0, %v1013
      %1015 = vst [vmem:[#allocation2 + $0x38] sm:$0xf] %v1014
      %v1016 = vld [vmem:[#allocation2 + $0x44] sm:$0xf]
      %v1017 = vsel %vm1000, 0, %v1016
      %1018 = vst [vmem:[#allocation2 + $0x44] sm:$0xf] %v1017
      %v1019 = vld [vmem:[#allocation2 + $0x50] sm:$0xf]
      %v1020 = vsel %vm1000, 0, %v1019
      %1021 = vst [vmem:[#allocation2 + $0x50] sm:$0xf] %v1020
      %v1022 = vld [vmem:[#allocation2 + $0x5c] sm:$0xf]
      %v1023 = vsel %vm1000, 0, %v1022
      %1024 = vst [vmem:[#allocation2 + $0x5c] sm:$0xf] %v1023
      %v1025 = vld [vmem:[#allocation2 + $0x68] sm:$0xf]
      %v1026 = vsel %vm1000, 0, %v1025
      %1027 = vst [vmem:[#allocation2 + $0x68] sm:$0xf] %v1026
      %v1028 = vld [vmem:[#allocation2 + $0x74] sm:$0xf]
      %v1029 = vsel %vm1000, 0, %v1028
      %1030 = vst [vmem:[#allocation2 + $0x74] sm:$0xf] %v1029
      %v1031 = vpack.c.bf16 %v945, %v945
      %v1032 = vpack.c.bf16 %v946, %v946
      %v1033 = vpack.c.bf16 %v947, %v947
      %v1034 = vpack.c.bf16 %v948, %v948
      %v1035 = vpack.c.bf16 %v949, %v949
      %v1036 = vpack.c.bf16 %v950, %v950
      %v1037 = vpack.c.bf16 %v951, %v951
      %v1038 = vpack.c.bf16 %v952, %v952
      %v1039 = vpack.c.bf16 %v953, %v953
      %v1040 = vpack.c.bf16 %v954, %v954
      %v1041 = vpack.c.bf16 %v955, %v955
      %v1042 = vpack.c.bf16 %v956, %v956
      %v1043 = vpack.c.bf16 %v957, %v957
      %v1044 = vpack.c.bf16 %v958, %v958
      %v1045 = vpack.c.bf16 %v959, %v959
      %v1046 = vpack.c.bf16 %v960, %v960
      %v1047 = vpack.c.bf16 %v961, %v961
      %v1048 = vpack.c.bf16 %v962, %v962
      %v1049 = vpack.c.bf16 %v963, %v963
      %v1050 = vpack.c.bf16 %v964, %v964
      %vm1051 = vsmask.f32 4368
      %vm1052 = vmor %vm966, %vm1051
      %v1054 = vshrl.u32 %v1031, 16
      %v1056 = vrot.slane %v1054, 7
      %v1057 = vshll.u32 %v1031, 16
      %v1059 = vor.u32 %v1056, %v1057
      %v1060 = vrot.slane %v1056, 4
      %v1062 = vshrl.u32 %v1032, 16
      %v1064 = vrot.slane %v1062, 7
      %v1065 = vshll.u32 %v1032, 16
      %v1067 = vor.u32 %v1064, %v1065
      %v1068 = vsel %vm1052, %v1060, %v1067
      %v1069 = vrot.slane %v1064, 4
      %v1071 = vshrl.u32 %v1033, 16
      %v1073 = vrot.slane %v1071, 7
      %v1074 = vshll.u32 %v1033, 16
      %v1076 = vor.u32 %v1073, %v1074
      %v1077 = vrot.slane %v1073, 4
      %v1079 = vshrl.u32 %v1034, 16
      %v1081 = vrot.slane %v1079, 7
      %v1082 = vshll.u32 %v1034, 16
      %v1084 = vor.u32 %v1081, %v1082
      %v1085 = vsel %vm1052, %v1077, %v1084
      %v1086 = vrot.slane %v1081, 4
      %v1088 = vshrl.u32 %v1035, 16
      %v1090 = vrot.slane %v1088, 7
      %v1091 = vshll.u32 %v1035, 16
      %v1093 = vor.u32 %v1090, %v1091
      %v1094 = vrot.slane %v1090, 4
      %v1096 = vshrl.u32 %v1036, 16
      %v1098 = vrot.slane %v1096, 7
      %v1099 = vshll.u32 %v1036, 16
      %v1101 = vor.u32 %v1098, %v1099
      %v1102 = vsel %vm1052, %v1094, %v1101
      %v1103 = vrot.slane %v1098, 4
      %v1105 = vshrl.u32 %v1037, 16
      %v1107 = vrot.slane %v1105, 7
      %v1108 = vshll.u32 %v1037, 16
      %v1110 = vor.u32 %v1107, %v1108
      %v1111 = vrot.slane %v1107, 4
      %v1113 = vshrl.u32 %v1038, 16
      %v1115 = vrot.slane %v1113, 7
      %v1116 = vshll.u32 %v1038, 16
      %v1118 = vor.u32 %v1115, %v1116
      %v1119 = vsel %vm1052, %v1111, %v1118
      %v1120 = vrot.slane %v1115, 4
      %v1122 = vshrl.u32 %v1039, 16
      %v1124 = vrot.slane %v1122, 7
      %v1125 = vshll.u32 %v1039, 16
      %v1127 = vor.u32 %v1124, %v1125
      %v1128 = vrot.slane %v1124, 4
      %v1130 = vshrl.u32 %v1040, 16
      %v1132 = vrot.slane %v1130, 7
      %v1133 = vshll.u32 %v1040, 16
      %v1135 = vor.u32 %v1132, %v1133
      %v1136 = vsel %vm1052, %v1128, %v1135
      %v1137 = vrot.slane %v1132, 4
      %v1139 = vshrl.u32 %v1041, 16
      %v1141 = vrot.slane %v1139, 7
      %v1142 = vshll.u32 %v1041, 16
      %v1144 = vor.u32 %v1141, %v1142
      %v1145 = vrot.slane %v1141, 4
      %v1147 = vshrl.u32 %v1042, 16
      %v1149 = vrot.slane %v1147, 7
      %v1150 = vshll.u32 %v1042, 16
      %v1152 = vor.u32 %v1149, %v1150
      %v1153 = vsel %vm1052, %v1145, %v1152
      %v1154 = vrot.slane %v1149, 4
      %v1156 = vshrl.u32 %v1043, 16
      %v1158 = vrot.slane %v1156, 7
      %v1159 = vshll.u32 %v1043, 16
      %v1161 = vor.u32 %v1158, %v1159
      %v1162 = vrot.slane %v1158, 4
      %v1164 = vshrl.u32 %v1044, 16
      %v1166 = vrot.slane %v1164, 7
      %v1167 = vshll.u32 %v1044, 16
      %v1169 = vor.u32 %v1166, %v1167
      %v1170 = vsel %vm1052, %v1162, %v1169
      %v1171 = vrot.slane %v1166, 4
      %v1173 = vshrl.u32 %v1045, 16
      %v1175 = vrot.slane %v1173, 7
      %v1176 = vshll.u32 %v1045, 16
      %v1178 = vor.u32 %v1175, %v1176
      %v1179 = vrot.slane %v1175, 4
      %v1181 = vshrl.u32 %v1046, 16
      %v1183 = vrot.slane %v1181, 7
      %v1184 = vshll.u32 %v1046, 16
      %v1186 = vor.u32 %v1183, %v1184
      %v1187 = vsel %vm1052, %v1179, %v1186
      %v1188 = vrot.slane %v1183, 4
      %v1190 = vshrl.u32 %v1047, 16
      %v1192 = vrot.slane %v1190, 7
      %v1193 = vshll.u32 %v1047, 16
      %v1195 = vor.u32 %v1192, %v1193
      %v1196 = vrot.slane %v1192, 4
      %v1198 = vshrl.u32 %v1048, 16
      %v1200 = vrot.slane %v1198, 7
      %v1201 = vshll.u32 %v1048, 16
      %v1203 = vor.u32 %v1200, %v1201
      %v1204 = vsel %vm1052, %v1196, %v1203
      %v1205 = vrot.slane %v1200, 4
      %v1207 = vshrl.u32 %v1049, 16
      %v1209 = vrot.slane %v1207, 7
      %v1210 = vshll.u32 %v1049, 16
      %v1212 = vor.u32 %v1209, %v1210
      %v1213 = vrot.slane %v1209, 4
      %v1215 = vshrl.u32 %v1050, 16
      %v1217 = vrot.slane %v1215, 7
      %v1218 = vshll.u32 %v1050, 16
      %v1220 = vor.u32 %v1217, %v1218
      %v1221 = vsel %vm1052, %v1213, %v1220
      %v1222 = vrot.slane %v1217, 4
      %v1253 = vld [vmem:[#allocation2] sm:$0xf]
      %v1254 = vsel %vm1000, %v1059, %v1253
      %1255 = vst [vmem:[#allocation2] sm:$0xf] %v1254
      %vm1256 = vcmask 257024
      %1257 = vst.msk [vmem:[#allocation2 + $0x4] sm:$0xf] %vm1256, %v1068
      %v1258 = vld [vmem:[#allocation2 + $0x8] sm:$0x1]
      %v1259 = vsel %vm967, %v1069, %v1258
      %1260 = vst [vmem:[#allocation2 + $0x8] sm:$0x1] %v1259
      %v1261 = vld [vmem:[#allocation2 + $0xc] sm:$0xf]
      %v1262 = vsel %vm1000, %v1076, %v1261
      %1263 = vst [vmem:[#allocation2 + $0xc] sm:$0xf] %v1262
      %1264 = vst.msk [vmem:[#allocation2 + $0x10] sm:$0xf] %vm1256, %v1085
      %v1265 = vld [vmem:[#allocation2 + $0x14] sm:$0x1]
      %v1266 = vsel %vm967, %v1086, %v1265
      %1267 = vst [vmem:[#allocation2 + $0x14] sm:$0x1] %v1266
      %v1268 = vld [vmem:[#allocation2 + $0x18] sm:$0xf]
      %v1269 = vsel %vm1000, %v1093, %v1268
      %1270 = vst [vmem:[#allocation2 + $0x18] sm:$0xf] %v1269
      %1271 = vst.msk [vmem:[#allocation2 + $0x1c] sm:$0xf] %vm1256, %v1102
      %v1272 = vld [vmem:[#allocation2 + $0x20] sm:$0x1]
      %v1273 = vsel %vm967, %v1103, %v1272
      %1274 = vst [vmem:[#allocation2 + $0x20] sm:$0x1] %v1273
      %v1275 = vld [vmem:[#allocation2 + $0x24] sm:$0xf]
      %v1276 = vsel %vm1000, %v1110, %v1275
      %1277 = vst [vmem:[#allocation2 + $0x24] sm:$0xf] %v1276
      %1278 = vst.msk [vmem:[#allocation2 + $0x28] sm:$0xf] %vm1256, %v1119
      %v1279 = vld [vmem:[#allocation2 + $0x2c] sm:$0x1]
      %v1280 = vsel %vm967, %v1120, %v1279
      %1281 = vst [vmem:[#allocation2 + $0x2c] sm:$0x1] %v1280
      %v1282 = vld [vmem:[#allocation2 + $0x30] sm:$0xf]
      %v1283 = vsel %vm1000, %v1127, %v1282
      %1284 = vst [vmem:[#allocation2 + $0x30] sm:$0xf] %v1283
      %1285 = vst.msk [vmem:[#allocation2 + $0x34] sm:$0xf] %vm1256, %v1136
      %v1286 = vld [vmem:[#allocation2 + $0x38] sm:$0x1]
      %v1287 = vsel %vm967, %v1137, %v1286
      %1288 = vst [vmem:[#allocation2 + $0x38] sm:$0x1] %v1287
      %v1289 = vld [vmem:[#allocation2 + $0x3c] sm:$0xf]
      %v1290 = vsel %vm1000, %v1144, %v1289
      %1291 = vst [vmem:[#allocation2 + $0x3c] sm:$0xf] %v1290
      %1292 = vst.msk [vmem:[#allocation2 + $0x40] sm:$0xf] %vm1256, %v1153
      %v1293 = vld [vmem:[#allocation2 + $0x44] sm:$0x1]
      %v1294 = vsel %vm967, %v1154, %v1293
      %1295 = vst [vmem:[#allocation2 + $0x44] sm:$0x1] %v1294
      %v1296 = vld [vmem:[#allocation2 + $0x48] sm:$0xf]
      %v1297 = vsel %vm1000, %v1161, %v1296
      %1298 = vst [vmem:[#allocation2 + $0x48] sm:$0xf] %v1297
      %1299 = vst.msk [vmem:[#allocation2 + $0x4c] sm:$0xf] %vm1256, %v1170
      %v1300 = vld [vmem:[#allocation2 + $0x50] sm:$0x1]
      %v1301 = vsel %vm967, %v1171, %v1300
      %1302 = vst [vmem:[#allocation2 + $0x50] sm:$0x1] %v1301
      %v1303 = vld [vmem:[#allocation2 + $0x54] sm:$0xf]
      %v1304 = vsel %vm1000, %v1178, %v1303
      %1305 = vst [vmem:[#allocation2 + $0x54] sm:$0xf] %v1304
      %1306 = vst.msk [vmem:[#allocation2 + $0x58] sm:$0xf] %vm1256, %v1187
      %v1307 = vld [vmem:[#allocation2 + $0x5c] sm:$0x1]
      %v1308 = vsel %vm967, %v1188, %v1307
      %1309 = vst [vmem:[#allocation2 + $0x5c] sm:$0x1] %v1308
      %v1310 = vld [vmem:[#allocation2 + $0x60] sm:$0xf]
      %v1311 = vsel %vm1000, %v1195, %v1310
      %1312 = vst [vmem:[#allocation2 + $0x60] sm:$0xf] %v1311
      %1313 = vst.msk [vmem:[#allocation2 + $0x64] sm:$0xf] %vm1256, %v1204
      %v1314 = vld [vmem:[#allocation2 + $0x68] sm:$0x1]
      %v1315 = vsel %vm967, %v1205, %v1314
      %1316 = vst [vmem:[#allocation2 + $0x68] sm:$0x1] %v1315
      %v1317 = vld [vmem:[#allocation2 + $0x6c] sm:$0xf]
      %v1318 = vsel %vm1000, %v1212, %v1317
      %1319 = vst [vmem:[#allocation2 + $0x6c] sm:$0xf] %v1318
      %1320 = vst.msk [vmem:[#allocation2 + $0x70] sm:$0xf] %vm1256, %v1221
      %v1321 = vld [vmem:[#allocation2 + $0x74] sm:$0x1]
      %v1322 = vsel %vm967, %v1222, %v1321
      %1323 = vst [vmem:[#allocation2 + $0x74] sm:$0x1] %v1322
      %p1324 = scmp.eq.s32.totalorder %s26, 0
      // Predicated region
      $region61: #{tpu_custom_call.1} parent=59 // pred_check
        %p1325 = pneg %p1324
      $region62: #{tpu_custom_call.1} parent=59 // pred_check_branch
        %1327 = sbr.rel (%p1325) target = $region64
      $region63: #{tpu_custom_call.1} parent=59 // pred_region
        %1328 = vst.msk [vmem:[#allocation2] sm:$0xf] %vm1256, 0
        %1329 = vst.msk [vmem:[#allocation2 + $0x4] sm:$0xf] %vm1256, 0
        %1330 = vst.msk [vmem:[#allocation2 + $0x8] sm:$0xf] %vm1256, 0
      $region64: #{tpu_custom_call.1} parent=59 // pred_fallthru
        _
      %p1331 = scmp.eq.s32.totalorder %s26, 1
      // Predicated region
      $region65: #{tpu_custom_call.1} parent=59 // pred_check
        %p1332 = pneg %p1331
      $region66: #{tpu_custom_call.1} parent=59 // pred_check_branch
        %1334 = sbr.rel (%p1332) target = $region68
      $region67: #{tpu_custom_call.1} parent=59 // pred_region
        %s1335 = scalar_lea.vmem [#allocation2], 108
        %1336 = vst.msk [vmem:[%s1335] sm:$0xf] %vm1256, 0
        %1337 = vst.msk [vmem:[%s1335 + $0x4] sm:$0xf] %vm1256, 0
        %1338 = vst.msk [vmem:[%s1335 + $0x8] sm:$0xf] %vm1256, 0
      $region68: #{tpu_custom_call.1} parent=59 // pred_fallthru
        _
      %v1339 = vld [vmem:[#allocation2] sm:$0xf]
      %v1340 = vld [vmem:[#allocation2 + $0x4] sm:$0xf]
      %v1341 = vld [vmem:[#allocation2 + $0x8] sm:$0xf]
      %v1342 = vld [vmem:[#allocation2 + $0xc] sm:$0xf]
      %v1343 = vld [vmem:[#allocation2 + $0x10] sm:$0xf]
      %v1344 = vld [vmem:[#allocation2 + $0x14] sm:$0xf]
      %v1345 = vld [vmem:[#allocation2 + $0x18] sm:$0xf]
      %v1346 = vld [vmem:[#allocation2 + $0x1c] sm:$0xf]
      %v1347 = vld [vmem:[#allocation2 + $0x20] sm:$0xf]
      %v1348 = vld [vmem:[#allocation2 + $0x24] sm:$0xf]
      %v1349 = vld [vmem:[#allocation2 + $0x28] sm:$0xf]
      %v1350 = vld [vmem:[#allocation2 + $0x2c] sm:$0xf]
      %v1351 = vld [vmem:[#allocation2 + $0x30] sm:$0xf]
      %v1352 = vld [vmem:[#allocation2 + $0x34] sm:$0xf]
      %v1353 = vld [vmem:[#allocation2 + $0x38] sm:$0xf]
      %v1354 = vld [vmem:[#allocation2 + $0x3c] sm:$0xf]
      %v1355 = vld [vmem:[#allocation2 + $0x40] sm:$0xf]
      %v1356 = vld [vmem:[#allocation2 + $0x44] sm:$0xf]
      %v1357 = vld [vmem:[#allocation2 + $0x48] sm:$0xf]
      %v1358 = vld [vmem:[#allocation2 + $0x4c] sm:$0xf]
      %v1359 = vld [vmem:[#allocation2 + $0x50] sm:$0xf]
      %v1360 = vld [vmem:[#allocation2 + $0x54] sm:$0xf]
      %v1361 = vld [vmem:[#allocation2 + $0x58] sm:$0xf]
      %v1362 = vld [vmem:[#allocation2 + $0x5c] sm:$0xf]
      %v1363 = vld [vmem:[%s4] sm:$0xf]
      %v1364 = vld [vmem:[%s4 + $0x4] sm:$0xf]
      %v1365 = vld [vmem:[%s4 + $0x8] sm:$0xf]
      %v1366 = vld [vmem:[%s4 + $0xc] sm:$0xf]
      %s1367 = scalar_lea.vmem %s4, 16
      %v1368 = vld [vmem:[%s1367] sm:$0xf]
      %v1369 = vld [vmem:[%s1367 + $0x4] sm:$0xf]
      %v1370 = vld [vmem:[%s1367 + $0x8] sm:$0xf]
      %v1371 = vld [vmem:[%s1367 + $0xc] sm:$0xf]
      %v1396 = vunpack.c.l.b16 %v1339
      %v1397 = vunpack.c.l.b16 %v1340
      %v1398 = vunpack.c.l.b16 %v1341
      %v1399 = vunpack.c.l.b16 %v1342
      %v1400 = vunpack.c.l.b16 %v1343
      %v1401 = vunpack.c.l.b16 %v1344
      %v1402 = vunpack.c.l.b16 %v1345
      %v1403 = vunpack.c.l.b16 %v1346
      %v1404 = vunpack.c.l.b16 %v1347
      %v1405 = vunpack.c.l.b16 %v1348
      %v1406 = vunpack.c.l.b16 %v1349
      %v1407 = vunpack.c.l.b16 %v1350
      %v1408 = vunpack.c.l.b16 %v1351
      %v1409 = vunpack.c.l.b16 %v1352
      %v1410 = vunpack.c.l.b16 %v1353
      %v1411 = vunpack.c.l.b16 %v1354
      %v1412 = vunpack.c.l.b16 %v1355
      %v1413 = vunpack.c.l.b16 %v1356
      %v1414 = vunpack.c.l.b16 %v1357
      %v1415 = vunpack.c.l.b16 %v1358
      %v1416 = vunpack.c.l.b16 %v1359
      %v1417 = vunpack.c.l.b16 %v1360
      %v1418 = vunpack.c.l.b16 %v1361
      %v1419 = vunpack.c.l.b16 %v1362
      %v1420 = vpack.c.b16 %v1397, %v1396
      %v1421 = vpack.c.b16 %v1399, %v1398
      %v1422 = vpack.c.b16 %v1401, %v1400
      %v1423 = vpack.c.b16 %v1403, %v1402
      %v1424 = vpack.c.b16 %v1405, %v1404
      %v1425 = vpack.c.b16 %v1407, %v1406
      %v1426 = vpack.c.b16 %v1409, %v1408
      %v1427 = vpack.c.b16 %v1411, %v1410
      %v1428 = vpack.c.b16 %v1413, %v1412
      %v1429 = vpack.c.b16 %v1415, %v1414
      %v1430 = vpack.c.b16 %v1417, %v1416
      %v1431 = vpack.c.b16 %v1419, %v1418
      %v1436 = vunpack.c.l.b16 %v1368
      %v1437 = vunpack.c.l.b16 %v1369
      %v1438 = vunpack.c.l.b16 %v1370
      %v1439 = vunpack.c.l.b16 %v1371
      %v1440 = vpack.c.b16 %v1437, %v1436
      %v1441 = vpack.c.b16 %v1439, %v1438
      %vm1444 = vcmask 261120
      %v1446 = vsel %vm1444, %v1420, 0
      %v1449 = vsel %vm1444, %v1421, 0
      %v1452 = vsel %vm1444, %v1422, 0
      %v1455 = vsel %vm1444, %v1423, 0
      %v1458 = vsel %vm1444, %v1424, 0
      %v1461 = vsel %vm1444, %v1425, 0
      %v1464 = vsel %vm1444, %v1426, 0
      %v1467 = vsel %vm1444, %v1427, 0
      %v1470 = vsel %vm1444, %v1428, 0
      %v1473 = vsel %vm1444, %v1429, 0
      %v1476 = vsel %vm1444, %v1430, 0
      %v1479 = vsel %vm1444, %v1431, 0
      %1481 = vmatpush.bf16.msra.mxu0 0
      %1482 = vmatpush.bf16.msra.mxu0 0
      %1483 = vmatpush.bf16.msra.mxu0 0
      %1484 = vmatpush.bf16.msra.mxu0 0
      %1485 = vmatpush.bf16.msra.mxu0 0
      %1486 = vmatpush.bf16.msra.mxu0 0
      %1487 = vmatpush.bf16.msra.mxu0 %v1441
      %1488 = vmatpush.bf16.msra.mxu0 %v1440
      %1489 = vmatmul.bf16.gmra.mxu0 %v1446
      %v1490 = vpop.f32.mrf.mxu0
      %v1491 = vadd.f32 0.0, %v1490
      %v1492 = vpop.f32.mrf.mxu0
      %v1493 = vadd.f32 0.0, %v1492
      %1494 = vmatmul.bf16.gmra.mxu0 %v1449
      %v1495 = vpop.f32.mrf.mxu0
      %v1496 = vadd.f32 0.0, %v1495
      %v1497 = vpop.f32.mrf.mxu0
      %v1498 = vadd.f32 0.0, %v1497
      %1499 = vmatmul.bf16.gmra.mxu0 %v1452
      %v1500 = vpop.f32.mrf.mxu0
      %v1501 = vadd.f32 0.0, %v1500
      %v1502 = vpop.f32.mrf.mxu0
      %v1503 = vadd.f32 0.0, %v1502
      %1504 = vmatmul.bf16.gmra.mxu0 %v1455
      %v1505 = vpop.f32.mrf.mxu0
      %v1506 = vadd.f32 0.0, %v1505
      %v1507 = vpop.f32.mrf.mxu0
      %v1508 = vadd.f32 0.0, %v1507
      %1509 = vmatmul.bf16.gmra.mxu0 %v1458
      %v1510 = vpop.f32.mrf.mxu0
      %v1511 = vadd.f32 0.0, %v1510
      %v1512 = vpop.f32.mrf.mxu0
      %v1513 = vadd.f32 0.0, %v1512
      %1514 = vmatmul.bf16.gmra.mxu0 %v1461
      %v1515 = vpop.f32.mrf.mxu0
      %v1516 = vadd.f32 0.0, %v1515
      %v1517 = vpop.f32.mrf.mxu0
      %v1518 = vadd.f32 0.0, %v1517
      %1519 = vmatmul.bf16.gmra.mxu0 %v1464
      %v1520 = vpop.f32.mrf.mxu0
      %v1521 = vadd.f32 0.0, %v1520
      %v1522 = vpop.f32.mrf.mxu0
      %v1523 = vadd.f32 0.0, %v1522
      %1524 = vmatmul.bf16.gmra.mxu0 %v1467
      %v1525 = vpop.f32.mrf.mxu0
      %v1526 = vadd.f32 0.0, %v1525
      %v1527 = vpop.f32.mrf.mxu0
      %v1528 = vadd.f32 0.0, %v1527
      %1529 = vmatmul.bf16.gmra.mxu0 %v1470
      %v1530 = vpop.f32.mrf.mxu0
      %v1531 = vadd.f32 0.0, %v1530
      %v1532 = vpop.f32.mrf.mxu0
      %v1533 = vadd.f32 0.0, %v1532
      %1534 = vmatmul.bf16.gmra.mxu0 %v1473
      %v1535 = vpop.f32.mrf.mxu0
      %v1536 = vadd.f32 0.0, %v1535
      %v1537 = vpop.f32.mrf.mxu0
      %v1538 = vadd.f32 0.0, %v1537
      %1539 = vmatmul.bf16.gmra.mxu0 %v1476
      %v1540 = vpop.f32.mrf.mxu0
      %v1541 = vadd.f32 0.0, %v1540
      %v1542 = vpop.f32.mrf.mxu0
      %v1543 = vadd.f32 0.0, %v1542
      %1544 = vmatmul.bf16.gmra.mxu0 %v1479
      %v1545 = vpop.f32.mrf.mxu0
      %v1546 = vadd.f32 0.0, %v1545
      %v1547 = vpop.f32.mrf.mxu0
      %v1548 = vadd.f32 0.0, %v1547
      %1549 = vdwg.mxu0
      %v1550 = vrot.slane %v1491, 1
      %v1551 = vrot.slane %v1493, 1
      %v1552 = vrot.slane %v1496, 1
      %v1553 = vrot.slane %v1498, 1
      %v1554 = vrot.slane %v1501, 1
      %v1555 = vrot.slane %v1503, 1
      %v1556 = vrot.slane %v1506, 1
      %v1557 = vrot.slane %v1508, 1
      %v1558 = vrot.slane %v1511, 1
      %v1559 = vrot.slane %v1513, 1
      %v1560 = vrot.slane %v1516, 1
      %v1561 = vrot.slane %v1518, 1
      %v1562 = vrot.slane %v1521, 1
      %v1563 = vrot.slane %v1523, 1
      %v1564 = vrot.slane %v1526, 1
      %v1565 = vrot.slane %v1528, 1
      %v1566 = vrot.slane %v1531, 1
      %v1567 = vrot.slane %v1533, 1
      %v1568 = vrot.slane %v1536, 1
      %v1569 = vrot.slane %v1538, 1
      %v1570 = vrot.slane %v1541, 1
      %v1571 = vrot.slane %v1543, 1
      %v1572 = vrot.slane %v1546, 1
      %v1573 = vrot.slane %v1548, 1
      %v1574 = vlaneseq
      %v1575 = vshrl.u32 %v1574, 7
      %vm1576 = vcmp.lt.s32.totalorder %v1575, 7
      %v1577 = vsel %vm1576, %v1572, %v1573
      %v1578 = vsel %vm1576, %v1571, %v1572
      %v1579 = vsel %vm1576, %v1570, %v1571
      %v1580 = vsel %vm1576, %v1569, %v1570
      %v1581 = vsel %vm1576, %v1568, %v1569
      %v1582 = vsel %vm1576, %v1567, %v1568
      %v1583 = vsel %vm1576, %v1566, %v1567
      %v1584 = vsel %vm1576, %v1565, %v1566
      %v1585 = vsel %vm1576, %v1564, %v1565
      %v1586 = vsel %vm1576, %v1563, %v1564
      %v1587 = vsel %vm1576, %v1562, %v1563
      %v1588 = vsel %vm1576, %v1561, %v1562
      %v1589 = vsel %vm1576, %v1560, %v1561
      %v1590 = vsel %vm1576, %v1559, %v1560
      %v1591 = vsel %vm1576, %v1558, %v1559
      %v1592 = vsel %vm1576, %v1557, %v1558
      %v1593 = vsel %vm1576, %v1556, %v1557
      %v1594 = vsel %vm1576, %v1555, %v1556
      %v1595 = vsel %vm1576, %v1554, %v1555
      %v1596 = vsel %vm1576, %v1553, %v1554
      %v1597 = vsel %vm1576, %v1552, %v1553
      %v1598 = vsel %vm1576, %v1551, %v1552
      %v1599 = vsel %vm1576, %v1550, %v1551
      %v1600 = vsel %vm1576, %v1573, %v1550
      %v1605 = vunpack.c.l.b16 %v1363
      %v1606 = vunpack.c.l.b16 %v1364
      %v1607 = vunpack.c.l.b16 %v1365
      %v1608 = vunpack.c.l.b16 %v1366
      %v1609 = vpack.c.b16 %v1606, %v1605
      %v1610 = vpack.c.b16 %v1608, %v1607
      %1613 = vmatpush.bf16.msra.mxu0 0
      %1614 = vmatpush.bf16.msra.mxu0 0
      %1615 = vmatpush.bf16.msra.mxu0 0
      %1616 = vmatpush.bf16.msra.mxu0 0
      %1617 = vmatpush.bf16.msra.mxu0 0
      %1618 = vmatpush.bf16.msra.mxu0 0
      %1619 = vmatpush.bf16.msra.mxu0 %v1610
      %1620 = vmatpush.bf16.msra.mxu0 %v1609
      %1621 = vmatmul.bf16.gmra.mxu0 %v1446
      %v1622 = vpop.f32.mrf.mxu0
      %v1623 = vadd.f32 %v1599, %v1622
      %v1624 = vpop.f32.mrf.mxu0
      %v1625 = vadd.f32 %v1598, %v1624
      %1626 = vmatmul.bf16.gmra.mxu0 %v1449
      %v1627 = vpop.f32.mrf.mxu0
      %v1628 = vadd.f32 %v1597, %v1627
      %v1629 = vpop.f32.mrf.mxu0
      %v1630 = vadd.f32 %v1596, %v1629
      %1631 = vmatmul.bf16.gmra.mxu0 %v1452
      %v1632 = vpop.f32.mrf.mxu0
      %v1633 = vadd.f32 %v1595, %v1632
      %v1634 = vpop.f32.mrf.mxu0
      %v1635 = vadd.f32 %v1594, %v1634
      %1636 = vmatmul.bf16.gmra.mxu0 %v1455
      %v1637 = vpop.f32.mrf.mxu0
      %v1638 = vadd.f32 %v1593, %v1637
      %v1639 = vpop.f32.mrf.mxu0
      %v1640 = vadd.f32 %v1592, %v1639
      %1641 = vmatmul.bf16.gmra.mxu0 %v1458
      %v1642 = vpop.f32.mrf.mxu0
      %v1643 = vadd.f32 %v1591, %v1642
      %v1644 = vpop.f32.mrf.mxu0
      %v1645 = vadd.f32 %v1590, %v1644
      %1646 = vmatmul.bf16.gmra.mxu0 %v1461
      %v1647 = vpop.f32.mrf.mxu0
      %v1648 = vadd.f32 %v1589, %v1647
      %v1649 = vpop.f32.mrf.mxu0
      %v1650 = vadd.f32 %v1588, %v1649
      %1651 = vmatmul.bf16.gmra.mxu0 %v1464
      %v1652 = vpop.f32.mrf.mxu0
      %v1653 = vadd.f32 %v1587, %v1652
      %v1654 = vpop.f32.mrf.mxu0
      %v1655 = vadd.f32 %v1586, %v1654
      %1656 = vmatmul.bf16.gmra.mxu0 %v1467
      %v1657 = vpop.f32.mrf.mxu0
      %v1658 = vadd.f32 %v1585, %v1657
      %v1659 = vpop.f32.mrf.mxu0
      %v1660 = vadd.f32 %v1584, %v1659
      %1661 = vmatmul.bf16.gmra.mxu0 %v1470
      %v1662 = vpop.f32.mrf.mxu0
      %v1663 = vadd.f32 %v1583, %v1662
      %v1664 = vpop.f32.mrf.mxu0
      %v1665 = vadd.f32 %v1582, %v1664
      %1666 = vmatmul.bf16.gmra.mxu0 %v1473
      %v1667 = vpop.f32.mrf.mxu0
      %v1668 = vadd.f32 %v1581, %v1667
      %v1669 = vpop.f32.mrf.mxu0
      %v1670 = vadd.f32 %v1580, %v1669
      %1671 = vmatmul.bf16.gmra.mxu0 %v1476
      %v1672 = vpop.f32.mrf.mxu0
      %v1673 = vadd.f32 %v1579, %v1672
      %v1674 = vpop.f32.mrf.mxu0
      %v1675 = vadd.f32 %v1578, %v1674
      %1676 = vmatmul.bf16.gmra.mxu0 %v1479
      %v1677 = vpop.f32.mrf.mxu0
      %v1678 = vadd.f32 %v1577, %v1677
      %v1679 = vpop.f32.mrf.mxu0
      %v1680 = vadd.f32 %v1600, %v1679
      %1681 = vdwg.mxu0
      %s1682 = scalar_lea.vmem %s4, 32
      %v1683 = vld [vmem:[%s1682] sm:$0xf]
      %v1684 = vld [vmem:[%s1682 + $0x4] sm:$0xf]
      %v1685 = vld [vmem:[%s1682 + $0x8] sm:$0xf]
      %v1686 = vld [vmem:[%s1682 + $0xc] sm:$0xf]
      %v1691 = vunpack.c.l.b16 %v1683
      %v1692 = vunpack.c.l.b16 %v1684
      %v1693 = vunpack.c.l.b16 %v1685
      %v1694 = vunpack.c.l.b16 %v1686
      %v1695 = vpack.c.b16 %v1692, %v1691
      %v1696 = vpack.c.b16 %v1694, %v1693
      %1699 = vmatpush.bf16.msra.mxu0 0
      %1700 = vmatpush.bf16.msra.mxu0 0
      %1701 = vmatpush.bf16.msra.mxu0 0
      %1702 = vmatpush.bf16.msra.mxu0 0
      %1703 = vmatpush.bf16.msra.mxu0 0
      %1704 = vmatpush.bf16.msra.mxu0 0
      %1705 = vmatpush.bf16.msra.mxu0 %v1696
      %1706 = vmatpush.bf16.msra.mxu0 %v1695
      %1707 = vmatmul.bf16.gmra.mxu0 %v1446
      %v1708 = vpop.f32.mrf.mxu0
      %v1709 = vadd.f32 0.0, %v1708
      %v1710 = vpop.f32.mrf.mxu0
      %v1711 = vadd.f32 0.0, %v1710
      %1712 = vmatmul.bf16.gmra.mxu0 %v1449
      %v1713 = vpop.f32.mrf.mxu0
      %v1714 = vadd.f32 0.0, %v1713
      %v1715 = vpop.f32.mrf.mxu0
      %v1716 = vadd.f32 0.0, %v1715
      %1717 = vmatmul.bf16.gmra.mxu0 %v1452
      %v1718 = vpop.f32.mrf.mxu0
      %v1719 = vadd.f32 0.0, %v1718
      %v1720 = vpop.f32.mrf.mxu0
      %v1721 = vadd.f32 0.0, %v1720
      %1722 = vmatmul.bf16.gmra.mxu0 %v1455
      %v1723 = vpop.f32.mrf.mxu0
      %v1724 = vadd.f32 0.0, %v1723
      %v1725 = vpop.f32.mrf.mxu0
      %v1726 = vadd.f32 0.0, %v1725
      %1727 = vmatmul.bf16.gmra.mxu0 %v1458
      %v1728 = vpop.f32.mrf.mxu0
      %v1729 = vadd.f32 0.0, %v1728
      %v1730 = vpop.f32.mrf.mxu0
      %v1731 = vadd.f32 0.0, %v1730
      %1732 = vmatmul.bf16.gmra.mxu0 %v1461
      %v1733 = vpop.f32.mrf.mxu0
      %v1734 = vadd.f32 0.0, %v1733
      %v1735 = vpop.f32.mrf.mxu0
      %v1736 = vadd.f32 0.0, %v1735
      %1737 = vmatmul.bf16.gmra.mxu0 %v1464
      %v1738 = vpop.f32.mrf.mxu0
      %v1739 = vadd.f32 0.0, %v1738
      %v1740 = vpop.f32.mrf.mxu0
      %v1741 = vadd.f32 0.0, %v1740
      %1742 = vmatmul.bf16.gmra.mxu0 %v1467
      %v1743 = vpop.f32.mrf.mxu0
      %v1744 = vadd.f32 0.0, %v1743
      %v1745 = vpop.f32.mrf.mxu0
      %v1746 = vadd.f32 0.0, %v1745
      %1747 = vmatmul.bf16.gmra.mxu0 %v1470
      %v1748 = vpop.f32.mrf.mxu0
      %v1749 = vadd.f32 0.0, %v1748
      %v1750 = vpop.f32.mrf.mxu0
      %v1751 = vadd.f32 0.0, %v1750
      %1752 = vmatmul.bf16.gmra.mxu0 %v1473
      %v1753 = vpop.f32.mrf.mxu0
      %v1754 = vadd.f32 0.0, %v1753
      %v1755 = vpop.f32.mrf.mxu0
      %v1756 = vadd.f32 0.0, %v1755
      %1757 = vmatmul.bf16.gmra.mxu0 %v1476
      %v1758 = vpop.f32.mrf.mxu0
      %v1759 = vadd.f32 0.0, %v1758
      %v1760 = vpop.f32.mrf.mxu0
      %v1761 = vadd.f32 0.0, %v1760
      %1762 = vmatmul.bf16.gmra.mxu0 %v1479
      %v1763 = vpop.f32.mrf.mxu0
      %v1764 = vadd.f32 0.0, %v1763
      %v1765 = vpop.f32.mrf.mxu0
      %v1766 = vadd.f32 0.0, %v1765
      %1767 = vdwg.mxu0
      %v1768 = vrot.slane %v1709, 2
      %v1769 = vrot.slane %v1711, 2
      %v1770 = vrot.slane %v1714, 2
      %v1771 = vrot.slane %v1716, 2
      %v1772 = vrot.slane %v1719, 2
      %v1773 = vrot.slane %v1721, 2
      %v1774 = vrot.slane %v1724, 2
      %v1775 = vrot.slane %v1726, 2
      %v1776 = vrot.slane %v1729, 2
      %v1777 = vrot.slane %v1731, 2
      %v1778 = vrot.slane %v1734, 2
      %v1779 = vrot.slane %v1736, 2
      %v1780 = vrot.slane %v1739, 2
      %v1781 = vrot.slane %v1741, 2
      %v1782 = vrot.slane %v1744, 2
      %v1783 = vrot.slane %v1746, 2
      %v1784 = vrot.slane %v1749, 2
      %v1785 = vrot.slane %v1751, 2
      %v1786 = vrot.slane %v1754, 2
      %v1787 = vrot.slane %v1756, 2
      %v1788 = vrot.slane %v1759, 2
      %v1789 = vrot.slane %v1761, 2
      %v1790 = vrot.slane %v1764, 2
      %v1791 = vrot.slane %v1766, 2
      %vm1792 = vcmp.lt.s32.totalorder %v1575, 6
      %v1793 = vsel %vm1792, %v1790, %v1791
      %v1794 = vsel %vm1792, %v1789, %v1790
      %v1795 = vsel %vm1792, %v1788, %v1789
      %v1796 = vsel %vm1792, %v1787, %v1788
      %v1797 = vsel %vm1792, %v1786, %v1787
      %v1798 = vsel %vm1792, %v1785, %v1786
      %v1799 = vsel %vm1792, %v1784, %v1785
      %v1800 = vsel %vm1792, %v1783, %v1784
      %v1801 = vsel %vm1792, %v1782, %v1783
      %v1802 = vsel %vm1792, %v1781, %v1782
      %v1803 = vsel %vm1792, %v1780, %v1781
      %v1804 = vsel %vm1792, %v1779, %v1780
      %v1805 = vsel %vm1792, %v1778, %v1779
      %v1806 = vsel %vm1792, %v1777, %v1778
      %v1807 = vsel %vm1792, %v1776, %v1777
      %v1808 = vsel %vm1792, %v1775, %v1776
      %v1809 = vsel %vm1792, %v1774, %v1775
      %v1810 = vsel %vm1792, %v1773, %v1774
      %v1811 = vsel %vm1792, %v1772, %v1773
      %v1812 = vsel %vm1792, %v1771, %v1772
      %v1813 = vsel %vm1792, %v1770, %v1771
      %v1814 = vsel %vm1792, %v1769, %v1770
      %v1815 = vsel %vm1792, %v1768, %v1769
      %v1816 = vsel %vm1792, %v1791, %v1768
      %v1817 = vadd.f32 %v1623, %v1815
      %v1818 = vadd.f32 %v1625, %v1814
      %v1819 = vadd.f32 %v1628, %v1813
      %v1820 = vadd.f32 %v1630, %v1812
      %v1821 = vadd.f32 %v1633, %v1811
      %v1822 = vadd.f32 %v1635, %v1810
      %v1823 = vadd.f32 %v1638, %v1809
      %v1824 = vadd.f32 %v1640, %v1808
      %v1825 = vadd.f32 %v1643, %v1807
      %v1826 = vadd.f32 %v1645, %v1806
      %v1827 = vadd.f32 %v1648, %v1805
      %v1828 = vadd.f32 %v1650, %v1804
      %v1829 = vadd.f32 %v1653, %v1803
      %v1830 = vadd.f32 %v1655, %v1802
      %v1831 = vadd.f32 %v1658, %v1801
      %v1832 = vadd.f32 %v1660, %v1800
      %v1833 = vadd.f32 %v1663, %v1799
      %v1834 = vadd.f32 %v1665, %v1798
      %v1835 = vadd.f32 %v1668, %v1797
      %v1836 = vadd.f32 %v1670, %v1796
      %v1837 = vadd.f32 %v1673, %v1795
      %v1838 = vadd.f32 %v1675, %v1794
      %v1839 = vadd.f32 %v1678, %v1793
      %v1840 = vadd.f32 %v1680, %v1816
      %s1841 = scalar_lea.vmem [#allocation2], 12
      %v1842 = vld [vmem:[%s1841] sm:$0xf]
      %v1843 = vld [vmem:[%s1841 + $0x4] sm:$0xf]
      %v1844 = vld [vmem:[%s1841 + $0x8] sm:$0xf]
      %v1845 = vld [vmem:[%s1841 + $0xc] sm:$0xf]
      %v1846 = vld [vmem:[%s1841 + $0x10] sm:$0xf]
      %v1847 = vld [vmem:[%s1841 + $0x14] sm:$0xf]
      %v1848 = vld [vmem:[%s1841 + $0x18] sm:$0xf]
      %v1849 = vld [vmem:[%s1841 + $0x1c] sm:$0xf]
      %v1850 = vld [vmem:[%s1841 + $0x20] sm:$0xf]
      %v1851 = vld [vmem:[%s1841 + $0x24] sm:$0xf]
      %v1852 = vld [vmem:[%s1841 + $0x28] sm:$0xf]
      %v1853 = vld [vmem:[%s1841 + $0x2c] sm:$0xf]
      %v1854 = vld [vmem:[%s1841 + $0x30] sm:$0xf]
      %v1855 = vld [vmem:[%s1841 + $0x34] sm:$0xf]
      %v1856 = vld [vmem:[%s1841 + $0x38] sm:$0xf]
      %v1857 = vld [vmem:[%s1841 + $0x3c] sm:$0xf]
      %v1858 = vld [vmem:[%s1841 + $0x40] sm:$0xf]
      %v1859 = vld [vmem:[%s1841 + $0x44] sm:$0xf]
      %v1860 = vld [vmem:[%s1841 + $0x48] sm:$0xf]
      %v1861 = vld [vmem:[%s1841 + $0x4c] sm:$0xf]
      %v1862 = vld [vmem:[%s1841 + $0x50] sm:$0xf]
      %v1863 = vld [vmem:[%s1841 + $0x54] sm:$0xf]
      %v1864 = vld [vmem:[%s1841 + $0x58] sm:$0xf]
      %v1865 = vld [vmem:[%s1841 + $0x5c] sm:$0xf]
      %s1866 = scalar_lea.vmem %s4, 48
      %v1867 = vld [vmem:[%s1866] sm:$0xf]
      %v1868 = vld [vmem:[%s1866 + $0x4] sm:$0xf]
      %v1869 = vld [vmem:[%s1866 + $0x8] sm:$0xf]
      %v1870 = vld [vmem:[%s1866 + $0xc] sm:$0xf]
      %v1895 = vunpack.c.l.b16 %v1842
      %v1896 = vunpack.c.l.b16 %v1843
      %v1897 = vunpack.c.l.b16 %v1844
      %v1898 = vunpack.c.l.b16 %v1845
      %v1899 = vunpack.c.l.b16 %v1846
      %v1900 = vunpack.c.l.b16 %v1847
      %v1901 = vunpack.c.l.b16 %v1848
      %v1902 = vunpack.c.l.b16 %v1849
      %v1903 = vunpack.c.l.b16 %v1850
      %v1904 = vunpack.c.l.b16 %v1851
      %v1905 = vunpack.c.l.b16 %v1852
      %v1906 = vunpack.c.l.b16 %v1853
      %v1907 = vunpack.c.l.b16 %v1854
      %v1908 = vunpack.c.l.b16 %v1855
      %v1909 = vunpack.c.l.b16 %v1856
      %v1910 = vunpack.c.l.b16 %v1857
      %v1911 = vunpack.c.l.b16 %v1858
      %v1912 = vunpack.c.l.b16 %v1859
      %v1913 = vunpack.c.l.b16 %v1860
      %v1914 = vunpack.c.l.b16 %v1861
      %v1915 = vunpack.c.l.b16 %v1862
      %v1916 = vunpack.c.l.b16 %v1863
      %v1917 = vunpack.c.l.b16 %v1864
      %v1918 = vunpack.c.l.b16 %v1865
      %v1919 = vpack.c.b16 %v1896, %v1895
      %v1920 = vpack.c.b16 %v1898, %v1897
      %v1921 = vpack.c.b16 %v1900, %v1899
      %v1922 = vpack.c.b16 %v1902, %v1901
      %v1923 = vpack.c.b16 %v1904, %v1903
      %v1924 = vpack.c.b16 %v1906, %v1905
      %v1925 = vpack.c.b16 %v1908, %v1907
      %v1926 = vpack.c.b16 %v1910, %v1909
      %v1927 = vpack.c.b16 %v1912, %v1911
      %v1928 = vpack.c.b16 %v1914, %v1913
      %v1929 = vpack.c.b16 %v1916, %v1915
      %v1930 = vpack.c.b16 %v1918, %v1917
      %v1935 = vunpack.c.l.b16 %v1867
      %v1936 = vunpack.c.l.b16 %v1868
      %v1937 = vunpack.c.l.b16 %v1869
      %v1938 = vunpack.c.l.b16 %v1870
      %v1939 = vpack.c.b16 %v1936, %v1935
      %v1940 = vpack.c.b16 %v1938, %v1937
      %v1944 = vsel %vm1444, %v1919, 0
      %v1947 = vsel %vm1444, %v1920, 0
      %v1950 = vsel %vm1444, %v1921, 0
      %v1953 = vsel %vm1444, %v1922, 0
      %v1956 = vsel %vm1444, %v1923, 0
      %v1959 = vsel %vm1444, %v1924, 0
      %v1962 = vsel %vm1444, %v1925, 0
      %v1965 = vsel %vm1444, %v1926, 0
      %v1968 = vsel %vm1444, %v1927, 0
      %v1971 = vsel %vm1444, %v1928, 0
      %v1974 = vsel %vm1444, %v1929, 0
      %v1977 = vsel %vm1444, %v1930, 0
      %1979 = vmatpush.bf16.msra.mxu0 0
      %1980 = vmatpush.bf16.msra.mxu0 0
      %1981 = vmatpush.bf16.msra.mxu0 0
      %1982 = vmatpush.bf16.msra.mxu0 0
      %1983 = vmatpush.bf16.msra.mxu0 0
      %1984 = vmatpush.bf16.msra.mxu0 0
      %1985 = vmatpush.bf16.msra.mxu0 %v1940
      %1986 = vmatpush.bf16.msra.mxu0 %v1939
      %1987 = vmatmul.bf16.gmra.mxu0 %v1944
      %v1988 = vpop.f32.mrf.mxu0
      %v1989 = vadd.f32 0.0, %v1988
      %v1990 = vpop.f32.mrf.mxu0
      %v1991 = vadd.f32 0.0, %v1990
      %1992 = vmatmul.bf16.gmra.mxu0 %v1947
      %v1993 = vpop.f32.mrf.mxu0
      %v1994 = vadd.f32 0.0, %v1993
      %v1995 = vpop.f32.mrf.mxu0
      %v1996 = vadd.f32 0.0, %v1995
      %1997 = vmatmul.bf16.gmra.mxu0 %v1950
      %v1998 = vpop.f32.mrf.mxu0
      %v1999 = vadd.f32 0.0, %v1998
      %v2000 = vpop.f32.mrf.mxu0
      %v2001 = vadd.f32 0.0, %v2000
      %2002 = vmatmul.bf16.gmra.mxu0 %v1953
      %v2003 = vpop.f32.mrf.mxu0
      %v2004 = vadd.f32 0.0, %v2003
      %v2005 = vpop.f32.mrf.mxu0
      %v2006 = vadd.f32 0.0, %v2005
      %2007 = vmatmul.bf16.gmra.mxu0 %v1956
      %v2008 = vpop.f32.mrf.mxu0
      %v2009 = vadd.f32 0.0, %v2008
      %v2010 = vpop.f32.mrf.mxu0
      %v2011 = vadd.f32 0.0, %v2010
      %2012 = vmatmul.bf16.gmra.mxu0 %v1959
      %v2013 = vpop.f32.mrf.mxu0
      %v2014 = vadd.f32 0.0, %v2013
      %v2015 = vpop.f32.mrf.mxu0
      %v2016 = vadd.f32 0.0, %v2015
      %2017 = vmatmul.bf16.gmra.mxu0 %v1962
      %v2018 = vpop.f32.mrf.mxu0
      %v2019 = vadd.f32 0.0, %v2018
      %v2020 = vpop.f32.mrf.mxu0
      %v2021 = vadd.f32 0.0, %v2020
      %2022 = vmatmul.bf16.gmra.mxu0 %v1965
      %v2023 = vpop.f32.mrf.mxu0
      %v2024 = vadd.f32 0.0, %v2023
      %v2025 = vpop.f32.mrf.mxu0
      %v2026 = vadd.f32 0.0, %v2025
      %2027 = vmatmul.bf16.gmra.mxu0 %v1968
      %v2028 = vpop.f32.mrf.mxu0
      %v2029 = vadd.f32 0.0, %v2028
      %v2030 = vpop.f32.mrf.mxu0
      %v2031 = vadd.f32 0.0, %v2030
      %2032 = vmatmul.bf16.gmra.mxu0 %v1971
      %v2033 = vpop.f32.mrf.mxu0
      %v2034 = vadd.f32 0.0, %v2033
      %v2035 = vpop.f32.mrf.mxu0
      %v2036 = vadd.f32 0.0, %v2035
      %2037 = vmatmul.bf16.gmra.mxu0 %v1974
      %v2038 = vpop.f32.mrf.mxu0
      %v2039 = vadd.f32 0.0, %v2038
      %v2040 = vpop.f32.mrf.mxu0
      %v2041 = vadd.f32 0.0, %v2040
      %2042 = vmatmul.bf16.gmra.mxu0 %v1977
      %v2043 = vpop.f32.mrf.mxu0
      %v2044 = vadd.f32 0.0, %v2043
      %v2045 = vpop.f32.mrf.mxu0
      %v2046 = vadd.f32 0.0, %v2045
      %2047 = vdwg.mxu0
      %v2048 = vadd.f32 %v1817, %v1989
      %v2049 = vadd.f32 %v1818, %v1991
      %v2050 = vadd.f32 %v1819, %v1994
      %v2051 = vadd.f32 %v1820, %v1996
      %v2052 = vadd.f32 %v1821, %v1999
      %v2053 = vadd.f32 %v1822, %v2001
      %v2054 = vadd.f32 %v1823, %v2004
      %v2055 = vadd.f32 %v1824, %v2006
      %v2056 = vadd.f32 %v1825, %v2009
      %v2057 = vadd.f32 %v1826, %v2011
      %v2058 = vadd.f32 %v1827, %v2014
      %v2059 = vadd.f32 %v1828, %v2016
      %v2060 = vadd.f32 %v1829, %v2019
      %v2061 = vadd.f32 %v1830, %v2021
      %v2062 = vadd.f32 %v1831, %v2024
      %v2063 = vadd.f32 %v1832, %v2026
      %v2064 = vadd.f32 %v1833, %v2029
      %v2065 = vadd.f32 %v1834, %v2031
      %v2066 = vadd.f32 %v1835, %v2034
      %v2067 = vadd.f32 %v1836, %v2036
      %v2068 = vadd.f32 %v1837, %v2039
      %v2069 = vadd.f32 %v1838, %v2041
      %v2070 = vadd.f32 %v1839, %v2044
      %v2071 = vadd.f32 %v1840, %v2046
      %s2072 = scalar_lea.vmem %s4, 64
      %v2073 = vld [vmem:[%s2072] sm:$0xf]
      %v2074 = vld [vmem:[%s2072 + $0x4] sm:$0xf]
      %v2075 = vld [vmem:[%s2072 + $0x8] sm:$0xf]
      %v2076 = vld [vmem:[%s2072 + $0xc] sm:$0xf]
      %v2081 = vunpack.c.l.b16 %v2073
      %v2082 = vunpack.c.l.b16 %v2074
      %v2083 = vunpack.c.l.b16 %v2075
      %v2084 = vunpack.c.l.b16 %v2076
      %v2085 = vpack.c.b16 %v2082, %v2081
      %v2086 = vpack.c.b16 %v2084, %v2083
      %2089 = vmatpush.bf16.msra.mxu0 0
      %2090 = vmatpush.bf16.msra.mxu0 0
      %2091 = vmatpush.bf16.msra.mxu0 0
      %2092 = vmatpush.bf16.msra.mxu0 0
      %2093 = vmatpush.bf16.msra.mxu0 0
      %2094 = vmatpush.bf16.msra.mxu0 0
      %2095 = vmatpush.bf16.msra.mxu0 %v2086
      %2096 = vmatpush.bf16.msra.mxu0 %v2085
      %2097 = vmatmul.bf16.gmra.mxu0 %v1944
      %v2098 = vpop.f32.mrf.mxu0
      %v2099 = vadd.f32 0.0, %v2098
      %v2100 = vpop.f32.mrf.mxu0
      %v2101 = vadd.f32 0.0, %v2100
      %2102 = vmatmul.bf16.gmra.mxu0 %v1947
      %v2103 = vpop.f32.mrf.mxu0
      %v2104 = vadd.f32 0.0, %v2103
      %v2105 = vpop.f32.mrf.mxu0
      %v2106 = vadd.f32 0.0, %v2105
      %2107 = vmatmul.bf16.gmra.mxu0 %v1950
      %v2108 = vpop.f32.mrf.mxu0
      %v2109 = vadd.f32 0.0, %v2108
      %v2110 = vpop.f32.mrf.mxu0
      %v2111 = vadd.f32 0.0, %v2110
      %2112 = vmatmul.bf16.gmra.mxu0 %v1953
      %v2113 = vpop.f32.mrf.mxu0
      %v2114 = vadd.f32 0.0, %v2113
      %v2115 = vpop.f32.mrf.mxu0
      %v2116 = vadd.f32 0.0, %v2115
      %2117 = vmatmul.bf16.gmra.mxu0 %v1956
      %v2118 = vpop.f32.mrf.mxu0
      %v2119 = vadd.f32 0.0, %v2118
      %v2120 = vpop.f32.mrf.mxu0
      %v2121 = vadd.f32 0.0, %v2120
      %2122 = vmatmul.bf16.gmra.mxu0 %v1959
      %v2123 = vpop.f32.mrf.mxu0
      %v2124 = vadd.f32 0.0, %v2123
      %v2125 = vpop.f32.mrf.mxu0
      %v2126 = vadd.f32 0.0, %v2125
      %2127 = vmatmul.bf16.gmra.mxu0 %v1962
      %v2128 = vpop.f32.mrf.mxu0
      %v2129 = vadd.f32 0.0, %v2128
      %v2130 = vpop.f32.mrf.mxu0
      %v2131 = vadd.f32 0.0, %v2130
      %2132 = vmatmul.bf16.gmra.mxu0 %v1965
      %v2133 = vpop.f32.mrf.mxu0
      %v2134 = vadd.f32 0.0, %v2133
      %v2135 = vpop.f32.mrf.mxu0
      %v2136 = vadd.f32 0.0, %v2135
      %2137 = vmatmul.bf16.gmra.mxu0 %v1968
      %v2138 = vpop.f32.mrf.mxu0
      %v2139 = vadd.f32 0.0, %v2138
      %v2140 = vpop.f32.mrf.mxu0
      %v2141 = vadd.f32 0.0, %v2140
      %2142 = vmatmul.bf16.gmra.mxu0 %v1971
      %v2143 = vpop.f32.mrf.mxu0
      %v2144 = vadd.f32 0.0, %v2143
      %v2145 = vpop.f32.mrf.mxu0
      %v2146 = vadd.f32 0.0, %v2145
      %2147 = vmatmul.bf16.gmra.mxu0 %v1974
      %v2148 = vpop.f32.mrf.mxu0
      %v2149 = vadd.f32 0.0, %v2148
      %v2150 = vpop.f32.mrf.mxu0
      %v2151 = vadd.f32 0.0, %v2150
      %2152 = vmatmul.bf16.gmra.mxu0 %v1977
      %v2153 = vpop.f32.mrf.mxu0
      %v2154 = vadd.f32 0.0, %v2153
      %v2155 = vpop.f32.mrf.mxu0
      %v2156 = vadd.f32 0.0, %v2155
      %2157 = vdwg.mxu0
      %v2158 = vrot.slane %v2099, 1
      %v2159 = vrot.slane %v2101, 1
      %v2160 = vrot.slane %v2104, 1
      %v2161 = vrot.slane %v2106, 1
      %v2162 = vrot.slane %v2109, 1
      %v2163 = vrot.slane %v2111, 1
      %v2164 = vrot.slane %v2114, 1
      %v2165 = vrot.slane %v2116, 1
      %v2166 = vrot.slane %v2119, 1
      %v2167 = vrot.slane %v2121, 1
      %v2168 = vrot.slane %v2124, 1
      %v2169 = vrot.slane %v2126, 1
      %v2170 = vrot.slane %v2129, 1
      %v2171 = vrot.slane %v2131, 1
      %v2172 = vrot.slane %v2134, 1
      %v2173 = vrot.slane %v2136, 1
      %v2174 = vrot.slane %v2139, 1
      %v2175 = vrot.slane %v2141, 1
      %v2176 = vrot.slane %v2144, 1
      %v2177 = vrot.slane %v2146, 1
      %v2178 = vrot.slane %v2149, 1
      %v2179 = vrot.slane %v2151, 1
      %v2180 = vrot.slane %v2154, 1
      %v2181 = vrot.slane %v2156, 1
      %v2182 = vsel %vm1576, %v2180, %v2181
      %v2183 = vsel %vm1576, %v2179, %v2180
      %v2184 = vsel %vm1576, %v2178, %v2179
      %v2185 = vsel %vm1576, %v2177, %v2178
      %v2186 = vsel %vm1576, %v2176, %v2177
      %v2187 = vsel %vm1576, %v2175, %v2176
      %v2188 = vsel %vm1576, %v2174, %v2175
      %v2189 = vsel %vm1576, %v2173, %v2174
      %v2190 = vsel %vm1576, %v2172, %v2173
      %v2191 = vsel %vm1576, %v2171, %v2172
      %v2192 = vsel %vm1576, %v2170, %v2171
      %v2193 = vsel %vm1576, %v2169, %v2170
      %v2194 = vsel %vm1576, %v2168, %v2169
      %v2195 = vsel %vm1576, %v2167, %v2168
      %v2196 = vsel %vm1576, %v2166, %v2167
      %v2197 = vsel %vm1576, %v2165, %v2166
      %v2198 = vsel %vm1576, %v2164, %v2165
      %v2199 = vsel %vm1576, %v2163, %v2164
      %v2200 = vsel %vm1576, %v2162, %v2163
      %v2201 = vsel %vm1576, %v2161, %v2162
      %v2202 = vsel %vm1576, %v2160, %v2161
      %v2203 = vsel %vm1576, %v2159, %v2160
      %v2204 = vsel %vm1576, %v2158, %v2159
      %v2205 = vsel %vm1576, %v2181, %v2158
      %v2206 = vadd.f32 %v2048, %v2204
      %v2207 = vadd.f32 %v2049, %v2203
      %v2208 = vadd.f32 %v2050, %v2202
      %v2209 = vadd.f32 %v2051, %v2201
      %v2210 = vadd.f32 %v2052, %v2200
      %v2211 = vadd.f32 %v2053, %v2199
      %v2212 = vadd.f32 %v2054, %v2198
      %v2213 = vadd.f32 %v2055, %v2197
      %v2214 = vadd.f32 %v2056, %v2196
      %v2215 = vadd.f32 %v2057, %v2195
      %v2216 = vadd.f32 %v2058, %v2194
      %v2217 = vadd.f32 %v2059, %v2193
      %v2218 = vadd.f32 %v2060, %v2192
      %v2219 = vadd.f32 %v2061, %v2191
      %v2220 = vadd.f32 %v2062, %v2190
      %v2221 = vadd.f32 %v2063, %v2189
      %v2222 = vadd.f32 %v2064, %v2188
      %v2223 = vadd.f32 %v2065, %v2187
      %v2224 = vadd.f32 %v2066, %v2186
      %v2225 = vadd.f32 %v2067, %v2185
      %v2226 = vadd.f32 %v2068, %v2184
      %v2227 = vadd.f32 %v2069, %v2183
      %v2228 = vadd.f32 %v2070, %v2182
      %v2229 = vadd.f32 %v2071, %v2205
      %s2230 = scalar_lea.vmem %s4, 80
      %v2231 = vld [vmem:[%s2230] sm:$0xf]
      %v2232 = vld [vmem:[%s2230 + $0x4] sm:$0xf]
      %v2233 = vld [vmem:[%s2230 + $0x8] sm:$0xf]
      %v2234 = vld [vmem:[%s2230 + $0xc] sm:$0xf]
      %v2239 = vunpack.c.l.b16 %v2231
      %v2240 = vunpack.c.l.b16 %v2232
      %v2241 = vunpack.c.l.b16 %v2233
      %v2242 = vunpack.c.l.b16 %v2234
      %v2243 = vpack.c.b16 %v2240, %v2239
      %v2244 = vpack.c.b16 %v2242, %v2241
      %2247 = vmatpush.bf16.msra.mxu0 0
      %2248 = vmatpush.bf16.msra.mxu0 0
      %2249 = vmatpush.bf16.msra.mxu0 0
      %2250 = vmatpush.bf16.msra.mxu0 0
      %2251 = vmatpush.bf16.msra.mxu0 0
      %2252 = vmatpush.bf16.msra.mxu0 0
      %2253 = vmatpush.bf16.msra.mxu0 %v2244
      %2254 = vmatpush.bf16.msra.mxu0 %v2243
      %2255 = vmatmul.bf16.gmra.mxu0 %v1944
      %v2256 = vpop.f32.mrf.mxu0
      %v2257 = vadd.f32 0.0, %v2256
      %v2258 = vpop.f32.mrf.mxu0
      %v2259 = vadd.f32 0.0, %v2258
      %2260 = vmatmul.bf16.gmra.mxu0 %v1947
      %v2261 = vpop.f32.mrf.mxu0
      %v2262 = vadd.f32 0.0, %v2261
      %v2263 = vpop.f32.mrf.mxu0
      %v2264 = vadd.f32 0.0, %v2263
      %2265 = vmatmul.bf16.gmra.mxu0 %v1950
      %v2266 = vpop.f32.mrf.mxu0
      %v2267 = vadd.f32 0.0, %v2266
      %v2268 = vpop.f32.mrf.mxu0
      %v2269 = vadd.f32 0.0, %v2268
      %2270 = vmatmul.bf16.gmra.mxu0 %v1953
      %v2271 = vpop.f32.mrf.mxu0
      %v2272 = vadd.f32 0.0, %v2271
      %v2273 = vpop.f32.mrf.mxu0
      %v2274 = vadd.f32 0.0, %v2273
      %2275 = vmatmul.bf16.gmra.mxu0 %v1956
      %v2276 = vpop.f32.mrf.mxu0
      %v2277 = vadd.f32 0.0, %v2276
      %v2278 = vpop.f32.mrf.mxu0
      %v2279 = vadd.f32 0.0, %v2278
      %2280 = vmatmul.bf16.gmra.mxu0 %v1959
      %v2281 = vpop.f32.mrf.mxu0
      %v2282 = vadd.f32 0.0, %v2281
      %v2283 = vpop.f32.mrf.mxu0
      %v2284 = vadd.f32 0.0, %v2283
      %2285 = vmatmul.bf16.gmra.mxu0 %v1962
      %v2286 = vpop.f32.mrf.mxu0
      %v2287 = vadd.f32 0.0, %v2286
      %v2288 = vpop.f32.mrf.mxu0
      %v2289 = vadd.f32 0.0, %v2288
      %2290 = vmatmul.bf16.gmra.mxu0 %v1965
      %v2291 = vpop.f32.mrf.mxu0
      %v2292 = vadd.f32 0.0, %v2291
      %v2293 = vpop.f32.mrf.mxu0
      %v2294 = vadd.f32 0.0, %v2293
      %2295 = vmatmul.bf16.gmra.mxu0 %v1968
      %v2296 = vpop.f32.mrf.mxu0
      %v2297 = vadd.f32 0.0, %v2296
      %v2298 = vpop.f32.mrf.mxu0
      %v2299 = vadd.f32 0.0, %v2298
      %2300 = vmatmul.bf16.gmra.mxu0 %v1971
      %v2301 = vpop.f32.mrf.mxu0
      %v2302 = vadd.f32 0.0, %v2301
      %v2303 = vpop.f32.mrf.mxu0
      %v2304 = vadd.f32 0.0, %v2303
      %2305 = vmatmul.bf16.gmra.mxu0 %v1974
      %v2306 = vpop.f32.mrf.mxu0
      %v2307 = vadd.f32 0.0, %v2306
      %v2308 = vpop.f32.mrf.mxu0
      %v2309 = vadd.f32 0.0, %v2308
      %2310 = vmatmul.bf16.gmra.mxu0 %v1977
      %v2311 = vpop.f32.mrf.mxu0
      %v2312 = vadd.f32 0.0, %v2311
      %v2313 = vpop.f32.mrf.mxu0
      %v2314 = vadd.f32 0.0, %v2313
      %2315 = vdwg.mxu0
      %v2316 = vrot.slane %v2257, 2
      %v2317 = vrot.slane %v2259, 2
      %v2318 = vrot.slane %v2262, 2
      %v2319 = vrot.slane %v2264, 2
      %v2320 = vrot.slane %v2267, 2
      %v2321 = vrot.slane %v2269, 2
      %v2322 = vrot.slane %v2272, 2
      %v2323 = vrot.slane %v2274, 2
      %v2324 = vrot.slane %v2277, 2
      %v2325 = vrot.slane %v2279, 2
      %v2326 = vrot.slane %v2282, 2
      %v2327 = vrot.slane %v2284, 2
      %v2328 = vrot.slane %v2287, 2
      %v2329 = vrot.slane %v2289, 2
      %v2330 = vrot.slane %v2292, 2
      %v2331 = vrot.slane %v2294, 2
      %v2332 = vrot.slane %v2297, 2
      %v2333 = vrot.slane %v2299, 2
      %v2334 = vrot.slane %v2302, 2
      %v2335 = vrot.slane %v2304, 2
      %v2336 = vrot.slane %v2307, 2
      %v2337 = vrot.slane %v2309, 2
      %v2338 = vrot.slane %v2312, 2
      %v2339 = vrot.slane %v2314, 2
      %v2340 = vsel %vm1792, %v2338, %v2339
      %v2341 = vsel %vm1792, %v2337, %v2338
      %v2342 = vsel %vm1792, %v2336, %v2337
      %v2343 = vsel %vm1792, %v2335, %v2336
      %v2344 = vsel %vm1792, %v2334, %v2335
      %v2345 = vsel %vm1792, %v2333, %v2334
      %v2346 = vsel %vm1792, %v2332, %v2333
      %v2347 = vsel %vm1792, %v2331, %v2332
      %v2348 = vsel %vm1792, %v2330, %v2331
      %v2349 = vsel %vm1792, %v2329, %v2330
      %v2350 = vsel %vm1792, %v2328, %v2329
      %v2351 = vsel %vm1792, %v2327, %v2328
      %v2352 = vsel %vm1792, %v2326, %v2327
      %v2353 = vsel %vm1792, %v2325, %v2326
      %v2354 = vsel %vm1792, %v2324, %v2325
      %v2355 = vsel %vm1792, %v2323, %v2324
      %v2356 = vsel %vm1792, %v2322, %v2323
      %v2357 = vsel %vm1792, %v2321, %v2322
      %v2358 = vsel %vm1792, %v2320, %v2321
      %v2359 = vsel %vm1792, %v2319, %v2320
      %v2360 = vsel %vm1792, %v2318, %v2319
      %v2361 = vsel %vm1792, %v2317, %v2318
      %v2362 = vsel %vm1792, %v2316, %v2317
      %v2363 = vsel %vm1792, %v2339, %v2316
      %v2364 = vadd.f32 %v2206, %v2362
      %v2365 = vadd.f32 %v2207, %v2361
      %v2366 = vadd.f32 %v2208, %v2360
      %v2367 = vadd.f32 %v2209, %v2359
      %v2368 = vadd.f32 %v2210, %v2358
      %v2369 = vadd.f32 %v2211, %v2357
      %v2370 = vadd.f32 %v2212, %v2356
      %v2371 = vadd.f32 %v2213, %v2355
      %v2372 = vadd.f32 %v2214, %v2354
      %v2373 = vadd.f32 %v2215, %v2353
      %v2374 = vadd.f32 %v2216, %v2352
      %v2375 = vadd.f32 %v2217, %v2351
      %v2376 = vadd.f32 %v2218, %v2350
      %v2377 = vadd.f32 %v2219, %v2349
      %v2378 = vadd.f32 %v2220, %v2348
      %v2379 = vadd.f32 %v2221, %v2347
      %v2380 = vadd.f32 %v2222, %v2346
      %v2381 = vadd.f32 %v2223, %v2345
      %v2382 = vadd.f32 %v2224, %v2344
      %v2383 = vadd.f32 %v2225, %v2343
      %v2384 = vadd.f32 %v2226, %v2342
      %v2385 = vadd.f32 %v2227, %v2341
      %v2386 = vadd.f32 %v2228, %v2340
      %v2387 = vadd.f32 %v2229, %v2363
      %s2388 = scalar_lea.vmem [#allocation2], 24
      %v2389 = vld [vmem:[%s2388] sm:$0xf]
      %v2390 = vld [vmem:[%s2388 + $0x4] sm:$0xf]
      %v2391 = vld [vmem:[%s2388 + $0x8] sm:$0xf]
      %v2392 = vld [vmem:[%s2388 + $0xc] sm:$0xf]
      %v2393 = vld [vmem:[%s2388 + $0x10] sm:$0xf]
      %v2394 = vld [vmem:[%s2388 + $0x14] sm:$0xf]
      %v2395 = vld [vmem:[%s2388 + $0x18] sm:$0xf]
      %v2396 = vld [vmem:[%s2388 + $0x1c] sm:$0xf]
      %v2397 = vld [vmem:[%s2388 + $0x20] sm:$0xf]
      %v2398 = vld [vmem:[%s2388 + $0x24] sm:$0xf]
      %v2399 = vld [vmem:[%s2388 + $0x28] sm:$0xf]
      %v2400 = vld [vmem:[%s2388 + $0x2c] sm:$0xf]
      %v2401 = vld [vmem:[%s2388 + $0x30] sm:$0xf]
      %v2402 = vld [vmem:[%s2388 + $0x34] sm:$0xf]
      %v2403 = vld [vmem:[%s2388 + $0x38] sm:$0xf]
      %v2404 = vld [vmem:[%s2388 + $0x3c] sm:$0xf]
      %v2405 = vld [vmem:[%s2388 + $0x40] sm:$0xf]
      %v2406 = vld [vmem:[%s2388 + $0x44] sm:$0xf]
      %v2407 = vld [vmem:[%s2388 + $0x48] sm:$0xf]
      %v2408 = vld [vmem:[%s2388 + $0x4c] sm:$0xf]
      %v2409 = vld [vmem:[%s2388 + $0x50] sm:$0xf]
      %v2410 = vld [vmem:[%s2388 + $0x54] sm:$0xf]
      %v2411 = vld [vmem:[%s2388 + $0x58] sm:$0xf]
      %v2412 = vld [vmem:[%s2388 + $0x5c] sm:$0xf]
      %s2413 = scalar_lea.vmem %s4, 96
      %v2414 = vld [vmem:[%s2413] sm:$0xf]
      %v2415 = vld [vmem:[%s2413 + $0x4] sm:$0xf]
      %v2416 = vld [vmem:[%s2413 + $0x8] sm:$0xf]
      %v2417 = vld [vmem:[%s2413 + $0xc] sm:$0xf]
      %v2442 = vunpack.c.l.b16 %v2389
      %v2443 = vunpack.c.l.b16 %v2390
      %v2444 = vunpack.c.l.b16 %v2391
      %v2445 = vunpack.c.l.b16 %v2392
      %v2446 = vunpack.c.l.b16 %v2393
      %v2447 = vunpack.c.l.b16 %v2394
      %v2448 = vunpack.c.l.b16 %v2395
      %v2449 = vunpack.c.l.b16 %v2396
      %v2450 = vunpack.c.l.b16 %v2397
      %v2451 = vunpack.c.l.b16 %v2398
      %v2452 = vunpack.c.l.b16 %v2399
      %v2453 = vunpack.c.l.b16 %v2400
      %v2454 = vunpack.c.l.b16 %v2401
      %v2455 = vunpack.c.l.b16 %v2402
      %v2456 = vunpack.c.l.b16 %v2403
      %v2457 = vunpack.c.l.b16 %v2404
      %v2458 = vunpack.c.l.b16 %v2405
      %v2459 = vunpack.c.l.b16 %v2406
      %v2460 = vunpack.c.l.b16 %v2407
      %v2461 = vunpack.c.l.b16 %v2408
      %v2462 = vunpack.c.l.b16 %v2409
      %v2463 = vunpack.c.l.b16 %v2410
      %v2464 = vunpack.c.l.b16 %v2411
      %v2465 = vunpack.c.l.b16 %v2412
      %v2466 = vpack.c.b16 %v2443, %v2442
      %v2467 = vpack.c.b16 %v2445, %v2444
      %v2468 = vpack.c.b16 %v2447, %v2446
      %v2469 = vpack.c.b16 %v2449, %v2448
      %v2470 = vpack.c.b16 %v2451, %v2450
      %v2471 = vpack.c.b16 %v2453, %v2452
      %v2472 = vpack.c.b16 %v2455, %v2454
      %v2473 = vpack.c.b16 %v2457, %v2456
      %v2474 = vpack.c.b16 %v2459, %v2458
      %v2475 = vpack.c.b16 %v2461, %v2460
      %v2476 = vpack.c.b16 %v2463, %v2462
      %v2477 = vpack.c.b16 %v2465, %v2464
      %v2482 = vunpack.c.l.b16 %v2414
      %v2483 = vunpack.c.l.b16 %v2415
      %v2484 = vunpack.c.l.b16 %v2416
      %v2485 = vunpack.c.l.b16 %v2417
      %v2486 = vpack.c.b16 %v2483, %v2482
      %v2487 = vpack.c.b16 %v2485, %v2484
      %v2491 = vsel %vm1444, %v2466, 0
      %v2494 = vsel %vm1444, %v2467, 0
      %v2497 = vsel %vm1444, %v2468, 0
      %v2500 = vsel %vm1444, %v2469, 0
      %v2503 = vsel %vm1444, %v2470, 0
      %v2506 = vsel %vm1444, %v2471, 0
      %v2509 = vsel %vm1444, %v2472, 0
      %v2512 = vsel %vm1444, %v2473, 0
      %v2515 = vsel %vm1444, %v2474, 0
      %v2518 = vsel %vm1444, %v2475, 0
      %v2521 = vsel %vm1444, %v2476, 0
      %v2524 = vsel %vm1444, %v2477, 0
      %2526 = vmatpush.bf16.msra.mxu0 0
      %2527 = vmatpush.bf16.msra.mxu0 0
      %2528 = vmatpush.bf16.msra.mxu0 0
      %2529 = vmatpush.bf16.msra.mxu0 0
      %2530 = vmatpush.bf16.msra.mxu0 0
      %2531 = vmatpush.bf16.msra.mxu0 0
      %2532 = vmatpush.bf16.msra.mxu0 %v2487
      %2533 = vmatpush.bf16.msra.mxu0 %v2486
      %2534 = vmatmul.bf16.gmra.mxu0 %v2491
      %v2535 = vpop.f32.mrf.mxu0
      %v2536 = vadd.f32 0.0, %v2535
      %v2537 = vpop.f32.mrf.mxu0
      %v2538 = vadd.f32 0.0, %v2537
      %2539 = vmatmul.bf16.gmra.mxu0 %v2494
      %v2540 = vpop.f32.mrf.mxu0
      %v2541 = vadd.f32 0.0, %v2540
      %v2542 = vpop.f32.mrf.mxu0
      %v2543 = vadd.f32 0.0, %v2542
      %2544 = vmatmul.bf16.gmra.mxu0 %v2497
      %v2545 = vpop.f32.mrf.mxu0
      %v2546 = vadd.f32 0.0, %v2545
      %v2547 = vpop.f32.mrf.mxu0
      %v2548 = vadd.f32 0.0, %v2547
      %2549 = vmatmul.bf16.gmra.mxu0 %v2500
      %v2550 = vpop.f32.mrf.mxu0
      %v2551 = vadd.f32 0.0, %v2550
      %v2552 = vpop.f32.mrf.mxu0
      %v2553 = vadd.f32 0.0, %v2552
      %2554 = vmatmul.bf16.gmra.mxu0 %v2503
      %v2555 = vpop.f32.mrf.mxu0
      %v2556 = vadd.f32 0.0, %v2555
      %v2557 = vpop.f32.mrf.mxu0
      %v2558 = vadd.f32 0.0, %v2557
      %2559 = vmatmul.bf16.gmra.mxu0 %v2506
      %v2560 = vpop.f32.mrf.mxu0
      %v2561 = vadd.f32 0.0, %v2560
      %v2562 = vpop.f32.mrf.mxu0
      %v2563 = vadd.f32 0.0, %v2562
      %2564 = vmatmul.bf16.gmra.mxu0 %v2509
      %v2565 = vpop.f32.mrf.mxu0
      %v2566 = vadd.f32 0.0, %v2565
      %v2567 = vpop.f32.mrf.mxu0
      %v2568 = vadd.f32 0.0, %v2567
      %2569 = vmatmul.bf16.gmra.mxu0 %v2512
      %v2570 = vpop.f32.mrf.mxu0
      %v2571 = vadd.f32 0.0, %v2570
      %v2572 = vpop.f32.mrf.mxu0
      %v2573 = vadd.f32 0.0, %v2572
      %2574 = vmatmul.bf16.gmra.mxu0 %v2515
      %v2575 = vpop.f32.mrf.mxu0
      %v2576 = vadd.f32 0.0, %v2575
      %v2577 = vpop.f32.mrf.mxu0
      %v2578 = vadd.f32 0.0, %v2577
      %2579 = vmatmul.bf16.gmra.mxu0 %v2518
      %v2580 = vpop.f32.mrf.mxu0
      %v2581 = vadd.f32 0.0, %v2580
      %v2582 = vpop.f32.mrf.mxu0
      %v2583 = vadd.f32 0.0, %v2582
      %2584 = vmatmul.bf16.gmra.mxu0 %v2521
      %v2585 = vpop.f32.mrf.mxu0
      %v2586 = vadd.f32 0.0, %v2585
      %v2587 = vpop.f32.mrf.mxu0
      %v2588 = vadd.f32 0.0, %v2587
      %2589 = vmatmul.bf16.gmra.mxu0 %v2524
      %v2590 = vpop.f32.mrf.mxu0
      %v2591 = vadd.f32 0.0, %v2590
      %v2592 = vpop.f32.mrf.mxu0
      %v2593 = vadd.f32 0.0, %v2592
      %2594 = vdwg.mxu0
      %v2595 = vadd.f32 %v2364, %v2536
      %v2596 = vadd.f32 %v2365, %v2538
      %v2597 = vadd.f32 %v2366, %v2541
      %v2598 = vadd.f32 %v2367, %v2543
      %v2599 = vadd.f32 %v2368, %v2546
      %v2600 = vadd.f32 %v2369, %v2548
      %v2601 = vadd.f32 %v2370, %v2551
      %v2602 = vadd.f32 %v2371, %v2553
      %v2603 = vadd.f32 %v2372, %v2556
      %v2604 = vadd.f32 %v2373, %v2558
      %v2605 = vadd.f32 %v2374, %v2561
      %v2606 = vadd.f32 %v2375, %v2563
      %v2607 = vadd.f32 %v2376, %v2566
      %v2608 = vadd.f32 %v2377, %v2568
      %v2609 = vadd.f32 %v2378, %v2571
      %v2610 = vadd.f32 %v2379, %v2573
      %v2611 = vadd.f32 %v2380, %v2576
      %v2612 = vadd.f32 %v2381, %v2578
      %v2613 = vadd.f32 %v2382, %v2581
      %v2614 = vadd.f32 %v2383, %v2583
      %v2615 = vadd.f32 %v2384, %v2586
      %v2616 = vadd.f32 %v2385, %v2588
      %v2617 = vadd.f32 %v2386, %v2591
      %v2618 = vadd.f32 %v2387, %v2593
      %s2619 = scalar_lea.vmem %s4, 112
      %v2620 = vld [vmem:[%s2619] sm:$0xf]
      %v2621 = vld [vmem:[%s2619 + $0x4] sm:$0xf]
      %v2622 = vld [vmem:[%s2619 + $0x8] sm:$0xf]
      %v2623 = vld [vmem:[%s2619 + $0xc] sm:$0xf]
      %v2628 = vunpack.c.l.b16 %v2620
      %v2629 = vunpack.c.l.b16 %v2621
      %v2630 = vunpack.c.l.b16 %v2622
      %v2631 = vunpack.c.l.b16 %v2623
      %v2632 = vpack.c.b16 %v2629, %v2628
      %v2633 = vpack.c.b16 %v2631, %v2630
      %2636 = vmatpush.bf16.msra.mxu0 0
      %2637 = vmatpush.bf16.msra.mxu0 0
      %2638 = vmatpush.bf16.msra.mxu0 0
      %2639 = vmatpush.bf16.msra.mxu0 0
      %2640 = vmatpush.bf16.msra.mxu0 0
      %2641 = vmatpush.bf16.msra.mxu0 0
      %2642 = vmatpush.bf16.msra.mxu0 %v2633
      %2643 = vmatpush.bf16.msra.mxu0 %v2632
      %2644 = vmatmul.bf16.gmra.mxu0 %v2491
      %v2645 = vpop.f32.mrf.mxu0
      %v2646 = vadd.f32 0.0, %v2645
      %v2647 = vpop.f32.mrf.mxu0
      %v2648 = vadd.f32 0.0, %v2647
      %2649 = vmatmul.bf16.gmra.mxu0 %v2494
      %v2650 = vpop.f32.mrf.mxu0
      %v2651 = vadd.f32 0.0, %v2650
      %v2652 = vpop.f32.mrf.mxu0
      %v2653 = vadd.f32 0.0, %v2652
      %2654 = vmatmul.bf16.gmra.mxu0 %v2497
      %v2655 = vpop.f32.mrf.mxu0
      %v2656 = vadd.f32 0.0, %v2655
      %v2657 = vpop.f32.mrf.mxu0
      %v2658 = vadd.f32 0.0, %v2657
      %2659 = vmatmul.bf16.gmra.mxu0 %v2500
      %v2660 = vpop.f32.mrf.mxu0
      %v2661 = vadd.f32 0.0, %v2660
      %v2662 = vpop.f32.mrf.mxu0
      %v2663 = vadd.f32 0.0, %v2662
      %2664 = vmatmul.bf16.gmra.mxu0 %v2503
      %v2665 = vpop.f32.mrf.mxu0
      %v2666 = vadd.f32 0.0, %v2665
      %v2667 = vpop.f32.mrf.mxu0
      %v2668 = vadd.f32 0.0, %v2667
      %2669 = vmatmul.bf16.gmra.mxu0 %v2506
      %v2670 = vpop.f32.mrf.mxu0
      %v2671 = vadd.f32 0.0, %v2670
      %v2672 = vpop.f32.mrf.mxu0
      %v2673 = vadd.f32 0.0, %v2672
      %2674 = vmatmul.bf16.gmra.mxu0 %v2509
      %v2675 = vpop.f32.mrf.mxu0
      %v2676 = vadd.f32 0.0, %v2675
      %v2677 = vpop.f32.mrf.mxu0
      %v2678 = vadd.f32 0.0, %v2677
      %2679 = vmatmul.bf16.gmra.mxu0 %v2512
      %v2680 = vpop.f32.mrf.mxu0
      %v2681 = vadd.f32 0.0, %v2680
      %v2682 = vpop.f32.mrf.mxu0
      %v2683 = vadd.f32 0.0, %v2682
      %2684 = vmatmul.bf16.gmra.mxu0 %v2515
      %v2685 = vpop.f32.mrf.mxu0
      %v2686 = vadd.f32 0.0, %v2685
      %v2687 = vpop.f32.mrf.mxu0
      %v2688 = vadd.f32 0.0, %v2687
      %2689 = vmatmul.bf16.gmra.mxu0 %v2518
      %v2690 = vpop.f32.mrf.mxu0
      %v2691 = vadd.f32 0.0, %v2690
      %v2692 = vpop.f32.mrf.mxu0
      %v2693 = vadd.f32 0.0, %v2692
      %2694 = vmatmul.bf16.gmra.mxu0 %v2521
      %v2695 = vpop.f32.mrf.mxu0
      %v2696 = vadd.f32 0.0, %v2695
      %v2697 = vpop.f32.mrf.mxu0
      %v2698 = vadd.f32 0.0, %v2697
      %2699 = vmatmul.bf16.gmra.mxu0 %v2524
      %v2700 = vpop.f32.mrf.mxu0
      %v2701 = vadd.f32 0.0, %v2700
      %v2702 = vpop.f32.mrf.mxu0
      %v2703 = vadd.f32 0.0, %v2702
      %2704 = vdwg.mxu0
      %v2705 = vrot.slane %v2646, 1
      %v2706 = vrot.slane %v2648, 1
      %v2707 = vrot.slane %v2651, 1
      %v2708 = vrot.slane %v2653, 1
      %v2709 = vrot.slane %v2656, 1
      %v2710 = vrot.slane %v2658, 1
      %v2711 = vrot.slane %v2661, 1
      %v2712 = vrot.slane %v2663, 1
      %v2713 = vrot.slane %v2666, 1
      %v2714 = vrot.slane %v2668, 1
      %v2715 = vrot.slane %v2671, 1
      %v2716 = vrot.slane %v2673, 1
      %v2717 = vrot.slane %v2676, 1
      %v2718 = vrot.slane %v2678, 1
      %v2719 = vrot.slane %v2681, 1
      %v2720 = vrot.slane %v2683, 1
      %v2721 = vrot.slane %v2686, 1
      %v2722 = vrot.slane %v2688, 1
      %v2723 = vrot.slane %v2691, 1
      %v2724 = vrot.slane %v2693, 1
      %v2725 = vrot.slane %v2696, 1
      %v2726 = vrot.slane %v2698, 1
      %v2727 = vrot.slane %v2701, 1
      %v2728 = vrot.slane %v2703, 1
      %v2729 = vsel %vm1576, %v2727, %v2728
      %v2730 = vsel %vm1576, %v2726, %v2727
      %v2731 = vsel %vm1576, %v2725, %v2726
      %v2732 = vsel %vm1576, %v2724, %v2725
      %v2733 = vsel %vm1576, %v2723, %v2724
      %v2734 = vsel %vm1576, %v2722, %v2723
      %v2735 = vsel %vm1576, %v2721, %v2722
      %v2736 = vsel %vm1576, %v2720, %v2721
      %v2737 = vsel %vm1576, %v2719, %v2720
      %v2738 = vsel %vm1576, %v2718, %v2719
      %v2739 = vsel %vm1576, %v2717, %v2718
      %v2740 = vsel %vm1576, %v2716, %v2717
      %v2741 = vsel %vm1576, %v2715, %v2716
      %v2742 = vsel %vm1576, %v2714, %v2715
      %v2743 = vsel %vm1576, %v2713, %v2714
      %v2744 = vsel %vm1576, %v2712, %v2713
      %v2745 = vsel %vm1576, %v2711, %v2712
      %v2746 = vsel %vm1576, %v2710, %v2711
      %v2747 = vsel %vm1576, %v2709, %v2710
      %v2748 = vsel %vm1576, %v2708, %v2709
      %v2749 = vsel %vm1576, %v2707, %v2708
      %v2750 = vsel %vm1576, %v2706, %v2707
      %v2751 = vsel %vm1576, %v2705, %v2706
      %v2752 = vsel %vm1576, %v2728, %v2705
      %v2753 = vadd.f32 %v2595, %v2751
      %v2754 = vadd.f32 %v2596, %v2750
      %v2755 = vadd.f32 %v2597, %v2749
      %v2756 = vadd.f32 %v2598, %v2748
      %v2757 = vadd.f32 %v2599, %v2747
      %v2758 = vadd.f32 %v2600, %v2746
      %v2759 = vadd.f32 %v2601, %v2745
      %v2760 = vadd.f32 %v2602, %v2744
      %v2761 = vadd.f32 %v2603, %v2743
      %v2762 = vadd.f32 %v2604, %v2742
      %v2763 = vadd.f32 %v2605, %v2741
      %v2764 = vadd.f32 %v2606, %v2740
      %v2765 = vadd.f32 %v2607, %v2739
      %v2766 = vadd.f32 %v2608, %v2738
      %v2767 = vadd.f32 %v2609, %v2737
      %v2768 = vadd.f32 %v2610, %v2736
      %v2769 = vadd.f32 %v2611, %v2735
      %v2770 = vadd.f32 %v2612, %v2734
      %v2771 = vadd.f32 %v2613, %v2733
      %v2772 = vadd.f32 %v2614, %v2732
      %v2773 = vadd.f32 %v2615, %v2731
      %v2774 = vadd.f32 %v2616, %v2730
      %v2775 = vadd.f32 %v2617, %v2729
      %v2776 = vadd.f32 %v2618, %v2752
      %s2777 = scalar_lea.vmem %s4, 128
      %v2778 = vld [vmem:[%s2777] sm:$0xf]
      %v2779 = vld [vmem:[%s2777 + $0x4] sm:$0xf]
      %v2780 = vld [vmem:[%s2777 + $0x8] sm:$0xf]
      %v2781 = vld [vmem:[%s2777 + $0xc] sm:$0xf]
      %v2786 = vunpack.c.l.b16 %v2778
      %v2787 = vunpack.c.l.b16 %v2779
      %v2788 = vunpack.c.l.b16 %v2780
      %v2789 = vunpack.c.l.b16 %v2781
      %v2790 = vpack.c.b16 %v2787, %v2786
      %v2791 = vpack.c.b16 %v2789, %v2788
      %2794 = vmatpush.bf16.msra.mxu0 0
      %2795 = vmatpush.bf16.msra.mxu0 0
      %2796 = vmatpush.bf16.msra.mxu0 0
      %2797 = vmatpush.bf16.msra.mxu0 0
      %2798 = vmatpush.bf16.msra.mxu0 0
      %2799 = vmatpush.bf16.msra.mxu0 0
      %2800 = vmatpush.bf16.msra.mxu0 %v2791
      %2801 = vmatpush.bf16.msra.mxu0 %v2790
      %2802 = vmatmul.bf16.gmra.mxu0 %v2491
      %v2803 = vpop.f32.mrf.mxu0
      %v2804 = vadd.f32 0.0, %v2803
      %v2805 = vpop.f32.mrf.mxu0
      %v2806 = vadd.f32 0.0, %v2805
      %2807 = vmatmul.bf16.gmra.mxu0 %v2494
      %v2808 = vpop.f32.mrf.mxu0
      %v2809 = vadd.f32 0.0, %v2808
      %v2810 = vpop.f32.mrf.mxu0
      %v2811 = vadd.f32 0.0, %v2810
      %2812 = vmatmul.bf16.gmra.mxu0 %v2497
      %v2813 = vpop.f32.mrf.mxu0
      %v2814 = vadd.f32 0.0, %v2813
      %v2815 = vpop.f32.mrf.mxu0
      %v2816 = vadd.f32 0.0, %v2815
      %2817 = vmatmul.bf16.gmra.mxu0 %v2500
      %v2818 = vpop.f32.mrf.mxu0
      %v2819 = vadd.f32 0.0, %v2818
      %v2820 = vpop.f32.mrf.mxu0
      %v2821 = vadd.f32 0.0, %v2820
      %2822 = vmatmul.bf16.gmra.mxu0 %v2503
      %v2823 = vpop.f32.mrf.mxu0
      %v2824 = vadd.f32 0.0, %v2823
      %v2825 = vpop.f32.mrf.mxu0
      %v2826 = vadd.f32 0.0, %v2825
      %2827 = vmatmul.bf16.gmra.mxu0 %v2506
      %v2828 = vpop.f32.mrf.mxu0
      %v2829 = vadd.f32 0.0, %v2828
      %v2830 = vpop.f32.mrf.mxu0
      %v2831 = vadd.f32 0.0, %v2830
      %2832 = vmatmul.bf16.gmra.mxu0 %v2509
      %v2833 = vpop.f32.mrf.mxu0
      %v2834 = vadd.f32 0.0, %v2833
      %v2835 = vpop.f32.mrf.mxu0
      %v2836 = vadd.f32 0.0, %v2835
      %2837 = vmatmul.bf16.gmra.mxu0 %v2512
      %v2838 = vpop.f32.mrf.mxu0
      %v2839 = vadd.f32 0.0, %v2838
      %v2840 = vpop.f32.mrf.mxu0
      %v2841 = vadd.f32 0.0, %v2840
      %2842 = vmatmul.bf16.gmra.mxu0 %v2515
      %v2843 = vpop.f32.mrf.mxu0
      %v2844 = vadd.f32 0.0, %v2843
      %v2845 = vpop.f32.mrf.mxu0
      %v2846 = vadd.f32 0.0, %v2845
      %2847 = vmatmul.bf16.gmra.mxu0 %v2518
      %v2848 = vpop.f32.mrf.mxu0
      %v2849 = vadd.f32 0.0, %v2848
      %v2850 = vpop.f32.mrf.mxu0
      %v2851 = vadd.f32 0.0, %v2850
      %2852 = vmatmul.bf16.gmra.mxu0 %v2521
      %v2853 = vpop.f32.mrf.mxu0
      %v2854 = vadd.f32 0.0, %v2853
      %v2855 = vpop.f32.mrf.mxu0
      %v2856 = vadd.f32 0.0, %v2855
      %2857 = vmatmul.bf16.gmra.mxu0 %v2524
      %v2858 = vpop.f32.mrf.mxu0
      %v2859 = vadd.f32 0.0, %v2858
      %v2860 = vpop.f32.mrf.mxu0
      %v2861 = vadd.f32 0.0, %v2860
      %2862 = vdwg.mxu0
      %v2863 = vrot.slane %v2804, 2
      %v2864 = vrot.slane %v2806, 2
      %v2865 = vrot.slane %v2809, 2
      %v2866 = vrot.slane %v2811, 2
      %v2867 = vrot.slane %v2814, 2
      %v2868 = vrot.slane %v2816, 2
      %v2869 = vrot.slane %v2819, 2
      %v2870 = vrot.slane %v2821, 2
      %v2871 = vrot.slane %v2824, 2
      %v2872 = vrot.slane %v2826, 2
      %v2873 = vrot.slane %v2829, 2
      %v2874 = vrot.slane %v2831, 2
      %v2875 = vrot.slane %v2834, 2
      %v2876 = vrot.slane %v2836, 2
      %v2877 = vrot.slane %v2839, 2
      %v2878 = vrot.slane %v2841, 2
      %v2879 = vrot.slane %v2844, 2
      %v2880 = vrot.slane %v2846, 2
      %v2881 = vrot.slane %v2849, 2
      %v2882 = vrot.slane %v2851, 2
      %v2883 = vrot.slane %v2854, 2
      %v2884 = vrot.slane %v2856, 2
      %v2885 = vrot.slane %v2859, 2
      %v2886 = vrot.slane %v2861, 2
      %v2887 = vsel %vm1792, %v2885, %v2886
      %v2888 = vsel %vm1792, %v2884, %v2885
      %v2889 = vsel %vm1792, %v2883, %v2884
      %v2890 = vsel %vm1792, %v2882, %v2883
      %v2891 = vsel %vm1792, %v2881, %v2882
      %v2892 = vsel %vm1792, %v2880, %v2881
      %v2893 = vsel %vm1792, %v2879, %v2880
      %v2894 = vsel %vm1792, %v2878, %v2879
      %v2895 = vsel %vm1792, %v2877, %v2878
      %v2896 = vsel %vm1792, %v2876, %v2877
      %v2897 = vsel %vm1792, %v2875, %v2876
      %v2898 = vsel %vm1792, %v2874, %v2875
      %v2899 = vsel %vm1792, %v2873, %v2874
      %v2900 = vsel %vm1792, %v2872, %v2873
      %v2901 = vsel %vm1792, %v2871, %v2872
      %v2902 = vsel %vm1792, %v2870, %v2871
      %v2903 = vsel %vm1792, %v2869, %v2870
      %v2904 = vsel %vm1792, %v2868, %v2869
      %v2905 = vsel %vm1792, %v2867, %v2868
      %v2906 = vsel %vm1792, %v2866, %v2867
      %v2907 = vsel %vm1792, %v2865, %v2866
      %v2908 = vsel %vm1792, %v2864, %v2865
      %v2909 = vsel %vm1792, %v2863, %v2864
      %v2910 = vsel %vm1792, %v2886, %v2863
      %v2911 = vadd.f32 %v2753, %v2909
      %v2912 = vadd.f32 %v2754, %v2908
      %v2913 = vadd.f32 %v2755, %v2907
      %v2914 = vadd.f32 %v2756, %v2906
      %v2915 = vadd.f32 %v2757, %v2905
      %v2916 = vadd.f32 %v2758, %v2904
      %v2917 = vadd.f32 %v2759, %v2903
      %v2918 = vadd.f32 %v2760, %v2902
      %v2919 = vadd.f32 %v2761, %v2901
      %v2920 = vadd.f32 %v2762, %v2900
      %v2921 = vadd.f32 %v2763, %v2899
      %v2922 = vadd.f32 %v2764, %v2898
      %v2923 = vadd.f32 %v2765, %v2897
      %v2924 = vadd.f32 %v2766, %v2896
      %v2925 = vadd.f32 %v2767, %v2895
      %v2926 = vadd.f32 %v2768, %v2894
      %v2927 = vadd.f32 %v2769, %v2893
      %v2928 = vadd.f32 %v2770, %v2892
      %v2929 = vadd.f32 %v2771, %v2891
      %v2930 = vadd.f32 %v2772, %v2890
      %v2931 = vadd.f32 %v2773, %v2889
      %v2932 = vadd.f32 %v2774, %v2888
      %v2933 = vadd.f32 %v2775, %v2887
      %v2934 = vadd.f32 %v2776, %v2910
      %v2935 = vld [vmem:[%s5] sm:$0x1]
      %v2937 = vperm.slane %v2935, 0
      %v2939 = vmul.f32 %v2911, %v2937
      %v2940 = vmul.f32 %v2912, %v2937
      %v2941 = vmul.f32 %v2913, %v2937
      %v2942 = vmul.f32 %v2914, %v2937
      %v2943 = vmul.f32 %v2915, %v2937
      %v2944 = vmul.f32 %v2916, %v2937
      %v2945 = vmul.f32 %v2917, %v2937
      %v2946 = vmul.f32 %v2918, %v2937
      %v2947 = vmul.f32 %v2919, %v2937
      %v2948 = vmul.f32 %v2920, %v2937
      %v2949 = vmul.f32 %v2921, %v2937
      %v2950 = vmul.f32 %v2922, %v2937
      %v2951 = vmul.f32 %v2923, %v2937
      %v2952 = vmul.f32 %v2924, %v2937
      %v2953 = vmul.f32 %v2925, %v2937
      %v2954 = vmul.f32 %v2926, %v2937
      %v2955 = vmul.f32 %v2927, %v2937
      %v2956 = vmul.f32 %v2928, %v2937
      %v2957 = vmul.f32 %v2929, %v2937
      %v2958 = vmul.f32 %v2930, %v2937
      %v2959 = vmul.f32 %v2931, %v2937
      %v2960 = vmul.f32 %v2932, %v2937
      %v2961 = vmul.f32 %v2933, %v2937
      %v2962 = vmul.f32 %v2934, %v2937
      %v2963 = vld [vmem:[%s6] sm:$0x1]
      %v2965 = vperm.slane %v2963, 0
      %v2967 = vadd.f32 %v2939, %v2965
      %v2968 = vadd.f32 %v2940, %v2965
      %v2969 = vadd.f32 %v2941, %v2965
      %v2970 = vadd.f32 %v2942, %v2965
      %v2971 = vadd.f32 %v2943, %v2965
      %v2972 = vadd.f32 %v2944, %v2965
      %v2973 = vadd.f32 %v2945, %v2965
      %v2974 = vadd.f32 %v2946, %v2965
      %v2975 = vadd.f32 %v2947, %v2965
      %v2976 = vadd.f32 %v2948, %v2965
      %v2977 = vadd.f32 %v2949, %v2965
      %v2978 = vadd.f32 %v2950, %v2965
      %v2979 = vadd.f32 %v2951, %v2965
      %v2980 = vadd.f32 %v2952, %v2965
      %v2981 = vadd.f32 %v2953, %v2965
      %v2982 = vadd.f32 %v2954, %v2965
      %v2983 = vadd.f32 %v2955, %v2965
      %v2984 = vadd.f32 %v2956, %v2965
      %v2985 = vadd.f32 %v2957, %v2965
      %v2986 = vadd.f32 %v2958, %v2965
      %v2987 = vadd.f32 %v2959, %v2965
      %v2988 = vadd.f32 %v2960, %v2965
      %v2989 = vadd.f32 %v2961, %v2965
      %v2990 = vadd.f32 %v2962, %v2965
      %v2991 = vmax.f32 %v2967, 0.0
      %v2992 = vmax.f32 %v2968, 0.0
      %v2993 = vmax.f32 %v2969, 0.0
      %v2994 = vmax.f32 %v2970, 0.0
      %v2995 = vmax.f32 %v2971, 0.0
      %v2996 = vmax.f32 %v2972, 0.0
      %v2997 = vmax.f32 %v2973, 0.0
      %v2998 = vmax.f32 %v2974, 0.0
      %v2999 = vmax.f32 %v2975, 0.0
      %v3000 = vmax.f32 %v2976, 0.0
      %v3001 = vmax.f32 %v2977, 0.0
      %v3002 = vmax.f32 %v2978, 0.0
      %v3003 = vmax.f32 %v2979, 0.0
      %v3004 = vmax.f32 %v2980, 0.0
      %v3005 = vmax.f32 %v2981, 0.0
      %v3006 = vmax.f32 %v2982, 0.0
      %v3007 = vmax.f32 %v2983, 0.0
      %v3008 = vmax.f32 %v2984, 0.0
      %v3009 = vmax.f32 %v2985, 0.0
      %v3010 = vmax.f32 %v2986, 0.0
      %v3011 = vmax.f32 %v2987, 0.0
      %v3012 = vmax.f32 %v2988, 0.0
      %v3013 = vmax.f32 %v2989, 0.0
      %v3014 = vmax.f32 %v2990, 0.0
      %v3015 = vpack.c.bf16 %v2992, %v2991
      %v3016 = vpack.c.bf16 %v2994, %v2993
      %v3017 = vpack.c.bf16 %v2996, %v2995
      %v3018 = vpack.c.bf16 %v2998, %v2997
      %v3019 = vpack.c.bf16 %v3000, %v2999
      %v3020 = vpack.c.bf16 %v3002, %v3001
      %v3021 = vpack.c.bf16 %v3004, %v3003
      %v3022 = vpack.c.bf16 %v3006, %v3005
      %v3023 = vpack.c.bf16 %v3008, %v3007
      %v3024 = vpack.c.bf16 %v3010, %v3009
      %v3025 = vpack.c.bf16 %v3012, %v3011
      %v3026 = vpack.c.bf16 %v3014, %v3013
      %v3027 = vld [vmem:[%s7] sm:$0xf]
      %v3028 = vld [vmem:[%s7 + $0x4] sm:$0xf]
      %v3029 = vld [vmem:[%s7 + $0x8] sm:$0xf]
      %v3030 = vld [vmem:[%s7 + $0xc] sm:$0xf]
      %v3035 = vunpack.c.l.b16 %v3027
      %v3036 = vunpack.c.l.b16 %v3028
      %v3037 = vunpack.c.l.b16 %v3029
      %v3038 = vunpack.c.l.b16 %v3030
      %v3039 = vpack.c.b16 %v3036, %v3035
      %v3040 = vpack.c.b16 %v3038, %v3037
      %v3044 = vsel %vm1444, %v3015, 0
      %v3047 = vsel %vm1444, %v3016, 0
      %v3050 = vsel %vm1444, %v3017, 0
      %v3053 = vsel %vm1444, %v3018, 0
      %v3056 = vsel %vm1444, %v3019, 0
      %v3059 = vsel %vm1444, %v3020, 0
      %v3062 = vsel %vm1444, %v3021, 0
      %v3065 = vsel %vm1444, %v3022, 0
      %v3068 = vsel %vm1444, %v3023, 0
      %v3071 = vsel %vm1444, %v3024, 0
      %v3074 = vsel %vm1444, %v3025, 0
      %v3077 = vsel %vm1444, %v3026, 0
      %3079 = vmatpush.bf16.msra.mxu0 0
      %3080 = vmatpush.bf16.msra.mxu0 0
      %3081 = vmatpush.bf16.msra.mxu0 0
      %3082 = vmatpush.bf16.msra.mxu0 0
      %3083 = vmatpush.bf16.msra.mxu0 0
      %3084 = vmatpush.bf16.msra.mxu0 0
      %3085 = vmatpush.bf16.msra.mxu0 %v3040
      %3086 = vmatpush.bf16.msra.mxu0 %v3039
      %3087 = vmatmul.bf16.gmra.mxu0 %v3044
      %v3088 = vpop.f32.mrf.mxu0
      %v3089 = vadd.f32 0.0, %v3088
      %v3090 = vpop.f32.mrf.mxu0
      %v3091 = vadd.f32 0.0, %v3090
      %3092 = vmatmul.bf16.gmra.mxu0 %v3047
      %v3093 = vpop.f32.mrf.mxu0
      %v3094 = vpop.f32.mrf.mxu0
      %v3095 = vadd.f32 0.0, %v3094
      %3096 = vmatmul.bf16.gmra.mxu0 %v3050
      %v3097 = vpop.f32.mrf.mxu0
      %v3098 = vadd.f32 0.0, %v3097
      %v3099 = vpop.f32.mrf.mxu0
      %3100 = vmatmul.bf16.gmra.mxu0 %v3053
      %v3101 = vpop.f32.mrf.mxu0
      %v3102 = vadd.f32 0.0, %v3101
      %v3103 = vpop.f32.mrf.mxu0
      %v3104 = vadd.f32 0.0, %v3103
      %3105 = vmatmul.bf16.gmra.mxu0 %v3056
      %v3106 = vpop.f32.mrf.mxu0
      %v3107 = vpop.f32.mrf.mxu0
      %v3108 = vadd.f32 0.0, %v3107
      %3109 = vmatmul.bf16.gmra.mxu0 %v3059
      %v3110 = vpop.f32.mrf.mxu0
      %v3111 = vadd.f32 0.0, %v3110
      %v3112 = vpop.f32.mrf.mxu0
      %3113 = vmatmul.bf16.gmra.mxu0 %v3062
      %v3114 = vpop.f32.mrf.mxu0
      %v3115 = vadd.f32 0.0, %v3114
      %v3116 = vpop.f32.mrf.mxu0
      %v3117 = vadd.f32 0.0, %v3116
      %3118 = vmatmul.bf16.gmra.mxu0 %v3065
      %v3119 = vpop.f32.mrf.mxu0
      %v3120 = vpop.f32.mrf.mxu0
      %v3121 = vadd.f32 0.0, %v3120
      %3122 = vmatmul.bf16.gmra.mxu0 %v3068
      %v3123 = vpop.f32.mrf.mxu0
      %v3124 = vadd.f32 0.0, %v3123
      %v3125 = vpop.f32.mrf.mxu0
      %3126 = vmatmul.bf16.gmra.mxu0 %v3071
      %v3127 = vpop.f32.mrf.mxu0
      %v3128 = vadd.f32 0.0, %v3127
      %v3129 = vpop.f32.mrf.mxu0
      %v3130 = vadd.f32 0.0, %v3129
      %3131 = vmatmul.bf16.gmra.mxu0 %v3074
      %v3132 = vpop.f32.mrf.mxu0
      %v3133 = vpop.f32.mrf.mxu0
      %v3134 = vadd.f32 0.0, %v3133
      %3135 = vmatmul.bf16.gmra.mxu0 %v3077
      %v3136 = vpop.f32.mrf.mxu0
      %v3137 = vadd.f32 0.0, %v3136
      %v3138 = vpop.f32.mrf.mxu0
      %3139 = vdwg.mxu0
      %v3140 = vld [vmem:[%s8] sm:$0x1]
      %v3142 = vperm.slane %v3140, 0
      %v3144 = vmul.f32 %v3089, %v3142
      %v3145 = vmul.f32 %v3091, %v3142
      %v3146 = vmul.f32 %v3095, %v3142
      %v3147 = vmul.f32 %v3098, %v3142
      %v3148 = vmul.f32 %v3102, %v3142
      %v3149 = vmul.f32 %v3104, %v3142
      %v3150 = vmul.f32 %v3108, %v3142
      %v3151 = vmul.f32 %v3111, %v3142
      %v3152 = vmul.f32 %v3115, %v3142
      %v3153 = vmul.f32 %v3117, %v3142
      %v3154 = vmul.f32 %v3121, %v3142
      %v3155 = vmul.f32 %v3124, %v3142
      %v3156 = vmul.f32 %v3128, %v3142
      %v3157 = vmul.f32 %v3130, %v3142
      %v3158 = vmul.f32 %v3134, %v3142
      %v3159 = vmul.f32 %v3137, %v3142
      %v3160 = vld [vmem:[%s9] sm:$0x1]
      %v3162 = vperm.slane %v3160, 0
      %v3164 = vadd.f32 %v3144, %v3162
      %v3165 = vadd.f32 %v3145, %v3162
      %v3166 = vadd.f32 %v3146, %v3162
      %v3167 = vadd.f32 %v3147, %v3162
      %v3168 = vadd.f32 %v3148, %v3162
      %v3169 = vadd.f32 %v3149, %v3162
      %v3170 = vadd.f32 %v3150, %v3162
      %v3171 = vadd.f32 %v3151, %v3162
      %v3172 = vadd.f32 %v3152, %v3162
      %v3173 = vadd.f32 %v3153, %v3162
      %v3174 = vadd.f32 %v3154, %v3162
      %v3175 = vadd.f32 %v3155, %v3162
      %v3176 = vadd.f32 %v3156, %v3162
      %v3177 = vadd.f32 %v3157, %v3162
      %v3178 = vadd.f32 %v3158, %v3162
      %v3179 = vadd.f32 %v3159, %v3162
      %s3180 = sadd.s32 %s386, 1
      %s3181 = smul.u32 %s3180, 16
      %s3182 = scalar_lea.vmem %s373, %s3181
      %v3183 = vld [vmem:[%s3182] sm:$0xff]
      %v3184 = vld [vmem:[%s3182 + $0x8] sm:$0xff]
      %v3185 = vld [vmem:[%s3182 + $0x10] sm:$0xff]
      %v3186 = vld [vmem:[%s3182 + $0x18] sm:$0xff]
      %v3187 = vld [vmem:[%s3182 + $0x20] sm:$0xff]
      %v3188 = vld [vmem:[%s3182 + $0x28] sm:$0xff]
      %v3189 = vld [vmem:[%s3182 + $0x30] sm:$0xff]
      %v3190 = vld [vmem:[%s3182 + $0x38] sm:$0xff]
      %v3191 = vld [vmem:[%s3182 + $0x40] sm:$0xff]
      %v3192 = vld [vmem:[%s3182 + $0x48] sm:$0xff]
      %v3193 = vld [vmem:[%s3182 + $0x50] sm:$0xff]
      %v3194 = vld [vmem:[%s3182 + $0x58] sm:$0xff]
      %v3195 = vld [vmem:[%s3182 + $0x60] sm:$0xff]
      %v3196 = vld [vmem:[%s3182 + $0x68] sm:$0xff]
      %v3197 = vld [vmem:[%s3182 + $0x70] sm:$0xff]
      %v3198 = vld [vmem:[%s3182 + $0x78] sm:$0xff]
      %v3199 = vadd.f32 %v3164, %v3183
      %v3200 = vadd.f32 %v3165, %v3184
      %v3201 = vadd.f32 %v3166, %v3185
      %v3202 = vadd.f32 %v3167, %v3186
      %v3203 = vadd.f32 %v3168, %v3187
      %v3204 = vadd.f32 %v3169, %v3188
      %v3205 = vadd.f32 %v3170, %v3189
      %v3206 = vadd.f32 %v3171, %v3190
      %v3207 = vadd.f32 %v3172, %v3191
      %v3208 = vadd.f32 %v3173, %v3192
      %v3209 = vadd.f32 %v3174, %v3193
      %v3210 = vadd.f32 %v3175, %v3194
      %v3211 = vadd.f32 %v3176, %v3195
      %v3212 = vadd.f32 %v3177, %v3196
      %v3213 = vadd.f32 %v3178, %v3197
      %v3214 = vadd.f32 %v3179, %v3198
      %v3215 = vmax.f32 %v3199, 0.0
      %v3216 = vmax.f32 %v3200, 0.0
      %v3217 = vmax.f32 %v3201, 0.0
      %v3218 = vmax.f32 %v3202, 0.0
      %v3219 = vmax.f32 %v3203, 0.0
      %v3220 = vmax.f32 %v3204, 0.0
      %v3221 = vmax.f32 %v3205, 0.0
      %v3222 = vmax.f32 %v3206, 0.0
      %v3223 = vmax.f32 %v3207, 0.0
      %v3224 = vmax.f32 %v3208, 0.0
      %v3225 = vmax.f32 %v3209, 0.0
      %v3226 = vmax.f32 %v3210, 0.0
      %v3227 = vmax.f32 %v3211, 0.0
      %v3228 = vmax.f32 %v3212, 0.0
      %v3229 = vmax.f32 %v3213, 0.0
      %v3230 = vmax.f32 %v3214, 0.0
      %vm3231 = vcmask 31744
      %3232 = vst.msk [vmem:[%s383] sm:$0xff] %vm3231, %v3215
      %3233 = vst.msk [vmem:[%s383 + $0x8] sm:$0xff] %vm3231, %v3216
      %3234 = vst.msk [vmem:[%s383 + $0x10] sm:$0xff] %vm3231, %v3217
      %3235 = vst.msk [vmem:[%s383 + $0x18] sm:$0xff] %vm3231, %v3218
      %3236 = vst.msk [vmem:[%s383 + $0x20] sm:$0xff] %vm3231, %v3219
      %3237 = vst.msk [vmem:[%s383 + $0x28] sm:$0xff] %vm3231, %v3220
      %3238 = vst.msk [vmem:[%s383 + $0x30] sm:$0xff] %vm3231, %v3221
      %3239 = vst.msk [vmem:[%s383 + $0x38] sm:$0xff] %vm3231, %v3222
      %3240 = vst.msk [vmem:[%s383 + $0x40] sm:$0xff] %vm3231, %v3223
      %3241 = vst.msk [vmem:[%s383 + $0x48] sm:$0xff] %vm3231, %v3224
      %3242 = vst.msk [vmem:[%s383 + $0x50] sm:$0xff] %vm3231, %v3225
      %3243 = vst.msk [vmem:[%s383 + $0x58] sm:$0xff] %vm3231, %v3226
      %3244 = vst.msk [vmem:[%s383 + $0x60] sm:$0xff] %vm3231, %v3227
      %3245 = vst.msk [vmem:[%s383 + $0x68] sm:$0xff] %vm3231, %v3228
      %3246 = vst.msk [vmem:[%s383 + $0x70] sm:$0xff] %vm3231, %v3229
      %3247 = vst.msk [vmem:[%s383 + $0x78] sm:$0xff] %vm3231, %v3230
      %s3248 = smul.u32 8, %s26
      %p3249 = scmp.lt.s32.totalorder %s25, 1
      %s3250 = scalar_select %p3249, %s25, 1
      %p3251 = scmp.lt.s32.totalorder %s3248, 15
      %s3252 = scalar_select %p3251, %s3248, 15
      %s3253 = smul.addr %s3252, 2
      %s3254 = smul.addr %s3250, 32
      %s3255 = sadd.s32 %s3253, %s3254
      %s3256 = smul.addr %s3255, 8
      %s3257 = scalar_lea.vmem %s10, %s3256
      // Predicated region
      $region69: #{tpu_custom_call.1} parent=59 // pred_check
        %p3258 = pneg %p268
      $region70: #{tpu_custom_call.1} parent=59 // pred_check_branch
        %3260 = sbr.rel (%p3258) target = $region72
      $region71: #{tpu_custom_call.1} parent=59 // pred_region
        %s3261 = smul.u32 8, %s26
      $region72: #{tpu_custom_call.1} parent=59 // pred_fallthru
        _
    $region60: #{tpu_custom_call.1} parent=5 // pred_fallthru
      _
    %p3262 = scmp.le.s32.totalorder 2, %s16
    // Predicated region
    $region73: #{tpu_custom_call.1} parent=5 // pred_check
      %p3263 = pneg %p3262
    $region74: #{tpu_custom_call.1} parent=5 // pred_check_branch
      %3265 = sbr.rel (%p3263) target = $region76
    $region75: #{tpu_custom_call.1} parent=5 // pred_region
      %s3266 = ssub.s32 %s16, 2
      // Predicated region
      $region77: #{tpu_custom_call.1} parent=75 // pred_check
        %p3267 = pneg %p274
      $region78: #{tpu_custom_call.1} parent=75 // pred_check_branch
        %3269 = sbr.rel (%p3267) target = $region80
      $region79: #{tpu_custom_call.1} parent=75 // pred_region
        %s3270 = smul.u32 8, %s28
        %p3271 = scmp.lt.s32.totalorder %s27, 1
        %s3272 = scalar_select %p3271, %s27, 1
        %p3273 = scmp.lt.s32.totalorder %s3270, 15
        %s3274 = scalar_select %p3273, %s3270, 15
        %s3275 = smul.addr %s3274, 2
        %s3276 = smul.addr %s3272, 32
        %s3277 = sadd.s32 %s3275, %s3276
        %s3278 = smul.addr %s3277, 8
        %s3279 = scalar_lea.vmem %s10, %s3278
      $region80: #{tpu_custom_call.1} parent=75 // pred_fallthru
        _
    $region76: #{tpu_custom_call.1} parent=5 // pred_fallthru
      _
  $region6: #{tpu_custom_call.1} parent=0 // loop_footer
    %s20 = sadd.s32 1, %s16
  $region7: #{tpu_custom_call.1} parent=0 // loop_footer_branch
    %15 = sbr.rel target = $region3
  $region8: #{tpu_custom_call.1} parent=0 // loop_exit
    _

</llo_original>
